<compile_context>
chip_gen: v7x
topology: tpu7x:2x2x1
jax: 0.10.0
libtpu: 0.0.40
codegen_flags: <defaults>
</compile_context>

<pallas_src>
import functools

import jax
import jax.numpy as jnp
from jax.experimental import pallas as pl
from jax.experimental.pallas import tpu as pltpu


# ----------------------------------------------------------------------------
# helpers
# ----------------------------------------------------------------------------
def _rup(x, m):
    return (x + m - 1) // m * m


def _tf_same_pads(size, k, s):
    out = -(-size // s)
    pad_total = max((out - 1) * s + k - size, 0)
    return pad_total // 2, pad_total - pad_total // 2


def _extract_patches(x, k, stride):
    """x: [B,H,W,C] -> [B,Ho,Wo,k*k,C] (tf-SAME). Only used for the tiny stem."""
    B, H, W, C = x.shape
    ph = _tf_same_pads(H, k, stride)
    pw = _tf_same_pads(W, k, stride)
    xp = jnp.pad(x, ((0, 0), ph, pw, (0, 0)))
    Ho, Wo = -(-H // stride), -(-W // stride)
    taps = []
    for ky in range(k):
        for kx in range(k):
            taps.append(
                xp[:, ky:ky + Ho * stride:stride, kx:kx + Wo * stride:stride, :]
            )
    return jnp.stack(taps, axis=3)


# ----------------------------------------------------------------------------
# Pallas tiled matmul: bf16 operands, f32 accumulation in the output block,
# fused bias + activation, optional per-M-tile K-channel scale (SE fusion).
# ----------------------------------------------------------------------------
def _mm_kernel_factory(act, has_scale):
    def kernel(*refs):
        if has_scale:
            a_ref, s_ref, b_ref, bias_ref, o_ref = refs
        else:
            a_ref, b_ref, bias_ref, o_ref = refs

        @pl.when(pl.program_id(2) == 0)
        def _init():
            o_ref[...] = jnp.zeros_like(o_ref)

        a = a_ref[...]
        if has_scale:
            a = a * s_ref[0]          # fold SE gate into the A tile (bf16 VPU mul)
        o_ref[...] += jnp.dot(a, b_ref[...], preferred_element_type=jnp.float32)

        @pl.when(pl.program_id(2) == pl.num_programs(2) - 1)
        def _fin():
            r = o_ref[...] + bias_ref[0]
            if act == "silu":
                r = r * jax.nn.sigmoid(r)
            elif act == "relu":
                r = jnp.maximum(r, 0.0)
            elif act == "sigmoid":
                r = jax.nn.sigmoid(r)
            o_ref[...] = r

    return kernel


def matmul_bias_act(a, b, bias=None, act=None, a_scale=None, tm=None):
    """act(a @ b + bias) -> f32.

    a:[M,K] b:[K,N] bias:[N]|None.  a_scale: optional [M//tm, K] — A tile i is
    scaled (broadcast over its rows) by a_scale[i] before the MXU.
    K and N are never padded: the full extent is used as the block size (legal
    when block dim == array dim); only M pads up to the M tile.
    """
    M, K = a.shape
    K2, N = b.shape
    assert K == K2
    if bias is None:
        bias = jnp.zeros((N,), jnp.float32)

    tk = K if K <= 512 else 512
    tn = N if N <= 512 else 256
    if tm is None:
        tm = min(256, _rup(M, 16))
    Mp, Np, Kp = _rup(M, tm), _rup(N, tn), _rup(K, tk)

    a_p = a.astype(jnp.bfloat16)
    if (Mp, Kp) != (M, K):
        a_p = jnp.pad(a_p, ((0, Mp - M), (0, Kp - K)))
    b_p = b.astype(jnp.bfloat16)
    if (Kp, Np) != (K, N):
        b_p = jnp.pad(b_p, ((0, Kp - K), (0, Np - N)))
    bias_p = bias.astype(jnp.float32)
    if Np != N:
        bias_p = jnp.pad(bias_p, (0, Np - N))
    bias_p = bias_p.reshape(1, Np)

    has_scale = a_scale is not None
    inputs = [a_p]
    in_specs = [pl.BlockSpec((tm, tk), lambda i, j, k: (i, k))]
    if has_scale:
        assert Mp == M and M % tm == 0 and a_scale.shape == (M // tm, K)
        s_p = a_scale.astype(jnp.bfloat16)
        if Kp != K:
            s_p = jnp.pad(s_p, ((0, 0), (0, Kp - K)))
        s_p = s_p.reshape(M // tm, 1, Kp)
        inputs.append(s_p)
        in_specs.append(pl.BlockSpec((1, 1, tk), lambda i, j, k: (i, 0, k)))
    inputs += [b_p, bias_p]
    in_specs += [
        pl.BlockSpec((tk, tn), lambda i, j, k: (k, j)),
        pl.BlockSpec((1, tn), lambda i, j, k: (0, j)),
    ]

    out = pl.pallas_call(
        _mm_kernel_factory(act, has_scale),
        out_shape=jax.ShapeDtypeStruct((Mp, Np), jnp.float32),
        grid_spec=pltpu.PrefetchScalarGridSpec(
            num_scalar_prefetch=0,
            grid=(Mp // tm, Np // tn, Kp // tk),
            in_specs=in_specs,
            out_specs=pl.BlockSpec((tm, tn), lambda i, j, k: (i, j)),
        ),
        compiler_params=pltpu.CompilerParams(
            dimension_semantics=("parallel", "parallel", "arbitrary")
        ),
    )(*inputs)
    if (Mp, Np) != (M, N):
        out = out[:M, :N]
    return out


# ----------------------------------------------------------------------------
# Pallas depthwise 3x3 conv: shifted MACs in VMEM (no im2col) + fused SiLU.
# Stride 2 uses a 4-phase decomposition so every in-kernel slice is contiguous.
# ----------------------------------------------------------------------------
def _dw_kernel_factory(stride, Ho, Wo):
    def kernel(x_ref, w_ref, o_ref):
        # x_ref: (stride*stride, Hph, Wph, C) bf16 phases of the padded input
        # w_ref: (9, C) f32;  o_ref: (1, Ho, Wo, C) f32
        C = o_ref.shape[-1]
        acc = jnp.zeros((Ho, Wo, C), jnp.float32)
        for ky in range(3):
            for kx in range(3):
                ph = (ky % stride) * stride + (kx % stride)
                ro, co = ky // stride, kx // stride
                tap = x_ref[ph, ro:ro + Ho, co:co + Wo, :].astype(jnp.float32)
                acc = acc + tap * w_ref[ky * 3 + kx, :]
        o_ref[0] = (acc * jax.nn.sigmoid(acc)).astype(o_ref.dtype)   # fused SiLU

    return kernel


def depthwise_conv3x3_silu(x, w, stride):
    """x: [B,H,W,C], w: [3,3,C] -> silu(depthwise_conv(x, w)) [B,Ho,Wo,C] f32."""
    B, H, W, C = x.shape
    Ho, Wo = -(-H // stride), -(-W // stride)
    pt, _ = _tf_same_pads(H, 3, stride)
    pw0, _ = _tf_same_pads(W, 3, stride)
    if stride == 1:
        Hph, Wph = Ho + 2, Wo + 2
        xp = jnp.pad(x, ((0, 0), (pt, Hph - H - pt), (pw0, Wph - W - pw0), (0, 0)))
        xph = xp[:, None].astype(jnp.bfloat16)             # (B, 1, Ho+2, Wo+2, C)
    elif stride == 2:
        Hp, Wp = 2 * Ho + 2, 2 * Wo + 2                    # last zero row/col never read
        xp = jnp.pad(x, ((0, 0), (pt, Hp - H - pt), (pw0, Wp - W - pw0), (0, 0)))
        xph = jnp.stack(
            [xp[:, py::2, px::2, :] for py in range(2) for px in range(2)], axis=1
        ).astype(jnp.bfloat16)                             # (B, 4, Ho+1, Wo+1, C)
        Hph, Wph = Ho + 1, Wo + 1
    else:
        raise ValueError("stride must be 1 or 2")
    nph = stride * stride
    xph = xph.reshape(B * nph, Hph, Wph, C)

    return pl.pallas_call(
        _dw_kernel_factory(stride, Ho, Wo),
        out_shape=jax.ShapeDtypeStruct((B, Ho, Wo, C), jnp.float32),
        grid_spec=pltpu.PrefetchScalarGridSpec(
            num_scalar_prefetch=0,
            grid=(B,),
            in_specs=[
                pl.BlockSpec((nph, Hph, Wph, C), lambda b: (b, 0, 0, 0)),
                pl.BlockSpec((9, C), lambda b: (0, 0)),
            ],
            out_specs=pl.BlockSpec((1, Ho, Wo, C), lambda b: (b, 0, 0, 0)),
        ),
        compiler_params=pltpu.CompilerParams(dimension_semantics=("parallel",)),
    )(xph, w.reshape(9, C).astype(jnp.float32))


# ----------------------------------------------------------------------------
# Pallas GeM pooling: ((1/HW) * sum(clamp(x,eps)^3))^(1/3), tiled over HW.
# ----------------------------------------------------------------------------
def _gem_kernel(x_ref, o_ref, *, p, eps, inv_hw):
    @pl.when(pl.program_id(0) == 0)
    def _init():
        o_ref[...] = jnp.zeros_like(o_ref)

    x = x_ref[...].astype(jnp.float32)                     # (B, thw, C)
    xc = jnp.maximum(x, eps)
    if p == 3.0:
        xq = xc * xc * xc                                  # VPU muls, not pow-on-EUP
    else:
        xq = xc ** p
    o_ref[...] += jnp.sum(xq, axis=1)

    @pl.when(pl.program_id(0) == pl.num_programs(0) - 1)
    def _fin():
        o_ref[...] = (o_ref[...] * inv_hw) ** (1.0 / p)


def gem_pool(x, p=3.0, eps=1e-6):
    """x: [B,H,W,C] -> [B,C] (f32), accumulated over HW tiles in the out block."""
    B, H, W, C = x.shape
    HW = H * W
    thw = HW
    for cand in (512, 256, 128, 64, 32, 16, 8):
        if HW % cand == 0:
            thw = cand
            break
    xf = x.reshape(B, HW, C)
    return pl.pallas_call(
        functools.partial(_gem_kernel, p=p, eps=eps, inv_hw=1.0 / HW),
        out_shape=jax.ShapeDtypeStruct((B, C), jnp.float32),
        grid_spec=pltpu.PrefetchScalarGridSpec(
            num_scalar_prefetch=0,
            grid=(HW // thw,),
            in_specs=[pl.BlockSpec((B, thw, C), lambda i: (0, i, 0))],
            out_specs=pl.BlockSpec((B, C), lambda i: (0, 0)),
        ),
        compiler_params=pltpu.CompilerParams(dimension_semantics=("arbitrary",)),
    )(xf)


# ----------------------------------------------------------------------------
# conv wrappers built on the Pallas matmul
# ----------------------------------------------------------------------------
def conv2d_3x3(x, w, stride, act):
    """x: [B,H,W,Cin], w: [3,3,Cin,Cout] (BN folded / no bias)."""
    B, H, W, Cin = x.shape
    Cout = w.shape[-1]
    patches = _extract_patches(x, 3, stride)               # tiny (stem, Cin=3)
    Ho, Wo = patches.shape[1], patches.shape[2]
    a = patches.reshape(B * Ho * Wo, 9 * Cin)
    out = matmul_bias_act(a, w.reshape(9 * Cin, Cout), act=act)
    return out.reshape(B, Ho, Wo, Cout)


def conv2d_1x1(x, w, act):
    """x: [B,H,W,Cin], w: [Cin,Cout]."""
    B, H, W, Cin = x.shape
    Cout = w.shape[-1]
    out = matmul_bias_act(x.reshape(B * H * W, Cin), w, act=act)
    return out.reshape(B, H, W, Cout)


# ----------------------------------------------------------------------------
# MBConv block (expand -> depthwise -> SE -> project), BN folded to identity
# ----------------------------------------------------------------------------
def mbconv(x, p, stride, residual):
    shortcut = x
    h = conv2d_1x1(x, p["expand_w"], act="silu")
    h = depthwise_conv3x3_silu(h, p["dw_w"], stride)
    # squeeze-and-excite: tiny (B x <=192) FCs — plain XLA (a pallas_call would
    # be pure launch overhead); the gate is folded into the projection matmul.
    s = jnp.mean(h, axis=(1, 2))                                    # [B, Cexp]
    s = jax.nn.silu(s @ p["se_w1"] + p["se_b1"])
    s = jax.nn.sigmoid(s @ p["se_w2"] + p["se_b2"])
    B, Ho, Wo, Cexp = h.shape
    rows = Ho * Wo
    if rows % 16 == 0:
        out = matmul_bias_act(h.reshape(B * rows, Cexp), p["proj_w"],
                              act=None, a_scale=s, tm=rows)
        h = out.reshape(B, Ho, Wo, -1)
    else:
        # TODO(synk): fallback keeps a separate broadcast-multiply pass
        h = h * s[:, None, None, :]
        h = conv2d_1x1(h, p["proj_w"], act=None)
    if residual:
        h = h + shortcut
    return h


# ----------------------------------------------------------------------------
# full forward:  backbone -> GeM pool -> flatten -> Linear(embedding_size)
# ----------------------------------------------------------------------------
def efficientnet_forward(x_nchw, params):
    x = jnp.transpose(x_nchw, (0, 2, 3, 1)).astype(jnp.float32)     # NCHW->NHWC
    x = conv2d_3x3(x, params["stem_w"], stride=2, act="silu")       # stem
    x = mbconv(x, params["b1"], stride=2, residual=False)
    x = mbconv(x, params["b2"], stride=1, residual=True)
    x = conv2d_1x1(x, params["head_w"], act="silu")                 # head conv
    feat = gem_pool(x, p=3.0, eps=1e-6)                             # GeM -> [B,C]
    out = matmul_bias_act(feat, params["emb_w"], params["emb_b"], act=None)
    return out                                                      # [B, 200]


# ----------------------------------------------------------------------------
# deterministic parameter init
# ----------------------------------------------------------------------------
def init_params(key, embedding_size=200):
    stem_c, b1_in, b1_out, b2_out, head_c = 32, 32, 48, 48, 128
    ks = jax.random.split(key, 16)

    def w(k, shape, fan_in):
        return jax.random.normal(k, shape, jnp.float32) * (1.0 / jnp.sqrt(fan_in))

    def mb_params(keys, cin, cout, expand=4, se_ratio=0.25):
        cexp = cin * expand
        cr = max(1, int(cin * se_ratio))
        return {
            "expand_w": w(keys[0], (cin, cexp), cin),
            "dw_w": w(keys[1], (3, 3, cexp), 9),
            "se_w1": w(keys[2], (cexp, cr), cexp),
            "se_b1": jnp.zeros((cr,), jnp.float32),
            "se_w2": w(keys[3], (cr, cexp), cr),
            "se_b2": jnp.zeros((cexp,), jnp.float32),
            "proj_w": w(keys[4], (cexp, cout), cexp),
        }

    return {
        "stem_w": w(ks[0], (3, 3, 3, stem_c), 27),
        "b1": mb_params(ks[1:6], b1_in, b1_out),
        "b2": mb_params(ks[6:11], b1_out, b2_out),
        "head_w": w(ks[11], (b2_out, head_c), b2_out),
        "emb_w": w(ks[12], (head_c, embedding_size), head_c),
        "emb_b": jnp.zeros((embedding_size,), jnp.float32),
    }


if __name__ == "__main__":
    key = jax.random.PRNGKey(0)
    pkey, xkey = jax.random.split(key)
    params = init_params(pkey, embedding_size=200)

    # small RGB input consistent with an image backbone
    x = jax.random.normal(xkey, (2, 3, 32, 32), jnp.float32)        # NCHW

    fwd = jax.jit(efficientnet_forward)
    out = fwd(x, params)
    jax.block_until_ready(out)
    assert out.shape == (2, 200), out.shape
    print("KERNEL_OK")
</pallas_src>

<mosaic_0001>
module attributes {stable_mosaic.version = 11 : i64} {
  func.func @kernel(%arg0: i32, %arg1: i32, %arg2: i32, %arg3: memref<256x27xbf16, #tpu.memory_space<vmem>>, %arg4: memref<27x32xbf16, #tpu.memory_space<vmem>>, %arg5: memref<1x32xf32, #tpu.memory_space<vmem>>, %arg6: memref<256x32xf32, #tpu.memory_space<vmem>>) attributes {dimension_semantics = [#tpu.dimension_semantics<parallel>, #tpu.dimension_semantics<parallel>, #tpu.dimension_semantics<arbitrary>], iteration_bounds = array<i64: 2, 1, 1>, scalar_prefetch = 0 : i64, scratch_operands = 0 : i64, tpu.core_type = #tpu.core_type<tc>, window_params = [{transform_indices = @transform_0, window_bounds = array<i64: 256, 27>}, {transform_indices = @transform_1, window_bounds = array<i64: 27, 32>}, {transform_indices = @transform_2, window_bounds = array<i64: 1, 32>}, {transform_indices = @transform_3, window_bounds = array<i64: 256, 32>}]} {
    %c0_i32 = arith.constant 0 : i32
    %0 = arith.cmpi eq, %arg2, %c0_i32 : i32
    %1 = arith.extui %0 : i1 to i32
    %c0_i32_0 = arith.constant 0 : i32
    %2 = arith.cmpi ne, %1, %c0_i32_0 : i32
    scf.if %2 {
      %cst_10 = arith.constant 0.000000e+00 : f32
      %12 = vector.broadcast %cst_10 : f32 to vector<256x32xf32>
      %c0_11 = arith.constant 0 : index
      %c0_12 = arith.constant 0 : index
      %13 = vector.load %arg6[%c0_11, %c0_12] : memref<256x32xf32, #tpu.memory_space<vmem>>, vector<256x32xf32>
      tpu.vector_store %arg6[%c0_11, %c0_12], %12 {strides = array<i32>} : memref<256x32xf32, #tpu.memory_space<vmem>>, vector<256x32xf32>,
    } else {
    }
    %c0 = arith.constant 0 : index
    %c0_1 = arith.constant 0 : index
    %3 = vector.load %arg3[%c0, %c0_1] : memref<256x27xbf16, #tpu.memory_space<vmem>>, vector<256x27xbf16>
    %c0_2 = arith.constant 0 : index
    %c0_3 = arith.constant 0 : index
    %4 = vector.load %arg6[%c0_2, %c0_3] : memref<256x32xf32, #tpu.memory_space<vmem>>, vector<256x32xf32>
    %c0_4 = arith.constant 0 : index
    %c0_5 = arith.constant 0 : index
    %5 = vector.load %arg4[%c0_4, %c0_5] : memref<27x32xbf16, #tpu.memory_space<vmem>>, vector<27x32xbf16>
    %cst = arith.constant dense<0.000000e+00> : vector<256x32xf32>
    %6 = tpu.matmul %3, %5, %cst {dimension_numbers = #tpu.dot_dimension_numbers<[1], [0], [0], [1], [0, 0, 1, 1], [], []>} : vector<256x27xbf16>, vector<27x32xbf16>, vector<256x32xf32> -> vector<256x32xf32>
    %7 = arith.addf %4, %6 : vector<256x32xf32>
    %c0_6 = arith.constant 0 : index
    %c0_7 = arith.constant 0 : index
    %8 = vector.load %arg6[%c0_6, %c0_7] : memref<256x32xf32, #tpu.memory_space<vmem>>, vector<256x32xf32>
    tpu.vector_store %arg6[%c0_6, %c0_7], %7 {strides = array<i32>} : memref<256x32xf32, #tpu.memory_space<vmem>>, vector<256x32xf32>,
    %c0_i32_8 = arith.constant 0 : i32
    %9 = arith.cmpi eq, %arg2, %c0_i32_8 : i32
    %10 = arith.extui %9 : i1 to i32
    %c0_i32_9 = arith.constant 0 : i32
    %11 = arith.cmpi ne, %10, %c0_i32_9 : i32
    scf.if %11 {
      %c0_10 = arith.constant 0 : index
      %c0_11 = arith.constant 0 : index
      %12 = vector.load %arg6[%c0_10, %c0_11] : memref<256x32xf32, #tpu.memory_space<vmem>>, vector<256x32xf32>
      %c0_12 = arith.constant 0 : index
      %c0_13 = arith.constant 0 : index
      %13 = vector.load %arg5[%c0_12, %c0_13] : memref<1x32xf32, #tpu.memory_space<vmem>>, vector<1x32xf32>
      %14 = vector.shape_cast %13 : vector<1x32xf32> to vector<32xf32>
      %15 = vector.shape_cast %14 : vector<32xf32> to vector<1x32xf32>
      %16 = vector.broadcast %15 : vector<1x32xf32> to vector<256x32xf32>
      %17 = arith.addf %12, %16 : vector<256x32xf32>
      %18 = arith.negf %17 : vector<256x32xf32>
      %19 = math.exp %18 : vector<256x32xf32>
      %cst_14 = arith.constant 1.000000e+00 : f32
      %20 = vector.broadcast %cst_14 : f32 to vector<256x32xf32>
      %21 = arith.addf %20, %19 : vector<256x32xf32>
      %22 = arith.divf %20, %21 : vector<256x32xf32>
      %23 = arith.mulf %17, %22 : vector<256x32xf32>
      %c0_15 = arith.constant 0 : index
      %c0_16 = arith.constant 0 : index
      %24 = vector.load %arg6[%c0_15, %c0_16] : memref<256x32xf32, #tpu.memory_space<vmem>>, vector<256x32xf32>
      tpu.vector_store %arg6[%c0_15, %c0_16], %23 {strides = array<i32>} : memref<256x32xf32, #tpu.memory_space<vmem>>, vector<256x32xf32>,
    } else {
    }
    return
  }
  func.func @transform_0(%arg0: i32, %arg1: i32, %arg2: i32) -> (i32, i32) {
    %c0_i32 = arith.constant 0 : i32
    return %arg0, %arg2 : i32, i32
  }
  func.func @transform_1(%arg0: i32, %arg1: i32, %arg2: i32) -> (i32, i32) {
    %c0_i32 = arith.constant 0 : i32
    return %arg2, %arg1 : i32, i32
  }
  func.func @transform_2(%arg0: i32, %arg1: i32, %arg2: i32) -> (i32, i32) {
    %c0_i32 = arith.constant 0 : i32
    %c0_i32_0 = arith.constant 0 : i32
    return %c0_i32, %arg1 : i32, i32
  }
  func.func @transform_3(%arg0: i32, %arg1: i32, %arg2: i32) -> (i32, i32) {
    %c0_i32 = arith.constant 0 : i32
    return %arg0, %arg1 : i32, i32
  }
}

module attributes {stable_mosaic.version = 11 : i64} {
  func.func @kernel(%arg0: i32, %arg1: i32, %arg2: i32, %arg3: memref<256x32xbf16, #tpu.memory_space<vmem>>, %arg4: memref<32x128xbf16, #tpu.memory_space<vmem>>, %arg5: memref<1x128xf32, #tpu.memory_space<vmem>>, %arg6: memref<256x128xf32, #tpu.memory_space<vmem>>) attributes {dimension_semantics = [#tpu.dimension_semantics<parallel>, #tpu.dimension_semantics<parallel>, #tpu.dimension_semantics<arbitrary>], iteration_bounds = array<i64: 2, 1, 1>, scalar_prefetch = 0 : i64, scratch_operands = 0 : i64, tpu.core_type = #tpu.core_type<tc>, window_params = [{transform_indices = @transform_0, window_bounds = array<i64: 256, 32>}, {transform_indices = @transform_1, window_bounds = array<i64: 32, 128>}, {transform_indices = @transform_2, window_bounds = array<i64: 1, 128>}, {transform_indices = @transform_3, window_bounds = array<i64: 256, 128>}]} {
    %c0_i32 = arith.constant 0 : i32
    %0 = arith.cmpi eq, %arg2, %c0_i32 : i32
    %1 = arith.extui %0 : i1 to i32
    %c0_i32_0 = arith.constant 0 : i32
    %2 = arith.cmpi ne, %1, %c0_i32_0 : i32
    scf.if %2 {
      %cst_10 = arith.constant 0.000000e+00 : f32
      %12 = vector.broadcast %cst_10 : f32 to vector<256x128xf32>
      %c0_11 = arith.constant 0 : index
      %c0_12 = arith.constant 0 : index
      %13 = vector.load %arg6[%c0_11, %c0_12] : memref<256x128xf32, #tpu.memory_space<vmem>>, vector<256x128xf32>
      tpu.vector_store %arg6[%c0_11, %c0_12], %12 {strides = array<i32>} : memref<256x128xf32, #tpu.memory_space<vmem>>, vector<256x128xf32>,
    } else {
    }
    %c0 = arith.constant 0 : index
    %c0_1 = arith.constant 0 : index
    %3 = vector.load %arg3[%c0, %c0_1] : memref<256x32xbf16, #tpu.memory_space<vmem>>, vector<256x32xbf16>
    %c0_2 = arith.constant 0 : index
    %c0_3 = arith.constant 0 : index
    %4 = vector.load %arg6[%c0_2, %c0_3] : memref<256x128xf32, #tpu.memory_space<vmem>>, vector<256x128xf32>
    %c0_4 = arith.constant 0 : index
    %c0_5 = arith.constant 0 : index
    %5 = vector.load %arg4[%c0_4, %c0_5] : memref<32x128xbf16, #tpu.memory_space<vmem>>, vector<32x128xbf16>
    %cst = arith.constant dense<0.000000e+00> : vector<256x128xf32>
    %6 = tpu.matmul %3, %5, %cst {dimension_numbers = #tpu.dot_dimension_numbers<[1], [0], [0], [1], [0, 0, 1, 1], [], []>} : vector<256x32xbf16>, vector<32x128xbf16>, vector<256x128xf32> -> vector<256x128xf32>
    %7 = arith.addf %4, %6 : vector<256x128xf32>
    %c0_6 = arith.constant 0 : index
    %c0_7 = arith.constant 0 : index
    %8 = vector.load %arg6[%c0_6, %c0_7] : memref<256x128xf32, #tpu.memory_space<vmem>>, vector<256x128xf32>
    tpu.vector_store %arg6[%c0_6, %c0_7], %7 {strides = array<i32>} : memref<256x128xf32, #tpu.memory_space<vmem>>, vector<256x128xf32>,
    %c0_i32_8 = arith.constant 0 : i32
    %9 = arith.cmpi eq, %arg2, %c0_i32_8 : i32
    %10 = arith.extui %9 : i1 to i32
    %c0_i32_9 = arith.constant 0 : i32
    %11 = arith.cmpi ne, %10, %c0_i32_9 : i32
    scf.if %11 {
      %c0_10 = arith.constant 0 : index
      %c0_11 = arith.constant 0 : index
      %12 = vector.load %arg6[%c0_10, %c0_11] : memref<256x128xf32, #tpu.memory_space<vmem>>, vector<256x128xf32>
      %c0_12 = arith.constant 0 : index
      %c0_13 = arith.constant 0 : index
      %13 = vector.load %arg5[%c0_12, %c0_13] : memref<1x128xf32, #tpu.memory_space<vmem>>, vector<1x128xf32>
      %14 = vector.shape_cast %13 : vector<1x128xf32> to vector<128xf32>
      %15 = vector.shape_cast %14 : vector<128xf32> to vector<1x128xf32>
      %16 = vector.broadcast %15 : vector<1x128xf32> to vector<256x128xf32>
      %17 = arith.addf %12, %16 : vector<256x128xf32>
      %18 = arith.negf %17 : vector<256x128xf32>
      %19 = math.exp %18 : vector<256x128xf32>
      %cst_14 = arith.constant 1.000000e+00 : f32
      %20 = vector.broadcast %cst_14 : f32 to vector<256x128xf32>
      %21 = arith.addf %20, %19 : vector<256x128xf32>
      %22 = arith.divf %20, %21 : vector<256x128xf32>
      %23 = arith.mulf %17, %22 : vector<256x128xf32>
      %c0_15 = arith.constant 0 : index
      %c0_16 = arith.constant 0 : index
      %24 = vector.load %arg6[%c0_15, %c0_16] : memref<256x128xf32, #tpu.memory_space<vmem>>, vector<256x128xf32>
      tpu.vector_store %arg6[%c0_15, %c0_16], %23 {strides = array<i32>} : memref<256x128xf32, #tpu.memory_space<vmem>>, vector<256x128xf32>,
    } else {
    }
    return
  }
  func.func @transform_0(%arg0: i32, %arg1: i32, %arg2: i32) -> (i32, i32) {
    %c0_i32 = arith.constant 0 : i32
    return %arg0, %arg2 : i32, i32
  }
  func.func @transform_1(%arg0: i32, %arg1: i32, %arg2: i32) -> (i32, i32) {
    %c0_i32 = arith.constant 0 : i32
    return %arg2, %arg1 : i32, i32
  }
  func.func @transform_2(%arg0: i32, %arg1: i32, %arg2: i32) -> (i32, i32) {
    %c0_i32 = arith.constant 0 : i32
    %c0_i32_0 = arith.constant 0 : i32
    return %c0_i32, %arg1 : i32, i32
  }
  func.func @transform_3(%arg0: i32, %arg1: i32, %arg2: i32) -> (i32, i32) {
    %c0_i32 = arith.constant 0 : i32
    return %arg0, %arg1 : i32, i32
  }
}

module attributes {stable_mosaic.version = 11 : i64} {
  func.func @kernel(%arg0: i32, %arg1: memref<4x9x9x128xbf16, #tpu.memory_space<vmem>>, %arg2: memref<9x128xf32, #tpu.memory_space<vmem>>, %arg3: memref<1x8x8x128xf32, #tpu.memory_space<vmem>>) attributes {dimension_semantics = [#tpu.dimension_semantics<parallel>], iteration_bounds = array<i64: 2>, scalar_prefetch = 0 : i64, scratch_operands = 0 : i64, tpu.core_type = #tpu.core_type<tc>, window_params = [{transform_indices = @transform_0, window_bounds = array<i64: 4, 9, 9, 128>}, {pipeline_mode = #tpu.pipeline_mode<synchronous>, transform_indices = @transform_1, window_bounds = array<i64: 9, 128>}, {transform_indices = @transform_2, window_bounds = array<i64: 1, 8, 8, 128>}]} {
    %cst = arith.constant 0.000000e+00 : f32
    %0 = vector.broadcast %cst : f32 to vector<8x8x128xf32>
    %c0 = arith.constant 0 : index
    %c0_0 = arith.constant 0 : index
    %c0_1 = arith.constant 0 : index
    %c0_2 = arith.constant 0 : index
    %1 = vector.load %arg1[%c0, %c0_0, %c0_1, %c0_2] : memref<4x9x9x128xbf16, #tpu.memory_space<vmem>>, vector<1x8x8x128xbf16>
    %2 = vector.shape_cast %1 : vector<1x8x8x128xbf16> to vector<8x8x128xbf16>
    %3 = arith.extf %2 : vector<8x8x128xbf16> to vector<8x8x128xf32>
    %c0_3 = arith.constant 0 : index
    %c0_4 = arith.constant 0 : index
    %4 = vector.load %arg2[%c0_3, %c0_4] : memref<9x128xf32, #tpu.memory_space<vmem>>, vector<1x128xf32>
    %5 = vector.shape_cast %4 : vector<1x128xf32> to vector<128xf32>
    %6 = vector.shape_cast %5 : vector<128xf32> to vector<1x1x128xf32>
    %7 = vector.broadcast %6 : vector<1x1x128xf32> to vector<8x8x128xf32>
    %8 = arith.mulf %3, %7 : vector<8x8x128xf32>
    %9 = arith.addf %0, %8 : vector<8x8x128xf32>
    %c1 = arith.constant 1 : index
    %c0_5 = arith.constant 0 : index
    %c0_6 = arith.constant 0 : index
    %c0_7 = arith.constant 0 : index
    %10 = vector.load %arg1[%c1, %c0_5, %c0_6, %c0_7] : memref<4x9x9x128xbf16, #tpu.memory_space<vmem>>, vector<1x8x8x128xbf16>
    %11 = vector.shape_cast %10 : vector<1x8x8x128xbf16> to vector<8x8x128xbf16>
    %12 = arith.extf %11 : vector<8x8x128xbf16> to vector<8x8x128xf32>
    %c1_8 = arith.constant 1 : index
    %c0_9 = arith.constant 0 : index
    %13 = vector.load %arg2[%c1_8, %c0_9] : memref<9x128xf32, #tpu.memory_space<vmem>>, vector<1x128xf32>
    %14 = vector.shape_cast %13 : vector<1x128xf32> to vector<128xf32>
    %15 = vector.shape_cast %14 : vector<128xf32> to vector<1x1x128xf32>
    %16 = vector.broadcast %15 : vector<1x1x128xf32> to vector<8x8x128xf32>
    %17 = arith.mulf %12, %16 : vector<8x8x128xf32>
    %18 = arith.addf %9, %17 : vector<8x8x128xf32>
    %c0_10 = arith.constant 0 : index
    %c0_11 = arith.constant 0 : index
    %c1_12 = arith.constant 1 : index
    %c0_13 = arith.constant 0 : index
    %19 = vector.load %arg1[%c0_10, %c0_11, %c1_12, %c0_13] : memref<4x9x9x128xbf16, #tpu.memory_space<vmem>>, vector<1x8x8x128xbf16>
    %20 = vector.shape_cast %19 : vector<1x8x8x128xbf16> to vector<8x8x128xbf16>
    %21 = arith.extf %20 : vector<8x8x128xbf16> to vector<8x8x128xf32>
    %c2 = arith.constant 2 : index
    %c0_14 = arith.constant 0 : index
    %22 = vector.load %arg2[%c2, %c0_14] : memref<9x128xf32, #tpu.memory_space<vmem>>, vector<1x128xf32>
    %23 = vector.shape_cast %22 : vector<1x128xf32> to vector<128xf32>
    %24 = vector.shape_cast %23 : vector<128xf32> to vector<1x1x128xf32>
    %25 = vector.broadcast %24 : vector<1x1x128xf32> to vector<8x8x128xf32>
    %26 = arith.mulf %21, %25 : vector<8x8x128xf32>
    %27 = arith.addf %18, %26 : vector<8x8x128xf32>
    %c2_15 = arith.constant 2 : index
    %c0_16 = arith.constant 0 : index
    %c0_17 = arith.constant 0 : index
    %c0_18 = arith.constant 0 : index
    %28 = vector.load %arg1[%c2_15, %c0_16, %c0_17, %c0_18] : memref<4x9x9x128xbf16, #tpu.memory_space<vmem>>, vector<1x8x8x128xbf16>
    %29 = vector.shape_cast %28 : vector<1x8x8x128xbf16> to vector<8x8x128xbf16>
    %30 = arith.extf %29 : vector<8x8x128xbf16> to vector<8x8x128xf32>
    %c3 = arith.constant 3 : index
    %c0_19 = arith.constant 0 : index
    %31 = vector.load %arg2[%c3, %c0_19] : memref<9x128xf32, #tpu.memory_space<vmem>>, vector<1x128xf32>
    %32 = vector.shape_cast %31 : vector<1x128xf32> to vector<128xf32>
    %33 = vector.shape_cast %32 : vector<128xf32> to vector<1x1x128xf32>
    %34 = vector.broadcast %33 : vector<1x1x128xf32> to vector<8x8x128xf32>
    %35 = arith.mulf %30, %34 : vector<8x8x128xf32>
    %36 = arith.addf %27, %35 : vector<8x8x128xf32>
    %c3_20 = arith.constant 3 : index
    %c0_21 = arith.constant 0 : index
    %c0_22 = arith.constant 0 : index
    %c0_23 = arith.constant 0 : index
    %37 = vector.load %arg1[%c3_20, %c0_21, %c0_22, %c0_23] : memref<4x9x9x128xbf16, #tpu.memory_space<vmem>>, vector<1x8x8x128xbf16>
    %38 = vector.shape_cast %37 : vector<1x8x8x128xbf16> to vector<8x8x128xbf16>
    %39 = arith.extf %38 : vector<8x8x128xbf16> to vector<8x8x128xf32>
    %c4 = arith.constant 4 : index
    %c0_24 = arith.constant 0 : index
    %40 = vector.load %arg2[%c4, %c0_24] : memref<9x128xf32, #tpu.memory_space<vmem>>, vector<1x128xf32>
    %41 = vector.shape_cast %40 : vector<1x128xf32> to vector<128xf32>
    %42 = vector.shape_cast %41 : vector<128xf32> to vector<1x1x128xf32>
    %43 = vector.broadcast %42 : vector<1x1x128xf32> to vector<8x8x128xf32>
    %44 = arith.mulf %39, %43 : vector<8x8x128xf32>
    %45 = arith.addf %36, %44 : vector<8x8x128xf32>
    %c2_25 = arith.constant 2 : index
    %c0_26 = arith.constant 0 : index
    %c1_27 = arith.constant 1 : index
    %c0_28 = arith.constant 0 : index
    %46 = vector.load %arg1[%c2_25, %c0_26, %c1_27, %c0_28] : memref<4x9x9x128xbf16, #tpu.memory_space<vmem>>, vector<1x8x8x128xbf16>
    %47 = vector.shape_cast %46 : vector<1x8x8x128xbf16> to vector<8x8x128xbf16>
    %48 = arith.extf %47 : vector<8x8x128xbf16> to vector<8x8x128xf32>
    %c5 = arith.constant 5 : index
    %c0_29 = arith.constant 0 : index
    %49 = vector.load %arg2[%c5, %c0_29] : memref<9x128xf32, #tpu.memory_space<vmem>>, vector<1x128xf32>
    %50 = vector.shape_cast %49 : vector<1x128xf32> to vector<128xf32>
    %51 = vector.shape_cast %50 : vector<128xf32> to vector<1x1x128xf32>
    %52 = vector.broadcast %51 : vector<1x1x128xf32> to vector<8x8x128xf32>
    %53 = arith.mulf %48, %52 : vector<8x8x128xf32>
    %54 = arith.addf %45, %53 : vector<8x8x128xf32>
    %c0_30 = arith.constant 0 : index
    %c1_31 = arith.constant 1 : index
    %c0_32 = arith.constant 0 : index
    %c0_33 = arith.constant 0 : index
    %55 = vector.load %arg1[%c0_30, %c1_31, %c0_32, %c0_33] : memref<4x9x9x128xbf16, #tpu.memory_space<vmem>>, vector<1x8x8x128xbf16>
    %56 = vector.shape_cast %55 : vector<1x8x8x128xbf16> to vector<8x8x128xbf16>
    %57 = arith.extf %56 : vector<8x8x128xbf16> to vector<8x8x128xf32>
    %c6 = arith.constant 6 : index
    %c0_34 = arith.constant 0 : index
    %58 = vector.load %arg2[%c6, %c0_34] : memref<9x128xf32, #tpu.memory_space<vmem>>, vector<1x128xf32>
    %59 = vector.shape_cast %58 : vector<1x128xf32> to vector<128xf32>
    %60 = vector.shape_cast %59 : vector<128xf32> to vector<1x1x128xf32>
    %61 = vector.broadcast %60 : vector<1x1x128xf32> to vector<8x8x128xf32>
    %62 = arith.mulf %57, %61 : vector<8x8x128xf32>
    %63 = arith.addf %54, %62 : vector<8x8x128xf32>
    %c1_35 = arith.constant 1 : index
    %c1_36 = arith.constant 1 : index
    %c0_37 = arith.constant 0 : index
    %c0_38 = arith.constant 0 : index
    %64 = vector.load %arg1[%c1_35, %c1_36, %c0_37, %c0_38] : memref<4x9x9x128xbf16, #tpu.memory_space<vmem>>, vector<1x8x8x128xbf16>
    %65 = vector.shape_cast %64 : vector<1x8x8x128xbf16> to vector<8x8x128xbf16>
    %66 = arith.extf %65 : vector<8x8x128xbf16> to vector<8x8x128xf32>
    %c7 = arith.constant 7 : index
    %c0_39 = arith.constant 0 : index
    %67 = vector.load %arg2[%c7, %c0_39] : memref<9x128xf32, #tpu.memory_space<vmem>>, vector<1x128xf32>
    %68 = vector.shape_cast %67 : vector<1x128xf32> to vector<128xf32>
    %69 = vector.shape_cast %68 : vector<128xf32> to vector<1x1x128xf32>
    %70 = vector.broadcast %69 : vector<1x1x128xf32> to vector<8x8x128xf32>
    %71 = arith.mulf %66, %70 : vector<8x8x128xf32>
    %72 = arith.addf %63, %71 : vector<8x8x128xf32>
    %c0_40 = arith.constant 0 : index
    %c1_41 = arith.constant 1 : index
    %c1_42 = arith.constant 1 : index
    %c0_43 = arith.constant 0 : index
    %73 = vector.load %arg1[%c0_40, %c1_41, %c1_42, %c0_43] : memref<4x9x9x128xbf16, #tpu.memory_space<vmem>>, vector<1x8x8x128xbf16>
    %74 = vector.shape_cast %73 : vector<1x8x8x128xbf16> to vector<8x8x128xbf16>
    %75 = arith.extf %74 : vector<8x8x128xbf16> to vector<8x8x128xf32>
    %c8 = arith.constant 8 : index
    %c0_44 = arith.constant 0 : index
    %76 = vector.load %arg2[%c8, %c0_44] : memref<9x128xf32, #tpu.memory_space<vmem>>, vector<1x128xf32>
    %77 = vector.shape_cast %76 : vector<1x128xf32> to vector<128xf32>
    %78 = vector.shape_cast %77 : vector<128xf32> to vector<1x1x128xf32>
    %79 = vector.broadcast %78 : vector<1x1x128xf32> to vector<8x8x128xf32>
    %80 = arith.mulf %75, %79 : vector<8x8x128xf32>
    %81 = arith.addf %72, %80 : vector<8x8x128xf32>
    %82 = arith.negf %81 : vector<8x8x128xf32>
    %83 = math.exp %82 : vector<8x8x128xf32>
    %cst_45 = arith.constant 1.000000e+00 : f32
    %84 = vector.broadcast %cst_45 : f32 to vector<8x8x128xf32>
    %85 = arith.addf %84, %83 : vector<8x8x128xf32>
    %86 = arith.divf %84, %85 : vector<8x8x128xf32>
    %87 = arith.mulf %81, %86 : vector<8x8x128xf32>
    %c0_46 = arith.constant 0 : index
    %c0_47 = arith.constant 0 : index
    %c0_48 = arith.constant 0 : index
    %c0_49 = arith.constant 0 : index
    %88 = vector.load %arg3[%c0_46, %c0_47, %c0_48, %c0_49] : memref<1x8x8x128xf32, #tpu.memory_space<vmem>>, vector<1x8x8x128xf32>
    %89 = vector.shape_cast %88 : vector<1x8x8x128xf32> to vector<8x8x128xf32>
    %90 = vector.shape_cast %87 : vector<8x8x128xf32> to vector<1x8x8x128xf32>
    tpu.vector_store %arg3[%c0_46, %c0_47, %c0_48, %c0_49], %90 {strides = array<i32>} : memref<1x8x8x128xf32, #tpu.memory_space<vmem>>, vector<1x8x8x128xf32>,
    return
  }
  func.func @transform_0(%arg0: i32) -> (i32, i32, i32, i32) {
    %c0_i32 = arith.constant 0 : i32
    %c0_i32_0 = arith.constant 0 : i32
    %c0_i32_1 = arith.constant 0 : i32
    %c0_i32_2 = arith.constant 0 : i32
    return %arg0, %c0_i32, %c0_i32_0, %c0_i32_1 : i32, i32, i32, i32
  }
  func.func @transform_1(%arg0: i32) -> (i32, i32) {
    %c0_i32 = arith.constant 0 : i32
    %c0_i32_0 = arith.constant 0 : i32
    %c0_i32_1 = arith.constant 0 : i32
    return %c0_i32, %c0_i32_0 : i32, i32
  }
  func.func @transform_2(%arg0: i32) -> (i32, i32, i32, i32) {
    %c0_i32 = arith.constant 0 : i32
    %c0_i32_0 = arith.constant 0 : i32
    %c0_i32_1 = arith.constant 0 : i32
    %c0_i32_2 = arith.constant 0 : i32
    return %arg0, %c0_i32, %c0_i32_0, %c0_i32_1 : i32, i32, i32, i32
  }
}

module attributes {stable_mosaic.version = 11 : i64} {
  func.func @kernel(%arg0: i32, %arg1: i32, %arg2: i32, %arg3: memref<64x128xbf16, #tpu.memory_space<vmem>>, %arg4: memref<1x1x128xbf16, #tpu.memory_space<vmem>>, %arg5: memref<128x48xbf16, #tpu.memory_space<vmem>>, %arg6: memref<1x48xf32, #tpu.memory_space<vmem>>, %arg7: memref<64x48xf32, #tpu.memory_space<vmem>>) attributes {dimension_semantics = [#tpu.dimension_semantics<parallel>, #tpu.dimension_semantics<parallel>, #tpu.dimension_semantics<arbitrary>], iteration_bounds = array<i64: 2, 1, 1>, scalar_prefetch = 0 : i64, scratch_operands = 0 : i64, tpu.core_type = #tpu.core_type<tc>, window_params = [{transform_indices = @transform_0, window_bounds = array<i64: 64, 128>}, {transform_indices = @transform_1, window_bounds = array<i64: 1, 1, 128>}, {transform_indices = @transform_2, window_bounds = array<i64: 128, 48>}, {transform_indices = @transform_3, window_bounds = array<i64: 1, 48>}, {transform_indices = @transform_4, window_bounds = array<i64: 64, 48>}]} {
    %c0_i32 = arith.constant 0 : i32
    %0 = arith.cmpi eq, %arg2, %c0_i32 : i32
    %1 = arith.extui %0 : i1 to i32
    %c0_i32_0 = arith.constant 0 : i32
    %2 = arith.cmpi ne, %1, %c0_i32_0 : i32
    scf.if %2 {
      %cst_13 = arith.constant 0.000000e+00 : f32
      %16 = vector.broadcast %cst_13 : f32 to vector<64x48xf32>
      %c0_14 = arith.constant 0 : index
      %c0_15 = arith.constant 0 : index
      %17 = vector.load %arg7[%c0_14, %c0_15] : memref<64x48xf32, #tpu.memory_space<vmem>>, vector<64x48xf32>
      tpu.vector_store %arg7[%c0_14, %c0_15], %16 {strides = array<i32>} : memref<64x48xf32, #tpu.memory_space<vmem>>, vector<64x48xf32>,
    } else {
    }
    %c0 = arith.constant 0 : index
    %c0_1 = arith.constant 0 : index
    %3 = vector.load %arg3[%c0, %c0_1] : memref<64x128xbf16, #tpu.memory_space<vmem>>, vector<64x128xbf16>
    %c0_2 = arith.constant 0 : index
    %c0_3 = arith.constant 0 : index
    %c0_4 = arith.constant 0 : index
    %4 = vector.load %arg4[%c0_2, %c0_3, %c0_4] : memref<1x1x128xbf16, #tpu.memory_space<vmem>>, vector<1x1x128xbf16>
    %5 = vector.shape_cast %4 : vector<1x1x128xbf16> to vector<1x128xbf16>
    %6 = vector.broadcast %5 : vector<1x128xbf16> to vector<64x128xbf16>
    %7 = arith.mulf %3, %6 : vector<64x128xbf16>
    %c0_5 = arith.constant 0 : index
    %c0_6 = arith.constant 0 : index
    %8 = vector.load %arg7[%c0_5, %c0_6] : memref<64x48xf32, #tpu.memory_space<vmem>>, vector<64x48xf32>
    %c0_7 = arith.constant 0 : index
    %c0_8 = arith.constant 0 : index
    %9 = vector.load %arg5[%c0_7, %c0_8] : memref<128x48xbf16, #tpu.memory_space<vmem>>, vector<128x48xbf16>
    %cst = arith.constant dense<0.000000e+00> : vector<64x48xf32>
    %10 = tpu.matmul %7, %9, %cst {dimension_numbers = #tpu.dot_dimension_numbers<[1], [0], [0], [1], [0, 0, 1, 1], [], []>} : vector<64x128xbf16>, vector<128x48xbf16>, vector<64x48xf32> -> vector<64x48xf32>
    %11 = arith.addf %8, %10 : vector<64x48xf32>
    %c0_9 = arith.constant 0 : index
    %c0_10 = arith.constant 0 : index
    %12 = vector.load %arg7[%c0_9, %c0_10] : memref<64x48xf32, #tpu.memory_space<vmem>>, vector<64x48xf32>
    tpu.vector_store %arg7[%c0_9, %c0_10], %11 {strides = array<i32>} : memref<64x48xf32, #tpu.memory_space<vmem>>, vector<64x48xf32>,
    %c0_i32_11 = arith.constant 0 : i32
    %13 = arith.cmpi eq, %arg2, %c0_i32_11 : i32
    %14 = arith.extui %13 : i1 to i32
    %c0_i32_12 = arith.constant 0 : i32
    %15 = arith.cmpi ne, %14, %c0_i32_12 : i32
    scf.if %15 {
      %c0_13 = arith.constant 0 : index
      %c0_14 = arith.constant 0 : index
      %16 = vector.load %arg7[%c0_13, %c0_14] : memref<64x48xf32, #tpu.memory_space<vmem>>, vector<64x48xf32>
      %c0_15 = arith.constant 0 : index
      %c0_16 = arith.constant 0 : index
      %17 = vector.load %arg6[%c0_15, %c0_16] : memref<1x48xf32, #tpu.memory_space<vmem>>, vector<1x48xf32>
      %18 = vector.shape_cast %17 : vector<1x48xf32> to vector<48xf32>
      %19 = vector.shape_cast %18 : vector<48xf32> to vector<1x48xf32>
      %20 = vector.broadcast %19 : vector<1x48xf32> to vector<64x48xf32>
      %21 = arith.addf %16, %20 : vector<64x48xf32>
      %c0_17 = arith.constant 0 : index
      %c0_18 = arith.constant 0 : index
      %22 = vector.load %arg7[%c0_17, %c0_18] : memref<64x48xf32, #tpu.memory_space<vmem>>, vector<64x48xf32>
      tpu.vector_store %arg7[%c0_17, %c0_18], %21 {strides = array<i32>} : memref<64x48xf32, #tpu.memory_space<vmem>>, vector<64x48xf32>,
    } else {
    }
    return
  }
  func.func @transform_0(%arg0: i32, %arg1: i32, %arg2: i32) -> (i32, i32) {
    %c0_i32 = arith.constant 0 : i32
    return %arg0, %arg2 : i32, i32
  }
  func.func @transform_1(%arg0: i32, %arg1: i32, %arg2: i32) -> (i32, i32, i32) {
    %c0_i32 = arith.constant 0 : i32
    %c0_i32_0 = arith.constant 0 : i32
    return %arg0, %c0_i32, %arg2 : i32, i32, i32
  }
  func.func @transform_2(%arg0: i32, %arg1: i32, %arg2: i32) -> (i32, i32) {
    %c0_i32 = arith.constant 0 : i32
    return %arg2, %arg1 : i32, i32
  }
  func.func @transform_3(%arg0: i32, %arg1: i32, %arg2: i32) -> (i32, i32) {
    %c0_i32 = arith.constant 0 : i32
    %c0_i32_0 = arith.constant 0 : i32
    return %c0_i32, %arg1 : i32, i32
  }
  func.func @transform_4(%arg0: i32, %arg1: i32, %arg2: i32) -> (i32, i32) {
    %c0_i32 = arith.constant 0 : i32
    return %arg0, %arg1 : i32, i32
  }
}

module attributes {stable_mosaic.version = 11 : i64} {
  func.func @kernel(%arg0: i32, %arg1: i32, %arg2: i32, %arg3: memref<128x48xbf16, #tpu.memory_space<vmem>>, %arg4: memref<48x192xbf16, #tpu.memory_space<vmem>>, %arg5: memref<1x192xf32, #tpu.memory_space<vmem>>, %arg6: memref<128x192xf32, #tpu.memory_space<vmem>>) attributes {dimension_semantics = [#tpu.dimension_semantics<parallel>, #tpu.dimension_semantics<parallel>, #tpu.dimension_semantics<arbitrary>], iteration_bounds = array<i64: 1, 1, 1>, scalar_prefetch = 0 : i64, scratch_operands = 0 : i64, tpu.core_type = #tpu.core_type<tc>, window_params = [{transform_indices = @transform_0, window_bounds = array<i64: 128, 48>}, {transform_indices = @transform_1, window_bounds = array<i64: 48, 192>}, {transform_indices = @transform_2, window_bounds = array<i64: 1, 192>}, {transform_indices = @transform_3, window_bounds = array<i64: 128, 192>}]} {
    %c0_i32 = arith.constant 0 : i32
    %0 = arith.cmpi eq, %arg2, %c0_i32 : i32
    %1 = arith.extui %0 : i1 to i32
    %c0_i32_0 = arith.constant 0 : i32
    %2 = arith.cmpi ne, %1, %c0_i32_0 : i32
    scf.if %2 {
      %cst_10 = arith.constant 0.000000e+00 : f32
      %12 = vector.broadcast %cst_10 : f32 to vector<128x192xf32>
      %c0_11 = arith.constant 0 : index
      %c0_12 = arith.constant 0 : index
      %13 = vector.load %arg6[%c0_11, %c0_12] : memref<128x192xf32, #tpu.memory_space<vmem>>, vector<128x192xf32>
      tpu.vector_store %arg6[%c0_11, %c0_12], %12 {strides = array<i32>} : memref<128x192xf32, #tpu.memory_space<vmem>>, vector<128x192xf32>,
    } else {
    }
    %c0 = arith.constant 0 : index
    %c0_1 = arith.constant 0 : index
    %3 = vector.load %arg3[%c0, %c0_1] : memref<128x48xbf16, #tpu.memory_space<vmem>>, vector<128x48xbf16>
    %c0_2 = arith.constant 0 : index
    %c0_3 = arith.constant 0 : index
    %4 = vector.load %arg6[%c0_2, %c0_3] : memref<128x192xf32, #tpu.memory_space<vmem>>, vector<128x192xf32>
    %c0_4 = arith.constant 0 : index
    %c0_5 = arith.constant 0 : index
    %5 = vector.load %arg4[%c0_4, %c0_5] : memref<48x192xbf16, #tpu.memory_space<vmem>>, vector<48x192xbf16>
    %cst = arith.constant dense<0.000000e+00> : vector<128x192xf32>
    %6 = tpu.matmul %3, %5, %cst {dimension_numbers = #tpu.dot_dimension_numbers<[1], [0], [0], [1], [0, 0, 1, 1], [], []>} : vector<128x48xbf16>, vector<48x192xbf16>, vector<128x192xf32> -> vector<128x192xf32>
    %7 = arith.addf %4, %6 : vector<128x192xf32>
    %c0_6 = arith.constant 0 : index
    %c0_7 = arith.constant 0 : index
    %8 = vector.load %arg6[%c0_6, %c0_7] : memref<128x192xf32, #tpu.memory_space<vmem>>, vector<128x192xf32>
    tpu.vector_store %arg6[%c0_6, %c0_7], %7 {strides = array<i32>} : memref<128x192xf32, #tpu.memory_space<vmem>>, vector<128x192xf32>,
    %c0_i32_8 = arith.constant 0 : i32
    %9 = arith.cmpi eq, %arg2, %c0_i32_8 : i32
    %10 = arith.extui %9 : i1 to i32
    %c0_i32_9 = arith.constant 0 : i32
    %11 = arith.cmpi ne, %10, %c0_i32_9 : i32
    scf.if %11 {
      %c0_10 = arith.constant 0 : index
      %c0_11 = arith.constant 0 : index
      %12 = vector.load %arg6[%c0_10, %c0_11] : memref<128x192xf32, #tpu.memory_space<vmem>>, vector<128x192xf32>
      %c0_12 = arith.constant 0 : index
      %c0_13 = arith.constant 0 : index
      %13 = vector.load %arg5[%c0_12, %c0_13] : memref<1x192xf32, #tpu.memory_space<vmem>>, vector<1x192xf32>
      %14 = vector.shape_cast %13 : vector<1x192xf32> to vector<192xf32>
      %15 = vector.shape_cast %14 : vector<192xf32> to vector<1x192xf32>
      %16 = vector.broadcast %15 : vector<1x192xf32> to vector<128x192xf32>
      %17 = arith.addf %12, %16 : vector<128x192xf32>
      %18 = arith.negf %17 : vector<128x192xf32>
      %19 = math.exp %18 : vector<128x192xf32>
      %cst_14 = arith.constant 1.000000e+00 : f32
      %20 = vector.broadcast %cst_14 : f32 to vector<128x192xf32>
      %21 = arith.addf %20, %19 : vector<128x192xf32>
      %22 = arith.divf %20, %21 : vector<128x192xf32>
      %23 = arith.mulf %17, %22 : vector<128x192xf32>
      %c0_15 = arith.constant 0 : index
      %c0_16 = arith.constant 0 : index
      %24 = vector.load %arg6[%c0_15, %c0_16] : memref<128x192xf32, #tpu.memory_space<vmem>>, vector<128x192xf32>
      tpu.vector_store %arg6[%c0_15, %c0_16], %23 {strides = array<i32>} : memref<128x192xf32, #tpu.memory_space<vmem>>, vector<128x192xf32>,
    } else {
    }
    return
  }
  func.func @transform_0(%arg0: i32, %arg1: i32, %arg2: i32) -> (i32, i32) {
    %c0_i32 = arith.constant 0 : i32
    return %arg0, %arg2 : i32, i32
  }
  func.func @transform_1(%arg0: i32, %arg1: i32, %arg2: i32) -> (i32, i32) {
    %c0_i32 = arith.constant 0 : i32
    return %arg2, %arg1 : i32, i32
  }
  func.func @transform_2(%arg0: i32, %arg1: i32, %arg2: i32) -> (i32, i32) {
    %c0_i32 = arith.constant 0 : i32
    %c0_i32_0 = arith.constant 0 : i32
    return %c0_i32, %arg1 : i32, i32
  }
  func.func @transform_3(%arg0: i32, %arg1: i32, %arg2: i32) -> (i32, i32) {
    %c0_i32 = arith.constant 0 : i32
    return %arg0, %arg1 : i32, i32
  }
}

module attributes {stable_mosaic.version = 11 : i64} {
  func.func @kernel(%arg0: i32, %arg1: memref<1x10x10x192xbf16, #tpu.memory_space<vmem>>, %arg2: memref<9x192xf32, #tpu.memory_space<vmem>>, %arg3: memref<1x8x8x192xf32, #tpu.memory_space<vmem>>) attributes {dimension_semantics = [#tpu.dimension_semantics<parallel>], iteration_bounds = array<i64: 2>, scalar_prefetch = 0 : i64, scratch_operands = 0 : i64, tpu.core_type = #tpu.core_type<tc>, window_params = [{transform_indices = @transform_0, window_bounds = array<i64: 1, 10, 10, 192>}, {pipeline_mode = #tpu.pipeline_mode<synchronous>, transform_indices = @transform_1, window_bounds = array<i64: 9, 192>}, {transform_indices = @transform_2, window_bounds = array<i64: 1, 8, 8, 192>}]} {
    %cst = arith.constant 0.000000e+00 : f32
    %0 = vector.broadcast %cst : f32 to vector<8x8x192xf32>
    %c0 = arith.constant 0 : index
    %c0_0 = arith.constant 0 : index
    %c0_1 = arith.constant 0 : index
    %c0_2 = arith.constant 0 : index
    %1 = vector.load %arg1[%c0, %c0_0, %c0_1, %c0_2] : memref<1x10x10x192xbf16, #tpu.memory_space<vmem>>, vector<1x8x8x192xbf16>
    %2 = vector.shape_cast %1 : vector<1x8x8x192xbf16> to vector<8x8x192xbf16>
    %3 = arith.extf %2 : vector<8x8x192xbf16> to vector<8x8x192xf32>
    %c0_3 = arith.constant 0 : index
    %c0_4 = arith.constant 0 : index
    %4 = vector.load %arg2[%c0_3, %c0_4] : memref<9x192xf32, #tpu.memory_space<vmem>>, vector<1x192xf32>
    %5 = vector.shape_cast %4 : vector<1x192xf32> to vector<192xf32>
    %6 = vector.shape_cast %5 : vector<192xf32> to vector<1x1x192xf32>
    %7 = vector.broadcast %6 : vector<1x1x192xf32> to vector<8x8x192xf32>
    %8 = arith.mulf %3, %7 : vector<8x8x192xf32>
    %9 = arith.addf %0, %8 : vector<8x8x192xf32>
    %c0_5 = arith.constant 0 : index
    %c0_6 = arith.constant 0 : index
    %c1 = arith.constant 1 : index
    %c0_7 = arith.constant 0 : index
    %10 = vector.load %arg1[%c0_5, %c0_6, %c1, %c0_7] : memref<1x10x10x192xbf16, #tpu.memory_space<vmem>>, vector<1x8x8x192xbf16>
    %11 = vector.shape_cast %10 : vector<1x8x8x192xbf16> to vector<8x8x192xbf16>
    %12 = arith.extf %11 : vector<8x8x192xbf16> to vector<8x8x192xf32>
    %c1_8 = arith.constant 1 : index
    %c0_9 = arith.constant 0 : index
    %13 = vector.load %arg2[%c1_8, %c0_9] : memref<9x192xf32, #tpu.memory_space<vmem>>, vector<1x192xf32>
    %14 = vector.shape_cast %13 : vector<1x192xf32> to vector<192xf32>
    %15 = vector.shape_cast %14 : vector<192xf32> to vector<1x1x192xf32>
    %16 = vector.broadcast %15 : vector<1x1x192xf32> to vector<8x8x192xf32>
    %17 = arith.mulf %12, %16 : vector<8x8x192xf32>
    %18 = arith.addf %9, %17 : vector<8x8x192xf32>
    %c0_10 = arith.constant 0 : index
    %c0_11 = arith.constant 0 : index
    %c2 = arith.constant 2 : index
    %c0_12 = arith.constant 0 : index
    %19 = vector.load %arg1[%c0_10, %c0_11, %c2, %c0_12] : memref<1x10x10x192xbf16, #tpu.memory_space<vmem>>, vector<1x8x8x192xbf16>
    %20 = vector.shape_cast %19 : vector<1x8x8x192xbf16> to vector<8x8x192xbf16>
    %21 = arith.extf %20 : vector<8x8x192xbf16> to vector<8x8x192xf32>
    %c2_13 = arith.constant 2 : index
    %c0_14 = arith.constant 0 : index
    %22 = vector.load %arg2[%c2_13, %c0_14] : memref<9x192xf32, #tpu.memory_space<vmem>>, vector<1x192xf32>
    %23 = vector.shape_cast %22 : vector<1x192xf32> to vector<192xf32>
    %24 = vector.shape_cast %23 : vector<192xf32> to vector<1x1x192xf32>
    %25 = vector.broadcast %24 : vector<1x1x192xf32> to vector<8x8x192xf32>
    %26 = arith.mulf %21, %25 : vector<8x8x192xf32>
    %27 = arith.addf %18, %26 : vector<8x8x192xf32>
    %c0_15 = arith.constant 0 : index
    %c1_16 = arith.constant 1 : index
    %c0_17 = arith.constant 0 : index
    %c0_18 = arith.constant 0 : index
    %28 = vector.load %arg1[%c0_15, %c1_16, %c0_17, %c0_18] : memref<1x10x10x192xbf16, #tpu.memory_space<vmem>>, vector<1x8x8x192xbf16>
    %29 = vector.shape_cast %28 : vector<1x8x8x192xbf16> to vector<8x8x192xbf16>
    %30 = arith.extf %29 : vector<8x8x192xbf16> to vector<8x8x192xf32>
    %c3 = arith.constant 3 : index
    %c0_19 = arith.constant 0 : index
    %31 = vector.load %arg2[%c3, %c0_19] : memref<9x192xf32, #tpu.memory_space<vmem>>, vector<1x192xf32>
    %32 = vector.shape_cast %31 : vector<1x192xf32> to vector<192xf32>
    %33 = vector.shape_cast %32 : vector<192xf32> to vector<1x1x192xf32>
    %34 = vector.broadcast %33 : vector<1x1x192xf32> to vector<8x8x192xf32>
    %35 = arith.mulf %30, %34 : vector<8x8x192xf32>
    %36 = arith.addf %27, %35 : vector<8x8x192xf32>
    %c0_20 = arith.constant 0 : index
    %c1_21 = arith.constant 1 : index
    %c1_22 = arith.constant 1 : index
    %c0_23 = arith.constant 0 : index
    %37 = vector.load %arg1[%c0_20, %c1_21, %c1_22, %c0_23] : memref<1x10x10x192xbf16, #tpu.memory_space<vmem>>, vector<1x8x8x192xbf16>
    %38 = vector.shape_cast %37 : vector<1x8x8x192xbf16> to vector<8x8x192xbf16>
    %39 = arith.extf %38 : vector<8x8x192xbf16> to vector<8x8x192xf32>
    %c4 = arith.constant 4 : index
    %c0_24 = arith.constant 0 : index
    %40 = vector.load %arg2[%c4, %c0_24] : memref<9x192xf32, #tpu.memory_space<vmem>>, vector<1x192xf32>
    %41 = vector.shape_cast %40 : vector<1x192xf32> to vector<192xf32>
    %42 = vector.shape_cast %41 : vector<192xf32> to vector<1x1x192xf32>
    %43 = vector.broadcast %42 : vector<1x1x192xf32> to vector<8x8x192xf32>
    %44 = arith.mulf %39, %43 : vector<8x8x192xf32>
    %45 = arith.addf %36, %44 : vector<8x8x192xf32>
    %c0_25 = arith.constant 0 : index
    %c1_26 = arith.constant 1 : index
    %c2_27 = arith.constant 2 : index
    %c0_28 = arith.constant 0 : index
    %46 = vector.load %arg1[%c0_25, %c1_26, %c2_27, %c0_28] : memref<1x10x10x192xbf16, #tpu.memory_space<vmem>>, vector<1x8x8x192xbf16>
    %47 = vector.shape_cast %46 : vector<1x8x8x192xbf16> to vector<8x8x192xbf16>
    %48 = arith.extf %47 : vector<8x8x192xbf16> to vector<8x8x192xf32>
    %c5 = arith.constant 5 : index
    %c0_29 = arith.constant 0 : index
    %49 = vector.load %arg2[%c5, %c0_29] : memref<9x192xf32, #tpu.memory_space<vmem>>, vector<1x192xf32>
    %50 = vector.shape_cast %49 : vector<1x192xf32> to vector<192xf32>
    %51 = vector.shape_cast %50 : vector<192xf32> to vector<1x1x192xf32>
    %52 = vector.broadcast %51 : vector<1x1x192xf32> to vector<8x8x192xf32>
    %53 = arith.mulf %48, %52 : vector<8x8x192xf32>
    %54 = arith.addf %45, %53 : vector<8x8x192xf32>
    %c0_30 = arith.constant 0 : index
    %c2_31 = arith.constant 2 : index
    %c0_32 = arith.constant 0 : index
    %c0_33 = arith.constant 0 : index
    %55 = vector.load %arg1[%c0_30, %c2_31, %c0_32, %c0_33] : memref<1x10x10x192xbf16, #tpu.memory_space<vmem>>, vector<1x8x8x192xbf16>
    %56 = vector.shape_cast %55 : vector<1x8x8x192xbf16> to vector<8x8x192xbf16>
    %57 = arith.extf %56 : vector<8x8x192xbf16> to vector<8x8x192xf32>
    %c6 = arith.constant 6 : index
    %c0_34 = arith.constant 0 : index
    %58 = vector.load %arg2[%c6, %c0_34] : memref<9x192xf32, #tpu.memory_space<vmem>>, vector<1x192xf32>
    %59 = vector.shape_cast %58 : vector<1x192xf32> to vector<192xf32>
    %60 = vector.shape_cast %59 : vector<192xf32> to vector<1x1x192xf32>
    %61 = vector.broadcast %60 : vector<1x1x192xf32> to vector<8x8x192xf32>
    %62 = arith.mulf %57, %61 : vector<8x8x192xf32>
    %63 = arith.addf %54, %62 : vector<8x8x192xf32>
    %c0_35 = arith.constant 0 : index
    %c2_36 = arith.constant 2 : index
    %c1_37 = arith.constant 1 : index
    %c0_38 = arith.constant 0 : index
    %64 = vector.load %arg1[%c0_35, %c2_36, %c1_37, %c0_38] : memref<1x10x10x192xbf16, #tpu.memory_space<vmem>>, vector<1x8x8x192xbf16>
    %65 = vector.shape_cast %64 : vector<1x8x8x192xbf16> to vector<8x8x192xbf16>
    %66 = arith.extf %65 : vector<8x8x192xbf16> to vector<8x8x192xf32>
    %c7 = arith.constant 7 : index
    %c0_39 = arith.constant 0 : index
    %67 = vector.load %arg2[%c7, %c0_39] : memref<9x192xf32, #tpu.memory_space<vmem>>, vector<1x192xf32>
    %68 = vector.shape_cast %67 : vector<1x192xf32> to vector<192xf32>
    %69 = vector.shape_cast %68 : vector<192xf32> to vector<1x1x192xf32>
    %70 = vector.broadcast %69 : vector<1x1x192xf32> to vector<8x8x192xf32>
    %71 = arith.mulf %66, %70 : vector<8x8x192xf32>
    %72 = arith.addf %63, %71 : vector<8x8x192xf32>
    %c0_40 = arith.constant 0 : index
    %c2_41 = arith.constant 2 : index
    %c2_42 = arith.constant 2 : index
    %c0_43 = arith.constant 0 : index
    %73 = vector.load %arg1[%c0_40, %c2_41, %c2_42, %c0_43] : memref<1x10x10x192xbf16, #tpu.memory_space<vmem>>, vector<1x8x8x192xbf16>
    %74 = vector.shape_cast %73 : vector<1x8x8x192xbf16> to vector<8x8x192xbf16>
    %75 = arith.extf %74 : vector<8x8x192xbf16> to vector<8x8x192xf32>
    %c8 = arith.constant 8 : index
    %c0_44 = arith.constant 0 : index
    %76 = vector.load %arg2[%c8, %c0_44] : memref<9x192xf32, #tpu.memory_space<vmem>>, vector<1x192xf32>
    %77 = vector.shape_cast %76 : vector<1x192xf32> to vector<192xf32>
    %78 = vector.shape_cast %77 : vector<192xf32> to vector<1x1x192xf32>
    %79 = vector.broadcast %78 : vector<1x1x192xf32> to vector<8x8x192xf32>
    %80 = arith.mulf %75, %79 : vector<8x8x192xf32>
    %81 = arith.addf %72, %80 : vector<8x8x192xf32>
    %82 = arith.negf %81 : vector<8x8x192xf32>
    %83 = math.exp %82 : vector<8x8x192xf32>
    %cst_45 = arith.constant 1.000000e+00 : f32
    %84 = vector.broadcast %cst_45 : f32 to vector<8x8x192xf32>
    %85 = arith.addf %84, %83 : vector<8x8x192xf32>
    %86 = arith.divf %84, %85 : vector<8x8x192xf32>
    %87 = arith.mulf %81, %86 : vector<8x8x192xf32>
    %c0_46 = arith.constant 0 : index
    %c0_47 = arith.constant 0 : index
    %c0_48 = arith.constant 0 : index
    %c0_49 = arith.constant 0 : index
    %88 = vector.load %arg3[%c0_46, %c0_47, %c0_48, %c0_49] : memref<1x8x8x192xf32, #tpu.memory_space<vmem>>, vector<1x8x8x192xf32>
    %89 = vector.shape_cast %88 : vector<1x8x8x192xf32> to vector<8x8x192xf32>
    %90 = vector.shape_cast %87 : vector<8x8x192xf32> to vector<1x8x8x192xf32>
    tpu.vector_store %arg3[%c0_46, %c0_47, %c0_48, %c0_49], %90 {strides = array<i32>} : memref<1x8x8x192xf32, #tpu.memory_space<vmem>>, vector<1x8x8x192xf32>,
    return
  }
  func.func @transform_0(%arg0: i32) -> (i32, i32, i32, i32) {
    %c0_i32 = arith.constant 0 : i32
    %c0_i32_0 = arith.constant 0 : i32
    %c0_i32_1 = arith.constant 0 : i32
    %c0_i32_2 = arith.constant 0 : i32
    return %arg0, %c0_i32, %c0_i32_0, %c0_i32_1 : i32, i32, i32, i32
  }
  func.func @transform_1(%arg0: i32) -> (i32, i32) {
    %c0_i32 = arith.constant 0 : i32
    %c0_i32_0 = arith.constant 0 : i32
    %c0_i32_1 = arith.constant 0 : i32
    return %c0_i32, %c0_i32_0 : i32, i32
  }
  func.func @transform_2(%arg0: i32) -> (i32, i32, i32, i32) {
    %c0_i32 = arith.constant 0 : i32
    %c0_i32_0 = arith.constant 0 : i32
    %c0_i32_1 = arith.constant 0 : i32
    %c0_i32_2 = arith.constant 0 : i32
    return %arg0, %c0_i32, %c0_i32_0, %c0_i32_1 : i32, i32, i32, i32
  }
}

module attributes {stable_mosaic.version = 11 : i64} {
  func.func @kernel(%arg0: i32, %arg1: i32, %arg2: i32, %arg3: memref<64x192xbf16, #tpu.memory_space<vmem>>, %arg4: memref<1x1x192xbf16, #tpu.memory_space<vmem>>, %arg5: memref<192x48xbf16, #tpu.memory_space<vmem>>, %arg6: memref<1x48xf32, #tpu.memory_space<vmem>>, %arg7: memref<64x48xf32, #tpu.memory_space<vmem>>) attributes {dimension_semantics = [#tpu.dimension_semantics<parallel>, #tpu.dimension_semantics<parallel>, #tpu.dimension_semantics<arbitrary>], iteration_bounds = array<i64: 2, 1, 1>, scalar_prefetch = 0 : i64, scratch_operands = 0 : i64, tpu.core_type = #tpu.core_type<tc>, window_params = [{transform_indices = @transform_0, window_bounds = array<i64: 64, 192>}, {transform_indices = @transform_1, window_bounds = array<i64: 1, 1, 192>}, {transform_indices = @transform_2, window_bounds = array<i64: 192, 48>}, {transform_indices = @transform_3, window_bounds = array<i64: 1, 48>}, {transform_indices = @transform_4, window_bounds = array<i64: 64, 48>}]} {
    %c0_i32 = arith.constant 0 : i32
    %0 = arith.cmpi eq, %arg2, %c0_i32 : i32
    %1 = arith.extui %0 : i1 to i32
    %c0_i32_0 = arith.constant 0 : i32
    %2 = arith.cmpi ne, %1, %c0_i32_0 : i32
    scf.if %2 {
      %cst_13 = arith.constant 0.000000e+00 : f32
      %16 = vector.broadcast %cst_13 : f32 to vector<64x48xf32>
      %c0_14 = arith.constant 0 : index
      %c0_15 = arith.constant 0 : index
      %17 = vector.load %arg7[%c0_14, %c0_15] : memref<64x48xf32, #tpu.memory_space<vmem>>, vector<64x48xf32>
      tpu.vector_store %arg7[%c0_14, %c0_15], %16 {strides = array<i32>} : memref<64x48xf32, #tpu.memory_space<vmem>>, vector<64x48xf32>,
    } else {
    }
    %c0 = arith.constant 0 : index
    %c0_1 = arith.constant 0 : index
    %3 = vector.load %arg3[%c0, %c0_1] : memref<64x192xbf16, #tpu.memory_space<vmem>>, vector<64x192xbf16>
    %c0_2 = arith.constant 0 : index
    %c0_3 = arith.constant 0 : index
    %c0_4 = arith.constant 0 : index
    %4 = vector.load %arg4[%c0_2, %c0_3, %c0_4] : memref<1x1x192xbf16, #tpu.memory_space<vmem>>, vector<1x1x192xbf16>
    %5 = vector.shape_cast %4 : vector<1x1x192xbf16> to vector<1x192xbf16>
    %6 = vector.broadcast %5 : vector<1x192xbf16> to vector<64x192xbf16>
    %7 = arith.mulf %3, %6 : vector<64x192xbf16>
    %c0_5 = arith.constant 0 : index
    %c0_6 = arith.constant 0 : index
    %8 = vector.load %arg7[%c0_5, %c0_6] : memref<64x48xf32, #tpu.memory_space<vmem>>, vector<64x48xf32>
    %c0_7 = arith.constant 0 : index
    %c0_8 = arith.constant 0 : index
    %9 = vector.load %arg5[%c0_7, %c0_8] : memref<192x48xbf16, #tpu.memory_space<vmem>>, vector<192x48xbf16>
    %cst = arith.constant dense<0.000000e+00> : vector<64x48xf32>
    %10 = tpu.matmul %7, %9, %cst {dimension_numbers = #tpu.dot_dimension_numbers<[1], [0], [0], [1], [0, 0, 1, 1], [], []>} : vector<64x192xbf16>, vector<192x48xbf16>, vector<64x48xf32> -> vector<64x48xf32>
    %11 = arith.addf %8, %10 : vector<64x48xf32>
    %c0_9 = arith.constant 0 : index
    %c0_10 = arith.constant 0 : index
    %12 = vector.load %arg7[%c0_9, %c0_10] : memref<64x48xf32, #tpu.memory_space<vmem>>, vector<64x48xf32>
    tpu.vector_store %arg7[%c0_9, %c0_10], %11 {strides = array<i32>} : memref<64x48xf32, #tpu.memory_space<vmem>>, vector<64x48xf32>,
    %c0_i32_11 = arith.constant 0 : i32
    %13 = arith.cmpi eq, %arg2, %c0_i32_11 : i32
    %14 = arith.extui %13 : i1 to i32
    %c0_i32_12 = arith.constant 0 : i32
    %15 = arith.cmpi ne, %14, %c0_i32_12 : i32
    scf.if %15 {
      %c0_13 = arith.constant 0 : index
      %c0_14 = arith.constant 0 : index
      %16 = vector.load %arg7[%c0_13, %c0_14] : memref<64x48xf32, #tpu.memory_space<vmem>>, vector<64x48xf32>
      %c0_15 = arith.constant 0 : index
      %c0_16 = arith.constant 0 : index
      %17 = vector.load %arg6[%c0_15, %c0_16] : memref<1x48xf32, #tpu.memory_space<vmem>>, vector<1x48xf32>
      %18 = vector.shape_cast %17 : vector<1x48xf32> to vector<48xf32>
      %19 = vector.shape_cast %18 : vector<48xf32> to vector<1x48xf32>
      %20 = vector.broadcast %19 : vector<1x48xf32> to vector<64x48xf32>
      %21 = arith.addf %16, %20 : vector<64x48xf32>
      %c0_17 = arith.constant 0 : index
      %c0_18 = arith.constant 0 : index
      %22 = vector.load %arg7[%c0_17, %c0_18] : memref<64x48xf32, #tpu.memory_space<vmem>>, vector<64x48xf32>
      tpu.vector_store %arg7[%c0_17, %c0_18], %21 {strides = array<i32>} : memref<64x48xf32, #tpu.memory_space<vmem>>, vector<64x48xf32>,
    } else {
    }
    return
  }
  func.func @transform_0(%arg0: i32, %arg1: i32, %arg2: i32) -> (i32, i32) {
    %c0_i32 = arith.constant 0 : i32
    return %arg0, %arg2 : i32, i32
  }
  func.func @transform_1(%arg0: i32, %arg1: i32, %arg2: i32) -> (i32, i32, i32) {
    %c0_i32 = arith.constant 0 : i32
    %c0_i32_0 = arith.constant 0 : i32
    return %arg0, %c0_i32, %arg2 : i32, i32, i32
  }
  func.func @transform_2(%arg0: i32, %arg1: i32, %arg2: i32) -> (i32, i32) {
    %c0_i32 = arith.constant 0 : i32
    return %arg2, %arg1 : i32, i32
  }
  func.func @transform_3(%arg0: i32, %arg1: i32, %arg2: i32) -> (i32, i32) {
    %c0_i32 = arith.constant 0 : i32
    %c0_i32_0 = arith.constant 0 : i32
    return %c0_i32, %arg1 : i32, i32
  }
  func.func @transform_4(%arg0: i32, %arg1: i32, %arg2: i32) -> (i32, i32) {
    %c0_i32 = arith.constant 0 : i32
    return %arg0, %arg1 : i32, i32
  }
}

module attributes {stable_mosaic.version = 11 : i64} {
  func.func @kernel(%arg0: i32, %arg1: i32, %arg2: i32, %arg3: memref<128x48xbf16, #tpu.memory_space<vmem>>, %arg4: memref<48x128xbf16, #tpu.memory_space<vmem>>, %arg5: memref<1x128xf32, #tpu.memory_space<vmem>>, %arg6: memref<128x128xf32, #tpu.memory_space<vmem>>) attributes {dimension_semantics = [#tpu.dimension_semantics<parallel>, #tpu.dimension_semantics<parallel>, #tpu.dimension_semantics<arbitrary>], iteration_bounds = array<i64: 1, 1, 1>, scalar_prefetch = 0 : i64, scratch_operands = 0 : i64, tpu.core_type = #tpu.core_type<tc>, window_params = [{transform_indices = @transform_0, window_bounds = array<i64: 128, 48>}, {transform_indices = @transform_1, window_bounds = array<i64: 48, 128>}, {transform_indices = @transform_2, window_bounds = array<i64: 1, 128>}, {transform_indices = @transform_3, window_bounds = array<i64: 128, 128>}]} {
    %c0_i32 = arith.constant 0 : i32
    %0 = arith.cmpi eq, %arg2, %c0_i32 : i32
    %1 = arith.extui %0 : i1 to i32
    %c0_i32_0 = arith.constant 0 : i32
    %2 = arith.cmpi ne, %1, %c0_i32_0 : i32
    scf.if %2 {
      %cst_10 = arith.constant 0.000000e+00 : f32
      %12 = vector.broadcast %cst_10 : f32 to vector<128x128xf32>
      %c0_11 = arith.constant 0 : index
      %c0_12 = arith.constant 0 : index
      %13 = vector.load %arg6[%c0_11, %c0_12] : memref<128x128xf32, #tpu.memory_space<vmem>>, vector<128x128xf32>
      tpu.vector_store %arg6[%c0_11, %c0_12], %12 {strides = array<i32>} : memref<128x128xf32, #tpu.memory_space<vmem>>, vector<128x128xf32>,
    } else {
    }
    %c0 = arith.constant 0 : index
    %c0_1 = arith.constant 0 : index
    %3 = vector.load %arg3[%c0, %c0_1] : memref<128x48xbf16, #tpu.memory_space<vmem>>, vector<128x48xbf16>
    %c0_2 = arith.constant 0 : index
    %c0_3 = arith.constant 0 : index
    %4 = vector.load %arg6[%c0_2, %c0_3] : memref<128x128xf32, #tpu.memory_space<vmem>>, vector<128x128xf32>
    %c0_4 = arith.constant 0 : index
    %c0_5 = arith.constant 0 : index
    %5 = vector.load %arg4[%c0_4, %c0_5] : memref<48x128xbf16, #tpu.memory_space<vmem>>, vector<48x128xbf16>
    %cst = arith.constant dense<0.000000e+00> : vector<128x128xf32>
    %6 = tpu.matmul %3, %5, %cst {dimension_numbers = #tpu.dot_dimension_numbers<[1], [0], [0], [1], [0, 0, 1, 1], [], []>} : vector<128x48xbf16>, vector<48x128xbf16>, vector<128x128xf32> -> vector<128x128xf32>
    %7 = arith.addf %4, %6 : vector<128x128xf32>
    %c0_6 = arith.constant 0 : index
    %c0_7 = arith.constant 0 : index
    %8 = vector.load %arg6[%c0_6, %c0_7] : memref<128x128xf32, #tpu.memory_space<vmem>>, vector<128x128xf32>
    tpu.vector_store %arg6[%c0_6, %c0_7], %7 {strides = array<i32>} : memref<128x128xf32, #tpu.memory_space<vmem>>, vector<128x128xf32>,
    %c0_i32_8 = arith.constant 0 : i32
    %9 = arith.cmpi eq, %arg2, %c0_i32_8 : i32
    %10 = arith.extui %9 : i1 to i32
    %c0_i32_9 = arith.constant 0 : i32
    %11 = arith.cmpi ne, %10, %c0_i32_9 : i32
    scf.if %11 {
      %c0_10 = arith.constant 0 : index
      %c0_11 = arith.constant 0 : index
      %12 = vector.load %arg6[%c0_10, %c0_11] : memref<128x128xf32, #tpu.memory_space<vmem>>, vector<128x128xf32>
      %c0_12 = arith.constant 0 : index
      %c0_13 = arith.constant 0 : index
      %13 = vector.load %arg5[%c0_12, %c0_13] : memref<1x128xf32, #tpu.memory_space<vmem>>, vector<1x128xf32>
      %14 = vector.shape_cast %13 : vector<1x128xf32> to vector<128xf32>
      %15 = vector.shape_cast %14 : vector<128xf32> to vector<1x128xf32>
      %16 = vector.broadcast %15 : vector<1x128xf32> to vector<128x128xf32>
      %17 = arith.addf %12, %16 : vector<128x128xf32>
      %18 = arith.negf %17 : vector<128x128xf32>
      %19 = math.exp %18 : vector<128x128xf32>
      %cst_14 = arith.constant 1.000000e+00 : f32
      %20 = vector.broadcast %cst_14 : f32 to vector<128x128xf32>
      %21 = arith.addf %20, %19 : vector<128x128xf32>
      %22 = arith.divf %20, %21 : vector<128x128xf32>
      %23 = arith.mulf %17, %22 : vector<128x128xf32>
      %c0_15 = arith.constant 0 : index
      %c0_16 = arith.constant 0 : index
      %24 = vector.load %arg6[%c0_15, %c0_16] : memref<128x128xf32, #tpu.memory_space<vmem>>, vector<128x128xf32>
      tpu.vector_store %arg6[%c0_15, %c0_16], %23 {strides = array<i32>} : memref<128x128xf32, #tpu.memory_space<vmem>>, vector<128x128xf32>,
    } else {
    }
    return
  }
  func.func @transform_0(%arg0: i32, %arg1: i32, %arg2: i32) -> (i32, i32) {
    %c0_i32 = arith.constant 0 : i32
    return %arg0, %arg2 : i32, i32
  }
  func.func @transform_1(%arg0: i32, %arg1: i32, %arg2: i32) -> (i32, i32) {
    %c0_i32 = arith.constant 0 : i32
    return %arg2, %arg1 : i32, i32
  }
  func.func @transform_2(%arg0: i32, %arg1: i32, %arg2: i32) -> (i32, i32) {
    %c0_i32 = arith.constant 0 : i32
    %c0_i32_0 = arith.constant 0 : i32
    return %c0_i32, %arg1 : i32, i32
  }
  func.func @transform_3(%arg0: i32, %arg1: i32, %arg2: i32) -> (i32, i32) {
    %c0_i32 = arith.constant 0 : i32
    return %arg0, %arg1 : i32, i32
  }
}

module attributes {stable_mosaic.version = 11 : i64} {
  func.func @_gem_kernel(%arg0: i32, %arg1: memref<2x64x128xf32, #tpu.memory_space<vmem>>, %arg2: memref<2x128xf32, #tpu.memory_space<vmem>>) attributes {dimension_semantics = [#tpu.dimension_semantics<arbitrary>], iteration_bounds = array<i64: 1>, scalar_prefetch = 0 : i64, scratch_operands = 0 : i64, tpu.core_type = #tpu.core_type<tc>, window_params = [{transform_indices = @transform_0, window_bounds = array<i64: 2, 64, 128>}, {pipeline_mode = #tpu.pipeline_mode<synchronous>, transform_indices = @transform_1, window_bounds = array<i64: 2, 128>}]} {
    %c0_i32 = arith.constant 0 : i32
    %0 = arith.cmpi eq, %arg0, %c0_i32 : i32
    %1 = arith.extui %0 : i1 to i32
    %c0_i32_0 = arith.constant 0 : i32
    %2 = arith.cmpi ne, %1, %c0_i32_0 : i32
    scf.if %2 {
      %cst_10 = arith.constant 0.000000e+00 : f32
      %15 = vector.broadcast %cst_10 : f32 to vector<2x128xf32>
      %c0_11 = arith.constant 0 : index
      %c0_12 = arith.constant 0 : index
      %16 = vector.load %arg2[%c0_11, %c0_12] : memref<2x128xf32, #tpu.memory_space<vmem>>, vector<2x128xf32>
      tpu.vector_store %arg2[%c0_11, %c0_12], %15 {strides = array<i32>} : memref<2x128xf32, #tpu.memory_space<vmem>>, vector<2x128xf32>,
    } else {
    }
    %c0 = arith.constant 0 : index
    %c0_1 = arith.constant 0 : index
    %c0_2 = arith.constant 0 : index
    %3 = vector.load %arg1[%c0, %c0_1, %c0_2] : memref<2x64x128xf32, #tpu.memory_space<vmem>>, vector<2x64x128xf32>
    %cst = arith.constant 9.99999997E-7 : f32
    %4 = vector.broadcast %cst : f32 to vector<2x64x128xf32>
    %5 = arith.maximumf %3, %4 : vector<2x64x128xf32>
    %6 = arith.mulf %5, %5 : vector<2x64x128xf32>
    %7 = arith.mulf %6, %5 : vector<2x64x128xf32>
    %c0_3 = arith.constant 0 : index
    %c0_4 = arith.constant 0 : index
    %8 = vector.load %arg2[%c0_3, %c0_4] : memref<2x128xf32, #tpu.memory_space<vmem>>, vector<2x128xf32>
    %cst_5 = arith.constant dense<0.000000e+00> : vector<2x128xf32>
    %9 = vector.multi_reduction <add>, %7, %cst_5 [1] : vector<2x64x128xf32> to vector<2x128xf32>
    %10 = arith.addf %8, %9 : vector<2x128xf32>
    %c0_6 = arith.constant 0 : index
    %c0_7 = arith.constant 0 : index
    %11 = vector.load %arg2[%c0_6, %c0_7] : memref<2x128xf32, #tpu.memory_space<vmem>>, vector<2x128xf32>
    tpu.vector_store %arg2[%c0_6, %c0_7], %10 {strides = array<i32>} : memref<2x128xf32, #tpu.memory_space<vmem>>, vector<2x128xf32>,
    %c0_i32_8 = arith.constant 0 : i32
    %12 = arith.cmpi eq, %arg0, %c0_i32_8 : i32
    %13 = arith.extui %12 : i1 to i32
    %c0_i32_9 = arith.constant 0 : i32
    %14 = arith.cmpi ne, %13, %c0_i32_9 : i32
    scf.if %14 {
      %c0_10 = arith.constant 0 : index
      %c0_11 = arith.constant 0 : index
      %15 = vector.load %arg2[%c0_10, %c0_11] : memref<2x128xf32, #tpu.memory_space<vmem>>, vector<2x128xf32>
      %cst_12 = arith.constant 1.562500e-02 : f32
      %16 = vector.broadcast %cst_12 : f32 to vector<2x128xf32>
      %17 = arith.mulf %15, %16 : vector<2x128xf32>
      %cst_13 = arith.constant 0.333333343 : f32
      %18 = vector.broadcast %cst_13 : f32 to vector<2x128xf32>
      %19 = math.powf %17, %18 : vector<2x128xf32>
      %c0_14 = arith.constant 0 : index
      %c0_15 = arith.constant 0 : index
      %20 = vector.load %arg2[%c0_14, %c0_15] : memref<2x128xf32, #tpu.memory_space<vmem>>, vector<2x128xf32>
      tpu.vector_store %arg2[%c0_14, %c0_15], %19 {strides = array<i32>} : memref<2x128xf32, #tpu.memory_space<vmem>>, vector<2x128xf32>,
    } else {
    }
    return
  }
  func.func @transform_0(%arg0: i32) -> (i32, i32, i32) {
    %c0_i32 = arith.constant 0 : i32
    %c0_i32_0 = arith.constant 0 : i32
    %c0_i32_1 = arith.constant 0 : i32
    return %c0_i32, %arg0, %c0_i32_0 : i32, i32, i32
  }
  func.func @transform_1(%arg0: i32) -> (i32, i32) {
    %c0_i32 = arith.constant 0 : i32
    %c0_i32_0 = arith.constant 0 : i32
    %c0_i32_1 = arith.constant 0 : i32
    return %c0_i32, %c0_i32_0 : i32, i32
  }
}

module attributes {stable_mosaic.version = 11 : i64} {
  func.func @kernel(%arg0: i32, %arg1: i32, %arg2: i32, %arg3: memref<16x128xbf16, #tpu.memory_space<vmem>>, %arg4: memref<128x200xbf16, #tpu.memory_space<vmem>>, %arg5: memref<1x200xf32, #tpu.memory_space<vmem>>, %arg6: memref<16x200xf32, #tpu.memory_space<vmem>>) attributes {dimension_semantics = [#tpu.dimension_semantics<parallel>, #tpu.dimension_semantics<parallel>, #tpu.dimension_semantics<arbitrary>], iteration_bounds = array<i64: 1, 1, 1>, scalar_prefetch = 0 : i64, scratch_operands = 0 : i64, tpu.core_type = #tpu.core_type<tc>, window_params = [{transform_indices = @transform_0, window_bounds = array<i64: 16, 128>}, {transform_indices = @transform_1, window_bounds = array<i64: 128, 200>}, {transform_indices = @transform_2, window_bounds = array<i64: 1, 200>}, {transform_indices = @transform_3, window_bounds = array<i64: 16, 200>}]} {
    %c0_i32 = arith.constant 0 : i32
    %0 = arith.cmpi eq, %arg2, %c0_i32 : i32
    %1 = arith.extui %0 : i1 to i32
    %c0_i32_0 = arith.constant 0 : i32
    %2 = arith.cmpi ne, %1, %c0_i32_0 : i32
    scf.if %2 {
      %cst_10 = arith.constant 0.000000e+00 : f32
      %12 = vector.broadcast %cst_10 : f32 to vector<16x200xf32>
      %c0_11 = arith.constant 0 : index
      %c0_12 = arith.constant 0 : index
      %13 = vector.load %arg6[%c0_11, %c0_12] : memref<16x200xf32, #tpu.memory_space<vmem>>, vector<16x200xf32>
      tpu.vector_store %arg6[%c0_11, %c0_12], %12 {strides = array<i32>} : memref<16x200xf32, #tpu.memory_space<vmem>>, vector<16x200xf32>,
    } else {
    }
    %c0 = arith.constant 0 : index
    %c0_1 = arith.constant 0 : index
    %3 = vector.load %arg3[%c0, %c0_1] : memref<16x128xbf16, #tpu.memory_space<vmem>>, vector<16x128xbf16>
    %c0_2 = arith.constant 0 : index
    %c0_3 = arith.constant 0 : index
    %4 = vector.load %arg6[%c0_2, %c0_3] : memref<16x200xf32, #tpu.memory_space<vmem>>, vector<16x200xf32>
    %c0_4 = arith.constant 0 : index
    %c0_5 = arith.constant 0 : index
    %5 = vector.load %arg4[%c0_4, %c0_5] : memref<128x200xbf16, #tpu.memory_space<vmem>>, vector<128x200xbf16>
    %cst = arith.constant dense<0.000000e+00> : vector<16x200xf32>
    %6 = tpu.matmul %3, %5, %cst {dimension_numbers = #tpu.dot_dimension_numbers<[1], [0], [0], [1], [0, 0, 1, 1], [], []>} : vector<16x128xbf16>, vector<128x200xbf16>, vector<16x200xf32> -> vector<16x200xf32>
    %7 = arith.addf %4, %6 : vector<16x200xf32>
    %c0_6 = arith.constant 0 : index
    %c0_7 = arith.constant 0 : index
    %8 = vector.load %arg6[%c0_6, %c0_7] : memref<16x200xf32, #tpu.memory_space<vmem>>, vector<16x200xf32>
    tpu.vector_store %arg6[%c0_6, %c0_7], %7 {strides = array<i32>} : memref<16x200xf32, #tpu.memory_space<vmem>>, vector<16x200xf32>,
    %c0_i32_8 = arith.constant 0 : i32
    %9 = arith.cmpi eq, %arg2, %c0_i32_8 : i32
    %10 = arith.extui %9 : i1 to i32
    %c0_i32_9 = arith.constant 0 : i32
    %11 = arith.cmpi ne, %10, %c0_i32_9 : i32
    scf.if %11 {
      %c0_10 = arith.constant 0 : index
      %c0_11 = arith.constant 0 : index
      %12 = vector.load %arg6[%c0_10, %c0_11] : memref<16x200xf32, #tpu.memory_space<vmem>>, vector<16x200xf32>
      %c0_12 = arith.constant 0 : index
      %c0_13 = arith.constant 0 : index
      %13 = vector.load %arg5[%c0_12, %c0_13] : memref<1x200xf32, #tpu.memory_space<vmem>>, vector<1x200xf32>
      %14 = vector.shape_cast %13 : vector<1x200xf32> to vector<200xf32>
      %15 = vector.shape_cast %14 : vector<200xf32> to vector<1x200xf32>
      %16 = vector.broadcast %15 : vector<1x200xf32> to vector<16x200xf32>
      %17 = arith.addf %12, %16 : vector<16x200xf32>
      %c0_14 = arith.constant 0 : index
      %c0_15 = arith.constant 0 : index
      %18 = vector.load %arg6[%c0_14, %c0_15] : memref<16x200xf32, #tpu.memory_space<vmem>>, vector<16x200xf32>
      tpu.vector_store %arg6[%c0_14, %c0_15], %17 {strides = array<i32>} : memref<16x200xf32, #tpu.memory_space<vmem>>, vector<16x200xf32>,
    } else {
    }
    return
  }
  func.func @transform_0(%arg0: i32, %arg1: i32, %arg2: i32) -> (i32, i32) {
    %c0_i32 = arith.constant 0 : i32
    return %arg0, %arg2 : i32, i32
  }
  func.func @transform_1(%arg0: i32, %arg1: i32, %arg2: i32) -> (i32, i32) {
    %c0_i32 = arith.constant 0 : i32
    return %arg2, %arg1 : i32, i32
  }
  func.func @transform_2(%arg0: i32, %arg1: i32, %arg2: i32) -> (i32, i32) {
    %c0_i32 = arith.constant 0 : i32
    %c0_i32_0 = arith.constant 0 : i32
    return %c0_i32, %arg1 : i32, i32
  }
  func.func @transform_3(%arg0: i32, %arg1: i32, %arg2: i32) -> (i32, i32) {
    %c0_i32 = arith.constant 0 : i32
    return %arg0, %arg1 : i32, i32
  }
}

</mosaic_0001>

<llo_original>
// kernel: efficientnet_forward.10
$region0: #{efficientnet_forward.10}
  #allocation0 [shape = 'u32[]', space=smem, size = 0x4, offset = 0x4, fixed_abs, tag = 'smem constant byte address 0x4 - core index']
  #allocation1 [shape = 'u32[144,128]{1,0:T(1,128)}', space=vmem, size = 0x12000, scoped, tag = 'internal scratch']
  %s0 = inlined_call_operand.vmem [shape: bf16[512,27], index: 0, kind: input, shape index: {}]
  %s1 = inlined_call_operand.vmem [shape: bf16[27,32], index: 1, kind: input, shape index: {}]
  %s2 = inlined_call_operand.vmem [shape: f32[1,32], index: 2, kind: input, shape index: {}]
  %s3 = inlined_call_operand.vmem [shape: f32[512,32], index: 3, kind: output, shape index: {}]
  %s4 = sld [smem:[#allocation0]]
  $region53: #{efficientnet_forward.10} parent=0
    _
  %s6 = ssub.s32 1, %s4
  %s7 = scalar_select 0, %s6, %s4
  loop: start=0, step=1, limit=4
  $region2: #{efficientnet_forward.10} parent=0 // loop_pre_header
    _
  $region3: #{efficientnet_forward.10} parent=0 // loop_header
    %s9 = sphi 0, %s13
    %p10 = scmp.ge.s32.totalorder %s9, 4
    %s16 = sphi 0, %s35
    %s17 = sphi 0, %s31
    %s18 = sphi 0, %s27
    %s19 = sphi 0, %s16
    %s20 = sphi 0, %s17
    %s21 = sphi 0, %s18
    %s22 = sphi 0, %s19
    %s23 = sphi 0, %s20
    %s24 = sphi 0, %s21
    %s40 = sphi 0, %s42
    %s43 = sphi 0, %s40
    %s44 = sphi 0, %s43
    %s60 = sphi 0, %s44
    %s68 = sphi 0, %s70
    %s71 = sphi 0, %s68
    %s72 = sphi 0, %s71
    %s88 = sphi 0, %s72
    %s94 = sphi 0, %s96
    %s97 = sphi 0, %s94
    %s98 = sphi 0, %s97
    %s114 = sphi 0, %s98
    %s122 = sphi 0, %s124
    %s125 = sphi 0, %s122
    %s126 = sphi 0, %s125
    %s142 = sphi 0, %s126
  $region4: #{efficientnet_forward.10} parent=0 // loop_header_branch
    %12 = sbr.rel (%p10) target = $region8
  $region5: #{efficientnet_forward.10} parent=0 // loop_body
    %s14 = ssub.s32 %s9, 1
    %s15 = ssub.s32 %s9, 2
    %s25 = sadd.s32 1, %s18
    %p26 = scmp.ge.s32.totalorder %s25, 1
    %s27 = scalar_select %p26, 0, %s25
    %s28 = sadd.s32 1, %s17
    %s29 = scalar_select %p26, %s28, %s17
    %p30 = scmp.ge.s32.totalorder %s29, 1
    %s31 = scalar_select %p30, 0, %s29
    %s32 = sadd.s32 1, %s16
    %s33 = scalar_select %p30, %s32, %s16
    %p34 = scmp.ge.s32.totalorder %s33, 2
    %s35 = scalar_select %p34, 0, %s33
    %s36 = ssub.s32 %s16, %s35
    %s37 = ssub.s32 %s18, %s27
    %s38 = sor.u32 %s36, %s37
    %p39 = scmp.eq.s32.totalorder %s38, 0
    %s41 = sadd.s32 %s40, 1
    %s42 = scalar_select %p39, %s40, %s41
    %p45 = pneg %p39
    %p46 = scmp.eq.s32.totalorder %s9, 1
    %p47 = por %p45, %p46
    %p48 = scmp.ne.s32.totalorder %s40, %s43
    %p49 = scmp.eq.s32.totalorder %s9, 0
    %p50 = por %p48, %p49
    %p51 = scmp.ne.s32.totalorder %s40, %s43
    %p52 = scmp.eq.s32.totalorder %s14, 1
    %p53 = por %p51, %p52
    %p54 = scmp.ne.s32.totalorder %s43, %s44
    %p55 = scmp.eq.s32.totalorder %s14, 0
    %p56 = por %p54, %p55
    %p57 = scmp.ne.s32.totalorder %s43, %s44
    %p58 = scmp.eq.s32.totalorder %s15, 1
    %p59 = por %p57, %p58
    %p61 = scmp.ne.s32.totalorder %s44, %s60
    %p62 = scmp.eq.s32.totalorder %s15, 0
    %p63 = por %p61, %p62
    %s64 = ssub.s32 %s18, %s27
    %s65 = ssub.s32 %s17, %s31
    %s66 = sor.u32 %s64, %s65
    %p67 = scmp.eq.s32.totalorder %s66, 0
    %s69 = sadd.s32 %s68, 1
    %s70 = scalar_select %p67, %s68, %s69
    %p73 = pneg %p67
    %p74 = scmp.eq.s32.totalorder %s9, 1
    %p75 = por %p73, %p74
    %p76 = scmp.ne.s32.totalorder %s68, %s71
    %p77 = scmp.eq.s32.totalorder %s9, 0
    %p78 = por %p76, %p77
    %p79 = scmp.ne.s32.totalorder %s68, %s71
    %p80 = scmp.eq.s32.totalorder %s14, 1
    %p81 = por %p79, %p80
    %p82 = scmp.ne.s32.totalorder %s71, %s72
    %p83 = scmp.eq.s32.totalorder %s14, 0
    %p84 = por %p82, %p83
    %p85 = scmp.ne.s32.totalorder %s71, %s72
    %p86 = scmp.eq.s32.totalorder %s15, 1
    %p87 = por %p85, %p86
    %p89 = scmp.ne.s32.totalorder %s72, %s88
    %p90 = scmp.eq.s32.totalorder %s15, 0
    %p91 = por %p89, %p90
    %s92 = ssub.s32 %s17, %s31
    %p93 = scmp.eq.s32.totalorder %s92, 0
    %s95 = sadd.s32 %s94, 1
    %s96 = scalar_select %p93, %s94, %s95
    %p99 = pneg %p93
    %p100 = scmp.eq.s32.totalorder %s9, 1
    %p101 = por %p99, %p100
    %p102 = scmp.ne.s32.totalorder %s94, %s97
    %p103 = scmp.eq.s32.totalorder %s9, 0
    %p104 = por %p102, %p103
    %p105 = scmp.ne.s32.totalorder %s94, %s97
    %p106 = scmp.eq.s32.totalorder %s14, 1
    %p107 = por %p105, %p106
    %p108 = scmp.ne.s32.totalorder %s97, %s98
    %p109 = scmp.eq.s32.totalorder %s14, 0
    %p110 = por %p108, %p109
    %p111 = scmp.ne.s32.totalorder %s97, %s98
    %p112 = scmp.eq.s32.totalorder %s15, 1
    %p113 = por %p111, %p112
    %p115 = scmp.ne.s32.totalorder %s98, %s114
    %p116 = scmp.eq.s32.totalorder %s15, 0
    %p117 = por %p115, %p116
    %s118 = ssub.s32 %s16, %s35
    %s119 = ssub.s32 %s17, %s31
    %s120 = sor.u32 %s118, %s119
    %p121 = scmp.eq.s32.totalorder %s120, 0
    %s123 = sadd.s32 %s122, 1
    %s124 = scalar_select %p121, %s122, %s123
    %p127 = pneg %p121
    %p128 = scmp.eq.s32.totalorder %s9, 1
    %p129 = por %p127, %p128
    %p130 = scmp.ne.s32.totalorder %s122, %s125
    %p131 = scmp.eq.s32.totalorder %s9, 0
    %p132 = por %p130, %p131
    %p133 = scmp.ne.s32.totalorder %s122, %s125
    %p134 = scmp.eq.s32.totalorder %s14, 1
    %p135 = por %p133, %p134
    %p136 = scmp.ne.s32.totalorder %s125, %s126
    %p137 = scmp.eq.s32.totalorder %s14, 0
    %p138 = por %p136, %p137
    %p139 = scmp.ne.s32.totalorder %s125, %s126
    %p140 = scmp.eq.s32.totalorder %s15, 1
    %p141 = por %p139, %p140
    %p143 = scmp.ne.s32.totalorder %s126, %s142
    %p144 = scmp.eq.s32.totalorder %s15, 0
    %p145 = por %p143, %p144
    %p146 = scmp.le.s32.totalorder 1, %s9
    %p147 = scmp.lt.s32.totalorder %s9, 3
    %p148 = pnand %p146, %p147
    %p149 = pneg %p148
    // Predicated region
    $region9: #{efficientnet_forward.10} parent=5 // pred_check
      _
    $region10: #{efficientnet_forward.10} parent=5 // pred_check_branch
      %151 = sbr.rel (%p148) target = $region12
    $region11: #{efficientnet_forward.10} parent=5 // pred_region
      %s152 = ssub.s32 %s9, 1
      // Predicated region
      $region13: #{efficientnet_forward.10} parent=11 // pred_check
        %p153 = pneg %p84
      $region14: #{efficientnet_forward.10} parent=11 // pred_check_branch
        %155 = sbr.rel (%p153) target = $region16
      $region15: #{efficientnet_forward.10} parent=11 // pred_region
        %s156 = smul.u32 4, %s21
        %p157 = scmp.lt.s32.totalorder %s156, 3
        %s158 = scalar_select %p157, %s156, 3
        %p159 = scmp.lt.s32.totalorder %s20, 0
        %s160 = scalar_select %p159, %s20, 0
        %s161 = sadd.s32 %s160, %s158
        %s162 = smul.addr %s161, 4
        %s163 = scalar_lea.vmem %s1, %s162
        %s164 = smul.u32 4, %s21
      $region16: #{efficientnet_forward.10} parent=11 // pred_fallthru
        _
      // Predicated region
      $region17: #{efficientnet_forward.10} parent=11 // pred_check
        %p165 = pneg %p110
      $region18: #{efficientnet_forward.10} parent=11 // pred_check_branch
        %167 = sbr.rel (%p165) target = $region20
      $region19: #{efficientnet_forward.10} parent=11 // pred_region
        %p168 = scmp.lt.s32.totalorder %s20, 0
        %s169 = scalar_select %p168, %s20, 0
        %s170 = scalar_lea.vmem %s2, %s169
      $region20: #{efficientnet_forward.10} parent=11 // pred_fallthru
        _
    $region12: #{efficientnet_forward.10} parent=5 // pred_fallthru
      _
    %p171 = scmp.lt.s32.totalorder %s9, 2
    // Predicated region
    $region21: #{efficientnet_forward.10} parent=5 // pred_check
      %p172 = pneg %p171
    $region22: #{efficientnet_forward.10} parent=5 // pred_check_branch
      %174 = sbr.rel (%p172) target = $region24
    $region23: #{efficientnet_forward.10} parent=5 // pred_region
      // Predicated region
      $region25: #{efficientnet_forward.10} parent=23 // pred_check
        %p175 = pneg %p50
      $region26: #{efficientnet_forward.10} parent=23 // pred_check_branch
        %177 = sbr.rel (%p175) target = $region28
      $region27: #{efficientnet_forward.10} parent=23 // pred_region
        %s178 = smul.u32 32, %s16
        %p179 = scmp.lt.s32.totalorder %s178, 63
        %s180 = scalar_select %p179, %s178, 63
        %p181 = scmp.lt.s32.totalorder %s18, 0
        %s182 = scalar_select %p181, %s18, 0
        %s183 = sadd.s32 %s182, %s180
        %s184 = smul.addr %s183, 4
        %s185 = scalar_lea.vmem %s0, %s184
        %s186 = smul.u32 32, %s16
      $region28: #{efficientnet_forward.10} parent=23 // pred_fallthru
        _
    $region24: #{efficientnet_forward.10} parent=5 // pred_fallthru
      _
    %p187 = scmp.le.s32.totalorder 1, %s9
    %p188 = scmp.lt.s32.totalorder %s9, 3
    %p189 = pnand %p187, %p188
    %p190 = pneg %p189
    // Predicated region
    $region29: #{efficientnet_forward.10} parent=5 // pred_check
      _
    $region30: #{efficientnet_forward.10} parent=5 // pred_check_branch
      %192 = sbr.rel (%p189) target = $region32
    $region31: #{efficientnet_forward.10} parent=5 // pred_region
      %s193 = ssub.s32 %s9, 1
      %s194 = smul.u32 32, %s19
      %p195 = scmp.lt.s32.totalorder %s194, 63
      %s196 = scalar_select %p195, %s194, 63
      %p197 = scmp.lt.s32.totalorder %s21, 0
      %s198 = scalar_select %p197, %s21, 0
      %s199 = sadd.s32 %s198, %s196
      %s200 = smul.addr %s199, 4
      %s201 = scalar_lea.vmem %s0, %s200
      %p202 = pneg %p56
      %p203 = pneg %p53
      %s204 = smul.u32 4, %s21
      %p205 = scmp.lt.s32.totalorder %s204, 3
      %s206 = scalar_select %p205, %s204, 3
      %p207 = scmp.lt.s32.totalorder %s20, 0
      %s208 = scalar_select %p207, %s20, 0
      %s209 = sadd.s32 %s208, %s206
      %s210 = smul.addr %s209, 4
      %s211 = scalar_lea.vmem %s1, %s210
      %p212 = pneg %p84
      %p213 = pneg %p81
      %p214 = scmp.lt.s32.totalorder %s20, 0
      %s215 = scalar_select %p214, %s20, 0
      %s216 = scalar_lea.vmem %s2, %s215
      %p217 = pneg %p110
      %p218 = pneg %p107
      %p219 = pneg %p138
      %p220 = pneg %p135
      %s221 = smul.u32 32, %s19
      %p222 = scmp.lt.s32.totalorder %s221, 63
      %s223 = scalar_select %p222, %s221, 63
      %p224 = scmp.lt.s32.totalorder %s20, 0
      %s225 = scalar_select %p224, %s20, 0
      %s226 = sadd.s32 %s225, %s223
      %s227 = smul.addr %s226, 8
      %s228 = scalar_lea.vmem %s3, %s227
      %s229 = smul.u32 32, %s19
      %p230 = scmp.lt.s32.totalorder %s229, 63
      %s231 = scalar_select %p230, %s229, 63
      %p232 = scmp.lt.s32.totalorder %s21, 0
      %s233 = scalar_select %p232, %s21, 0
      %s234 = sadd.s32 %s233, %s231
      %s235 = smul.addr %s234, 4
      %s236 = scalar_lea.vmem %s0, %s235
      %s237 = smul.u32 32, %s19
      %s238 = smul.u32 4, %s21
      %p239 = scmp.lt.s32.totalorder %s238, 3
      %s240 = scalar_select %p239, %s238, 3
      %p241 = scmp.lt.s32.totalorder %s20, 0
      %s242 = scalar_select %p241, %s20, 0
      %s243 = sadd.s32 %s242, %s240
      %s244 = smul.addr %s243, 4
      %s245 = scalar_lea.vmem %s1, %s244
      %s246 = smul.u32 4, %s21
      %p247 = scmp.lt.s32.totalorder %s20, 0
      %s248 = scalar_select %p247, %s20, 0
      %s249 = scalar_lea.vmem %s2, %s248
      %s250 = smul.u32 32, %s19
      %p251 = scmp.lt.s32.totalorder %s250, 63
      %s252 = scalar_select %p251, %s250, 63
      %p253 = scmp.lt.s32.totalorder %s20, 0
      %s254 = scalar_select %p253, %s20, 0
      %s255 = sadd.s32 %s254, %s252
      %s256 = smul.addr %s255, 8
      %s257 = scalar_lea.vmem %s3, %s256
      %s258 = smul.u32 32, %s19
      %p260 = scmp.eq.s32.totalorder %s21, 0
      // Predicated region
      $region33: #{efficientnet_forward.10} parent=31 // pred_check
        %p261 = pneg %p260
      $region34: #{efficientnet_forward.10} parent=31 // pred_check_branch
        %263 = sbr.rel (%p261) target = $region36
      $region35: #{efficientnet_forward.10} parent=31 // pred_region
        %vm264 = vcmask 261120
        %265 = vst.msk [vmem:[%s257] sm:$0xff] %vm264, 0.0
        %266 = vst.msk [vmem:[%s257 + $0x8] sm:$0xff] %vm264, 0.0
        %267 = vst.msk [vmem:[%s257 + $0x10] sm:$0xff] %vm264, 0.0
        %268 = vst.msk [vmem:[%s257 + $0x18] sm:$0xff] %vm264, 0.0
        %269 = vst.msk [vmem:[%s257 + $0x20] sm:$0xff] %vm264, 0.0
        %270 = vst.msk [vmem:[%s257 + $0x28] sm:$0xff] %vm264, 0.0
        %271 = vst.msk [vmem:[%s257 + $0x30] sm:$0xff] %vm264, 0.0
        %272 = vst.msk [vmem:[%s257 + $0x38] sm:$0xff] %vm264, 0.0
        %273 = vst.msk [vmem:[%s257 + $0x40] sm:$0xff] %vm264, 0.0
        %274 = vst.msk [vmem:[%s257 + $0x48] sm:$0xff] %vm264, 0.0
        %275 = vst.msk [vmem:[%s257 + $0x50] sm:$0xff] %vm264, 0.0
        %276 = vst.msk [vmem:[%s257 + $0x58] sm:$0xff] %vm264, 0.0
        %277 = vst.msk [vmem:[%s257 + $0x60] sm:$0xff] %vm264, 0.0
        %278 = vst.msk [vmem:[%s257 + $0x68] sm:$0xff] %vm264, 0.0
        %279 = vst.msk [vmem:[%s257 + $0x70] sm:$0xff] %vm264, 0.0
        %280 = vst.msk [vmem:[%s257 + $0x78] sm:$0xff] %vm264, 0.0
        %281 = vst.msk [vmem:[%s257 + $0x80] sm:$0xff] %vm264, 0.0
        %282 = vst.msk [vmem:[%s257 + $0x88] sm:$0xff] %vm264, 0.0
        %283 = vst.msk [vmem:[%s257 + $0x90] sm:$0xff] %vm264, 0.0
        %284 = vst.msk [vmem:[%s257 + $0x98] sm:$0xff] %vm264, 0.0
        %285 = vst.msk [vmem:[%s257 + $0xa0] sm:$0xff] %vm264, 0.0
        %286 = vst.msk [vmem:[%s257 + $0xa8] sm:$0xff] %vm264, 0.0
        %287 = vst.msk [vmem:[%s257 + $0xb0] sm:$0xff] %vm264, 0.0
        %288 = vst.msk [vmem:[%s257 + $0xb8] sm:$0xff] %vm264, 0.0
        %289 = vst.msk [vmem:[%s257 + $0xc0] sm:$0xff] %vm264, 0.0
        %290 = vst.msk [vmem:[%s257 + $0xc8] sm:$0xff] %vm264, 0.0
        %291 = vst.msk [vmem:[%s257 + $0xd0] sm:$0xff] %vm264, 0.0
        %292 = vst.msk [vmem:[%s257 + $0xd8] sm:$0xff] %vm264, 0.0
        %293 = vst.msk [vmem:[%s257 + $0xe0] sm:$0xff] %vm264, 0.0
        %294 = vst.msk [vmem:[%s257 + $0xe8] sm:$0xff] %vm264, 0.0
        %295 = vst.msk [vmem:[%s257 + $0xf0] sm:$0xff] %vm264, 0.0
        %296 = vst.msk [vmem:[%s257 + $0xf8] sm:$0xff] %vm264, 0.0
      $region36: #{efficientnet_forward.10} parent=31 // pred_fallthru
        _
      %v297 = vld [vmem:[%s236] sm:$0xf]
      %v298 = vld [vmem:[%s236 + $0x4] sm:$0xf]
      %v299 = vld [vmem:[%s236 + $0x8] sm:$0xf]
      %v300 = vld [vmem:[%s236 + $0xc] sm:$0xf]
      %v301 = vld [vmem:[%s236 + $0x10] sm:$0xf]
      %v302 = vld [vmem:[%s236 + $0x14] sm:$0xf]
      %v303 = vld [vmem:[%s236 + $0x18] sm:$0xf]
      %v304 = vld [vmem:[%s236 + $0x1c] sm:$0xf]
      %v305 = vld [vmem:[%s236 + $0x20] sm:$0xf]
      %v306 = vld [vmem:[%s236 + $0x24] sm:$0xf]
      %v307 = vld [vmem:[%s236 + $0x28] sm:$0xf]
      %v308 = vld [vmem:[%s236 + $0x2c] sm:$0xf]
      %v309 = vld [vmem:[%s236 + $0x30] sm:$0xf]
      %v310 = vld [vmem:[%s236 + $0x34] sm:$0xf]
      %v311 = vld [vmem:[%s236 + $0x38] sm:$0xf]
      %v312 = vld [vmem:[%s236 + $0x3c] sm:$0xf]
      %v313 = vld [vmem:[%s236 + $0x40] sm:$0xf]
      %v314 = vld [vmem:[%s236 + $0x44] sm:$0xf]
      %v315 = vld [vmem:[%s236 + $0x48] sm:$0xf]
      %v316 = vld [vmem:[%s236 + $0x4c] sm:$0xf]
      %v317 = vld [vmem:[%s236 + $0x50] sm:$0xf]
      %v318 = vld [vmem:[%s236 + $0x54] sm:$0xf]
      %v319 = vld [vmem:[%s236 + $0x58] sm:$0xf]
      %v320 = vld [vmem:[%s236 + $0x5c] sm:$0xf]
      %v321 = vld [vmem:[%s236 + $0x60] sm:$0xf]
      %v322 = vld [vmem:[%s236 + $0x64] sm:$0xf]
      %v323 = vld [vmem:[%s236 + $0x68] sm:$0xf]
      %v324 = vld [vmem:[%s236 + $0x6c] sm:$0xf]
      %v325 = vld [vmem:[%s236 + $0x70] sm:$0xf]
      %v326 = vld [vmem:[%s236 + $0x74] sm:$0xf]
      %v327 = vld [vmem:[%s236 + $0x78] sm:$0xf]
      %v328 = vld [vmem:[%s236 + $0x7c] sm:$0xf]
      %v329 = vld [vmem:[%s257] sm:$0xff]
      %v330 = vld [vmem:[%s257 + $0x8] sm:$0xff]
      %v331 = vld [vmem:[%s257 + $0x10] sm:$0xff]
      %v332 = vld [vmem:[%s257 + $0x18] sm:$0xff]
      %v333 = vld [vmem:[%s257 + $0x20] sm:$0xff]
      %v334 = vld [vmem:[%s257 + $0x28] sm:$0xff]
      %v335 = vld [vmem:[%s257 + $0x30] sm:$0xff]
      %v336 = vld [vmem:[%s257 + $0x38] sm:$0xff]
      %v337 = vld [vmem:[%s257 + $0x40] sm:$0xff]
      %v338 = vld [vmem:[%s257 + $0x48] sm:$0xff]
      %v339 = vld [vmem:[%s257 + $0x50] sm:$0xff]
      %v340 = vld [vmem:[%s257 + $0x58] sm:$0xff]
      %v341 = vld [vmem:[%s257 + $0x60] sm:$0xff]
      %v342 = vld [vmem:[%s257 + $0x68] sm:$0xff]
      %v343 = vld [vmem:[%s257 + $0x70] sm:$0xff]
      %v344 = vld [vmem:[%s257 + $0x78] sm:$0xff]
      %v345 = vld [vmem:[%s257 + $0x80] sm:$0xff]
      %v346 = vld [vmem:[%s257 + $0x88] sm:$0xff]
      %v347 = vld [vmem:[%s257 + $0x90] sm:$0xff]
      %v348 = vld [vmem:[%s257 + $0x98] sm:$0xff]
      %v349 = vld [vmem:[%s257 + $0xa0] sm:$0xff]
      %v350 = vld [vmem:[%s257 + $0xa8] sm:$0xff]
      %v351 = vld [vmem:[%s257 + $0xb0] sm:$0xff]
      %v352 = vld [vmem:[%s257 + $0xb8] sm:$0xff]
      %v353 = vld [vmem:[%s257 + $0xc0] sm:$0xff]
      %v354 = vld [vmem:[%s257 + $0xc8] sm:$0xff]
      %v355 = vld [vmem:[%s257 + $0xd0] sm:$0xff]
      %v356 = vld [vmem:[%s257 + $0xd8] sm:$0xff]
      %v357 = vld [vmem:[%s257 + $0xe0] sm:$0xff]
      %v358 = vld [vmem:[%s257 + $0xe8] sm:$0xff]
      %v359 = vld [vmem:[%s257 + $0xf0] sm:$0xff]
      %v360 = vld [vmem:[%s257 + $0xf8] sm:$0xff]
      %v361 = vld [vmem:[%s245] sm:$0xf]
      %v362 = vld [vmem:[%s245 + $0x4] sm:$0xf]
      %v363 = vld [vmem:[%s245 + $0x8] sm:$0xf]
      %v364 = vld [vmem:[%s245 + $0xc] sm:$0x3]
      %v397 = vunpack.c.l.b16 %v297
      %v398 = vunpack.c.l.b16 %v298
      %v399 = vunpack.c.l.b16 %v299
      %v400 = vunpack.c.l.b16 %v300
      %v401 = vunpack.c.l.b16 %v301
      %v402 = vunpack.c.l.b16 %v302
      %v403 = vunpack.c.l.b16 %v303
      %v404 = vunpack.c.l.b16 %v304
      %v405 = vunpack.c.l.b16 %v305
      %v406 = vunpack.c.l.b16 %v306
      %v407 = vunpack.c.l.b16 %v307
      %v408 = vunpack.c.l.b16 %v308
      %v409 = vunpack.c.l.b16 %v309
      %v410 = vunpack.c.l.b16 %v310
      %v411 = vunpack.c.l.b16 %v311
      %v412 = vunpack.c.l.b16 %v312
      %v413 = vunpack.c.l.b16 %v313
      %v414 = vunpack.c.l.b16 %v314
      %v415 = vunpack.c.l.b16 %v315
      %v416 = vunpack.c.l.b16 %v316
      %v417 = vunpack.c.l.b16 %v317
      %v418 = vunpack.c.l.b16 %v318
      %v419 = vunpack.c.l.b16 %v319
      %v420 = vunpack.c.l.b16 %v320
      %v421 = vunpack.c.l.b16 %v321
      %v422 = vunpack.c.l.b16 %v322
      %v423 = vunpack.c.l.b16 %v323
      %v424 = vunpack.c.l.b16 %v324
      %v425 = vunpack.c.l.b16 %v325
      %v426 = vunpack.c.l.b16 %v326
      %v427 = vunpack.c.l.b16 %v327
      %v428 = vunpack.c.l.b16 %v328
      %v429 = vpack.c.b16 %v398, %v397
      %v430 = vpack.c.b16 %v400, %v399
      %v431 = vpack.c.b16 %v402, %v401
      %v432 = vpack.c.b16 %v404, %v403
      %v433 = vpack.c.b16 %v406, %v405
      %v434 = vpack.c.b16 %v408, %v407
      %v435 = vpack.c.b16 %v410, %v409
      %v436 = vpack.c.b16 %v412, %v411
      %v437 = vpack.c.b16 %v414, %v413
      %v438 = vpack.c.b16 %v416, %v415
      %v439 = vpack.c.b16 %v418, %v417
      %v440 = vpack.c.b16 %v420, %v419
      %v441 = vpack.c.b16 %v422, %v421
      %v442 = vpack.c.b16 %v424, %v423
      %v443 = vpack.c.b16 %v426, %v425
      %v444 = vpack.c.b16 %v428, %v427
      %v449 = vunpack.c.l.b16 %v361
      %v450 = vunpack.c.l.b16 %v362
      %v451 = vunpack.c.l.b16 %v363
      %v452 = vunpack.c.l.b16 %v364
      %v453 = vpack.c.b16 %v450, %v449
      %v454 = vpack.c.b16 %v452, %v451
      %vm456 = vcmask 220160
      %v458 = vsel %vm456, %v429, 0
      %v461 = vsel %vm456, %v430, 0
      %v464 = vsel %vm456, %v431, 0
      %v467 = vsel %vm456, %v432, 0
      %v470 = vsel %vm456, %v433, 0
      %v473 = vsel %vm456, %v434, 0
      %v476 = vsel %vm456, %v435, 0
      %v479 = vsel %vm456, %v436, 0
      %v482 = vsel %vm456, %v437, 0
      %v485 = vsel %vm456, %v438, 0
      %v488 = vsel %vm456, %v439, 0
      %v491 = vsel %vm456, %v440, 0
      %v494 = vsel %vm456, %v441, 0
      %v497 = vsel %vm456, %v442, 0
      %v500 = vsel %vm456, %v443, 0
      %v503 = vsel %vm456, %v444, 0
      %vm505 = vcmask 1044480
      %vm506 = vcmask 1045504
      %v507 = vsel %vm505, 4294967295, 65535
      %v508 = vsel %vm506, %v507, 0
      %v510 = vand.u32 %v454, %v508
      %512 = vmatprep.subr.bf16.mxu0 0
      %513 = vmatpush1.bf16.msra.mxu0 %v453
      %514 = vmatprep.subr.bf16.mxu0 0
      %515 = vmatpush1.bf16.msra.mxu0 %v510
      %516 = vmatprep.subr.bf16.mxu0 0
      %517 = vmatpush1.bf16.msra.mxu0 0
      %518 = vmatprep.subr.bf16.mxu0 0
      %519 = vmatpush1.bf16.msra.mxu0 0
      %520 = vmatprep.subr.bf16.mxu0 0
      %521 = vmatpush1.bf16.msra.mxu0 0
      %522 = vmatprep.subr.bf16.mxu0 0
      %523 = vmatpush1.bf16.msra.mxu0 0
      %524 = vmatprep.subr.bf16.mxu0 0
      %525 = vmatpush1.bf16.msra.mxu0 0
      %526 = vmatprep.subr.bf16.mxu0 0
      %527 = vmatpush1.bf16.msra.mxu0 0
      %528 = vmatprep.subr.bf16.mxu0 0
      %529 = vmatpush1.bf16.msra.mxu0 0
      %530 = vmatprep.subr.bf16.mxu0 0
      %531 = vmatpush1.bf16.msra.mxu0 0
      %532 = vmatprep.subr.bf16.mxu0 0
      %533 = vmatpush1.bf16.msra.mxu0 0
      %534 = vmatprep.subr.bf16.mxu0 0
      %535 = vmatpush1.bf16.msra.mxu0 0
      %536 = vmatprep.subr.bf16.mxu0 0
      %537 = vmatpush1.bf16.msra.mxu0 0
      %538 = vmatprep.subr.bf16.mxu0 0
      %539 = vmatpush1.bf16.msra.mxu0 0
      %540 = vmatprep.subr.bf16.mxu0 0
      %541 = vmatpush1.bf16.msra.mxu0 0
      %542 = vmatprep.subr.bf16.mxu0 0
      %543 = vmatpush1.bf16.msra.mxu0 0
      %544 = vmatprep.mubr.bf16.mxu0 0
      %545 = vmatmul.mubr.bf16.gmra.mrb[0].mxu0 %v458
      %v546 = vpop.f32.mrb[0].mxu0
      %v547 = vadd.f32 0.0, %v546
      %v548 = vpop.f32.mrb[0].mxu0
      %v549 = vpop.f32.mrb[0].mxu0
      %v550 = vadd.f32 0.0, %v549
      %v551 = vpop.f32.mrb[0].mxu0
      %552 = vmatprep.mubr.bf16.mxu0 0
      %553 = vmatmul.mubr.bf16.gmra.mrb[0].mxu0 %v461
      %v554 = vpop.f32.mrb[0].mxu0
      %v555 = vadd.f32 0.0, %v554
      %v556 = vpop.f32.mrb[0].mxu0
      %v557 = vpop.f32.mrb[0].mxu0
      %v558 = vadd.f32 0.0, %v557
      %v559 = vpop.f32.mrb[0].mxu0
      %560 = vmatprep.mubr.bf16.mxu0 0
      %561 = vmatmul.mubr.bf16.gmra.mrb[0].mxu0 %v464
      %v562 = vpop.f32.mrb[0].mxu0
      %v563 = vadd.f32 0.0, %v562
      %v564 = vpop.f32.mrb[0].mxu0
      %v565 = vpop.f32.mrb[0].mxu0
      %v566 = vadd.f32 0.0, %v565
      %v567 = vpop.f32.mrb[0].mxu0
      %568 = vmatprep.mubr.bf16.mxu0 0
      %569 = vmatmul.mubr.bf16.gmra.mrb[0].mxu0 %v467
      %v570 = vpop.f32.mrb[0].mxu0
      %v571 = vadd.f32 0.0, %v570
      %v572 = vpop.f32.mrb[0].mxu0
      %v573 = vpop.f32.mrb[0].mxu0
      %v574 = vadd.f32 0.0, %v573
      %v575 = vpop.f32.mrb[0].mxu0
      %576 = vmatprep.mubr.bf16.mxu0 0
      %577 = vmatmul.mubr.bf16.gmra.mrb[0].mxu0 %v470
      %v578 = vpop.f32.mrb[0].mxu0
      %v579 = vadd.f32 0.0, %v578
      %v580 = vpop.f32.mrb[0].mxu0
      %v581 = vpop.f32.mrb[0].mxu0
      %v582 = vadd.f32 0.0, %v581
      %v583 = vpop.f32.mrb[0].mxu0
      %584 = vmatprep.mubr.bf16.mxu0 0
      %585 = vmatmul.mubr.bf16.gmra.mrb[0].mxu0 %v473
      %v586 = vpop.f32.mrb[0].mxu0
      %v587 = vadd.f32 0.0, %v586
      %v588 = vpop.f32.mrb[0].mxu0
      %v589 = vpop.f32.mrb[0].mxu0
      %v590 = vadd.f32 0.0, %v589
      %v591 = vpop.f32.mrb[0].mxu0
      %592 = vmatprep.mubr.bf16.mxu0 0
      %593 = vmatmul.mubr.bf16.gmra.mrb[0].mxu0 %v476
      %v594 = vpop.f32.mrb[0].mxu0
      %v595 = vadd.f32 0.0, %v594
      %v596 = vpop.f32.mrb[0].mxu0
      %v597 = vpop.f32.mrb[0].mxu0
      %v598 = vadd.f32 0.0, %v597
      %v599 = vpop.f32.mrb[0].mxu0
      %600 = vmatprep.mubr.bf16.mxu0 0
      %601 = vmatmul.mubr.bf16.gmra.mrb[0].mxu0 %v479
      %v602 = vpop.f32.mrb[0].mxu0
      %v603 = vadd.f32 0.0, %v602
      %v604 = vpop.f32.mrb[0].mxu0
      %v605 = vpop.f32.mrb[0].mxu0
      %v606 = vadd.f32 0.0, %v605
      %v607 = vpop.f32.mrb[0].mxu0
      %608 = vmatprep.mubr.bf16.mxu0 0
      %609 = vmatmul.mubr.bf16.gmra.mrb[0].mxu0 %v482
      %v610 = vpop.f32.mrb[0].mxu0
      %v611 = vadd.f32 0.0, %v610
      %v612 = vpop.f32.mrb[0].mxu0
      %v613 = vpop.f32.mrb[0].mxu0
      %v614 = vadd.f32 0.0, %v613
      %v615 = vpop.f32.mrb[0].mxu0
      %616 = vmatprep.mubr.bf16.mxu0 0
      %617 = vmatmul.mubr.bf16.gmra.mrb[0].mxu0 %v485
      %v618 = vpop.f32.mrb[0].mxu0
      %v619 = vadd.f32 0.0, %v618
      %v620 = vpop.f32.mrb[0].mxu0
      %v621 = vpop.f32.mrb[0].mxu0
      %v622 = vadd.f32 0.0, %v621
      %v623 = vpop.f32.mrb[0].mxu0
      %624 = vmatprep.mubr.bf16.mxu0 0
      %625 = vmatmul.mubr.bf16.gmra.mrb[0].mxu0 %v488
      %v626 = vpop.f32.mrb[0].mxu0
      %v627 = vadd.f32 0.0, %v626
      %v628 = vpop.f32.mrb[0].mxu0
      %v629 = vpop.f32.mrb[0].mxu0
      %v630 = vadd.f32 0.0, %v629
      %v631 = vpop.f32.mrb[0].mxu0
      %632 = vmatprep.mubr.bf16.mxu0 0
      %633 = vmatmul.mubr.bf16.gmra.mrb[0].mxu0 %v491
      %v634 = vpop.f32.mrb[0].mxu0
      %v635 = vadd.f32 0.0, %v634
      %v636 = vpop.f32.mrb[0].mxu0
      %v637 = vpop.f32.mrb[0].mxu0
      %v638 = vadd.f32 0.0, %v637
      %v639 = vpop.f32.mrb[0].mxu0
      %640 = vmatprep.mubr.bf16.mxu0 0
      %641 = vmatmul.mubr.bf16.gmra.mrb[0].mxu0 %v494
      %v642 = vpop.f32.mrb[0].mxu0
      %v643 = vadd.f32 0.0, %v642
      %v644 = vpop.f32.mrb[0].mxu0
      %v645 = vpop.f32.mrb[0].mxu0
      %v646 = vadd.f32 0.0, %v645
      %v647 = vpop.f32.mrb[0].mxu0
      %648 = vmatprep.mubr.bf16.mxu0 0
      %649 = vmatmul.mubr.bf16.gmra.mrb[0].mxu0 %v497
      %v650 = vpop.f32.mrb[0].mxu0
      %v651 = vadd.f32 0.0, %v650
      %v652 = vpop.f32.mrb[0].mxu0
      %v653 = vpop.f32.mrb[0].mxu0
      %v654 = vadd.f32 0.0, %v653
      %v655 = vpop.f32.mrb[0].mxu0
      %656 = vmatprep.mubr.bf16.mxu0 0
      %657 = vmatmul.mubr.bf16.gmra.mrb[0].mxu0 %v500
      %v658 = vpop.f32.mrb[0].mxu0
      %v659 = vadd.f32 0.0, %v658
      %v660 = vpop.f32.mrb[0].mxu0
      %v661 = vpop.f32.mrb[0].mxu0
      %v662 = vadd.f32 0.0, %v661
      %v663 = vpop.f32.mrb[0].mxu0
      %664 = vmatprep.mubr.bf16.mxu0 0
      %665 = vmatmul.mubr.bf16.gmra.mrb[0].mxu0 %v503
      %v666 = vpop.f32.mrb[0].mxu0
      %v667 = vadd.f32 0.0, %v666
      %v668 = vpop.f32.mrb[0].mxu0
      %v669 = vpop.f32.mrb[0].mxu0
      %v670 = vadd.f32 0.0, %v669
      %v671 = vpop.f32.mrb[0].mxu0
      %672 = vdwg.mxu0
      %v673 = vadd.f32 %v329, %v547
      %v674 = vadd.f32 %v330, %v550
      %v675 = vadd.f32 %v331, %v555
      %v676 = vadd.f32 %v332, %v558
      %v677 = vadd.f32 %v333, %v563
      %v678 = vadd.f32 %v334, %v566
      %v679 = vadd.f32 %v335, %v571
      %v680 = vadd.f32 %v336, %v574
      %v681 = vadd.f32 %v337, %v579
      %v682 = vadd.f32 %v338, %v582
      %v683 = vadd.f32 %v339, %v587
      %v684 = vadd.f32 %v340, %v590
      %v685 = vadd.f32 %v341, %v595
      %v686 = vadd.f32 %v342, %v598
      %v687 = vadd.f32 %v343, %v603
      %v688 = vadd.f32 %v344, %v606
      %v689 = vadd.f32 %v345, %v611
      %v690 = vadd.f32 %v346, %v614
      %v691 = vadd.f32 %v347, %v619
      %v692 = vadd.f32 %v348, %v622
      %v693 = vadd.f32 %v349, %v627
      %v694 = vadd.f32 %v350, %v630
      %v695 = vadd.f32 %v351, %v635
      %v696 = vadd.f32 %v352, %v638
      %v697 = vadd.f32 %v353, %v643
      %v698 = vadd.f32 %v354, %v646
      %v699 = vadd.f32 %v355, %v651
      %v700 = vadd.f32 %v356, %v654
      %v701 = vadd.f32 %v357, %v659
      %v702 = vadd.f32 %v358, %v662
      %v703 = vadd.f32 %v359, %v667
      %v704 = vadd.f32 %v360, %v670
      %vm705 = vcmask 261120
      %706 = vst.msk [vmem:[%s257] sm:$0xff] %vm705, %v673
      %707 = vst.msk [vmem:[%s257 + $0x8] sm:$0xff] %vm705, %v674
      %708 = vst.msk [vmem:[%s257 + $0x10] sm:$0xff] %vm705, %v675
      %709 = vst.msk [vmem:[%s257 + $0x18] sm:$0xff] %vm705, %v676
      %710 = vst.msk [vmem:[%s257 + $0x20] sm:$0xff] %vm705, %v677
      %711 = vst.msk [vmem:[%s257 + $0x28] sm:$0xff] %vm705, %v678
      %712 = vst.msk [vmem:[%s257 + $0x30] sm:$0xff] %vm705, %v679
      %713 = vst.msk [vmem:[%s257 + $0x38] sm:$0xff] %vm705, %v680
      %714 = vst.msk [vmem:[%s257 + $0x40] sm:$0xff] %vm705, %v681
      %715 = vst.msk [vmem:[%s257 + $0x48] sm:$0xff] %vm705, %v682
      %716 = vst.msk [vmem:[%s257 + $0x50] sm:$0xff] %vm705, %v683
      %717 = vst.msk [vmem:[%s257 + $0x58] sm:$0xff] %vm705, %v684
      %718 = vst.msk [vmem:[%s257 + $0x60] sm:$0xff] %vm705, %v685
      %719 = vst.msk [vmem:[%s257 + $0x68] sm:$0xff] %vm705, %v686
      %720 = vst.msk [vmem:[%s257 + $0x70] sm:$0xff] %vm705, %v687
      %721 = vst.msk [vmem:[%s257 + $0x78] sm:$0xff] %vm705, %v688
      %722 = vst.msk [vmem:[%s257 + $0x80] sm:$0xff] %vm705, %v689
      %723 = vst.msk [vmem:[%s257 + $0x88] sm:$0xff] %vm705, %v690
      %724 = vst.msk [vmem:[%s257 + $0x90] sm:$0xff] %vm705, %v691
      %725 = vst.msk [vmem:[%s257 + $0x98] sm:$0xff] %vm705, %v692
      %726 = vst.msk [vmem:[%s257 + $0xa0] sm:$0xff] %vm705, %v693
      %727 = vst.msk [vmem:[%s257 + $0xa8] sm:$0xff] %vm705, %v694
      %728 = vst.msk [vmem:[%s257 + $0xb0] sm:$0xff] %vm705, %v695
      %729 = vst.msk [vmem:[%s257 + $0xb8] sm:$0xff] %vm705, %v696
      %730 = vst.msk [vmem:[%s257 + $0xc0] sm:$0xff] %vm705, %v697
      %731 = vst.msk [vmem:[%s257 + $0xc8] sm:$0xff] %vm705, %v698
      %732 = vst.msk [vmem:[%s257 + $0xd0] sm:$0xff] %vm705, %v699
      %733 = vst.msk [vmem:[%s257 + $0xd8] sm:$0xff] %vm705, %v700
      %734 = vst.msk [vmem:[%s257 + $0xe0] sm:$0xff] %vm705, %v701
      %735 = vst.msk [vmem:[%s257 + $0xe8] sm:$0xff] %vm705, %v702
      %736 = vst.msk [vmem:[%s257 + $0xf0] sm:$0xff] %vm705, %v703
      %737 = vst.msk [vmem:[%s257 + $0xf8] sm:$0xff] %vm705, %v704
      // Predicated region
      $region37: #{efficientnet_forward.10} parent=31 // pred_check
        %p738 = pneg %p260
      $region38: #{efficientnet_forward.10} parent=31 // pred_check_branch
        %740 = sbr.rel (%p738) target = $region40
      $region39: #{efficientnet_forward.10} parent=31 // pred_region
        %v741 = vld [vmem:[%s257] sm:$0xff]
        %v742 = vld [vmem:[%s257 + $0x8] sm:$0xff]
        %v743 = vld [vmem:[%s257 + $0x10] sm:$0xff]
        %v744 = vld [vmem:[%s257 + $0x18] sm:$0xff]
        %v745 = vld [vmem:[%s257 + $0x20] sm:$0xff]
        %v746 = vld [vmem:[%s257 + $0x28] sm:$0xff]
        %v747 = vld [vmem:[%s257 + $0x30] sm:$0xff]
        %v748 = vld [vmem:[%s257 + $0x38] sm:$0xff]
        %v749 = vld [vmem:[%s257 + $0x40] sm:$0xff]
        %v750 = vld [vmem:[%s257 + $0x48] sm:$0xff]
        %v751 = vld [vmem:[%s257 + $0x50] sm:$0xff]
        %v752 = vld [vmem:[%s257 + $0x58] sm:$0xff]
        %v753 = vld [vmem:[%s257 + $0x60] sm:$0xff]
        %v754 = vld [vmem:[%s257 + $0x68] sm:$0xff]
        %v755 = vld [vmem:[%s257 + $0x70] sm:$0xff]
        %v756 = vld [vmem:[%s257 + $0x78] sm:$0xff]
        %v757 = vld [vmem:[%s257 + $0x80] sm:$0xff]
        %v758 = vld [vmem:[%s257 + $0x88] sm:$0xff]
        %v759 = vld [vmem:[%s257 + $0x90] sm:$0xff]
        %v760 = vld [vmem:[%s257 + $0x98] sm:$0xff]
        %v761 = vld [vmem:[%s257 + $0xa0] sm:$0xff]
        %v762 = vld [vmem:[%s257 + $0xa8] sm:$0xff]
        %v763 = vld [vmem:[%s257 + $0xb0] sm:$0xff]
        %v764 = vld [vmem:[%s257 + $0xb8] sm:$0xff]
        %v765 = vld [vmem:[%s257 + $0xc0] sm:$0xff]
        %v766 = vld [vmem:[%s257 + $0xc8] sm:$0xff]
        %v767 = vld [vmem:[%s257 + $0xd0] sm:$0xff]
        %v768 = vld [vmem:[%s257 + $0xd8] sm:$0xff]
        %v769 = vld [vmem:[%s257 + $0xe0] sm:$0xff]
        %v770 = vld [vmem:[%s257 + $0xe8] sm:$0xff]
        %v771 = vld [vmem:[%s257 + $0xf0] sm:$0xff]
        %v772 = vld [vmem:[%s257 + $0xf8] sm:$0xff]
        %v773 = vld [vmem:[%s249] sm:$0x1]
        %v775 = vlaneseq
        %v776 = vshrl.u32 %v775, 7
        %v777 = vsub.s32 0, %v776
        %v778 = vrot.slane %v773, %v777
        %v780 = vadd.f32 %v741, %v778
        %v781 = vadd.f32 %v742, %v778
        %v782 = vadd.f32 %v743, %v778
        %v783 = vadd.f32 %v744, %v778
        %v784 = vadd.f32 %v745, %v778
        %v785 = vadd.f32 %v746, %v778
        %v786 = vadd.f32 %v747, %v778
        %v787 = vadd.f32 %v748, %v778
        %v788 = vadd.f32 %v749, %v778
        %v789 = vadd.f32 %v750, %v778
        %v790 = vadd.f32 %v751, %v778
        %v791 = vadd.f32 %v752, %v778
        %v792 = vadd.f32 %v753, %v778
        %v793 = vadd.f32 %v754, %v778
        %v794 = vadd.f32 %v755, %v778
        %v795 = vadd.f32 %v756, %v778
        %v796 = vadd.f32 %v757, %v778
        %v797 = vadd.f32 %v758, %v778
        %v798 = vadd.f32 %v759, %v778
        %v799 = vadd.f32 %v760, %v778
        %v800 = vadd.f32 %v761, %v778
        %v801 = vadd.f32 %v762, %v778
        %v802 = vadd.f32 %v763, %v778
        %v803 = vadd.f32 %v764, %v778
        %v804 = vadd.f32 %v765, %v778
        %v805 = vadd.f32 %v766, %v778
        %v806 = vadd.f32 %v767, %v778
        %v807 = vadd.f32 %v768, %v778
        %v808 = vadd.f32 %v769, %v778
        %v809 = vadd.f32 %v770, %v778
        %v810 = vadd.f32 %v771, %v778
        %v811 = vadd.f32 %v772, %v778
        %v812 = vxor.u32 %v780, 2147483648
        %v813 = vxor.u32 %v781, 2147483648
        %v814 = vxor.u32 %v782, 2147483648
        %v815 = vxor.u32 %v783, 2147483648
        %v816 = vxor.u32 %v784, 2147483648
        %v817 = vxor.u32 %v785, 2147483648
        %v818 = vxor.u32 %v786, 2147483648
        %v819 = vxor.u32 %v787, 2147483648
        %v820 = vxor.u32 %v788, 2147483648
        %v821 = vxor.u32 %v789, 2147483648
        %v822 = vxor.u32 %v790, 2147483648
        %v823 = vxor.u32 %v791, 2147483648
        %v824 = vxor.u32 %v792, 2147483648
        %v825 = vxor.u32 %v793, 2147483648
        %v826 = vxor.u32 %v794, 2147483648
        %v827 = vxor.u32 %v795, 2147483648
        %v828 = vxor.u32 %v796, 2147483648
        %v829 = vxor.u32 %v797, 2147483648
        %v830 = vxor.u32 %v798, 2147483648
        %v831 = vxor.u32 %v799, 2147483648
        %v832 = vxor.u32 %v800, 2147483648
        %v833 = vxor.u32 %v801, 2147483648
        %v834 = vxor.u32 %v802, 2147483648
        %v835 = vxor.u32 %v803, 2147483648
        %v836 = vxor.u32 %v804, 2147483648
        %v837 = vxor.u32 %v805, 2147483648
        %v838 = vxor.u32 %v806, 2147483648
        %v839 = vxor.u32 %v807, 2147483648
        %v840 = vxor.u32 %v808, 2147483648
        %v841 = vxor.u32 %v809, 2147483648
        %v842 = vxor.u32 %v810, 2147483648
        %v843 = vxor.u32 %v811, 2147483648
        %v844 = vmul.f32 %v812, 1.442695
        %v845 = vpow.pop %v844
        %v846 = vmul.f32 %v813, 1.442695
        %v847 = vpow.pop %v846
        %v848 = vmul.f32 %v814, 1.442695
        %v849 = vpow.pop %v848
        %v850 = vmul.f32 %v815, 1.442695
        %v851 = vpow.pop %v850
        %v852 = vmul.f32 %v816, 1.442695
        %v853 = vpow.pop %v852
        %v854 = vmul.f32 %v817, 1.442695
        %v855 = vpow.pop %v854
        %v856 = vmul.f32 %v818, 1.442695
        %v857 = vpow.pop %v856
        %v858 = vmul.f32 %v819, 1.442695
        %v859 = vpow.pop %v858
        %v860 = vmul.f32 %v820, 1.442695
        %v861 = vpow.pop %v860
        %v862 = vmul.f32 %v821, 1.442695
        %v863 = vpow.pop %v862
        %v864 = vmul.f32 %v822, 1.442695
        %v865 = vpow.pop %v864
        %v866 = vmul.f32 %v823, 1.442695
        %v867 = vpow.pop %v866
        %v868 = vmul.f32 %v824, 1.442695
        %v869 = vpow.pop %v868
        %v870 = vmul.f32 %v825, 1.442695
        %v871 = vpow.pop %v870
        %v872 = vmul.f32 %v826, 1.442695
        %v873 = vpow.pop %v872
        %v874 = vmul.f32 %v827, 1.442695
        %v875 = vpow.pop %v874
        %v876 = vmul.f32 %v828, 1.442695
        %v877 = vpow.pop %v876
        %v878 = vmul.f32 %v829, 1.442695
        %v879 = vpow.pop %v878
        %v880 = vmul.f32 %v830, 1.442695
        %v881 = vpow.pop %v880
        %v882 = vmul.f32 %v831, 1.442695
        %v883 = vpow.pop %v882
        %v884 = vmul.f32 %v832, 1.442695
        %v885 = vpow.pop %v884
        %v886 = vmul.f32 %v833, 1.442695
        %v887 = vpow.pop %v886
        %v888 = vmul.f32 %v834, 1.442695
        %v889 = vpow.pop %v888
        %v890 = vmul.f32 %v835, 1.442695
        %v891 = vpow.pop %v890
        %v892 = vmul.f32 %v836, 1.442695
        %v893 = vpow.pop %v892
        %v894 = vmul.f32 %v837, 1.442695
        %v895 = vpow.pop %v894
        %v896 = vmul.f32 %v838, 1.442695
        %v897 = vpow.pop %v896
        %v898 = vmul.f32 %v839, 1.442695
        %v899 = vpow.pop %v898
        %v900 = vmul.f32 %v840, 1.442695
        %v901 = vpow.pop %v900
        %v902 = vmul.f32 %v841, 1.442695
        %v903 = vpow.pop %v902
        %v904 = vmul.f32 %v842, 1.442695
        %v905 = vpow.pop %v904
        %v906 = vmul.f32 %v843, 1.442695
        %v907 = vpow.pop %v906
        %v908 = vadd.f32 %v845, 1.0
        %v909 = vadd.f32 %v847, 1.0
        %v910 = vadd.f32 %v849, 1.0
        %v911 = vadd.f32 %v851, 1.0
        %v912 = vadd.f32 %v853, 1.0
        %v913 = vadd.f32 %v855, 1.0
        %v914 = vadd.f32 %v857, 1.0
        %v915 = vadd.f32 %v859, 1.0
        %v916 = vadd.f32 %v861, 1.0
        %v917 = vadd.f32 %v863, 1.0
        %v918 = vadd.f32 %v865, 1.0
        %v919 = vadd.f32 %v867, 1.0
        %v920 = vadd.f32 %v869, 1.0
        %v921 = vadd.f32 %v871, 1.0
        %v922 = vadd.f32 %v873, 1.0
        %v923 = vadd.f32 %v875, 1.0
        %v924 = vadd.f32 %v877, 1.0
        %v925 = vadd.f32 %v879, 1.0
        %v926 = vadd.f32 %v881, 1.0
        %v927 = vadd.f32 %v883, 1.0
        %v928 = vadd.f32 %v885, 1.0
        %v929 = vadd.f32 %v887, 1.0
        %v930 = vadd.f32 %v889, 1.0
        %v931 = vadd.f32 %v891, 1.0
        %v932 = vadd.f32 %v893, 1.0
        %v933 = vadd.f32 %v895, 1.0
        %v934 = vadd.f32 %v897, 1.0
        %v935 = vadd.f32 %v899, 1.0
        %v936 = vadd.f32 %v901, 1.0
        %v937 = vadd.f32 %v903, 1.0
        %v938 = vadd.f32 %v905, 1.0
        %v939 = vadd.f32 %v907, 1.0
        %v940 = vrcp.pop %v908
        %v941 = vmul.f32 1.0, %v940
        %v942 = vrcp.pop %v909
        %v943 = vmul.f32 1.0, %v942
        %v944 = vrcp.pop %v910
        %v945 = vmul.f32 1.0, %v944
        %v946 = vrcp.pop %v911
        %v947 = vmul.f32 1.0, %v946
        %v948 = vrcp.pop %v912
        %v949 = vmul.f32 1.0, %v948
        %v950 = vrcp.pop %v913
        %v951 = vmul.f32 1.0, %v950
        %v952 = vrcp.pop %v914
        %v953 = vmul.f32 1.0, %v952
        %v954 = vrcp.pop %v915
        %v955 = vmul.f32 1.0, %v954
        %v956 = vrcp.pop %v916
        %v957 = vmul.f32 1.0, %v956
        %v958 = vrcp.pop %v917
        %v959 = vmul.f32 1.0, %v958
        %v960 = vrcp.pop %v918
        %v961 = vmul.f32 1.0, %v960
        %v962 = vrcp.pop %v919
        %v963 = vmul.f32 1.0, %v962
        %v964 = vrcp.pop %v920
        %v965 = vmul.f32 1.0, %v964
        %v966 = vrcp.pop %v921
        %v967 = vmul.f32 1.0, %v966
        %v968 = vrcp.pop %v922
        %v969 = vmul.f32 1.0, %v968
        %v970 = vrcp.pop %v923
        %v971 = vmul.f32 1.0, %v970
        %v972 = vrcp.pop %v924
        %v973 = vmul.f32 1.0, %v972
        %v974 = vrcp.pop %v925
        %v975 = vmul.f32 1.0, %v974
        %v976 = vrcp.pop %v926
        %v977 = vmul.f32 1.0, %v976
        %v978 = vrcp.pop %v927
        %v979 = vmul.f32 1.0, %v978
        %v980 = vrcp.pop %v928
        %v981 = vmul.f32 1.0, %v980
        %v982 = vrcp.pop %v929
        %v983 = vmul.f32 1.0, %v982
        %v984 = vrcp.pop %v930
        %v985 = vmul.f32 1.0, %v984
        %v986 = vrcp.pop %v931
        %v987 = vmul.f32 1.0, %v986
        %v988 = vrcp.pop %v932
        %v989 = vmul.f32 1.0, %v988
        %v990 = vrcp.pop %v933
        %v991 = vmul.f32 1.0, %v990
        %v992 = vrcp.pop %v934
        %v993 = vmul.f32 1.0, %v992
        %v994 = vrcp.pop %v935
        %v995 = vmul.f32 1.0, %v994
        %v996 = vrcp.pop %v936
        %v997 = vmul.f32 1.0, %v996
        %v998 = vrcp.pop %v937
        %v999 = vmul.f32 1.0, %v998
        %v1000 = vrcp.pop %v938
        %v1001 = vmul.f32 1.0, %v1000
        %v1002 = vrcp.pop %v939
        %v1003 = vmul.f32 1.0, %v1002
        %v1004 = vmul.f32 %v780, %v941
        %v1005 = vmul.f32 %v781, %v943
        %v1006 = vmul.f32 %v782, %v945
        %v1007 = vmul.f32 %v783, %v947
        %v1008 = vmul.f32 %v784, %v949
        %v1009 = vmul.f32 %v785, %v951
        %v1010 = vmul.f32 %v786, %v953
        %v1011 = vmul.f32 %v787, %v955
        %v1012 = vmul.f32 %v788, %v957
        %v1013 = vmul.f32 %v789, %v959
        %v1014 = vmul.f32 %v790, %v961
        %v1015 = vmul.f32 %v791, %v963
        %v1016 = vmul.f32 %v792, %v965
        %v1017 = vmul.f32 %v793, %v967
        %v1018 = vmul.f32 %v794, %v969
        %v1019 = vmul.f32 %v795, %v971
        %v1020 = vmul.f32 %v796, %v973
        %v1021 = vmul.f32 %v797, %v975
        %v1022 = vmul.f32 %v798, %v977
        %v1023 = vmul.f32 %v799, %v979
        %v1024 = vmul.f32 %v800, %v981
        %v1025 = vmul.f32 %v801, %v983
        %v1026 = vmul.f32 %v802, %v985
        %v1027 = vmul.f32 %v803, %v987
        %v1028 = vmul.f32 %v804, %v989
        %v1029 = vmul.f32 %v805, %v991
        %v1030 = vmul.f32 %v806, %v993
        %v1031 = vmul.f32 %v807, %v995
        %v1032 = vmul.f32 %v808, %v997
        %v1033 = vmul.f32 %v809, %v999
        %v1034 = vmul.f32 %v810, %v1001
        %v1035 = vmul.f32 %v811, %v1003
        %1036 = vst.msk [vmem:[%s257] sm:$0xff] %vm705, %v1004
        %1037 = vst.msk [vmem:[%s257 + $0x8] sm:$0xff] %vm705, %v1005
        %1038 = vst.msk [vmem:[%s257 + $0x10] sm:$0xff] %vm705, %v1006
        %1039 = vst.msk [vmem:[%s257 + $0x18] sm:$0xff] %vm705, %v1007
        %1040 = vst.msk [vmem:[%s257 + $0x20] sm:$0xff] %vm705, %v1008
        %1041 = vst.msk [vmem:[%s257 + $0x28] sm:$0xff] %vm705, %v1009
        %1042 = vst.msk [vmem:[%s257 + $0x30] sm:$0xff] %vm705, %v1010
        %1043 = vst.msk [vmem:[%s257 + $0x38] sm:$0xff] %vm705, %v1011
        %1044 = vst.msk [vmem:[%s257 + $0x40] sm:$0xff] %vm705, %v1012
        %1045 = vst.msk [vmem:[%s257 + $0x48] sm:$0xff] %vm705, %v1013
        %1046 = vst.msk [vmem:[%s257 + $0x50] sm:$0xff] %vm705, %v1014
        %1047 = vst.msk [vmem:[%s257 + $0x58] sm:$0xff] %vm705, %v1015
        %1048 = vst.msk [vmem:[%s257 + $0x60] sm:$0xff] %vm705, %v1016
        %1049 = vst.msk [vmem:[%s257 + $0x68] sm:$0xff] %vm705, %v1017
        %1050 = vst.msk [vmem:[%s257 + $0x70] sm:$0xff] %vm705, %v1018
        %1051 = vst.msk [vmem:[%s257 + $0x78] sm:$0xff] %vm705, %v1019
        %1052 = vst.msk [vmem:[%s257 + $0x80] sm:$0xff] %vm705, %v1020
        %1053 = vst.msk [vmem:[%s257 + $0x88] sm:$0xff] %vm705, %v1021
        %1054 = vst.msk [vmem:[%s257 + $0x90] sm:$0xff] %vm705, %v1022
        %1055 = vst.msk [vmem:[%s257 + $0x98] sm:$0xff] %vm705, %v1023
        %1056 = vst.msk [vmem:[%s257 + $0xa0] sm:$0xff] %vm705, %v1024
        %1057 = vst.msk [vmem:[%s257 + $0xa8] sm:$0xff] %vm705, %v1025
        %1058 = vst.msk [vmem:[%s257 + $0xb0] sm:$0xff] %vm705, %v1026
        %1059 = vst.msk [vmem:[%s257 + $0xb8] sm:$0xff] %vm705, %v1027
        %1060 = vst.msk [vmem:[%s257 + $0xc0] sm:$0xff] %vm705, %v1028
        %1061 = vst.msk [vmem:[%s257 + $0xc8] sm:$0xff] %vm705, %v1029
        %1062 = vst.msk [vmem:[%s257 + $0xd0] sm:$0xff] %vm705, %v1030
        %1063 = vst.msk [vmem:[%s257 + $0xd8] sm:$0xff] %vm705, %v1031
        %1064 = vst.msk [vmem:[%s257 + $0xe0] sm:$0xff] %vm705, %v1032
        %1065 = vst.msk [vmem:[%s257 + $0xe8] sm:$0xff] %vm705, %v1033
        %1066 = vst.msk [vmem:[%s257 + $0xf0] sm:$0xff] %vm705, %v1034
        %1067 = vst.msk [vmem:[%s257 + $0xf8] sm:$0xff] %vm705, %v1035
      $region40: #{efficientnet_forward.10} parent=31 // pred_fallthru
        _
      %s1068 = smul.u32 32, %s19
      %p1069 = scmp.lt.s32.totalorder %s1068, 63
      %s1070 = scalar_select %p1069, %s1068, 63
      %p1071 = scmp.lt.s32.totalorder %s20, 0
      %s1072 = scalar_select %p1071, %s20, 0
      %s1073 = sadd.s32 %s1072, %s1070
      %s1074 = smul.addr %s1073, 8
      %s1075 = scalar_lea.vmem %s3, %s1074
      // Predicated region
      $region41: #{efficientnet_forward.10} parent=31 // pred_check
        %p1076 = pneg %p135
      $region42: #{efficientnet_forward.10} parent=31 // pred_check_branch
        %1078 = sbr.rel (%p1076) target = $region44
      $region43: #{efficientnet_forward.10} parent=31 // pred_region
        %s1079 = smul.u32 32, %s19
      $region44: #{efficientnet_forward.10} parent=31 // pred_fallthru
        _
    $region32: #{efficientnet_forward.10} parent=5 // pred_fallthru
      _
    %p1080 = scmp.le.s32.totalorder 2, %s9
    // Predicated region
    $region45: #{efficientnet_forward.10} parent=5 // pred_check
      %p1081 = pneg %p1080
    $region46: #{efficientnet_forward.10} parent=5 // pred_check_branch
      %1083 = sbr.rel (%p1081) target = $region48
    $region47: #{efficientnet_forward.10} parent=5 // pred_region
      %s1084 = ssub.s32 %s9, 2
      // Predicated region
      $region49: #{efficientnet_forward.10} parent=47 // pred_check
        %p1085 = pneg %p141
      $region50: #{efficientnet_forward.10} parent=47 // pred_check_branch
        %1087 = sbr.rel (%p1085) target = $region52
      $region51: #{efficientnet_forward.10} parent=47 // pred_region
        %s1088 = smul.u32 32, %s22
        %p1089 = scmp.lt.s32.totalorder %s1088, 63
        %s1090 = scalar_select %p1089, %s1088, 63
        %p1091 = scmp.lt.s32.totalorder %s23, 0
        %s1092 = scalar_select %p1091, %s23, 0
        %s1093 = sadd.s32 %s1092, %s1090
        %s1094 = smul.addr %s1093, 8
        %s1095 = scalar_lea.vmem %s3, %s1094
      $region52: #{efficientnet_forward.10} parent=47 // pred_fallthru
        _
    $region48: #{efficientnet_forward.10} parent=5 // pred_fallthru
      _
  $region6: #{efficientnet_forward.10} parent=0 // loop_footer
    %s13 = sadd.s32 1, %s9
  $region7: #{efficientnet_forward.10} parent=0 // loop_footer_branch
    %8 = sbr.rel target = $region3
  $region8: #{efficientnet_forward.10} parent=0 // loop_exit
    _

// kernel: efficientnet_forward.11
$region0: #{efficientnet_forward.11}
  #allocation0 [shape = 'u32[]', space=smem, size = 0x4, offset = 0x4, fixed_abs, tag = 'smem constant byte address 0x4 - core index']
  #allocation1 [shape = 'u32[144,128]{1,0:T(1,128)}', space=vmem, size = 0x12000, scoped, tag = 'internal scratch']
  %s0 = inlined_call_operand.vmem [shape: bf16[512,32], index: 0, kind: input, shape index: {}]
  %s1 = inlined_call_operand.vmem [shape: bf16[32,128], index: 1, kind: input, shape index: {}]
  %s2 = inlined_call_operand.vmem [shape: f32[1,128], index: 2, kind: input, shape index: {}]
  %s3 = inlined_call_operand.vmem [shape: f32[512,128], index: 3, kind: output, shape index: {}]
  %s4 = sld [smem:[#allocation0]]
  $region53: #{efficientnet_forward.11} parent=0
    _
  %s6 = ssub.s32 1, %s4
  %s7 = scalar_select 0, %s6, %s4
  loop: start=0, step=1, limit=4
  $region2: #{efficientnet_forward.11} parent=0 // loop_pre_header
    _
  $region3: #{efficientnet_forward.11} parent=0 // loop_header
    %s9 = sphi 0, %s13
    %p10 = scmp.ge.s32.totalorder %s9, 4
    %s16 = sphi 0, %s35
    %s17 = sphi 0, %s31
    %s18 = sphi 0, %s27
    %s19 = sphi 0, %s16
    %s20 = sphi 0, %s17
    %s21 = sphi 0, %s18
    %s22 = sphi 0, %s19
    %s23 = sphi 0, %s20
    %s24 = sphi 0, %s21
    %s40 = sphi 0, %s42
    %s43 = sphi 0, %s40
    %s44 = sphi 0, %s43
    %s60 = sphi 0, %s44
    %s68 = sphi 0, %s70
    %s71 = sphi 0, %s68
    %s72 = sphi 0, %s71
    %s88 = sphi 0, %s72
    %s94 = sphi 0, %s96
    %s97 = sphi 0, %s94
    %s98 = sphi 0, %s97
    %s114 = sphi 0, %s98
    %s122 = sphi 0, %s124
    %s125 = sphi 0, %s122
    %s126 = sphi 0, %s125
    %s142 = sphi 0, %s126
  $region4: #{efficientnet_forward.11} parent=0 // loop_header_branch
    %12 = sbr.rel (%p10) target = $region8
  $region5: #{efficientnet_forward.11} parent=0 // loop_body
    %s14 = ssub.s32 %s9, 1
    %s15 = ssub.s32 %s9, 2
    %s25 = sadd.s32 1, %s18
    %p26 = scmp.ge.s32.totalorder %s25, 1
    %s27 = scalar_select %p26, 0, %s25
    %s28 = sadd.s32 1, %s17
    %s29 = scalar_select %p26, %s28, %s17
    %p30 = scmp.ge.s32.totalorder %s29, 1
    %s31 = scalar_select %p30, 0, %s29
    %s32 = sadd.s32 1, %s16
    %s33 = scalar_select %p30, %s32, %s16
    %p34 = scmp.ge.s32.totalorder %s33, 2
    %s35 = scalar_select %p34, 0, %s33
    %s36 = ssub.s32 %s16, %s35
    %s37 = ssub.s32 %s18, %s27
    %s38 = sor.u32 %s36, %s37
    %p39 = scmp.eq.s32.totalorder %s38, 0
    %s41 = sadd.s32 %s40, 1
    %s42 = scalar_select %p39, %s40, %s41
    %p45 = pneg %p39
    %p46 = scmp.eq.s32.totalorder %s9, 1
    %p47 = por %p45, %p46
    %p48 = scmp.ne.s32.totalorder %s40, %s43
    %p49 = scmp.eq.s32.totalorder %s9, 0
    %p50 = por %p48, %p49
    %p51 = scmp.ne.s32.totalorder %s40, %s43
    %p52 = scmp.eq.s32.totalorder %s14, 1
    %p53 = por %p51, %p52
    %p54 = scmp.ne.s32.totalorder %s43, %s44
    %p55 = scmp.eq.s32.totalorder %s14, 0
    %p56 = por %p54, %p55
    %p57 = scmp.ne.s32.totalorder %s43, %s44
    %p58 = scmp.eq.s32.totalorder %s15, 1
    %p59 = por %p57, %p58
    %p61 = scmp.ne.s32.totalorder %s44, %s60
    %p62 = scmp.eq.s32.totalorder %s15, 0
    %p63 = por %p61, %p62
    %s64 = ssub.s32 %s18, %s27
    %s65 = ssub.s32 %s17, %s31
    %s66 = sor.u32 %s64, %s65
    %p67 = scmp.eq.s32.totalorder %s66, 0
    %s69 = sadd.s32 %s68, 1
    %s70 = scalar_select %p67, %s68, %s69
    %p73 = pneg %p67
    %p74 = scmp.eq.s32.totalorder %s9, 1
    %p75 = por %p73, %p74
    %p76 = scmp.ne.s32.totalorder %s68, %s71
    %p77 = scmp.eq.s32.totalorder %s9, 0
    %p78 = por %p76, %p77
    %p79 = scmp.ne.s32.totalorder %s68, %s71
    %p80 = scmp.eq.s32.totalorder %s14, 1
    %p81 = por %p79, %p80
    %p82 = scmp.ne.s32.totalorder %s71, %s72
    %p83 = scmp.eq.s32.totalorder %s14, 0
    %p84 = por %p82, %p83
    %p85 = scmp.ne.s32.totalorder %s71, %s72
    %p86 = scmp.eq.s32.totalorder %s15, 1
    %p87 = por %p85, %p86
    %p89 = scmp.ne.s32.totalorder %s72, %s88
    %p90 = scmp.eq.s32.totalorder %s15, 0
    %p91 = por %p89, %p90
    %s92 = ssub.s32 %s17, %s31
    %p93 = scmp.eq.s32.totalorder %s92, 0
    %s95 = sadd.s32 %s94, 1
    %s96 = scalar_select %p93, %s94, %s95
    %p99 = pneg %p93
    %p100 = scmp.eq.s32.totalorder %s9, 1
    %p101 = por %p99, %p100
    %p102 = scmp.ne.s32.totalorder %s94, %s97
    %p103 = scmp.eq.s32.totalorder %s9, 0
    %p104 = por %p102, %p103
    %p105 = scmp.ne.s32.totalorder %s94, %s97
    %p106 = scmp.eq.s32.totalorder %s14, 1
    %p107 = por %p105, %p106
    %p108 = scmp.ne.s32.totalorder %s97, %s98
    %p109 = scmp.eq.s32.totalorder %s14, 0
    %p110 = por %p108, %p109
    %p111 = scmp.ne.s32.totalorder %s97, %s98
    %p112 = scmp.eq.s32.totalorder %s15, 1
    %p113 = por %p111, %p112
    %p115 = scmp.ne.s32.totalorder %s98, %s114
    %p116 = scmp.eq.s32.totalorder %s15, 0
    %p117 = por %p115, %p116
    %s118 = ssub.s32 %s16, %s35
    %s119 = ssub.s32 %s17, %s31
    %s120 = sor.u32 %s118, %s119
    %p121 = scmp.eq.s32.totalorder %s120, 0
    %s123 = sadd.s32 %s122, 1
    %s124 = scalar_select %p121, %s122, %s123
    %p127 = pneg %p121
    %p128 = scmp.eq.s32.totalorder %s9, 1
    %p129 = por %p127, %p128
    %p130 = scmp.ne.s32.totalorder %s122, %s125
    %p131 = scmp.eq.s32.totalorder %s9, 0
    %p132 = por %p130, %p131
    %p133 = scmp.ne.s32.totalorder %s122, %s125
    %p134 = scmp.eq.s32.totalorder %s14, 1
    %p135 = por %p133, %p134
    %p136 = scmp.ne.s32.totalorder %s125, %s126
    %p137 = scmp.eq.s32.totalorder %s14, 0
    %p138 = por %p136, %p137
    %p139 = scmp.ne.s32.totalorder %s125, %s126
    %p140 = scmp.eq.s32.totalorder %s15, 1
    %p141 = por %p139, %p140
    %p143 = scmp.ne.s32.totalorder %s126, %s142
    %p144 = scmp.eq.s32.totalorder %s15, 0
    %p145 = por %p143, %p144
    %p146 = scmp.le.s32.totalorder 1, %s9
    %p147 = scmp.lt.s32.totalorder %s9, 3
    %p148 = pnand %p146, %p147
    %p149 = pneg %p148
    // Predicated region
    $region9: #{efficientnet_forward.11} parent=5 // pred_check
      _
    $region10: #{efficientnet_forward.11} parent=5 // pred_check_branch
      %151 = sbr.rel (%p148) target = $region12
    $region11: #{efficientnet_forward.11} parent=5 // pred_region
      %s152 = ssub.s32 %s9, 1
      // Predicated region
      $region13: #{efficientnet_forward.11} parent=11 // pred_check
        %p153 = pneg %p84
      $region14: #{efficientnet_forward.11} parent=11 // pred_check_branch
        %155 = sbr.rel (%p153) target = $region16
      $region15: #{efficientnet_forward.11} parent=11 // pred_region
        %s156 = smul.u32 4, %s21
        %p157 = scmp.lt.s32.totalorder %s156, 3
        %s158 = scalar_select %p157, %s156, 3
        %p159 = scmp.lt.s32.totalorder %s20, 0
        %s160 = scalar_select %p159, %s20, 0
        %s161 = sadd.s32 %s160, %s158
        %s162 = smul.addr %s161, 4
        %s163 = scalar_lea.vmem %s1, %s162
        %s164 = smul.u32 4, %s21
      $region16: #{efficientnet_forward.11} parent=11 // pred_fallthru
        _
      // Predicated region
      $region17: #{efficientnet_forward.11} parent=11 // pred_check
        %p165 = pneg %p110
      $region18: #{efficientnet_forward.11} parent=11 // pred_check_branch
        %167 = sbr.rel (%p165) target = $region20
      $region19: #{efficientnet_forward.11} parent=11 // pred_region
        %p168 = scmp.lt.s32.totalorder %s20, 0
        %s169 = scalar_select %p168, %s20, 0
        %s170 = scalar_lea.vmem %s2, %s169
      $region20: #{efficientnet_forward.11} parent=11 // pred_fallthru
        _
    $region12: #{efficientnet_forward.11} parent=5 // pred_fallthru
      _
    %p171 = scmp.lt.s32.totalorder %s9, 2
    // Predicated region
    $region21: #{efficientnet_forward.11} parent=5 // pred_check
      %p172 = pneg %p171
    $region22: #{efficientnet_forward.11} parent=5 // pred_check_branch
      %174 = sbr.rel (%p172) target = $region24
    $region23: #{efficientnet_forward.11} parent=5 // pred_region
      // Predicated region
      $region25: #{efficientnet_forward.11} parent=23 // pred_check
        %p175 = pneg %p50
      $region26: #{efficientnet_forward.11} parent=23 // pred_check_branch
        %177 = sbr.rel (%p175) target = $region28
      $region27: #{efficientnet_forward.11} parent=23 // pred_region
        %s178 = smul.u32 32, %s16
        %p179 = scmp.lt.s32.totalorder %s178, 63
        %s180 = scalar_select %p179, %s178, 63
        %p181 = scmp.lt.s32.totalorder %s18, 0
        %s182 = scalar_select %p181, %s18, 0
        %s183 = sadd.s32 %s182, %s180
        %s184 = smul.addr %s183, 4
        %s185 = scalar_lea.vmem %s0, %s184
        %s186 = smul.u32 32, %s16
      $region28: #{efficientnet_forward.11} parent=23 // pred_fallthru
        _
    $region24: #{efficientnet_forward.11} parent=5 // pred_fallthru
      _
    %p187 = scmp.le.s32.totalorder 1, %s9
    %p188 = scmp.lt.s32.totalorder %s9, 3
    %p189 = pnand %p187, %p188
    %p190 = pneg %p189
    // Predicated region
    $region29: #{efficientnet_forward.11} parent=5 // pred_check
      _
    $region30: #{efficientnet_forward.11} parent=5 // pred_check_branch
      %192 = sbr.rel (%p189) target = $region32
    $region31: #{efficientnet_forward.11} parent=5 // pred_region
      %s193 = ssub.s32 %s9, 1
      %s194 = smul.u32 32, %s19
      %p195 = scmp.lt.s32.totalorder %s194, 63
      %s196 = scalar_select %p195, %s194, 63
      %p197 = scmp.lt.s32.totalorder %s21, 0
      %s198 = scalar_select %p197, %s21, 0
      %s199 = sadd.s32 %s198, %s196
      %s200 = smul.addr %s199, 4
      %s201 = scalar_lea.vmem %s0, %s200
      %p202 = pneg %p56
      %p203 = pneg %p53
      %s204 = smul.u32 4, %s21
      %p205 = scmp.lt.s32.totalorder %s204, 3
      %s206 = scalar_select %p205, %s204, 3
      %p207 = scmp.lt.s32.totalorder %s20, 0
      %s208 = scalar_select %p207, %s20, 0
      %s209 = sadd.s32 %s208, %s206
      %s210 = smul.addr %s209, 4
      %s211 = scalar_lea.vmem %s1, %s210
      %p212 = pneg %p84
      %p213 = pneg %p81
      %p214 = scmp.lt.s32.totalorder %s20, 0
      %s215 = scalar_select %p214, %s20, 0
      %s216 = scalar_lea.vmem %s2, %s215
      %p217 = pneg %p110
      %p218 = pneg %p107
      %p219 = pneg %p138
      %p220 = pneg %p135
      %s221 = smul.u32 32, %s19
      %p222 = scmp.lt.s32.totalorder %s221, 63
      %s223 = scalar_select %p222, %s221, 63
      %p224 = scmp.lt.s32.totalorder %s20, 0
      %s225 = scalar_select %p224, %s20, 0
      %s226 = sadd.s32 %s225, %s223
      %s227 = smul.addr %s226, 8
      %s228 = scalar_lea.vmem %s3, %s227
      %s229 = smul.u32 32, %s19
      %p230 = scmp.lt.s32.totalorder %s229, 63
      %s231 = scalar_select %p230, %s229, 63
      %p232 = scmp.lt.s32.totalorder %s21, 0
      %s233 = scalar_select %p232, %s21, 0
      %s234 = sadd.s32 %s233, %s231
      %s235 = smul.addr %s234, 4
      %s236 = scalar_lea.vmem %s0, %s235
      %s237 = smul.u32 32, %s19
      %s238 = smul.u32 4, %s21
      %p239 = scmp.lt.s32.totalorder %s238, 3
      %s240 = scalar_select %p239, %s238, 3
      %p241 = scmp.lt.s32.totalorder %s20, 0
      %s242 = scalar_select %p241, %s20, 0
      %s243 = sadd.s32 %s242, %s240
      %s244 = smul.addr %s243, 4
      %s245 = scalar_lea.vmem %s1, %s244
      %s246 = smul.u32 4, %s21
      %p247 = scmp.lt.s32.totalorder %s20, 0
      %s248 = scalar_select %p247, %s20, 0
      %s249 = scalar_lea.vmem %s2, %s248
      %s250 = smul.u32 32, %s19
      %p251 = scmp.lt.s32.totalorder %s250, 63
      %s252 = scalar_select %p251, %s250, 63
      %p253 = scmp.lt.s32.totalorder %s20, 0
      %s254 = scalar_select %p253, %s20, 0
      %s255 = sadd.s32 %s254, %s252
      %s256 = smul.addr %s255, 8
      %s257 = scalar_lea.vmem %s3, %s256
      %s258 = smul.u32 32, %s19
      %p260 = scmp.eq.s32.totalorder %s21, 0
      // Predicated region
      $region33: #{efficientnet_forward.11} parent=31 // pred_check
        %p261 = pneg %p260
      $region34: #{efficientnet_forward.11} parent=31 // pred_check_branch
        %263 = sbr.rel (%p261) target = $region36
      $region35: #{efficientnet_forward.11} parent=31 // pred_region
        %264 = vst [vmem:[%s257] sm:$0xff] 0.0
        %265 = vst [vmem:[%s257 + $0x8] sm:$0xff] 0.0
        %266 = vst [vmem:[%s257 + $0x10] sm:$0xff] 0.0
        %267 = vst [vmem:[%s257 + $0x18] sm:$0xff] 0.0
        %268 = vst [vmem:[%s257 + $0x20] sm:$0xff] 0.0
        %269 = vst [vmem:[%s257 + $0x28] sm:$0xff] 0.0
        %270 = vst [vmem:[%s257 + $0x30] sm:$0xff] 0.0
        %271 = vst [vmem:[%s257 + $0x38] sm:$0xff] 0.0
        %272 = vst [vmem:[%s257 + $0x40] sm:$0xff] 0.0
        %273 = vst [vmem:[%s257 + $0x48] sm:$0xff] 0.0
        %274 = vst [vmem:[%s257 + $0x50] sm:$0xff] 0.0
        %275 = vst [vmem:[%s257 + $0x58] sm:$0xff] 0.0
        %276 = vst [vmem:[%s257 + $0x60] sm:$0xff] 0.0
        %277 = vst [vmem:[%s257 + $0x68] sm:$0xff] 0.0
        %278 = vst [vmem:[%s257 + $0x70] sm:$0xff] 0.0
        %279 = vst [vmem:[%s257 + $0x78] sm:$0xff] 0.0
        %280 = vst [vmem:[%s257 + $0x80] sm:$0xff] 0.0
        %281 = vst [vmem:[%s257 + $0x88] sm:$0xff] 0.0
        %282 = vst [vmem:[%s257 + $0x90] sm:$0xff] 0.0
        %283 = vst [vmem:[%s257 + $0x98] sm:$0xff] 0.0
        %284 = vst [vmem:[%s257 + $0xa0] sm:$0xff] 0.0
        %285 = vst [vmem:[%s257 + $0xa8] sm:$0xff] 0.0
        %286 = vst [vmem:[%s257 + $0xb0] sm:$0xff] 0.0
        %287 = vst [vmem:[%s257 + $0xb8] sm:$0xff] 0.0
        %288 = vst [vmem:[%s257 + $0xc0] sm:$0xff] 0.0
        %289 = vst [vmem:[%s257 + $0xc8] sm:$0xff] 0.0
        %290 = vst [vmem:[%s257 + $0xd0] sm:$0xff] 0.0
        %291 = vst [vmem:[%s257 + $0xd8] sm:$0xff] 0.0
        %292 = vst [vmem:[%s257 + $0xe0] sm:$0xff] 0.0
        %293 = vst [vmem:[%s257 + $0xe8] sm:$0xff] 0.0
        %294 = vst [vmem:[%s257 + $0xf0] sm:$0xff] 0.0
        %295 = vst [vmem:[%s257 + $0xf8] sm:$0xff] 0.0
      $region36: #{efficientnet_forward.11} parent=31 // pred_fallthru
        _
      %v296 = vld [vmem:[%s236] sm:$0xf]
      %v297 = vld [vmem:[%s236 + $0x4] sm:$0xf]
      %v298 = vld [vmem:[%s236 + $0x8] sm:$0xf]
      %v299 = vld [vmem:[%s236 + $0xc] sm:$0xf]
      %v300 = vld [vmem:[%s236 + $0x10] sm:$0xf]
      %v301 = vld [vmem:[%s236 + $0x14] sm:$0xf]
      %v302 = vld [vmem:[%s236 + $0x18] sm:$0xf]
      %v303 = vld [vmem:[%s236 + $0x1c] sm:$0xf]
      %v304 = vld [vmem:[%s236 + $0x20] sm:$0xf]
      %v305 = vld [vmem:[%s236 + $0x24] sm:$0xf]
      %v306 = vld [vmem:[%s236 + $0x28] sm:$0xf]
      %v307 = vld [vmem:[%s236 + $0x2c] sm:$0xf]
      %v308 = vld [vmem:[%s236 + $0x30] sm:$0xf]
      %v309 = vld [vmem:[%s236 + $0x34] sm:$0xf]
      %v310 = vld [vmem:[%s236 + $0x38] sm:$0xf]
      %v311 = vld [vmem:[%s236 + $0x3c] sm:$0xf]
      %v312 = vld [vmem:[%s236 + $0x40] sm:$0xf]
      %v313 = vld [vmem:[%s236 + $0x44] sm:$0xf]
      %v314 = vld [vmem:[%s236 + $0x48] sm:$0xf]
      %v315 = vld [vmem:[%s236 + $0x4c] sm:$0xf]
      %v316 = vld [vmem:[%s236 + $0x50] sm:$0xf]
      %v317 = vld [vmem:[%s236 + $0x54] sm:$0xf]
      %v318 = vld [vmem:[%s236 + $0x58] sm:$0xf]
      %v319 = vld [vmem:[%s236 + $0x5c] sm:$0xf]
      %v320 = vld [vmem:[%s236 + $0x60] sm:$0xf]
      %v321 = vld [vmem:[%s236 + $0x64] sm:$0xf]
      %v322 = vld [vmem:[%s236 + $0x68] sm:$0xf]
      %v323 = vld [vmem:[%s236 + $0x6c] sm:$0xf]
      %v324 = vld [vmem:[%s236 + $0x70] sm:$0xf]
      %v325 = vld [vmem:[%s236 + $0x74] sm:$0xf]
      %v326 = vld [vmem:[%s236 + $0x78] sm:$0xf]
      %v327 = vld [vmem:[%s236 + $0x7c] sm:$0xf]
      %v328 = vld [vmem:[%s257] sm:$0xff]
      %v329 = vld [vmem:[%s257 + $0x8] sm:$0xff]
      %v330 = vld [vmem:[%s257 + $0x10] sm:$0xff]
      %v331 = vld [vmem:[%s257 + $0x18] sm:$0xff]
      %v332 = vld [vmem:[%s257 + $0x20] sm:$0xff]
      %v333 = vld [vmem:[%s257 + $0x28] sm:$0xff]
      %v334 = vld [vmem:[%s257 + $0x30] sm:$0xff]
      %v335 = vld [vmem:[%s257 + $0x38] sm:$0xff]
      %v336 = vld [vmem:[%s257 + $0x40] sm:$0xff]
      %v337 = vld [vmem:[%s257 + $0x48] sm:$0xff]
      %v338 = vld [vmem:[%s257 + $0x50] sm:$0xff]
      %v339 = vld [vmem:[%s257 + $0x58] sm:$0xff]
      %v340 = vld [vmem:[%s257 + $0x60] sm:$0xff]
      %v341 = vld [vmem:[%s257 + $0x68] sm:$0xff]
      %v342 = vld [vmem:[%s257 + $0x70] sm:$0xff]
      %v343 = vld [vmem:[%s257 + $0x78] sm:$0xff]
      %v344 = vld [vmem:[%s257 + $0x80] sm:$0xff]
      %v345 = vld [vmem:[%s257 + $0x88] sm:$0xff]
      %v346 = vld [vmem:[%s257 + $0x90] sm:$0xff]
      %v347 = vld [vmem:[%s257 + $0x98] sm:$0xff]
      %v348 = vld [vmem:[%s257 + $0xa0] sm:$0xff]
      %v349 = vld [vmem:[%s257 + $0xa8] sm:$0xff]
      %v350 = vld [vmem:[%s257 + $0xb0] sm:$0xff]
      %v351 = vld [vmem:[%s257 + $0xb8] sm:$0xff]
      %v352 = vld [vmem:[%s257 + $0xc0] sm:$0xff]
      %v353 = vld [vmem:[%s257 + $0xc8] sm:$0xff]
      %v354 = vld [vmem:[%s257 + $0xd0] sm:$0xff]
      %v355 = vld [vmem:[%s257 + $0xd8] sm:$0xff]
      %v356 = vld [vmem:[%s257 + $0xe0] sm:$0xff]
      %v357 = vld [vmem:[%s257 + $0xe8] sm:$0xff]
      %v358 = vld [vmem:[%s257 + $0xf0] sm:$0xff]
      %v359 = vld [vmem:[%s257 + $0xf8] sm:$0xff]
      %v360 = vld [vmem:[%s245] sm:$0xf]
      %v361 = vld [vmem:[%s245 + $0x4] sm:$0xf]
      %v362 = vld [vmem:[%s245 + $0x8] sm:$0xf]
      %v363 = vld [vmem:[%s245 + $0xc] sm:$0xf]
      %v396 = vunpack.c.l.b16 %v296
      %v397 = vunpack.c.l.b16 %v297
      %v398 = vunpack.c.l.b16 %v298
      %v399 = vunpack.c.l.b16 %v299
      %v400 = vunpack.c.l.b16 %v300
      %v401 = vunpack.c.l.b16 %v301
      %v402 = vunpack.c.l.b16 %v302
      %v403 = vunpack.c.l.b16 %v303
      %v404 = vunpack.c.l.b16 %v304
      %v405 = vunpack.c.l.b16 %v305
      %v406 = vunpack.c.l.b16 %v306
      %v407 = vunpack.c.l.b16 %v307
      %v408 = vunpack.c.l.b16 %v308
      %v409 = vunpack.c.l.b16 %v309
      %v410 = vunpack.c.l.b16 %v310
      %v411 = vunpack.c.l.b16 %v311
      %v412 = vunpack.c.l.b16 %v312
      %v413 = vunpack.c.l.b16 %v313
      %v414 = vunpack.c.l.b16 %v314
      %v415 = vunpack.c.l.b16 %v315
      %v416 = vunpack.c.l.b16 %v316
      %v417 = vunpack.c.l.b16 %v317
      %v418 = vunpack.c.l.b16 %v318
      %v419 = vunpack.c.l.b16 %v319
      %v420 = vunpack.c.l.b16 %v320
      %v421 = vunpack.c.l.b16 %v321
      %v422 = vunpack.c.l.b16 %v322
      %v423 = vunpack.c.l.b16 %v323
      %v424 = vunpack.c.l.b16 %v324
      %v425 = vunpack.c.l.b16 %v325
      %v426 = vunpack.c.l.b16 %v326
      %v427 = vunpack.c.l.b16 %v327
      %v428 = vpack.c.b16 %v397, %v396
      %v429 = vpack.c.b16 %v399, %v398
      %v430 = vpack.c.b16 %v401, %v400
      %v431 = vpack.c.b16 %v403, %v402
      %v432 = vpack.c.b16 %v405, %v404
      %v433 = vpack.c.b16 %v407, %v406
      %v434 = vpack.c.b16 %v409, %v408
      %v435 = vpack.c.b16 %v411, %v410
      %v436 = vpack.c.b16 %v413, %v412
      %v437 = vpack.c.b16 %v415, %v414
      %v438 = vpack.c.b16 %v417, %v416
      %v439 = vpack.c.b16 %v419, %v418
      %v440 = vpack.c.b16 %v421, %v420
      %v441 = vpack.c.b16 %v423, %v422
      %v442 = vpack.c.b16 %v425, %v424
      %v443 = vpack.c.b16 %v427, %v426
      %v448 = vunpack.c.l.b16 %v360
      %v449 = vunpack.c.l.b16 %v361
      %v450 = vunpack.c.l.b16 %v362
      %v451 = vunpack.c.l.b16 %v363
      %v452 = vpack.c.b16 %v449, %v448
      %v453 = vpack.c.b16 %v451, %v450
      %vm456 = vcmask 261120
      %v458 = vsel %vm456, %v428, 0
      %v461 = vsel %vm456, %v429, 0
      %v464 = vsel %vm456, %v430, 0
      %v467 = vsel %vm456, %v431, 0
      %v470 = vsel %vm456, %v432, 0
      %v473 = vsel %vm456, %v433, 0
      %v476 = vsel %vm456, %v434, 0
      %v479 = vsel %vm456, %v435, 0
      %v482 = vsel %vm456, %v436, 0
      %v485 = vsel %vm456, %v437, 0
      %v488 = vsel %vm456, %v438, 0
      %v491 = vsel %vm456, %v439, 0
      %v494 = vsel %vm456, %v440, 0
      %v497 = vsel %vm456, %v441, 0
      %v500 = vsel %vm456, %v442, 0
      %v503 = vsel %vm456, %v443, 0
      %505 = vmatprep.subr.bf16.mxu0 0
      %506 = vmatpush1.bf16.msra.mxu0 %v452
      %507 = vmatprep.subr.bf16.mxu0 0
      %508 = vmatpush1.bf16.msra.mxu0 %v453
      %509 = vmatprep.subr.bf16.mxu0 0
      %510 = vmatpush1.bf16.msra.mxu0 0
      %511 = vmatprep.subr.bf16.mxu0 0
      %512 = vmatpush1.bf16.msra.mxu0 0
      %513 = vmatprep.subr.bf16.mxu0 0
      %514 = vmatpush1.bf16.msra.mxu0 0
      %515 = vmatprep.subr.bf16.mxu0 0
      %516 = vmatpush1.bf16.msra.mxu0 0
      %517 = vmatprep.subr.bf16.mxu0 0
      %518 = vmatpush1.bf16.msra.mxu0 0
      %519 = vmatprep.subr.bf16.mxu0 0
      %520 = vmatpush1.bf16.msra.mxu0 0
      %521 = vmatprep.subr.bf16.mxu0 0
      %522 = vmatpush1.bf16.msra.mxu0 0
      %523 = vmatprep.subr.bf16.mxu0 0
      %524 = vmatpush1.bf16.msra.mxu0 0
      %525 = vmatprep.subr.bf16.mxu0 0
      %526 = vmatpush1.bf16.msra.mxu0 0
      %527 = vmatprep.subr.bf16.mxu0 0
      %528 = vmatpush1.bf16.msra.mxu0 0
      %529 = vmatprep.subr.bf16.mxu0 0
      %530 = vmatpush1.bf16.msra.mxu0 0
      %531 = vmatprep.subr.bf16.mxu0 0
      %532 = vmatpush1.bf16.msra.mxu0 0
      %533 = vmatprep.subr.bf16.mxu0 0
      %534 = vmatpush1.bf16.msra.mxu0 0
      %535 = vmatprep.subr.bf16.mxu0 0
      %536 = vmatpush1.bf16.msra.mxu0 0
      %537 = vmatprep.mubr.bf16.mxu0 0
      %538 = vmatmul.mubr.bf16.gmra.mrb[0].mxu0 %v458
      %v539 = vpop.f32.mrb[0].mxu0
      %v540 = vadd.f32 0.0, %v539
      %v541 = vpop.f32.mrb[0].mxu0
      %v542 = vpop.f32.mrb[0].mxu0
      %v543 = vadd.f32 0.0, %v542
      %v544 = vpop.f32.mrb[0].mxu0
      %545 = vmatprep.mubr.bf16.mxu0 0
      %546 = vmatmul.mubr.bf16.gmra.mrb[0].mxu0 %v461
      %v547 = vpop.f32.mrb[0].mxu0
      %v548 = vadd.f32 0.0, %v547
      %v549 = vpop.f32.mrb[0].mxu0
      %v550 = vpop.f32.mrb[0].mxu0
      %v551 = vadd.f32 0.0, %v550
      %v552 = vpop.f32.mrb[0].mxu0
      %553 = vmatprep.mubr.bf16.mxu0 0
      %554 = vmatmul.mubr.bf16.gmra.mrb[0].mxu0 %v464
      %v555 = vpop.f32.mrb[0].mxu0
      %v556 = vadd.f32 0.0, %v555
      %v557 = vpop.f32.mrb[0].mxu0
      %v558 = vpop.f32.mrb[0].mxu0
      %v559 = vadd.f32 0.0, %v558
      %v560 = vpop.f32.mrb[0].mxu0
      %561 = vmatprep.mubr.bf16.mxu0 0
      %562 = vmatmul.mubr.bf16.gmra.mrb[0].mxu0 %v467
      %v563 = vpop.f32.mrb[0].mxu0
      %v564 = vadd.f32 0.0, %v563
      %v565 = vpop.f32.mrb[0].mxu0
      %v566 = vpop.f32.mrb[0].mxu0
      %v567 = vadd.f32 0.0, %v566
      %v568 = vpop.f32.mrb[0].mxu0
      %569 = vmatprep.mubr.bf16.mxu0 0
      %570 = vmatmul.mubr.bf16.gmra.mrb[0].mxu0 %v470
      %v571 = vpop.f32.mrb[0].mxu0
      %v572 = vadd.f32 0.0, %v571
      %v573 = vpop.f32.mrb[0].mxu0
      %v574 = vpop.f32.mrb[0].mxu0
      %v575 = vadd.f32 0.0, %v574
      %v576 = vpop.f32.mrb[0].mxu0
      %577 = vmatprep.mubr.bf16.mxu0 0
      %578 = vmatmul.mubr.bf16.gmra.mrb[0].mxu0 %v473
      %v579 = vpop.f32.mrb[0].mxu0
      %v580 = vadd.f32 0.0, %v579
      %v581 = vpop.f32.mrb[0].mxu0
      %v582 = vpop.f32.mrb[0].mxu0
      %v583 = vadd.f32 0.0, %v582
      %v584 = vpop.f32.mrb[0].mxu0
      %585 = vmatprep.mubr.bf16.mxu0 0
      %586 = vmatmul.mubr.bf16.gmra.mrb[0].mxu0 %v476
      %v587 = vpop.f32.mrb[0].mxu0
      %v588 = vadd.f32 0.0, %v587
      %v589 = vpop.f32.mrb[0].mxu0
      %v590 = vpop.f32.mrb[0].mxu0
      %v591 = vadd.f32 0.0, %v590
      %v592 = vpop.f32.mrb[0].mxu0
      %593 = vmatprep.mubr.bf16.mxu0 0
      %594 = vmatmul.mubr.bf16.gmra.mrb[0].mxu0 %v479
      %v595 = vpop.f32.mrb[0].mxu0
      %v596 = vadd.f32 0.0, %v595
      %v597 = vpop.f32.mrb[0].mxu0
      %v598 = vpop.f32.mrb[0].mxu0
      %v599 = vadd.f32 0.0, %v598
      %v600 = vpop.f32.mrb[0].mxu0
      %601 = vmatprep.mubr.bf16.mxu0 0
      %602 = vmatmul.mubr.bf16.gmra.mrb[0].mxu0 %v482
      %v603 = vpop.f32.mrb[0].mxu0
      %v604 = vadd.f32 0.0, %v603
      %v605 = vpop.f32.mrb[0].mxu0
      %v606 = vpop.f32.mrb[0].mxu0
      %v607 = vadd.f32 0.0, %v606
      %v608 = vpop.f32.mrb[0].mxu0
      %609 = vmatprep.mubr.bf16.mxu0 0
      %610 = vmatmul.mubr.bf16.gmra.mrb[0].mxu0 %v485
      %v611 = vpop.f32.mrb[0].mxu0
      %v612 = vadd.f32 0.0, %v611
      %v613 = vpop.f32.mrb[0].mxu0
      %v614 = vpop.f32.mrb[0].mxu0
      %v615 = vadd.f32 0.0, %v614
      %v616 = vpop.f32.mrb[0].mxu0
      %617 = vmatprep.mubr.bf16.mxu0 0
      %618 = vmatmul.mubr.bf16.gmra.mrb[0].mxu0 %v488
      %v619 = vpop.f32.mrb[0].mxu0
      %v620 = vadd.f32 0.0, %v619
      %v621 = vpop.f32.mrb[0].mxu0
      %v622 = vpop.f32.mrb[0].mxu0
      %v623 = vadd.f32 0.0, %v622
      %v624 = vpop.f32.mrb[0].mxu0
      %625 = vmatprep.mubr.bf16.mxu0 0
      %626 = vmatmul.mubr.bf16.gmra.mrb[0].mxu0 %v491
      %v627 = vpop.f32.mrb[0].mxu0
      %v628 = vadd.f32 0.0, %v627
      %v629 = vpop.f32.mrb[0].mxu0
      %v630 = vpop.f32.mrb[0].mxu0
      %v631 = vadd.f32 0.0, %v630
      %v632 = vpop.f32.mrb[0].mxu0
      %633 = vmatprep.mubr.bf16.mxu0 0
      %634 = vmatmul.mubr.bf16.gmra.mrb[0].mxu0 %v494
      %v635 = vpop.f32.mrb[0].mxu0
      %v636 = vadd.f32 0.0, %v635
      %v637 = vpop.f32.mrb[0].mxu0
      %v638 = vpop.f32.mrb[0].mxu0
      %v639 = vadd.f32 0.0, %v638
      %v640 = vpop.f32.mrb[0].mxu0
      %641 = vmatprep.mubr.bf16.mxu0 0
      %642 = vmatmul.mubr.bf16.gmra.mrb[0].mxu0 %v497
      %v643 = vpop.f32.mrb[0].mxu0
      %v644 = vadd.f32 0.0, %v643
      %v645 = vpop.f32.mrb[0].mxu0
      %v646 = vpop.f32.mrb[0].mxu0
      %v647 = vadd.f32 0.0, %v646
      %v648 = vpop.f32.mrb[0].mxu0
      %649 = vmatprep.mubr.bf16.mxu0 0
      %650 = vmatmul.mubr.bf16.gmra.mrb[0].mxu0 %v500
      %v651 = vpop.f32.mrb[0].mxu0
      %v652 = vadd.f32 0.0, %v651
      %v653 = vpop.f32.mrb[0].mxu0
      %v654 = vpop.f32.mrb[0].mxu0
      %v655 = vadd.f32 0.0, %v654
      %v656 = vpop.f32.mrb[0].mxu0
      %657 = vmatprep.mubr.bf16.mxu0 0
      %658 = vmatmul.mubr.bf16.gmra.mrb[0].mxu0 %v503
      %v659 = vpop.f32.mrb[0].mxu0
      %v660 = vadd.f32 0.0, %v659
      %v661 = vpop.f32.mrb[0].mxu0
      %v662 = vpop.f32.mrb[0].mxu0
      %v663 = vadd.f32 0.0, %v662
      %v664 = vpop.f32.mrb[0].mxu0
      %665 = vdwg.mxu0
      %v666 = vadd.f32 %v328, %v540
      %v667 = vadd.f32 %v329, %v543
      %v668 = vadd.f32 %v330, %v548
      %v669 = vadd.f32 %v331, %v551
      %v670 = vadd.f32 %v332, %v556
      %v671 = vadd.f32 %v333, %v559
      %v672 = vadd.f32 %v334, %v564
      %v673 = vadd.f32 %v335, %v567
      %v674 = vadd.f32 %v336, %v572
      %v675 = vadd.f32 %v337, %v575
      %v676 = vadd.f32 %v338, %v580
      %v677 = vadd.f32 %v339, %v583
      %v678 = vadd.f32 %v340, %v588
      %v679 = vadd.f32 %v341, %v591
      %v680 = vadd.f32 %v342, %v596
      %v681 = vadd.f32 %v343, %v599
      %v682 = vadd.f32 %v344, %v604
      %v683 = vadd.f32 %v345, %v607
      %v684 = vadd.f32 %v346, %v612
      %v685 = vadd.f32 %v347, %v615
      %v686 = vadd.f32 %v348, %v620
      %v687 = vadd.f32 %v349, %v623
      %v688 = vadd.f32 %v350, %v628
      %v689 = vadd.f32 %v351, %v631
      %v690 = vadd.f32 %v352, %v636
      %v691 = vadd.f32 %v353, %v639
      %v692 = vadd.f32 %v354, %v644
      %v693 = vadd.f32 %v355, %v647
      %v694 = vadd.f32 %v356, %v652
      %v695 = vadd.f32 %v357, %v655
      %v696 = vadd.f32 %v358, %v660
      %v697 = vadd.f32 %v359, %v663
      %698 = vst [vmem:[%s257] sm:$0xff] %v666
      %699 = vst [vmem:[%s257 + $0x8] sm:$0xff] %v667
      %700 = vst [vmem:[%s257 + $0x10] sm:$0xff] %v668
      %701 = vst [vmem:[%s257 + $0x18] sm:$0xff] %v669
      %702 = vst [vmem:[%s257 + $0x20] sm:$0xff] %v670
      %703 = vst [vmem:[%s257 + $0x28] sm:$0xff] %v671
      %704 = vst [vmem:[%s257 + $0x30] sm:$0xff] %v672
      %705 = vst [vmem:[%s257 + $0x38] sm:$0xff] %v673
      %706 = vst [vmem:[%s257 + $0x40] sm:$0xff] %v674
      %707 = vst [vmem:[%s257 + $0x48] sm:$0xff] %v675
      %708 = vst [vmem:[%s257 + $0x50] sm:$0xff] %v676
      %709 = vst [vmem:[%s257 + $0x58] sm:$0xff] %v677
      %710 = vst [vmem:[%s257 + $0x60] sm:$0xff] %v678
      %711 = vst [vmem:[%s257 + $0x68] sm:$0xff] %v679
      %712 = vst [vmem:[%s257 + $0x70] sm:$0xff] %v680
      %713 = vst [vmem:[%s257 + $0x78] sm:$0xff] %v681
      %714 = vst [vmem:[%s257 + $0x80] sm:$0xff] %v682
      %715 = vst [vmem:[%s257 + $0x88] sm:$0xff] %v683
      %716 = vst [vmem:[%s257 + $0x90] sm:$0xff] %v684
      %717 = vst [vmem:[%s257 + $0x98] sm:$0xff] %v685
      %718 = vst [vmem:[%s257 + $0xa0] sm:$0xff] %v686
      %719 = vst [vmem:[%s257 + $0xa8] sm:$0xff] %v687
      %720 = vst [vmem:[%s257 + $0xb0] sm:$0xff] %v688
      %721 = vst [vmem:[%s257 + $0xb8] sm:$0xff] %v689
      %722 = vst [vmem:[%s257 + $0xc0] sm:$0xff] %v690
      %723 = vst [vmem:[%s257 + $0xc8] sm:$0xff] %v691
      %724 = vst [vmem:[%s257 + $0xd0] sm:$0xff] %v692
      %725 = vst [vmem:[%s257 + $0xd8] sm:$0xff] %v693
      %726 = vst [vmem:[%s257 + $0xe0] sm:$0xff] %v694
      %727 = vst [vmem:[%s257 + $0xe8] sm:$0xff] %v695
      %728 = vst [vmem:[%s257 + $0xf0] sm:$0xff] %v696
      %729 = vst [vmem:[%s257 + $0xf8] sm:$0xff] %v697
      // Predicated region
      $region37: #{efficientnet_forward.11} parent=31 // pred_check
        %p730 = pneg %p260
      $region38: #{efficientnet_forward.11} parent=31 // pred_check_branch
        %732 = sbr.rel (%p730) target = $region40
      $region39: #{efficientnet_forward.11} parent=31 // pred_region
        %v733 = vld [vmem:[%s257] sm:$0xff]
        %v734 = vld [vmem:[%s257 + $0x8] sm:$0xff]
        %v735 = vld [vmem:[%s257 + $0x10] sm:$0xff]
        %v736 = vld [vmem:[%s257 + $0x18] sm:$0xff]
        %v737 = vld [vmem:[%s257 + $0x20] sm:$0xff]
        %v738 = vld [vmem:[%s257 + $0x28] sm:$0xff]
        %v739 = vld [vmem:[%s257 + $0x30] sm:$0xff]
        %v740 = vld [vmem:[%s257 + $0x38] sm:$0xff]
        %v741 = vld [vmem:[%s257 + $0x40] sm:$0xff]
        %v742 = vld [vmem:[%s257 + $0x48] sm:$0xff]
        %v743 = vld [vmem:[%s257 + $0x50] sm:$0xff]
        %v744 = vld [vmem:[%s257 + $0x58] sm:$0xff]
        %v745 = vld [vmem:[%s257 + $0x60] sm:$0xff]
        %v746 = vld [vmem:[%s257 + $0x68] sm:$0xff]
        %v747 = vld [vmem:[%s257 + $0x70] sm:$0xff]
        %v748 = vld [vmem:[%s257 + $0x78] sm:$0xff]
        %v749 = vld [vmem:[%s257 + $0x80] sm:$0xff]
        %v750 = vld [vmem:[%s257 + $0x88] sm:$0xff]
        %v751 = vld [vmem:[%s257 + $0x90] sm:$0xff]
        %v752 = vld [vmem:[%s257 + $0x98] sm:$0xff]
        %v753 = vld [vmem:[%s257 + $0xa0] sm:$0xff]
        %v754 = vld [vmem:[%s257 + $0xa8] sm:$0xff]
        %v755 = vld [vmem:[%s257 + $0xb0] sm:$0xff]
        %v756 = vld [vmem:[%s257 + $0xb8] sm:$0xff]
        %v757 = vld [vmem:[%s257 + $0xc0] sm:$0xff]
        %v758 = vld [vmem:[%s257 + $0xc8] sm:$0xff]
        %v759 = vld [vmem:[%s257 + $0xd0] sm:$0xff]
        %v760 = vld [vmem:[%s257 + $0xd8] sm:$0xff]
        %v761 = vld [vmem:[%s257 + $0xe0] sm:$0xff]
        %v762 = vld [vmem:[%s257 + $0xe8] sm:$0xff]
        %v763 = vld [vmem:[%s257 + $0xf0] sm:$0xff]
        %v764 = vld [vmem:[%s257 + $0xf8] sm:$0xff]
        %v765 = vld [vmem:[%s249] sm:$0x1]
        %v767 = vlaneseq
        %v768 = vshrl.u32 %v767, 7
        %v769 = vsub.s32 0, %v768
        %v770 = vrot.slane %v765, %v769
        %v772 = vadd.f32 %v733, %v770
        %v773 = vadd.f32 %v734, %v770
        %v774 = vadd.f32 %v735, %v770
        %v775 = vadd.f32 %v736, %v770
        %v776 = vadd.f32 %v737, %v770
        %v777 = vadd.f32 %v738, %v770
        %v778 = vadd.f32 %v739, %v770
        %v779 = vadd.f32 %v740, %v770
        %v780 = vadd.f32 %v741, %v770
        %v781 = vadd.f32 %v742, %v770
        %v782 = vadd.f32 %v743, %v770
        %v783 = vadd.f32 %v744, %v770
        %v784 = vadd.f32 %v745, %v770
        %v785 = vadd.f32 %v746, %v770
        %v786 = vadd.f32 %v747, %v770
        %v787 = vadd.f32 %v748, %v770
        %v788 = vadd.f32 %v749, %v770
        %v789 = vadd.f32 %v750, %v770
        %v790 = vadd.f32 %v751, %v770
        %v791 = vadd.f32 %v752, %v770
        %v792 = vadd.f32 %v753, %v770
        %v793 = vadd.f32 %v754, %v770
        %v794 = vadd.f32 %v755, %v770
        %v795 = vadd.f32 %v756, %v770
        %v796 = vadd.f32 %v757, %v770
        %v797 = vadd.f32 %v758, %v770
        %v798 = vadd.f32 %v759, %v770
        %v799 = vadd.f32 %v760, %v770
        %v800 = vadd.f32 %v761, %v770
        %v801 = vadd.f32 %v762, %v770
        %v802 = vadd.f32 %v763, %v770
        %v803 = vadd.f32 %v764, %v770
        %v804 = vxor.u32 %v772, 2147483648
        %v805 = vxor.u32 %v773, 2147483648
        %v806 = vxor.u32 %v774, 2147483648
        %v807 = vxor.u32 %v775, 2147483648
        %v808 = vxor.u32 %v776, 2147483648
        %v809 = vxor.u32 %v777, 2147483648
        %v810 = vxor.u32 %v778, 2147483648
        %v811 = vxor.u32 %v779, 2147483648
        %v812 = vxor.u32 %v780, 2147483648
        %v813 = vxor.u32 %v781, 2147483648
        %v814 = vxor.u32 %v782, 2147483648
        %v815 = vxor.u32 %v783, 2147483648
        %v816 = vxor.u32 %v784, 2147483648
        %v817 = vxor.u32 %v785, 2147483648
        %v818 = vxor.u32 %v786, 2147483648
        %v819 = vxor.u32 %v787, 2147483648
        %v820 = vxor.u32 %v788, 2147483648
        %v821 = vxor.u32 %v789, 2147483648
        %v822 = vxor.u32 %v790, 2147483648
        %v823 = vxor.u32 %v791, 2147483648
        %v824 = vxor.u32 %v792, 2147483648
        %v825 = vxor.u32 %v793, 2147483648
        %v826 = vxor.u32 %v794, 2147483648
        %v827 = vxor.u32 %v795, 2147483648
        %v828 = vxor.u32 %v796, 2147483648
        %v829 = vxor.u32 %v797, 2147483648
        %v830 = vxor.u32 %v798, 2147483648
        %v831 = vxor.u32 %v799, 2147483648
        %v832 = vxor.u32 %v800, 2147483648
        %v833 = vxor.u32 %v801, 2147483648
        %v834 = vxor.u32 %v802, 2147483648
        %v835 = vxor.u32 %v803, 2147483648
        %v836 = vmul.f32 %v804, 1.442695
        %v837 = vpow.pop %v836
        %v838 = vmul.f32 %v805, 1.442695
        %v839 = vpow.pop %v838
        %v840 = vmul.f32 %v806, 1.442695
        %v841 = vpow.pop %v840
        %v842 = vmul.f32 %v807, 1.442695
        %v843 = vpow.pop %v842
        %v844 = vmul.f32 %v808, 1.442695
        %v845 = vpow.pop %v844
        %v846 = vmul.f32 %v809, 1.442695
        %v847 = vpow.pop %v846
        %v848 = vmul.f32 %v810, 1.442695
        %v849 = vpow.pop %v848
        %v850 = vmul.f32 %v811, 1.442695
        %v851 = vpow.pop %v850
        %v852 = vmul.f32 %v812, 1.442695
        %v853 = vpow.pop %v852
        %v854 = vmul.f32 %v813, 1.442695
        %v855 = vpow.pop %v854
        %v856 = vmul.f32 %v814, 1.442695
        %v857 = vpow.pop %v856
        %v858 = vmul.f32 %v815, 1.442695
        %v859 = vpow.pop %v858
        %v860 = vmul.f32 %v816, 1.442695
        %v861 = vpow.pop %v860
        %v862 = vmul.f32 %v817, 1.442695
        %v863 = vpow.pop %v862
        %v864 = vmul.f32 %v818, 1.442695
        %v865 = vpow.pop %v864
        %v866 = vmul.f32 %v819, 1.442695
        %v867 = vpow.pop %v866
        %v868 = vmul.f32 %v820, 1.442695
        %v869 = vpow.pop %v868
        %v870 = vmul.f32 %v821, 1.442695
        %v871 = vpow.pop %v870
        %v872 = vmul.f32 %v822, 1.442695
        %v873 = vpow.pop %v872
        %v874 = vmul.f32 %v823, 1.442695
        %v875 = vpow.pop %v874
        %v876 = vmul.f32 %v824, 1.442695
        %v877 = vpow.pop %v876
        %v878 = vmul.f32 %v825, 1.442695
        %v879 = vpow.pop %v878
        %v880 = vmul.f32 %v826, 1.442695
        %v881 = vpow.pop %v880
        %v882 = vmul.f32 %v827, 1.442695
        %v883 = vpow.pop %v882
        %v884 = vmul.f32 %v828, 1.442695
        %v885 = vpow.pop %v884
        %v886 = vmul.f32 %v829, 1.442695
        %v887 = vpow.pop %v886
        %v888 = vmul.f32 %v830, 1.442695
        %v889 = vpow.pop %v888
        %v890 = vmul.f32 %v831, 1.442695
        %v891 = vpow.pop %v890
        %v892 = vmul.f32 %v832, 1.442695
        %v893 = vpow.pop %v892
        %v894 = vmul.f32 %v833, 1.442695
        %v895 = vpow.pop %v894
        %v896 = vmul.f32 %v834, 1.442695
        %v897 = vpow.pop %v896
        %v898 = vmul.f32 %v835, 1.442695
        %v899 = vpow.pop %v898
        %v900 = vadd.f32 %v837, 1.0
        %v901 = vadd.f32 %v839, 1.0
        %v902 = vadd.f32 %v841, 1.0
        %v903 = vadd.f32 %v843, 1.0
        %v904 = vadd.f32 %v845, 1.0
        %v905 = vadd.f32 %v847, 1.0
        %v906 = vadd.f32 %v849, 1.0
        %v907 = vadd.f32 %v851, 1.0
        %v908 = vadd.f32 %v853, 1.0
        %v909 = vadd.f32 %v855, 1.0
        %v910 = vadd.f32 %v857, 1.0
        %v911 = vadd.f32 %v859, 1.0
        %v912 = vadd.f32 %v861, 1.0
        %v913 = vadd.f32 %v863, 1.0
        %v914 = vadd.f32 %v865, 1.0
        %v915 = vadd.f32 %v867, 1.0
        %v916 = vadd.f32 %v869, 1.0
        %v917 = vadd.f32 %v871, 1.0
        %v918 = vadd.f32 %v873, 1.0
        %v919 = vadd.f32 %v875, 1.0
        %v920 = vadd.f32 %v877, 1.0
        %v921 = vadd.f32 %v879, 1.0
        %v922 = vadd.f32 %v881, 1.0
        %v923 = vadd.f32 %v883, 1.0
        %v924 = vadd.f32 %v885, 1.0
        %v925 = vadd.f32 %v887, 1.0
        %v926 = vadd.f32 %v889, 1.0
        %v927 = vadd.f32 %v891, 1.0
        %v928 = vadd.f32 %v893, 1.0
        %v929 = vadd.f32 %v895, 1.0
        %v930 = vadd.f32 %v897, 1.0
        %v931 = vadd.f32 %v899, 1.0
        %v932 = vrcp.pop %v900
        %v933 = vmul.f32 1.0, %v932
        %v934 = vrcp.pop %v901
        %v935 = vmul.f32 1.0, %v934
        %v936 = vrcp.pop %v902
        %v937 = vmul.f32 1.0, %v936
        %v938 = vrcp.pop %v903
        %v939 = vmul.f32 1.0, %v938
        %v940 = vrcp.pop %v904
        %v941 = vmul.f32 1.0, %v940
        %v942 = vrcp.pop %v905
        %v943 = vmul.f32 1.0, %v942
        %v944 = vrcp.pop %v906
        %v945 = vmul.f32 1.0, %v944
        %v946 = vrcp.pop %v907
        %v947 = vmul.f32 1.0, %v946
        %v948 = vrcp.pop %v908
        %v949 = vmul.f32 1.0, %v948
        %v950 = vrcp.pop %v909
        %v951 = vmul.f32 1.0, %v950
        %v952 = vrcp.pop %v910
        %v953 = vmul.f32 1.0, %v952
        %v954 = vrcp.pop %v911
        %v955 = vmul.f32 1.0, %v954
        %v956 = vrcp.pop %v912
        %v957 = vmul.f32 1.0, %v956
        %v958 = vrcp.pop %v913
        %v959 = vmul.f32 1.0, %v958
        %v960 = vrcp.pop %v914
        %v961 = vmul.f32 1.0, %v960
        %v962 = vrcp.pop %v915
        %v963 = vmul.f32 1.0, %v962
        %v964 = vrcp.pop %v916
        %v965 = vmul.f32 1.0, %v964
        %v966 = vrcp.pop %v917
        %v967 = vmul.f32 1.0, %v966
        %v968 = vrcp.pop %v918
        %v969 = vmul.f32 1.0, %v968
        %v970 = vrcp.pop %v919
        %v971 = vmul.f32 1.0, %v970
        %v972 = vrcp.pop %v920
        %v973 = vmul.f32 1.0, %v972
        %v974 = vrcp.pop %v921
        %v975 = vmul.f32 1.0, %v974
        %v976 = vrcp.pop %v922
        %v977 = vmul.f32 1.0, %v976
        %v978 = vrcp.pop %v923
        %v979 = vmul.f32 1.0, %v978
        %v980 = vrcp.pop %v924
        %v981 = vmul.f32 1.0, %v980
        %v982 = vrcp.pop %v925
        %v983 = vmul.f32 1.0, %v982
        %v984 = vrcp.pop %v926
        %v985 = vmul.f32 1.0, %v984
        %v986 = vrcp.pop %v927
        %v987 = vmul.f32 1.0, %v986
        %v988 = vrcp.pop %v928
        %v989 = vmul.f32 1.0, %v988
        %v990 = vrcp.pop %v929
        %v991 = vmul.f32 1.0, %v990
        %v992 = vrcp.pop %v930
        %v993 = vmul.f32 1.0, %v992
        %v994 = vrcp.pop %v931
        %v995 = vmul.f32 1.0, %v994
        %v996 = vmul.f32 %v772, %v933
        %v997 = vmul.f32 %v773, %v935
        %v998 = vmul.f32 %v774, %v937
        %v999 = vmul.f32 %v775, %v939
        %v1000 = vmul.f32 %v776, %v941
        %v1001 = vmul.f32 %v777, %v943
        %v1002 = vmul.f32 %v778, %v945
        %v1003 = vmul.f32 %v779, %v947
        %v1004 = vmul.f32 %v780, %v949
        %v1005 = vmul.f32 %v781, %v951
        %v1006 = vmul.f32 %v782, %v953
        %v1007 = vmul.f32 %v783, %v955
        %v1008 = vmul.f32 %v784, %v957
        %v1009 = vmul.f32 %v785, %v959
        %v1010 = vmul.f32 %v786, %v961
        %v1011 = vmul.f32 %v787, %v963
        %v1012 = vmul.f32 %v788, %v965
        %v1013 = vmul.f32 %v789, %v967
        %v1014 = vmul.f32 %v790, %v969
        %v1015 = vmul.f32 %v791, %v971
        %v1016 = vmul.f32 %v792, %v973
        %v1017 = vmul.f32 %v793, %v975
        %v1018 = vmul.f32 %v794, %v977
        %v1019 = vmul.f32 %v795, %v979
        %v1020 = vmul.f32 %v796, %v981
        %v1021 = vmul.f32 %v797, %v983
        %v1022 = vmul.f32 %v798, %v985
        %v1023 = vmul.f32 %v799, %v987
        %v1024 = vmul.f32 %v800, %v989
        %v1025 = vmul.f32 %v801, %v991
        %v1026 = vmul.f32 %v802, %v993
        %v1027 = vmul.f32 %v803, %v995
        %1028 = vst [vmem:[%s257] sm:$0xff] %v996
        %1029 = vst [vmem:[%s257 + $0x8] sm:$0xff] %v997
        %1030 = vst [vmem:[%s257 + $0x10] sm:$0xff] %v998
        %1031 = vst [vmem:[%s257 + $0x18] sm:$0xff] %v999
        %1032 = vst [vmem:[%s257 + $0x20] sm:$0xff] %v1000
        %1033 = vst [vmem:[%s257 + $0x28] sm:$0xff] %v1001
        %1034 = vst [vmem:[%s257 + $0x30] sm:$0xff] %v1002
        %1035 = vst [vmem:[%s257 + $0x38] sm:$0xff] %v1003
        %1036 = vst [vmem:[%s257 + $0x40] sm:$0xff] %v1004
        %1037 = vst [vmem:[%s257 + $0x48] sm:$0xff] %v1005
        %1038 = vst [vmem:[%s257 + $0x50] sm:$0xff] %v1006
        %1039 = vst [vmem:[%s257 + $0x58] sm:$0xff] %v1007
        %1040 = vst [vmem:[%s257 + $0x60] sm:$0xff] %v1008
        %1041 = vst [vmem:[%s257 + $0x68] sm:$0xff] %v1009
        %1042 = vst [vmem:[%s257 + $0x70] sm:$0xff] %v1010
        %1043 = vst [vmem:[%s257 + $0x78] sm:$0xff] %v1011
        %1044 = vst [vmem:[%s257 + $0x80] sm:$0xff] %v1012
        %1045 = vst [vmem:[%s257 + $0x88] sm:$0xff] %v1013
        %1046 = vst [vmem:[%s257 + $0x90] sm:$0xff] %v1014
        %1047 = vst [vmem:[%s257 + $0x98] sm:$0xff] %v1015
        %1048 = vst [vmem:[%s257 + $0xa0] sm:$0xff] %v1016
        %1049 = vst [vmem:[%s257 + $0xa8] sm:$0xff] %v1017
        %1050 = vst [vmem:[%s257 + $0xb0] sm:$0xff] %v1018
        %1051 = vst [vmem:[%s257 + $0xb8] sm:$0xff] %v1019
        %1052 = vst [vmem:[%s257 + $0xc0] sm:$0xff] %v1020
        %1053 = vst [vmem:[%s257 + $0xc8] sm:$0xff] %v1021
        %1054 = vst [vmem:[%s257 + $0xd0] sm:$0xff] %v1022
        %1055 = vst [vmem:[%s257 + $0xd8] sm:$0xff] %v1023
        %1056 = vst [vmem:[%s257 + $0xe0] sm:$0xff] %v1024
        %1057 = vst [vmem:[%s257 + $0xe8] sm:$0xff] %v1025
        %1058 = vst [vmem:[%s257 + $0xf0] sm:$0xff] %v1026
        %1059 = vst [vmem:[%s257 + $0xf8] sm:$0xff] %v1027
      $region40: #{efficientnet_forward.11} parent=31 // pred_fallthru
        _
      %s1060 = smul.u32 32, %s19
      %p1061 = scmp.lt.s32.totalorder %s1060, 63
      %s1062 = scalar_select %p1061, %s1060, 63
      %p1063 = scmp.lt.s32.totalorder %s20, 0
      %s1064 = scalar_select %p1063, %s20, 0
      %s1065 = sadd.s32 %s1064, %s1062
      %s1066 = smul.addr %s1065, 8
      %s1067 = scalar_lea.vmem %s3, %s1066
      // Predicated region
      $region41: #{efficientnet_forward.11} parent=31 // pred_check
        %p1068 = pneg %p135
      $region42: #{efficientnet_forward.11} parent=31 // pred_check_branch
        %1070 = sbr.rel (%p1068) target = $region44
      $region43: #{efficientnet_forward.11} parent=31 // pred_region
        %s1071 = smul.u32 32, %s19
      $region44: #{efficientnet_forward.11} parent=31 // pred_fallthru
        _
    $region32: #{efficientnet_forward.11} parent=5 // pred_fallthru
      _
    %p1072 = scmp.le.s32.totalorder 2, %s9
    // Predicated region
    $region45: #{efficientnet_forward.11} parent=5 // pred_check
      %p1073 = pneg %p1072
    $region46: #{efficientnet_forward.11} parent=5 // pred_check_branch
      %1075 = sbr.rel (%p1073) target = $region48
    $region47: #{efficientnet_forward.11} parent=5 // pred_region
      %s1076 = ssub.s32 %s9, 2
      // Predicated region
      $region49: #{efficientnet_forward.11} parent=47 // pred_check
        %p1077 = pneg %p141
      $region50: #{efficientnet_forward.11} parent=47 // pred_check_branch
        %1079 = sbr.rel (%p1077) target = $region52
      $region51: #{efficientnet_forward.11} parent=47 // pred_region
        %s1080 = smul.u32 32, %s22
        %p1081 = scmp.lt.s32.totalorder %s1080, 63
        %s1082 = scalar_select %p1081, %s1080, 63
        %p1083 = scmp.lt.s32.totalorder %s23, 0
        %s1084 = scalar_select %p1083, %s23, 0
        %s1085 = sadd.s32 %s1084, %s1082
        %s1086 = smul.addr %s1085, 8
        %s1087 = scalar_lea.vmem %s3, %s1086
      $region52: #{efficientnet_forward.11} parent=47 // pred_fallthru
        _
    $region48: #{efficientnet_forward.11} parent=5 // pred_fallthru
      _
  $region6: #{efficientnet_forward.11} parent=0 // loop_footer
    %s13 = sadd.s32 1, %s9
  $region7: #{efficientnet_forward.11} parent=0 // loop_footer_branch
    %8 = sbr.rel target = $region3
  $region8: #{efficientnet_forward.11} parent=0 // loop_exit
    _

// kernel: efficientnet_forward.13
$region0: #{efficientnet_forward.13}
  #allocation0 [shape = 'u32[]', space=smem, size = 0x4, offset = 0x4, fixed_abs, tag = 'smem constant byte address 0x4 - core index']
  #allocation1 [shape = 'u32[144,128]{1,0:T(1,128)}', space=vmem, size = 0x12000, scoped, tag = 'internal scratch']
  %s0 = inlined_call_operand.vmem [shape: bf16[128,128], index: 0, kind: input, shape index: {}]
  %s1 = inlined_call_operand.vmem [shape: bf16[2,1,128], index: 1, kind: input, shape index: {}]
  %s2 = inlined_call_operand.vmem [shape: bf16[128,48], index: 2, kind: input, shape index: {}]
  %s3 = inlined_call_operand.vmem [shape: f32[1,48], index: 3, kind: input, shape index: {}]
  %s4 = inlined_call_operand.vmem [shape: f32[128,48], index: 4, kind: output, shape index: {}]
  %s5 = sld [smem:[#allocation0]]
  $region57: #{efficientnet_forward.13} parent=0
    _
  %s7 = ssub.s32 1, %s5
  %s8 = scalar_select 0, %s7, %s5
  loop: start=0, step=1, limit=4
  $region2: #{efficientnet_forward.13} parent=0 // loop_pre_header
    _
  $region3: #{efficientnet_forward.13} parent=0 // loop_header
    %s10 = sphi 0, %s14
    %p11 = scmp.ge.s32.totalorder %s10, 4
    %s17 = sphi 0, %s36
    %s18 = sphi 0, %s32
    %s19 = sphi 0, %s28
    %s20 = sphi 0, %s17
    %s21 = sphi 0, %s18
    %s22 = sphi 0, %s19
    %s23 = sphi 0, %s20
    %s24 = sphi 0, %s21
    %s25 = sphi 0, %s22
    %s41 = sphi 0, %s43
    %s44 = sphi 0, %s41
    %s45 = sphi 0, %s44
    %s61 = sphi 0, %s45
    %s69 = sphi 0, %s71
    %s72 = sphi 0, %s69
    %s73 = sphi 0, %s72
    %s89 = sphi 0, %s73
    %s97 = sphi 0, %s99
    %s100 = sphi 0, %s97
    %s101 = sphi 0, %s100
    %s117 = sphi 0, %s101
    %s123 = sphi 0, %s125
    %s126 = sphi 0, %s123
    %s127 = sphi 0, %s126
    %s143 = sphi 0, %s127
    %s151 = sphi 0, %s153
    %s154 = sphi 0, %s151
    %s155 = sphi 0, %s154
    %s171 = sphi 0, %s155
  $region4: #{efficientnet_forward.13} parent=0 // loop_header_branch
    %13 = sbr.rel (%p11) target = $region8
  $region5: #{efficientnet_forward.13} parent=0 // loop_body
    %s15 = ssub.s32 %s10, 1
    %s16 = ssub.s32 %s10, 2
    %s26 = sadd.s32 1, %s19
    %p27 = scmp.ge.s32.totalorder %s26, 1
    %s28 = scalar_select %p27, 0, %s26
    %s29 = sadd.s32 1, %s18
    %s30 = scalar_select %p27, %s29, %s18
    %p31 = scmp.ge.s32.totalorder %s30, 1
    %s32 = scalar_select %p31, 0, %s30
    %s33 = sadd.s32 1, %s17
    %s34 = scalar_select %p31, %s33, %s17
    %p35 = scmp.ge.s32.totalorder %s34, 2
    %s36 = scalar_select %p35, 0, %s34
    %s37 = ssub.s32 %s17, %s36
    %s38 = ssub.s32 %s19, %s28
    %s39 = sor.u32 %s37, %s38
    %p40 = scmp.eq.s32.totalorder %s39, 0
    %s42 = sadd.s32 %s41, 1
    %s43 = scalar_select %p40, %s41, %s42
    %p46 = pneg %p40
    %p47 = scmp.eq.s32.totalorder %s10, 1
    %p48 = por %p46, %p47
    %p49 = scmp.ne.s32.totalorder %s41, %s44
    %p50 = scmp.eq.s32.totalorder %s10, 0
    %p51 = por %p49, %p50
    %p52 = scmp.ne.s32.totalorder %s41, %s44
    %p53 = scmp.eq.s32.totalorder %s15, 1
    %p54 = por %p52, %p53
    %p55 = scmp.ne.s32.totalorder %s44, %s45
    %p56 = scmp.eq.s32.totalorder %s15, 0
    %p57 = por %p55, %p56
    %p58 = scmp.ne.s32.totalorder %s44, %s45
    %p59 = scmp.eq.s32.totalorder %s16, 1
    %p60 = por %p58, %p59
    %p62 = scmp.ne.s32.totalorder %s45, %s61
    %p63 = scmp.eq.s32.totalorder %s16, 0
    %p64 = por %p62, %p63
    %s65 = ssub.s32 %s17, %s36
    %s66 = ssub.s32 %s19, %s28
    %s67 = sor.u32 %s65, %s66
    %p68 = scmp.eq.s32.totalorder %s67, 0
    %s70 = sadd.s32 %s69, 1
    %s71 = scalar_select %p68, %s69, %s70
    %p74 = pneg %p68
    %p75 = scmp.eq.s32.totalorder %s10, 1
    %p76 = por %p74, %p75
    %p77 = scmp.ne.s32.totalorder %s69, %s72
    %p78 = scmp.eq.s32.totalorder %s10, 0
    %p79 = por %p77, %p78
    %p80 = scmp.ne.s32.totalorder %s69, %s72
    %p81 = scmp.eq.s32.totalorder %s15, 1
    %p82 = por %p80, %p81
    %p83 = scmp.ne.s32.totalorder %s72, %s73
    %p84 = scmp.eq.s32.totalorder %s15, 0
    %p85 = por %p83, %p84
    %p86 = scmp.ne.s32.totalorder %s72, %s73
    %p87 = scmp.eq.s32.totalorder %s16, 1
    %p88 = por %p86, %p87
    %p90 = scmp.ne.s32.totalorder %s73, %s89
    %p91 = scmp.eq.s32.totalorder %s16, 0
    %p92 = por %p90, %p91
    %s93 = ssub.s32 %s19, %s28
    %s94 = ssub.s32 %s18, %s32
    %s95 = sor.u32 %s93, %s94
    %p96 = scmp.eq.s32.totalorder %s95, 0
    %s98 = sadd.s32 %s97, 1
    %s99 = scalar_select %p96, %s97, %s98
    %p102 = pneg %p96
    %p103 = scmp.eq.s32.totalorder %s10, 1
    %p104 = por %p102, %p103
    %p105 = scmp.ne.s32.totalorder %s97, %s100
    %p106 = scmp.eq.s32.totalorder %s10, 0
    %p107 = por %p105, %p106
    %p108 = scmp.ne.s32.totalorder %s97, %s100
    %p109 = scmp.eq.s32.totalorder %s15, 1
    %p110 = por %p108, %p109
    %p111 = scmp.ne.s32.totalorder %s100, %s101
    %p112 = scmp.eq.s32.totalorder %s15, 0
    %p113 = por %p111, %p112
    %p114 = scmp.ne.s32.totalorder %s100, %s101
    %p115 = scmp.eq.s32.totalorder %s16, 1
    %p116 = por %p114, %p115
    %p118 = scmp.ne.s32.totalorder %s101, %s117
    %p119 = scmp.eq.s32.totalorder %s16, 0
    %p120 = por %p118, %p119
    %s121 = ssub.s32 %s18, %s32
    %p122 = scmp.eq.s32.totalorder %s121, 0
    %s124 = sadd.s32 %s123, 1
    %s125 = scalar_select %p122, %s123, %s124
    %p128 = pneg %p122
    %p129 = scmp.eq.s32.totalorder %s10, 1
    %p130 = por %p128, %p129
    %p131 = scmp.ne.s32.totalorder %s123, %s126
    %p132 = scmp.eq.s32.totalorder %s10, 0
    %p133 = por %p131, %p132
    %p134 = scmp.ne.s32.totalorder %s123, %s126
    %p135 = scmp.eq.s32.totalorder %s15, 1
    %p136 = por %p134, %p135
    %p137 = scmp.ne.s32.totalorder %s126, %s127
    %p138 = scmp.eq.s32.totalorder %s15, 0
    %p139 = por %p137, %p138
    %p140 = scmp.ne.s32.totalorder %s126, %s127
    %p141 = scmp.eq.s32.totalorder %s16, 1
    %p142 = por %p140, %p141
    %p144 = scmp.ne.s32.totalorder %s127, %s143
    %p145 = scmp.eq.s32.totalorder %s16, 0
    %p146 = por %p144, %p145
    %s147 = ssub.s32 %s17, %s36
    %s148 = ssub.s32 %s18, %s32
    %s149 = sor.u32 %s147, %s148
    %p150 = scmp.eq.s32.totalorder %s149, 0
    %s152 = sadd.s32 %s151, 1
    %s153 = scalar_select %p150, %s151, %s152
    %p156 = pneg %p150
    %p157 = scmp.eq.s32.totalorder %s10, 1
    %p158 = por %p156, %p157
    %p159 = scmp.ne.s32.totalorder %s151, %s154
    %p160 = scmp.eq.s32.totalorder %s10, 0
    %p161 = por %p159, %p160
    %p162 = scmp.ne.s32.totalorder %s151, %s154
    %p163 = scmp.eq.s32.totalorder %s15, 1
    %p164 = por %p162, %p163
    %p165 = scmp.ne.s32.totalorder %s154, %s155
    %p166 = scmp.eq.s32.totalorder %s15, 0
    %p167 = por %p165, %p166
    %p168 = scmp.ne.s32.totalorder %s154, %s155
    %p169 = scmp.eq.s32.totalorder %s16, 1
    %p170 = por %p168, %p169
    %p172 = scmp.ne.s32.totalorder %s155, %s171
    %p173 = scmp.eq.s32.totalorder %s16, 0
    %p174 = por %p172, %p173
    %p175 = scmp.le.s32.totalorder 1, %s10
    %p176 = scmp.lt.s32.totalorder %s10, 3
    %p177 = pnand %p175, %p176
    %p178 = pneg %p177
    // Predicated region
    $region9: #{efficientnet_forward.13} parent=5 // pred_check
      _
    $region10: #{efficientnet_forward.13} parent=5 // pred_check_branch
      %180 = sbr.rel (%p177) target = $region12
    $region11: #{efficientnet_forward.13} parent=5 // pred_region
      %s181 = ssub.s32 %s10, 1
      // Predicated region
      $region13: #{efficientnet_forward.13} parent=11 // pred_check
        %p182 = pneg %p113
      $region14: #{efficientnet_forward.13} parent=11 // pred_check_branch
        %184 = sbr.rel (%p182) target = $region16
      $region15: #{efficientnet_forward.13} parent=11 // pred_region
        %s185 = smul.u32 16, %s22
        %p186 = scmp.lt.s32.totalorder %s185, 15
        %s187 = scalar_select %p186, %s185, 15
        %p188 = scmp.lt.s32.totalorder %s21, 0
        %s189 = scalar_select %p188, %s21, 0
        %s190 = sadd.s32 %s189, %s187
        %s191 = smul.addr %s190, 4
        %s192 = scalar_lea.vmem %s2, %s191
        %s193 = smul.u32 16, %s22
      $region16: #{efficientnet_forward.13} parent=11 // pred_fallthru
        _
      // Predicated region
      $region17: #{efficientnet_forward.13} parent=11 // pred_check
        %p194 = pneg %p139
      $region18: #{efficientnet_forward.13} parent=11 // pred_check_branch
        %196 = sbr.rel (%p194) target = $region20
      $region19: #{efficientnet_forward.13} parent=11 // pred_region
        %p197 = scmp.lt.s32.totalorder %s21, 0
        %s198 = scalar_select %p197, %s21, 0
        %s199 = scalar_lea.vmem %s3, %s198
      $region20: #{efficientnet_forward.13} parent=11 // pred_fallthru
        _
    $region12: #{efficientnet_forward.13} parent=5 // pred_fallthru
      _
    %p200 = scmp.lt.s32.totalorder %s10, 2
    // Predicated region
    $region21: #{efficientnet_forward.13} parent=5 // pred_check
      %p201 = pneg %p200
    $region22: #{efficientnet_forward.13} parent=5 // pred_check_branch
      %203 = sbr.rel (%p201) target = $region24
    $region23: #{efficientnet_forward.13} parent=5 // pred_region
      // Predicated region
      $region25: #{efficientnet_forward.13} parent=23 // pred_check
        %p204 = pneg %p51
      $region26: #{efficientnet_forward.13} parent=23 // pred_check_branch
        %206 = sbr.rel (%p204) target = $region28
      $region27: #{efficientnet_forward.13} parent=23 // pred_region
        %s207 = smul.u32 8, %s17
        %p208 = scmp.lt.s32.totalorder %s207, 15
        %s209 = scalar_select %p208, %s207, 15
        %p210 = scmp.lt.s32.totalorder %s19, 0
        %s211 = scalar_select %p210, %s19, 0
        %s212 = sadd.s32 %s211, %s209
        %s213 = smul.addr %s212, 4
        %s214 = scalar_lea.vmem %s0, %s213
        %s215 = smul.u32 8, %s17
      $region28: #{efficientnet_forward.13} parent=23 // pred_fallthru
        _
      // Predicated region
      $region29: #{efficientnet_forward.13} parent=23 // pred_check
        %p216 = pneg %p79
      $region30: #{efficientnet_forward.13} parent=23 // pred_check_branch
        %218 = sbr.rel (%p216) target = $region32
      $region31: #{efficientnet_forward.13} parent=23 // pred_region
        %p219 = scmp.lt.s32.totalorder %s17, 1
        %s220 = scalar_select %p219, %s17, 1
        %p221 = scmp.lt.s32.totalorder %s19, 0
        %s222 = scalar_select %p221, %s19, 0
        %s223 = sadd.s32 %s222, %s220
        %s224 = scalar_lea.vmem %s1, %s223
      $region32: #{efficientnet_forward.13} parent=23 // pred_fallthru
        _
    $region24: #{efficientnet_forward.13} parent=5 // pred_fallthru
      _
    %p225 = scmp.le.s32.totalorder 1, %s10
    %p226 = scmp.lt.s32.totalorder %s10, 3
    %p227 = pnand %p225, %p226
    %p228 = pneg %p227
    // Predicated region
    $region33: #{efficientnet_forward.13} parent=5 // pred_check
      _
    $region34: #{efficientnet_forward.13} parent=5 // pred_check_branch
      %230 = sbr.rel (%p227) target = $region36
    $region35: #{efficientnet_forward.13} parent=5 // pred_region
      %s231 = ssub.s32 %s10, 1
      %s232 = smul.u32 8, %s20
      %p233 = scmp.lt.s32.totalorder %s232, 15
      %s234 = scalar_select %p233, %s232, 15
      %p235 = scmp.lt.s32.totalorder %s22, 0
      %s236 = scalar_select %p235, %s22, 0
      %s237 = sadd.s32 %s236, %s234
      %s238 = smul.addr %s237, 4
      %s239 = scalar_lea.vmem %s0, %s238
      %p240 = pneg %p57
      %p241 = pneg %p54
      %p242 = scmp.lt.s32.totalorder %s20, 1
      %s243 = scalar_select %p242, %s20, 1
      %p244 = scmp.lt.s32.totalorder %s22, 0
      %s245 = scalar_select %p244, %s22, 0
      %s246 = sadd.s32 %s245, %s243
      %s247 = scalar_lea.vmem %s1, %s246
      %p248 = pneg %p85
      %p249 = pneg %p82
      %s250 = smul.u32 16, %s22
      %p251 = scmp.lt.s32.totalorder %s250, 15
      %s252 = scalar_select %p251, %s250, 15
      %p253 = scmp.lt.s32.totalorder %s21, 0
      %s254 = scalar_select %p253, %s21, 0
      %s255 = sadd.s32 %s254, %s252
      %s256 = smul.addr %s255, 4
      %s257 = scalar_lea.vmem %s2, %s256
      %p258 = pneg %p113
      %p259 = pneg %p110
      %p260 = scmp.lt.s32.totalorder %s21, 0
      %s261 = scalar_select %p260, %s21, 0
      %s262 = scalar_lea.vmem %s3, %s261
      %p263 = pneg %p139
      %p264 = pneg %p136
      %p265 = pneg %p167
      %p266 = pneg %p164
      %s267 = smul.u32 8, %s20
      %p268 = scmp.lt.s32.totalorder %s267, 15
      %s269 = scalar_select %p268, %s267, 15
      %p270 = scmp.lt.s32.totalorder %s21, 0
      %s271 = scalar_select %p270, %s21, 0
      %s272 = sadd.s32 %s271, %s269
      %s273 = smul.addr %s272, 8
      %s274 = scalar_lea.vmem %s4, %s273
      %s275 = smul.u32 8, %s20
      %p276 = scmp.lt.s32.totalorder %s275, 15
      %s277 = scalar_select %p276, %s275, 15
      %p278 = scmp.lt.s32.totalorder %s22, 0
      %s279 = scalar_select %p278, %s22, 0
      %s280 = sadd.s32 %s279, %s277
      %s281 = smul.addr %s280, 4
      %s282 = scalar_lea.vmem %s0, %s281
      %s283 = smul.u32 8, %s20
      %p284 = scmp.lt.s32.totalorder %s20, 1
      %s285 = scalar_select %p284, %s20, 1
      %p286 = scmp.lt.s32.totalorder %s22, 0
      %s287 = scalar_select %p286, %s22, 0
      %s288 = sadd.s32 %s287, %s285
      %s289 = scalar_lea.vmem %s1, %s288
      %s290 = smul.u32 16, %s22
      %p291 = scmp.lt.s32.totalorder %s290, 15
      %s292 = scalar_select %p291, %s290, 15
      %p293 = scmp.lt.s32.totalorder %s21, 0
      %s294 = scalar_select %p293, %s21, 0
      %s295 = sadd.s32 %s294, %s292
      %s296 = smul.addr %s295, 4
      %s297 = scalar_lea.vmem %s2, %s296
      %s298 = smul.u32 16, %s22
      %p299 = scmp.lt.s32.totalorder %s21, 0
      %s300 = scalar_select %p299, %s21, 0
      %s301 = scalar_lea.vmem %s3, %s300
      %s302 = smul.u32 8, %s20
      %p303 = scmp.lt.s32.totalorder %s302, 15
      %s304 = scalar_select %p303, %s302, 15
      %p305 = scmp.lt.s32.totalorder %s21, 0
      %s306 = scalar_select %p305, %s21, 0
      %s307 = sadd.s32 %s306, %s304
      %s308 = smul.addr %s307, 8
      %s309 = scalar_lea.vmem %s4, %s308
      %s310 = smul.u32 8, %s20
      %p312 = scmp.eq.s32.totalorder %s22, 0
      // Predicated region
      $region37: #{efficientnet_forward.13} parent=35 // pred_check
        %p313 = pneg %p312
      $region38: #{efficientnet_forward.13} parent=35 // pred_check_branch
        %315 = sbr.rel (%p313) target = $region40
      $region39: #{efficientnet_forward.13} parent=35 // pred_region
        %vm316 = vcmask 392192
        %317 = vst.msk [vmem:[%s309] sm:$0xff] %vm316, 0.0
        %318 = vst.msk [vmem:[%s309 + $0x8] sm:$0xff] %vm316, 0.0
        %319 = vst.msk [vmem:[%s309 + $0x10] sm:$0xff] %vm316, 0.0
        %320 = vst.msk [vmem:[%s309 + $0x18] sm:$0xff] %vm316, 0.0
        %321 = vst.msk [vmem:[%s309 + $0x20] sm:$0xff] %vm316, 0.0
        %322 = vst.msk [vmem:[%s309 + $0x28] sm:$0xff] %vm316, 0.0
        %323 = vst.msk [vmem:[%s309 + $0x30] sm:$0xff] %vm316, 0.0
        %324 = vst.msk [vmem:[%s309 + $0x38] sm:$0xff] %vm316, 0.0
      $region40: #{efficientnet_forward.13} parent=35 // pred_fallthru
        _
      %v325 = vld [vmem:[%s282] sm:$0xf]
      %v326 = vld [vmem:[%s282 + $0x4] sm:$0xf]
      %v327 = vld [vmem:[%s282 + $0x8] sm:$0xf]
      %v328 = vld [vmem:[%s282 + $0xc] sm:$0xf]
      %v329 = vld [vmem:[%s282 + $0x10] sm:$0xf]
      %v330 = vld [vmem:[%s282 + $0x14] sm:$0xf]
      %v331 = vld [vmem:[%s282 + $0x18] sm:$0xf]
      %v332 = vld [vmem:[%s282 + $0x1c] sm:$0xf]
      %v333 = vld [vmem:[%s289] sm:$0x1]
      %v335 = vpack.i.b16 %v333, %v333
      %v337 = vlaneseq
      %v338 = vshrl.u32 %v337, 7
      %v339 = vsub.s32 0, %v338
      %v340 = vrot.slane %v335, %v339
      %v342 = vunpack.c.l.b16 %v340
      %v343 = vpack.c.b16 %v342, %v342
      %v345 = vmul.bf16 %v325, %v343
      %v346 = vmul.bf16 %v326, %v343
      %v347 = vmul.bf16 %v327, %v343
      %v348 = vmul.bf16 %v328, %v343
      %v349 = vmul.bf16 %v329, %v343
      %v350 = vmul.bf16 %v330, %v343
      %v351 = vmul.bf16 %v331, %v343
      %v352 = vmul.bf16 %v332, %v343
      %v353 = vld [vmem:[%s309] sm:$0xff]
      %v354 = vld [vmem:[%s309 + $0x8] sm:$0xff]
      %v355 = vld [vmem:[%s309 + $0x10] sm:$0xff]
      %v356 = vld [vmem:[%s309 + $0x18] sm:$0xff]
      %v357 = vld [vmem:[%s309 + $0x20] sm:$0xff]
      %v358 = vld [vmem:[%s309 + $0x28] sm:$0xff]
      %v359 = vld [vmem:[%s309 + $0x30] sm:$0xff]
      %v360 = vld [vmem:[%s309 + $0x38] sm:$0xff]
      %v361 = vld [vmem:[%s297] sm:$0xf]
      %v362 = vld [vmem:[%s297 + $0x4] sm:$0xf]
      %v363 = vld [vmem:[%s297 + $0x8] sm:$0xf]
      %v364 = vld [vmem:[%s297 + $0xc] sm:$0xf]
      %v365 = vld [vmem:[%s297 + $0x10] sm:$0xf]
      %v366 = vld [vmem:[%s297 + $0x14] sm:$0xf]
      %v367 = vld [vmem:[%s297 + $0x18] sm:$0xf]
      %v368 = vld [vmem:[%s297 + $0x1c] sm:$0xf]
      %v369 = vld [vmem:[%s297 + $0x20] sm:$0xf]
      %v370 = vld [vmem:[%s297 + $0x24] sm:$0xf]
      %v371 = vld [vmem:[%s297 + $0x28] sm:$0xf]
      %v372 = vld [vmem:[%s297 + $0x2c] sm:$0xf]
      %v373 = vld [vmem:[%s297 + $0x30] sm:$0xf]
      %v374 = vld [vmem:[%s297 + $0x34] sm:$0xf]
      %v375 = vld [vmem:[%s297 + $0x38] sm:$0xf]
      %v376 = vld [vmem:[%s297 + $0x3c] sm:$0xf]
      %v385 = vunpack.c.l.b16 %v345
      %v386 = vunpack.c.l.b16 %v346
      %v387 = vunpack.c.l.b16 %v347
      %v388 = vunpack.c.l.b16 %v348
      %v389 = vunpack.c.l.b16 %v349
      %v390 = vunpack.c.l.b16 %v350
      %v391 = vunpack.c.l.b16 %v351
      %v392 = vunpack.c.l.b16 %v352
      %v393 = vpack.c.b16 %v386, %v385
      %v394 = vpack.c.b16 %v388, %v387
      %v395 = vpack.c.b16 %v390, %v389
      %v396 = vpack.c.b16 %v392, %v391
      %v417 = vunpack.c.l.b16 %v361
      %v418 = vunpack.c.l.b16 %v362
      %v419 = vunpack.c.l.b16 %v363
      %v420 = vunpack.c.l.b16 %v364
      %v421 = vunpack.c.l.b16 %v365
      %v422 = vunpack.c.l.b16 %v366
      %v423 = vunpack.c.l.b16 %v367
      %v424 = vunpack.c.l.b16 %v368
      %v425 = vunpack.c.l.b16 %v369
      %v426 = vunpack.c.l.b16 %v370
      %v427 = vunpack.c.l.b16 %v371
      %v428 = vunpack.c.l.b16 %v372
      %v429 = vunpack.c.l.b16 %v373
      %v430 = vunpack.c.l.b16 %v374
      %v431 = vunpack.c.l.b16 %v375
      %v432 = vunpack.c.l.b16 %v376
      %v433 = vpack.c.b16 %v418, %v417
      %v434 = vpack.c.b16 %v420, %v419
      %v435 = vpack.c.b16 %v422, %v421
      %v436 = vpack.c.b16 %v424, %v423
      %v437 = vpack.c.b16 %v426, %v425
      %v438 = vpack.c.b16 %v428, %v427
      %v439 = vpack.c.b16 %v430, %v429
      %v440 = vpack.c.b16 %v432, %v431
      %449 = vmatprep.subr.bf16.mxu0 0
      %450 = vmatpush1.bf16.msra.mxu0 %v433
      %451 = vmatprep.subr.bf16.mxu0 0
      %452 = vmatpush1.bf16.msra.mxu0 %v434
      %453 = vmatprep.subr.bf16.mxu0 0
      %454 = vmatpush1.bf16.msra.mxu0 %v435
      %455 = vmatprep.subr.bf16.mxu0 0
      %456 = vmatpush1.bf16.msra.mxu0 %v436
      %457 = vmatprep.subr.bf16.mxu0 0
      %458 = vmatpush1.bf16.msra.mxu0 %v437
      %459 = vmatprep.subr.bf16.mxu0 0
      %460 = vmatpush1.bf16.msra.mxu0 %v438
      %461 = vmatprep.subr.bf16.mxu0 0
      %462 = vmatpush1.bf16.msra.mxu0 %v439
      %463 = vmatprep.subr.bf16.mxu0 0
      %464 = vmatpush1.bf16.msra.mxu0 %v440
      %465 = vmatprep.subr.bf16.mxu0 0
      %466 = vmatpush1.bf16.msra.mxu0 0
      %467 = vmatprep.subr.bf16.mxu0 0
      %468 = vmatpush1.bf16.msra.mxu0 0
      %469 = vmatprep.subr.bf16.mxu0 0
      %470 = vmatpush1.bf16.msra.mxu0 0
      %471 = vmatprep.subr.bf16.mxu0 0
      %472 = vmatpush1.bf16.msra.mxu0 0
      %473 = vmatprep.subr.bf16.mxu0 0
      %474 = vmatpush1.bf16.msra.mxu0 0
      %475 = vmatprep.subr.bf16.mxu0 0
      %476 = vmatpush1.bf16.msra.mxu0 0
      %477 = vmatprep.subr.bf16.mxu0 0
      %478 = vmatpush1.bf16.msra.mxu0 0
      %479 = vmatprep.subr.bf16.mxu0 0
      %480 = vmatpush1.bf16.msra.mxu0 0
      %481 = vmatprep.mubr.bf16.mxu0 0
      %482 = vmatmul.mubr.bf16.gmra.mrb[0].mxu0 %v393
      %v483 = vpop.f32.mrb[0].mxu0
      %v484 = vadd.f32 0.0, %v483
      %v485 = vpop.f32.mrb[0].mxu0
      %v486 = vpop.f32.mrb[0].mxu0
      %v487 = vadd.f32 0.0, %v486
      %v488 = vpop.f32.mrb[0].mxu0
      %489 = vmatprep.mubr.bf16.mxu0 0
      %490 = vmatmul.mubr.bf16.gmra.mrb[0].mxu0 %v394
      %v491 = vpop.f32.mrb[0].mxu0
      %v492 = vadd.f32 0.0, %v491
      %v493 = vpop.f32.mrb[0].mxu0
      %v494 = vpop.f32.mrb[0].mxu0
      %v495 = vadd.f32 0.0, %v494
      %v496 = vpop.f32.mrb[0].mxu0
      %497 = vmatprep.mubr.bf16.mxu0 0
      %498 = vmatmul.mubr.bf16.gmra.mrb[0].mxu0 %v395
      %v499 = vpop.f32.mrb[0].mxu0
      %v500 = vadd.f32 0.0, %v499
      %v501 = vpop.f32.mrb[0].mxu0
      %v502 = vpop.f32.mrb[0].mxu0
      %v503 = vadd.f32 0.0, %v502
      %v504 = vpop.f32.mrb[0].mxu0
      %505 = vmatprep.mubr.bf16.mxu0 0
      %506 = vmatmul.mubr.bf16.gmra.mrb[0].mxu0 %v396
      %v507 = vpop.f32.mrb[0].mxu0
      %v508 = vadd.f32 0.0, %v507
      %v509 = vpop.f32.mrb[0].mxu0
      %v510 = vpop.f32.mrb[0].mxu0
      %v511 = vadd.f32 0.0, %v510
      %v512 = vpop.f32.mrb[0].mxu0
      %513 = vdwg.mxu0
      %v514 = vadd.f32 %v353, %v484
      %v515 = vadd.f32 %v354, %v487
      %v516 = vadd.f32 %v355, %v492
      %v517 = vadd.f32 %v356, %v495
      %v518 = vadd.f32 %v357, %v500
      %v519 = vadd.f32 %v358, %v503
      %v520 = vadd.f32 %v359, %v508
      %v521 = vadd.f32 %v360, %v511
      %vm522 = vcmask 392192
      %523 = vst.msk [vmem:[%s309] sm:$0xff] %vm522, %v514
      %524 = vst.msk [vmem:[%s309 + $0x8] sm:$0xff] %vm522, %v515
      %525 = vst.msk [vmem:[%s309 + $0x10] sm:$0xff] %vm522, %v516
      %526 = vst.msk [vmem:[%s309 + $0x18] sm:$0xff] %vm522, %v517
      %527 = vst.msk [vmem:[%s309 + $0x20] sm:$0xff] %vm522, %v518
      %528 = vst.msk [vmem:[%s309 + $0x28] sm:$0xff] %vm522, %v519
      %529 = vst.msk [vmem:[%s309 + $0x30] sm:$0xff] %vm522, %v520
      %530 = vst.msk [vmem:[%s309 + $0x38] sm:$0xff] %vm522, %v521
      // Predicated region
      $region41: #{efficientnet_forward.13} parent=35 // pred_check
        %p531 = pneg %p312
      $region42: #{efficientnet_forward.13} parent=35 // pred_check_branch
        %533 = sbr.rel (%p531) target = $region44
      $region43: #{efficientnet_forward.13} parent=35 // pred_region
        %v534 = vld [vmem:[%s309] sm:$0xff]
        %v535 = vld [vmem:[%s309 + $0x8] sm:$0xff]
        %v536 = vld [vmem:[%s309 + $0x10] sm:$0xff]
        %v537 = vld [vmem:[%s309 + $0x18] sm:$0xff]
        %v538 = vld [vmem:[%s309 + $0x20] sm:$0xff]
        %v539 = vld [vmem:[%s309 + $0x28] sm:$0xff]
        %v540 = vld [vmem:[%s309 + $0x30] sm:$0xff]
        %v541 = vld [vmem:[%s309 + $0x38] sm:$0xff]
        %v542 = vld [vmem:[%s301] sm:$0x1]
        %v544 = vlaneseq
        %v545 = vshrl.u32 %v544, 7
        %v546 = vsub.s32 0, %v545
        %v547 = vrot.slane %v542, %v546
        %v549 = vadd.f32 %v534, %v547
        %v550 = vadd.f32 %v535, %v547
        %v551 = vadd.f32 %v536, %v547
        %v552 = vadd.f32 %v537, %v547
        %v553 = vadd.f32 %v538, %v547
        %v554 = vadd.f32 %v539, %v547
        %v555 = vadd.f32 %v540, %v547
        %v556 = vadd.f32 %v541, %v547
        %557 = vst.msk [vmem:[%s309] sm:$0xff] %vm522, %v549
        %558 = vst.msk [vmem:[%s309 + $0x8] sm:$0xff] %vm522, %v550
        %559 = vst.msk [vmem:[%s309 + $0x10] sm:$0xff] %vm522, %v551
        %560 = vst.msk [vmem:[%s309 + $0x18] sm:$0xff] %vm522, %v552
        %561 = vst.msk [vmem:[%s309 + $0x20] sm:$0xff] %vm522, %v553
        %562 = vst.msk [vmem:[%s309 + $0x28] sm:$0xff] %vm522, %v554
        %563 = vst.msk [vmem:[%s309 + $0x30] sm:$0xff] %vm522, %v555
        %564 = vst.msk [vmem:[%s309 + $0x38] sm:$0xff] %vm522, %v556
      $region44: #{efficientnet_forward.13} parent=35 // pred_fallthru
        _
      %s565 = smul.u32 8, %s20
      %p566 = scmp.lt.s32.totalorder %s565, 15
      %s567 = scalar_select %p566, %s565, 15
      %p568 = scmp.lt.s32.totalorder %s21, 0
      %s569 = scalar_select %p568, %s21, 0
      %s570 = sadd.s32 %s569, %s567
      %s571 = smul.addr %s570, 8
      %s572 = scalar_lea.vmem %s4, %s571
      // Predicated region
      $region45: #{efficientnet_forward.13} parent=35 // pred_check
        %p573 = pneg %p164
      $region46: #{efficientnet_forward.13} parent=35 // pred_check_branch
        %575 = sbr.rel (%p573) target = $region48
      $region47: #{efficientnet_forward.13} parent=35 // pred_region
        %s576 = smul.u32 8, %s20
      $region48: #{efficientnet_forward.13} parent=35 // pred_fallthru
        _
    $region36: #{efficientnet_forward.13} parent=5 // pred_fallthru
      _
    %p577 = scmp.le.s32.totalorder 2, %s10
    // Predicated region
    $region49: #{efficientnet_forward.13} parent=5 // pred_check
      %p578 = pneg %p577
    $region50: #{efficientnet_forward.13} parent=5 // pred_check_branch
      %580 = sbr.rel (%p578) target = $region52
    $region51: #{efficientnet_forward.13} parent=5 // pred_region
      %s581 = ssub.s32 %s10, 2
      // Predicated region
      $region53: #{efficientnet_forward.13} parent=51 // pred_check
        %p582 = pneg %p170
      $region54: #{efficientnet_forward.13} parent=51 // pred_check_branch
        %584 = sbr.rel (%p582) target = $region56
      $region55: #{efficientnet_forward.13} parent=51 // pred_region
        %s585 = smul.u32 8, %s23
        %p586 = scmp.lt.s32.totalorder %s585, 15
        %s587 = scalar_select %p586, %s585, 15
        %p588 = scmp.lt.s32.totalorder %s24, 0
        %s589 = scalar_select %p588, %s24, 0
        %s590 = sadd.s32 %s589, %s587
        %s591 = smul.addr %s590, 8
        %s592 = scalar_lea.vmem %s4, %s591
      $region56: #{efficientnet_forward.13} parent=51 // pred_fallthru
        _
    $region52: #{efficientnet_forward.13} parent=5 // pred_fallthru
      _
  $region6: #{efficientnet_forward.13} parent=0 // loop_footer
    %s14 = sadd.s32 1, %s10
  $region7: #{efficientnet_forward.13} parent=0 // loop_footer_branch
    %9 = sbr.rel target = $region3
  $region8: #{efficientnet_forward.13} parent=0 // loop_exit
    _

// kernel: efficientnet_forward.12
$region0: #{efficientnet_forward.12}
  #allocation0 [shape = 'u32[]', space=smem, size = 0x4, offset = 0x4, fixed_abs, tag = 'smem constant byte address 0x4 - core index']
  #allocation1 [shape = 'u32[144,128]{1,0:T(1,128)}', space=vmem, size = 0x12000, scoped, tag = 'internal scratch']
  %s0 = inlined_call_operand.vmem [shape: bf16[8,9,9,128], index: 0, kind: input, shape index: {}]
  %s1 = inlined_call_operand.vmem [shape: f32[9,128], index: 1, kind: input, shape index: {}]
  %s2 = inlined_call_operand.vmem [shape: f32[2,8,8,128], index: 2, kind: output, shape index: {}]
  %s3 = sld [smem:[#allocation0]]
  $region41: #{efficientnet_forward.12} parent=0
    _
  %s5 = ssub.s32 1, %s3
  %s6 = scalar_select 0, %s5, %s3
  loop: start=0, step=1, limit=4
  $region2: #{efficientnet_forward.12} parent=0 // loop_pre_header
    _
  $region3: #{efficientnet_forward.12} parent=0 // loop_header
    %s8 = sphi 0, %s12
    %p9 = scmp.ge.s32.totalorder %s8, 4
    %s18 = sphi 0, %s20
    %s21 = sphi 0, %s18
    %s22 = sphi 0, %s21
    %s38 = sphi 0, %s22
    %s42 = sphi 0, %s42
    %s44 = sphi 0, %s42
    %s45 = sphi 0, %s44
    %s59 = sphi 0, %s45
    %s65 = sphi 0, %s67
    %s68 = sphi 0, %s65
    %s69 = sphi 0, %s68
    %s85 = sphi 0, %s69
  $region4: #{efficientnet_forward.12} parent=0 // loop_header_branch
    %11 = sbr.rel (%p9) target = $region8
  $region5: #{efficientnet_forward.12} parent=0 // loop_body
    %s13 = ssub.s32 %s8, 1
    %s14 = ssub.s32 %s8, 2
    %s15 = sadd.s32 %s8, 1
    %s16 = ssub.s32 %s8, %s15
    %p17 = scmp.eq.s32.totalorder %s16, 0
    %s19 = sadd.s32 %s18, 1
    %s20 = scalar_select %p17, %s18, %s19
    %p23 = pneg %p17
    %p24 = scmp.eq.s32.totalorder %s8, 1
    %p25 = por %p23, %p24
    %p26 = scmp.ne.s32.totalorder %s18, %s21
    %p27 = scmp.eq.s32.totalorder %s8, 0
    %p28 = por %p26, %p27
    %p29 = scmp.ne.s32.totalorder %s18, %s21
    %p30 = scmp.eq.s32.totalorder %s13, 1
    %p31 = por %p29, %p30
    %p32 = scmp.ne.s32.totalorder %s21, %s22
    %p33 = scmp.eq.s32.totalorder %s13, 0
    %p34 = por %p32, %p33
    %p35 = scmp.ne.s32.totalorder %s21, %s22
    %p36 = scmp.eq.s32.totalorder %s14, 1
    %p37 = por %p35, %p36
    %p39 = scmp.ne.s32.totalorder %s22, %s38
    %p40 = scmp.eq.s32.totalorder %s14, 0
    %p41 = por %p39, %p40
    %s43 = sadd.s32 %s42, 1
    %p46 = scmp.eq.s32.totalorder %s8, 1
    %p47 = scmp.ne.s32.totalorder %s42, %s44
    %p48 = scmp.eq.s32.totalorder %s8, 0
    %p49 = por %p47, %p48
    %p50 = scmp.ne.s32.totalorder %s42, %s44
    %p51 = scmp.eq.s32.totalorder %s13, 1
    %p52 = por %p50, %p51
    %p53 = scmp.ne.s32.totalorder %s44, %s45
    %p54 = scmp.eq.s32.totalorder %s13, 0
    %p55 = por %p53, %p54
    %p56 = scmp.ne.s32.totalorder %s44, %s45
    %p57 = scmp.eq.s32.totalorder %s14, 1
    %p58 = por %p56, %p57
    %p60 = scmp.ne.s32.totalorder %s45, %s59
    %p61 = scmp.eq.s32.totalorder %s14, 0
    %p62 = por %p60, %p61
    %s63 = ssub.s32 %s8, %s15
    %p64 = scmp.eq.s32.totalorder %s63, 0
    %s66 = sadd.s32 %s65, 1
    %s67 = scalar_select %p64, %s65, %s66
    %p70 = pneg %p64
    %p71 = scmp.eq.s32.totalorder %s8, 1
    %p72 = por %p70, %p71
    %p73 = scmp.ne.s32.totalorder %s65, %s68
    %p74 = scmp.eq.s32.totalorder %s8, 0
    %p75 = por %p73, %p74
    %p76 = scmp.ne.s32.totalorder %s65, %s68
    %p77 = scmp.eq.s32.totalorder %s13, 1
    %p78 = por %p76, %p77
    %p79 = scmp.ne.s32.totalorder %s68, %s69
    %p80 = scmp.eq.s32.totalorder %s13, 0
    %p81 = por %p79, %p80
    %p82 = scmp.ne.s32.totalorder %s68, %s69
    %p83 = scmp.eq.s32.totalorder %s14, 1
    %p84 = por %p82, %p83
    %p86 = scmp.ne.s32.totalorder %s69, %s85
    %p87 = scmp.eq.s32.totalorder %s14, 0
    %p88 = por %p86, %p87
    %p89 = scmp.le.s32.totalorder 1, %s8
    %p90 = scmp.lt.s32.totalorder %s8, 3
    %p91 = pnand %p89, %p90
    %p92 = pneg %p91
    // Predicated region
    $region9: #{efficientnet_forward.12} parent=5 // pred_check
      _
    $region10: #{efficientnet_forward.12} parent=5 // pred_check_branch
      %94 = sbr.rel (%p91) target = $region12
    $region11: #{efficientnet_forward.12} parent=5 // pred_region
      %s95 = ssub.s32 %s8, 1
      // Predicated region
      $region13: #{efficientnet_forward.12} parent=11 // pred_check
        %p96 = pneg %p55
      $region14: #{efficientnet_forward.12} parent=11 // pred_check_branch
        %98 = sbr.rel (%p96) target = $region16
      $region15: #{efficientnet_forward.12} parent=11 // pred_region
        _
      $region16: #{efficientnet_forward.12} parent=11 // pred_fallthru
        _
    $region12: #{efficientnet_forward.12} parent=5 // pred_fallthru
      _
    %p99 = scmp.lt.s32.totalorder %s8, 2
    // Predicated region
    $region17: #{efficientnet_forward.12} parent=5 // pred_check
      %p100 = pneg %p99
    $region18: #{efficientnet_forward.12} parent=5 // pred_check_branch
      %102 = sbr.rel (%p100) target = $region20
    $region19: #{efficientnet_forward.12} parent=5 // pred_region
      // Predicated region
      $region21: #{efficientnet_forward.12} parent=19 // pred_check
        %p103 = pneg %p28
      $region22: #{efficientnet_forward.12} parent=19 // pred_check_branch
        %105 = sbr.rel (%p103) target = $region24
      $region23: #{efficientnet_forward.12} parent=19 // pred_region
        %s106 = smul.u32 4, %s8
        %p107 = scmp.lt.s32.totalorder %s106, 7
        %s108 = scalar_select %p107, %s106, 7
        %s109 = smul.addr %s108, 18
        %s110 = smul.addr %s109, 4
        %s111 = scalar_lea.vmem %s0, %s110
        %s112 = smul.u32 4, %s8
      $region24: #{efficientnet_forward.12} parent=19 // pred_fallthru
        _
    $region20: #{efficientnet_forward.12} parent=5 // pred_fallthru
      _
    %p113 = scmp.le.s32.totalorder 1, %s8
    %p114 = scmp.lt.s32.totalorder %s8, 3
    %p115 = pnand %p113, %p114
    %p116 = pneg %p115
    // Predicated region
    $region25: #{efficientnet_forward.12} parent=5 // pred_check
      _
    $region26: #{efficientnet_forward.12} parent=5 // pred_check_branch
      %118 = sbr.rel (%p115) target = $region28
    $region27: #{efficientnet_forward.12} parent=5 // pred_region
      %s119 = ssub.s32 %s8, 1
      %s120 = smul.u32 4, %s13
      %p121 = scmp.lt.s32.totalorder %s120, 7
      %s122 = scalar_select %p121, %s120, 7
      %s123 = smul.addr %s122, 18
      %s124 = smul.addr %s123, 4
      %s125 = scalar_lea.vmem %s0, %s124
      %p126 = pneg %p34
      %p127 = pneg %p31
      %p128 = pneg %p55
      %p129 = pneg %p52
      %p130 = pneg %p81
      %p131 = pneg %p78
      %p132 = scmp.lt.s32.totalorder %s13, 1
      %s133 = scalar_select %p132, %s13, 1
      %s134 = smul.addr %s133, 8
      %s135 = smul.addr %s134, 8
      %s136 = scalar_lea.vmem %s2, %s135
      %s137 = smul.u32 4, %s13
      %p138 = scmp.lt.s32.totalorder %s137, 7
      %s139 = scalar_select %p138, %s137, 7
      %s140 = smul.addr %s139, 18
      %s141 = smul.addr %s140, 4
      %s142 = scalar_lea.vmem %s0, %s141
      %s143 = smul.u32 4, %s13
      %p144 = scmp.lt.s32.totalorder %s13, 1
      %s145 = scalar_select %p144, %s13, 1
      %s146 = smul.addr %s145, 8
      %s147 = smul.addr %s146, 8
      %s148 = scalar_lea.vmem %s2, %s147
      %v149 = vld [vmem:[%s142] sm:$0xf]
      %v150 = vld [vmem:[%s142 + $0x8] sm:$0xf]
      %v151 = vld [vmem:[%s142 + $0x10] sm:$0xf]
      %v152 = vld [vmem:[%s142 + $0x18] sm:$0xf]
      %v153 = vld [vmem:[%s142 + $0x20] sm:$0xf]
      %v154 = vld [vmem:[%s142 + $0x28] sm:$0xf]
      %v155 = vld [vmem:[%s142 + $0x30] sm:$0xf]
      %v156 = vld [vmem:[%s142 + $0x38] sm:$0xf]
      %v157 = vunpack.c.l.bf16 %v149
      %v158 = vunpack.c.l.bf16 %v150
      %v159 = vunpack.c.l.bf16 %v151
      %v160 = vunpack.c.l.bf16 %v152
      %v161 = vunpack.c.l.bf16 %v153
      %v162 = vunpack.c.l.bf16 %v154
      %v163 = vunpack.c.l.bf16 %v155
      %v164 = vunpack.c.l.bf16 %v156
      %v165 = vld [vmem:[%s1] sm:$0x1]
      %v166 = vlaneseq
      %v167 = vshrl.u32 %v166, 7
      %v168 = vsub.s32 0, %v167
      %v169 = vrot.slane %v165, %v168
      %v170 = vmul.f32 %v157, %v169
      %v171 = vmul.f32 %v158, %v169
      %v172 = vmul.f32 %v159, %v169
      %v173 = vmul.f32 %v160, %v169
      %v174 = vmul.f32 %v161, %v169
      %v175 = vmul.f32 %v162, %v169
      %v176 = vmul.f32 %v163, %v169
      %v177 = vmul.f32 %v164, %v169
      %v178 = vadd.f32 %v170, 0.0
      %v179 = vadd.f32 %v171, 0.0
      %v180 = vadd.f32 %v172, 0.0
      %v181 = vadd.f32 %v173, 0.0
      %v182 = vadd.f32 %v174, 0.0
      %v183 = vadd.f32 %v175, 0.0
      %v184 = vadd.f32 %v176, 0.0
      %v185 = vadd.f32 %v177, 0.0
      %s186 = scalar_lea.vmem %s142, 72
      %v187 = vld [vmem:[%s186] sm:$0xf]
      %v188 = vld [vmem:[%s186 + $0x8] sm:$0xf]
      %v189 = vld [vmem:[%s186 + $0x10] sm:$0xf]
      %v190 = vld [vmem:[%s186 + $0x18] sm:$0xf]
      %v191 = vld [vmem:[%s186 + $0x20] sm:$0xf]
      %v192 = vld [vmem:[%s186 + $0x28] sm:$0xf]
      %v193 = vld [vmem:[%s186 + $0x30] sm:$0xf]
      %v194 = vld [vmem:[%s186 + $0x38] sm:$0xf]
      %v195 = vunpack.c.l.bf16 %v187
      %v196 = vunpack.c.l.bf16 %v188
      %v197 = vunpack.c.l.bf16 %v189
      %v198 = vunpack.c.l.bf16 %v190
      %v199 = vunpack.c.l.bf16 %v191
      %v200 = vunpack.c.l.bf16 %v192
      %v201 = vunpack.c.l.bf16 %v193
      %v202 = vunpack.c.l.bf16 %v194
      %v203 = vld [vmem:[%s1 + $0x1] sm:$0x1]
      %v204 = vlaneseq
      %v205 = vshrl.u32 %v204, 7
      %v206 = vsub.s32 0, %v205
      %v207 = vrot.slane %v203, %v206
      %v208 = vmul.f32 %v195, %v207
      %v209 = vmul.f32 %v196, %v207
      %v210 = vmul.f32 %v197, %v207
      %v211 = vmul.f32 %v198, %v207
      %v212 = vmul.f32 %v199, %v207
      %v213 = vmul.f32 %v200, %v207
      %v214 = vmul.f32 %v201, %v207
      %v215 = vmul.f32 %v202, %v207
      %v216 = vadd.f32 %v178, %v208
      %v217 = vadd.f32 %v179, %v209
      %v218 = vadd.f32 %v180, %v210
      %v219 = vadd.f32 %v181, %v211
      %v220 = vadd.f32 %v182, %v212
      %v221 = vadd.f32 %v183, %v213
      %v222 = vadd.f32 %v184, %v214
      %v223 = vadd.f32 %v185, %v215
      %v224 = vld [vmem:[%s142 + $0x4] sm:$0x1]
      %v225 = vld [vmem:[%s142 + $0xc] sm:$0x1]
      %v226 = vld [vmem:[%s142 + $0x14] sm:$0x1]
      %v227 = vld [vmem:[%s142 + $0x1c] sm:$0x1]
      %v228 = vld [vmem:[%s142 + $0x24] sm:$0x1]
      %v229 = vld [vmem:[%s142 + $0x2c] sm:$0x1]
      %v230 = vld [vmem:[%s142 + $0x34] sm:$0x1]
      %v231 = vld [vmem:[%s142 + $0x3c] sm:$0x1]
      %v232 = vunpack.c.l.bf16 %v224
      %v233 = vunpack.c.l.bf16 %v225
      %v234 = vunpack.c.l.bf16 %v226
      %v235 = vunpack.c.l.bf16 %v227
      %v236 = vunpack.c.l.bf16 %v228
      %v237 = vunpack.c.l.bf16 %v229
      %v238 = vunpack.c.l.bf16 %v230
      %v239 = vunpack.c.l.bf16 %v231
      %v240 = vld [vmem:[%s1 + $0x2] sm:$0x1]
      %v241 = vlaneseq
      %v242 = vshrl.u32 %v241, 7
      %v243 = vsub.s32 0, %v242
      %v244 = vrot.slane %v240, %v243
      %v245 = vmul.f32 %v157, %v244
      %v246 = vmul.f32 %v232, %v244
      %v247 = vmul.f32 %v158, %v244
      %v248 = vmul.f32 %v233, %v244
      %v249 = vmul.f32 %v159, %v244
      %v250 = vmul.f32 %v234, %v244
      %v251 = vmul.f32 %v160, %v244
      %v252 = vmul.f32 %v235, %v244
      %v253 = vmul.f32 %v161, %v244
      %v254 = vmul.f32 %v236, %v244
      %v255 = vmul.f32 %v162, %v244
      %v256 = vmul.f32 %v237, %v244
      %v257 = vmul.f32 %v163, %v244
      %v258 = vmul.f32 %v238, %v244
      %v259 = vmul.f32 %v164, %v244
      %v260 = vmul.f32 %v239, %v244
      %vm277 = vcmask 1046528
      %v278 = vrot.slane %v245, 1
      %v279 = vrot.slane %v246, 1
      %v280 = vsel %vm277, %v278, %v279
      %v281 = vrot.slane %v247, 1
      %v282 = vrot.slane %v248, 1
      %v283 = vsel %vm277, %v281, %v282
      %v284 = vrot.slane %v249, 1
      %v285 = vrot.slane %v250, 1
      %v286 = vsel %vm277, %v284, %v285
      %v287 = vrot.slane %v251, 1
      %v288 = vrot.slane %v252, 1
      %v289 = vsel %vm277, %v287, %v288
      %v290 = vrot.slane %v253, 1
      %v291 = vrot.slane %v254, 1
      %v292 = vsel %vm277, %v290, %v291
      %v293 = vrot.slane %v255, 1
      %v294 = vrot.slane %v256, 1
      %v295 = vsel %vm277, %v293, %v294
      %v296 = vrot.slane %v257, 1
      %v297 = vrot.slane %v258, 1
      %v298 = vsel %vm277, %v296, %v297
      %v299 = vrot.slane %v259, 1
      %v300 = vrot.slane %v260, 1
      %v301 = vsel %vm277, %v299, %v300
      %v310 = vadd.f32 %v216, %v280
      %v311 = vadd.f32 %v217, %v283
      %v312 = vadd.f32 %v218, %v286
      %v313 = vadd.f32 %v219, %v289
      %v314 = vadd.f32 %v220, %v292
      %v315 = vadd.f32 %v221, %v295
      %v316 = vadd.f32 %v222, %v298
      %v317 = vadd.f32 %v223, %v301
      %s318 = scalar_lea.vmem %s142, 144
      %v319 = vld [vmem:[%s318] sm:$0xf]
      %v320 = vld [vmem:[%s318 + $0x8] sm:$0xf]
      %v321 = vld [vmem:[%s318 + $0x10] sm:$0xf]
      %v322 = vld [vmem:[%s318 + $0x18] sm:$0xf]
      %v323 = vld [vmem:[%s318 + $0x20] sm:$0xf]
      %v324 = vld [vmem:[%s318 + $0x28] sm:$0xf]
      %v325 = vld [vmem:[%s318 + $0x30] sm:$0xf]
      %v326 = vld [vmem:[%s318 + $0x38] sm:$0xf]
      %v327 = vunpack.c.l.bf16 %v319
      %v328 = vunpack.c.l.bf16 %v320
      %v329 = vunpack.c.l.bf16 %v321
      %v330 = vunpack.c.l.bf16 %v322
      %v331 = vunpack.c.l.bf16 %v323
      %v332 = vunpack.c.l.bf16 %v324
      %v333 = vunpack.c.l.bf16 %v325
      %v334 = vunpack.c.l.bf16 %v326
      %v335 = vld [vmem:[%s1 + $0x3] sm:$0x1]
      %v336 = vlaneseq
      %v337 = vshrl.u32 %v336, 7
      %v338 = vsub.s32 0, %v337
      %v339 = vrot.slane %v335, %v338
      %v340 = vmul.f32 %v327, %v339
      %v341 = vmul.f32 %v328, %v339
      %v342 = vmul.f32 %v329, %v339
      %v343 = vmul.f32 %v330, %v339
      %v344 = vmul.f32 %v331, %v339
      %v345 = vmul.f32 %v332, %v339
      %v346 = vmul.f32 %v333, %v339
      %v347 = vmul.f32 %v334, %v339
      %v348 = vadd.f32 %v310, %v340
      %v349 = vadd.f32 %v311, %v341
      %v350 = vadd.f32 %v312, %v342
      %v351 = vadd.f32 %v313, %v343
      %v352 = vadd.f32 %v314, %v344
      %v353 = vadd.f32 %v315, %v345
      %v354 = vadd.f32 %v316, %v346
      %v355 = vadd.f32 %v317, %v347
      %s356 = scalar_lea.vmem %s142, 216
      %v357 = vld [vmem:[%s356] sm:$0xf]
      %v358 = vld [vmem:[%s356 + $0x8] sm:$0xf]
      %v359 = vld [vmem:[%s356 + $0x10] sm:$0xf]
      %v360 = vld [vmem:[%s356 + $0x18] sm:$0xf]
      %v361 = vld [vmem:[%s356 + $0x20] sm:$0xf]
      %v362 = vld [vmem:[%s356 + $0x28] sm:$0xf]
      %v363 = vld [vmem:[%s356 + $0x30] sm:$0xf]
      %v364 = vld [vmem:[%s356 + $0x38] sm:$0xf]
      %v365 = vunpack.c.l.bf16 %v357
      %v366 = vunpack.c.l.bf16 %v358
      %v367 = vunpack.c.l.bf16 %v359
      %v368 = vunpack.c.l.bf16 %v360
      %v369 = vunpack.c.l.bf16 %v361
      %v370 = vunpack.c.l.bf16 %v362
      %v371 = vunpack.c.l.bf16 %v363
      %v372 = vunpack.c.l.bf16 %v364
      %v373 = vld [vmem:[%s1 + $0x4] sm:$0x1]
      %v374 = vlaneseq
      %v375 = vshrl.u32 %v374, 7
      %v376 = vsub.s32 0, %v375
      %v377 = vrot.slane %v373, %v376
      %v378 = vmul.f32 %v365, %v377
      %v379 = vmul.f32 %v366, %v377
      %v380 = vmul.f32 %v367, %v377
      %v381 = vmul.f32 %v368, %v377
      %v382 = vmul.f32 %v369, %v377
      %v383 = vmul.f32 %v370, %v377
      %v384 = vmul.f32 %v371, %v377
      %v385 = vmul.f32 %v372, %v377
      %v386 = vadd.f32 %v348, %v378
      %v387 = vadd.f32 %v349, %v379
      %v388 = vadd.f32 %v350, %v380
      %v389 = vadd.f32 %v351, %v381
      %v390 = vadd.f32 %v352, %v382
      %v391 = vadd.f32 %v353, %v383
      %v392 = vadd.f32 %v354, %v384
      %v393 = vadd.f32 %v355, %v385
      %v394 = vld [vmem:[%s318 + $0x4] sm:$0x1]
      %v395 = vld [vmem:[%s318 + $0xc] sm:$0x1]
      %v396 = vld [vmem:[%s318 + $0x14] sm:$0x1]
      %v397 = vld [vmem:[%s318 + $0x1c] sm:$0x1]
      %v398 = vld [vmem:[%s318 + $0x24] sm:$0x1]
      %v399 = vld [vmem:[%s318 + $0x2c] sm:$0x1]
      %v400 = vld [vmem:[%s318 + $0x34] sm:$0x1]
      %v401 = vld [vmem:[%s318 + $0x3c] sm:$0x1]
      %v402 = vunpack.c.l.bf16 %v394
      %v403 = vunpack.c.l.bf16 %v395
      %v404 = vunpack.c.l.bf16 %v396
      %v405 = vunpack.c.l.bf16 %v397
      %v406 = vunpack.c.l.bf16 %v398
      %v407 = vunpack.c.l.bf16 %v399
      %v408 = vunpack.c.l.bf16 %v400
      %v409 = vunpack.c.l.bf16 %v401
      %v410 = vld [vmem:[%s1 + $0x5] sm:$0x1]
      %v411 = vlaneseq
      %v412 = vshrl.u32 %v411, 7
      %v413 = vsub.s32 0, %v412
      %v414 = vrot.slane %v410, %v413
      %v415 = vmul.f32 %v327, %v414
      %v416 = vmul.f32 %v402, %v414
      %v417 = vmul.f32 %v328, %v414
      %v418 = vmul.f32 %v403, %v414
      %v419 = vmul.f32 %v329, %v414
      %v420 = vmul.f32 %v404, %v414
      %v421 = vmul.f32 %v330, %v414
      %v422 = vmul.f32 %v405, %v414
      %v423 = vmul.f32 %v331, %v414
      %v424 = vmul.f32 %v406, %v414
      %v425 = vmul.f32 %v332, %v414
      %v426 = vmul.f32 %v407, %v414
      %v427 = vmul.f32 %v333, %v414
      %v428 = vmul.f32 %v408, %v414
      %v429 = vmul.f32 %v334, %v414
      %v430 = vmul.f32 %v409, %v414
      %v447 = vrot.slane %v415, 1
      %v448 = vrot.slane %v416, 1
      %v449 = vsel %vm277, %v447, %v448
      %v450 = vrot.slane %v417, 1
      %v451 = vrot.slane %v418, 1
      %v452 = vsel %vm277, %v450, %v451
      %v453 = vrot.slane %v419, 1
      %v454 = vrot.slane %v420, 1
      %v455 = vsel %vm277, %v453, %v454
      %v456 = vrot.slane %v421, 1
      %v457 = vrot.slane %v422, 1
      %v458 = vsel %vm277, %v456, %v457
      %v459 = vrot.slane %v423, 1
      %v460 = vrot.slane %v424, 1
      %v461 = vsel %vm277, %v459, %v460
      %v462 = vrot.slane %v425, 1
      %v463 = vrot.slane %v426, 1
      %v464 = vsel %vm277, %v462, %v463
      %v465 = vrot.slane %v427, 1
      %v466 = vrot.slane %v428, 1
      %v467 = vsel %vm277, %v465, %v466
      %v468 = vrot.slane %v429, 1
      %v469 = vrot.slane %v430, 1
      %v470 = vsel %vm277, %v468, %v469
      %v479 = vadd.f32 %v386, %v449
      %v480 = vadd.f32 %v387, %v452
      %v481 = vadd.f32 %v388, %v455
      %v482 = vadd.f32 %v389, %v458
      %v483 = vadd.f32 %v390, %v461
      %v484 = vadd.f32 %v391, %v464
      %v485 = vadd.f32 %v392, %v467
      %v486 = vadd.f32 %v393, %v470
      %s487 = scalar_lea.vmem %s142, 8
      %v488 = vld [vmem:[%s487] sm:$0xf]
      %v489 = vld [vmem:[%s487 + $0x8] sm:$0xf]
      %v490 = vld [vmem:[%s487 + $0x10] sm:$0xf]
      %v491 = vld [vmem:[%s487 + $0x18] sm:$0xf]
      %v492 = vld [vmem:[%s487 + $0x20] sm:$0xf]
      %v493 = vld [vmem:[%s487 + $0x28] sm:$0xf]
      %v494 = vld [vmem:[%s487 + $0x30] sm:$0xf]
      %v495 = vld [vmem:[%s487 + $0x38] sm:$0xf]
      %v496 = vunpack.c.l.bf16 %v488
      %v497 = vunpack.c.l.bf16 %v489
      %v498 = vunpack.c.l.bf16 %v490
      %v499 = vunpack.c.l.bf16 %v491
      %v500 = vunpack.c.l.bf16 %v492
      %v501 = vunpack.c.l.bf16 %v493
      %v502 = vunpack.c.l.bf16 %v494
      %v503 = vunpack.c.l.bf16 %v495
      %v504 = vld [vmem:[%s1 + $0x6] sm:$0x1]
      %v505 = vlaneseq
      %v506 = vshrl.u32 %v505, 7
      %v507 = vsub.s32 0, %v506
      %v508 = vrot.slane %v504, %v507
      %v509 = vmul.f32 %v496, %v508
      %v510 = vmul.f32 %v497, %v508
      %v511 = vmul.f32 %v498, %v508
      %v512 = vmul.f32 %v499, %v508
      %v513 = vmul.f32 %v500, %v508
      %v514 = vmul.f32 %v501, %v508
      %v515 = vmul.f32 %v502, %v508
      %v516 = vmul.f32 %v503, %v508
      %v517 = vadd.f32 %v479, %v509
      %v518 = vadd.f32 %v480, %v510
      %v519 = vadd.f32 %v481, %v511
      %v520 = vadd.f32 %v482, %v512
      %v521 = vadd.f32 %v483, %v513
      %v522 = vadd.f32 %v484, %v514
      %v523 = vadd.f32 %v485, %v515
      %v524 = vadd.f32 %v486, %v516
      %s525 = scalar_lea.vmem %s142, 80
      %v526 = vld [vmem:[%s525] sm:$0xf]
      %v527 = vld [vmem:[%s525 + $0x8] sm:$0xf]
      %v528 = vld [vmem:[%s525 + $0x10] sm:$0xf]
      %v529 = vld [vmem:[%s525 + $0x18] sm:$0xf]
      %v530 = vld [vmem:[%s525 + $0x20] sm:$0xf]
      %v531 = vld [vmem:[%s525 + $0x28] sm:$0xf]
      %v532 = vld [vmem:[%s525 + $0x30] sm:$0xf]
      %v533 = vld [vmem:[%s525 + $0x38] sm:$0xf]
      %v534 = vunpack.c.l.bf16 %v526
      %v535 = vunpack.c.l.bf16 %v527
      %v536 = vunpack.c.l.bf16 %v528
      %v537 = vunpack.c.l.bf16 %v529
      %v538 = vunpack.c.l.bf16 %v530
      %v539 = vunpack.c.l.bf16 %v531
      %v540 = vunpack.c.l.bf16 %v532
      %v541 = vunpack.c.l.bf16 %v533
      %v542 = vld [vmem:[%s1 + $0x7] sm:$0x1]
      %v543 = vlaneseq
      %v544 = vshrl.u32 %v543, 7
      %v545 = vsub.s32 0, %v544
      %v546 = vrot.slane %v542, %v545
      %v547 = vmul.f32 %v534, %v546
      %v548 = vmul.f32 %v535, %v546
      %v549 = vmul.f32 %v536, %v546
      %v550 = vmul.f32 %v537, %v546
      %v551 = vmul.f32 %v538, %v546
      %v552 = vmul.f32 %v539, %v546
      %v553 = vmul.f32 %v540, %v546
      %v554 = vmul.f32 %v541, %v546
      %v555 = vadd.f32 %v517, %v547
      %v556 = vadd.f32 %v518, %v548
      %v557 = vadd.f32 %v519, %v549
      %v558 = vadd.f32 %v520, %v550
      %v559 = vadd.f32 %v521, %v551
      %v560 = vadd.f32 %v522, %v552
      %v561 = vadd.f32 %v523, %v553
      %v562 = vadd.f32 %v524, %v554
      %v563 = vld [vmem:[%s487 + $0x4] sm:$0x1]
      %v564 = vld [vmem:[%s487 + $0xc] sm:$0x1]
      %v565 = vld [vmem:[%s487 + $0x14] sm:$0x1]
      %v566 = vld [vmem:[%s487 + $0x1c] sm:$0x1]
      %v567 = vld [vmem:[%s487 + $0x24] sm:$0x1]
      %v568 = vld [vmem:[%s487 + $0x2c] sm:$0x1]
      %v569 = vld [vmem:[%s487 + $0x34] sm:$0x1]
      %v570 = vld [vmem:[%s487 + $0x3c] sm:$0x1]
      %v571 = vunpack.c.l.bf16 %v563
      %v572 = vunpack.c.l.bf16 %v564
      %v573 = vunpack.c.l.bf16 %v565
      %v574 = vunpack.c.l.bf16 %v566
      %v575 = vunpack.c.l.bf16 %v567
      %v576 = vunpack.c.l.bf16 %v568
      %v577 = vunpack.c.l.bf16 %v569
      %v578 = vunpack.c.l.bf16 %v570
      %v579 = vld [vmem:[%s1 + $0x8] sm:$0x1]
      %v580 = vlaneseq
      %v581 = vshrl.u32 %v580, 7
      %v582 = vsub.s32 0, %v581
      %v583 = vrot.slane %v579, %v582
      %v584 = vmul.f32 %v496, %v583
      %v585 = vmul.f32 %v571, %v583
      %v586 = vmul.f32 %v497, %v583
      %v587 = vmul.f32 %v572, %v583
      %v588 = vmul.f32 %v498, %v583
      %v589 = vmul.f32 %v573, %v583
      %v590 = vmul.f32 %v499, %v583
      %v591 = vmul.f32 %v574, %v583
      %v592 = vmul.f32 %v500, %v583
      %v593 = vmul.f32 %v575, %v583
      %v594 = vmul.f32 %v501, %v583
      %v595 = vmul.f32 %v576, %v583
      %v596 = vmul.f32 %v502, %v583
      %v597 = vmul.f32 %v577, %v583
      %v598 = vmul.f32 %v503, %v583
      %v599 = vmul.f32 %v578, %v583
      %v616 = vrot.slane %v584, 1
      %v617 = vrot.slane %v585, 1
      %v618 = vsel %vm277, %v616, %v617
      %v619 = vrot.slane %v586, 1
      %v620 = vrot.slane %v587, 1
      %v621 = vsel %vm277, %v619, %v620
      %v622 = vrot.slane %v588, 1
      %v623 = vrot.slane %v589, 1
      %v624 = vsel %vm277, %v622, %v623
      %v625 = vrot.slane %v590, 1
      %v626 = vrot.slane %v591, 1
      %v627 = vsel %vm277, %v625, %v626
      %v628 = vrot.slane %v592, 1
      %v629 = vrot.slane %v593, 1
      %v630 = vsel %vm277, %v628, %v629
      %v631 = vrot.slane %v594, 1
      %v632 = vrot.slane %v595, 1
      %v633 = vsel %vm277, %v631, %v632
      %v634 = vrot.slane %v596, 1
      %v635 = vrot.slane %v597, 1
      %v636 = vsel %vm277, %v634, %v635
      %v637 = vrot.slane %v598, 1
      %v638 = vrot.slane %v599, 1
      %v639 = vsel %vm277, %v637, %v638
      %v648 = vadd.f32 %v555, %v618
      %v649 = vadd.f32 %v556, %v621
      %v650 = vadd.f32 %v557, %v624
      %v651 = vadd.f32 %v558, %v627
      %v652 = vadd.f32 %v559, %v630
      %v653 = vadd.f32 %v560, %v633
      %v654 = vadd.f32 %v561, %v636
      %v655 = vadd.f32 %v562, %v639
      %v656 = vxor.u32 %v648, 2147483648
      %v657 = vxor.u32 %v649, 2147483648
      %v658 = vxor.u32 %v650, 2147483648
      %v659 = vxor.u32 %v651, 2147483648
      %v660 = vxor.u32 %v652, 2147483648
      %v661 = vxor.u32 %v653, 2147483648
      %v662 = vxor.u32 %v654, 2147483648
      %v663 = vxor.u32 %v655, 2147483648
      %v664 = vmul.f32 %v656, 1.442695
      %v665 = vpow.pop %v664
      %v666 = vmul.f32 %v657, 1.442695
      %v667 = vpow.pop %v666
      %v668 = vmul.f32 %v658, 1.442695
      %v669 = vpow.pop %v668
      %v670 = vmul.f32 %v659, 1.442695
      %v671 = vpow.pop %v670
      %v672 = vmul.f32 %v660, 1.442695
      %v673 = vpow.pop %v672
      %v674 = vmul.f32 %v661, 1.442695
      %v675 = vpow.pop %v674
      %v676 = vmul.f32 %v662, 1.442695
      %v677 = vpow.pop %v676
      %v678 = vmul.f32 %v663, 1.442695
      %v679 = vpow.pop %v678
      %v680 = vadd.f32 %v665, 1.0
      %v681 = vadd.f32 %v667, 1.0
      %v682 = vadd.f32 %v669, 1.0
      %v683 = vadd.f32 %v671, 1.0
      %v684 = vadd.f32 %v673, 1.0
      %v685 = vadd.f32 %v675, 1.0
      %v686 = vadd.f32 %v677, 1.0
      %v687 = vadd.f32 %v679, 1.0
      %v688 = vrcp.pop %v680
      %v689 = vmul.f32 1.0, %v688
      %v690 = vrcp.pop %v681
      %v691 = vmul.f32 1.0, %v690
      %v692 = vrcp.pop %v682
      %v693 = vmul.f32 1.0, %v692
      %v694 = vrcp.pop %v683
      %v695 = vmul.f32 1.0, %v694
      %v696 = vrcp.pop %v684
      %v697 = vmul.f32 1.0, %v696
      %v698 = vrcp.pop %v685
      %v699 = vmul.f32 1.0, %v698
      %v700 = vrcp.pop %v686
      %v701 = vmul.f32 1.0, %v700
      %v702 = vrcp.pop %v687
      %v703 = vmul.f32 1.0, %v702
      %v704 = vmul.f32 %v648, %v689
      %v705 = vmul.f32 %v649, %v691
      %v706 = vmul.f32 %v650, %v693
      %v707 = vmul.f32 %v651, %v695
      %v708 = vmul.f32 %v652, %v697
      %v709 = vmul.f32 %v653, %v699
      %v710 = vmul.f32 %v654, %v701
      %v711 = vmul.f32 %v655, %v703
      %712 = vst [vmem:[%s148] sm:$0xff] %v704
      %713 = vst [vmem:[%s148 + $0x8] sm:$0xff] %v705
      %714 = vst [vmem:[%s148 + $0x10] sm:$0xff] %v706
      %715 = vst [vmem:[%s148 + $0x18] sm:$0xff] %v707
      %716 = vst [vmem:[%s148 + $0x20] sm:$0xff] %v708
      %717 = vst [vmem:[%s148 + $0x28] sm:$0xff] %v709
      %718 = vst [vmem:[%s148 + $0x30] sm:$0xff] %v710
      %719 = vst [vmem:[%s148 + $0x38] sm:$0xff] %v711
      %p720 = scmp.lt.s32.totalorder %s13, 1
      %s721 = scalar_select %p720, %s13, 1
      %s722 = smul.addr %s721, 8
      %s723 = smul.addr %s722, 8
      %s724 = scalar_lea.vmem %s2, %s723
      // Predicated region
      $region29: #{efficientnet_forward.12} parent=27 // pred_check
        %p725 = pneg %p78
      $region30: #{efficientnet_forward.12} parent=27 // pred_check_branch
        %727 = sbr.rel (%p725) target = $region32
      $region31: #{efficientnet_forward.12} parent=27 // pred_region
        _
      $region32: #{efficientnet_forward.12} parent=27 // pred_fallthru
        _
    $region28: #{efficientnet_forward.12} parent=5 // pred_fallthru
      _
    %p728 = scmp.le.s32.totalorder 2, %s8
    // Predicated region
    $region33: #{efficientnet_forward.12} parent=5 // pred_check
      %p729 = pneg %p728
    $region34: #{efficientnet_forward.12} parent=5 // pred_check_branch
      %731 = sbr.rel (%p729) target = $region36
    $region35: #{efficientnet_forward.12} parent=5 // pred_region
      %s732 = ssub.s32 %s8, 2
      // Predicated region
      $region37: #{efficientnet_forward.12} parent=35 // pred_check
        %p733 = pneg %p84
      $region38: #{efficientnet_forward.12} parent=35 // pred_check_branch
        %735 = sbr.rel (%p733) target = $region40
      $region39: #{efficientnet_forward.12} parent=35 // pred_region
        %p736 = scmp.lt.s32.totalorder %s14, 1
        %s737 = scalar_select %p736, %s14, 1
        %s738 = smul.addr %s737, 8
        %s739 = smul.addr %s738, 8
        %s740 = scalar_lea.vmem %s2, %s739
      $region40: #{efficientnet_forward.12} parent=35 // pred_fallthru
        _
    $region36: #{efficientnet_forward.12} parent=5 // pred_fallthru
      _
  $region6: #{efficientnet_forward.12} parent=0 // loop_footer
    %s12 = sadd.s32 1, %s8
  $region7: #{efficientnet_forward.12} parent=0 // loop_footer_branch
    %7 = sbr.rel target = $region3
  $region8: #{efficientnet_forward.12} parent=0 // loop_exit
    _

// kernel: efficientnet_forward.14
$region0: #{efficientnet_forward.14}
  #allocation0 [shape = 'u32[]', space=smem, size = 0x4, offset = 0x4, fixed_abs, tag = 'smem constant byte address 0x4 - core index']
  #allocation1 [shape = 'u32[144,128]{1,0:T(1,128)}', space=vmem, size = 0x12000, scoped, tag = 'internal scratch']
  %s0 = inlined_call_operand.vmem [shape: bf16[128,48], index: 0, kind: input, shape index: {}]
  %s1 = inlined_call_operand.vmem [shape: bf16[48,192], index: 1, kind: input, shape index: {}]
  %s2 = inlined_call_operand.vmem [shape: f32[1,192], index: 2, kind: input, shape index: {}]
  %s3 = inlined_call_operand.vmem [shape: f32[128,192], index: 3, kind: output, shape index: {}]
  %s4 = sld [smem:[#allocation0]]
  $region30: #{efficientnet_forward.14} parent=0
    _
  %s6 = ssub.s32 1, %s4
  %s7 = scalar_select 0, %s6, %s4
  // Predicated region
  $region2: #{efficientnet_forward.14} parent=0 // pred_check
    _
  $region3: #{efficientnet_forward.14} parent=0 // pred_check_branch
    %9 = sbr.rel (0) target = $region5
  $region4: #{efficientnet_forward.14} parent=0 // pred_region
    _
  $region5: #{efficientnet_forward.14} parent=0 // pred_fallthru
    _
  // Predicated region
  $region6: #{efficientnet_forward.14} parent=0 // pred_check
    _
  $region7: #{efficientnet_forward.14} parent=0 // pred_check_branch
    %11 = sbr.rel (0) target = $region9
  $region8: #{efficientnet_forward.14} parent=0 // pred_region
    _
  $region9: #{efficientnet_forward.14} parent=0 // pred_fallthru
    _
  // Predicated region
  $region10: #{efficientnet_forward.14} parent=0 // pred_check
    _
  $region11: #{efficientnet_forward.14} parent=0 // pred_check_branch
    %13 = sbr.rel (0) target = $region13
  $region12: #{efficientnet_forward.14} parent=0 // pred_region
    _
  $region13: #{efficientnet_forward.14} parent=0 // pred_fallthru
    _
  %p15 = scmp.eq.s32.totalorder 0, 0
  // Predicated region
  $region14: #{efficientnet_forward.14} parent=0 // pred_check
    %p16 = pneg %p15
  $region15: #{efficientnet_forward.14} parent=0 // pred_check_branch
    %18 = sbr.rel (%p16) target = $region17
  $region16: #{efficientnet_forward.14} parent=0 // pred_region
    %19 = vst [vmem:[%s3] sm:$0xff] 0.0
    %vm20 = vcmask 523264
    %21 = vst.msk [vmem:[%s3 + $0x8] sm:$0xff] %vm20, 0.0
    %22 = vst [vmem:[%s3 + $0x10] sm:$0xff] 0.0
    %23 = vst.msk [vmem:[%s3 + $0x18] sm:$0xff] %vm20, 0.0
    %24 = vst [vmem:[%s3 + $0x20] sm:$0xff] 0.0
    %25 = vst.msk [vmem:[%s3 + $0x28] sm:$0xff] %vm20, 0.0
    %26 = vst [vmem:[%s3 + $0x30] sm:$0xff] 0.0
    %27 = vst.msk [vmem:[%s3 + $0x38] sm:$0xff] %vm20, 0.0
    %28 = vst [vmem:[%s3 + $0x40] sm:$0xff] 0.0
    %29 = vst.msk [vmem:[%s3 + $0x48] sm:$0xff] %vm20, 0.0
    %30 = vst [vmem:[%s3 + $0x50] sm:$0xff] 0.0
    %31 = vst.msk [vmem:[%s3 + $0x58] sm:$0xff] %vm20, 0.0
    %32 = vst [vmem:[%s3 + $0x60] sm:$0xff] 0.0
    %33 = vst.msk [vmem:[%s3 + $0x68] sm:$0xff] %vm20, 0.0
    %34 = vst [vmem:[%s3 + $0x70] sm:$0xff] 0.0
    %35 = vst.msk [vmem:[%s3 + $0x78] sm:$0xff] %vm20, 0.0
    %36 = vst [vmem:[%s3 + $0x80] sm:$0xff] 0.0
    %37 = vst.msk [vmem:[%s3 + $0x88] sm:$0xff] %vm20, 0.0
    %38 = vst [vmem:[%s3 + $0x90] sm:$0xff] 0.0
    %39 = vst.msk [vmem:[%s3 + $0x98] sm:$0xff] %vm20, 0.0
    %40 = vst [vmem:[%s3 + $0xa0] sm:$0xff] 0.0
    %41 = vst.msk [vmem:[%s3 + $0xa8] sm:$0xff] %vm20, 0.0
    %42 = vst [vmem:[%s3 + $0xb0] sm:$0xff] 0.0
    %43 = vst.msk [vmem:[%s3 + $0xb8] sm:$0xff] %vm20, 0.0
    %44 = vst [vmem:[%s3 + $0xc0] sm:$0xff] 0.0
    %45 = vst.msk [vmem:[%s3 + $0xc8] sm:$0xff] %vm20, 0.0
    %46 = vst [vmem:[%s3 + $0xd0] sm:$0xff] 0.0
    %47 = vst.msk [vmem:[%s3 + $0xd8] sm:$0xff] %vm20, 0.0
    %48 = vst [vmem:[%s3 + $0xe0] sm:$0xff] 0.0
    %49 = vst.msk [vmem:[%s3 + $0xe8] sm:$0xff] %vm20, 0.0
    %50 = vst [vmem:[%s3 + $0xf0] sm:$0xff] 0.0
    %51 = vst.msk [vmem:[%s3 + $0xf8] sm:$0xff] %vm20, 0.0
  $region17: #{efficientnet_forward.14} parent=0 // pred_fallthru
    _
  %v52 = vld [vmem:[%s0] sm:$0xf]
  %v53 = vld [vmem:[%s0 + $0x4] sm:$0xf]
  %v54 = vld [vmem:[%s0 + $0x8] sm:$0xf]
  %v55 = vld [vmem:[%s0 + $0xc] sm:$0xf]
  %v56 = vld [vmem:[%s0 + $0x10] sm:$0xf]
  %v57 = vld [vmem:[%s0 + $0x14] sm:$0xf]
  %v58 = vld [vmem:[%s0 + $0x18] sm:$0xf]
  %v59 = vld [vmem:[%s0 + $0x1c] sm:$0xf]
  %v60 = vld [vmem:[%s0 + $0x20] sm:$0xf]
  %v61 = vld [vmem:[%s0 + $0x24] sm:$0xf]
  %v62 = vld [vmem:[%s0 + $0x28] sm:$0xf]
  %v63 = vld [vmem:[%s0 + $0x2c] sm:$0xf]
  %v64 = vld [vmem:[%s0 + $0x30] sm:$0xf]
  %v65 = vld [vmem:[%s0 + $0x34] sm:$0xf]
  %v66 = vld [vmem:[%s0 + $0x38] sm:$0xf]
  %v67 = vld [vmem:[%s0 + $0x3c] sm:$0xf]
  %v68 = vld [vmem:[%s3] sm:$0xff]
  %v69 = vld [vmem:[%s3 + $0x8] sm:$0xff]
  %v70 = vld [vmem:[%s3 + $0x10] sm:$0xff]
  %v71 = vld [vmem:[%s3 + $0x18] sm:$0xff]
  %v72 = vld [vmem:[%s3 + $0x20] sm:$0xff]
  %v73 = vld [vmem:[%s3 + $0x28] sm:$0xff]
  %v74 = vld [vmem:[%s3 + $0x30] sm:$0xff]
  %v75 = vld [vmem:[%s3 + $0x38] sm:$0xff]
  %v76 = vld [vmem:[%s3 + $0x40] sm:$0xff]
  %v77 = vld [vmem:[%s3 + $0x48] sm:$0xff]
  %v78 = vld [vmem:[%s3 + $0x50] sm:$0xff]
  %v79 = vld [vmem:[%s3 + $0x58] sm:$0xff]
  %v80 = vld [vmem:[%s3 + $0x60] sm:$0xff]
  %v81 = vld [vmem:[%s3 + $0x68] sm:$0xff]
  %v82 = vld [vmem:[%s3 + $0x70] sm:$0xff]
  %v83 = vld [vmem:[%s3 + $0x78] sm:$0xff]
  %v84 = vld [vmem:[%s3 + $0x80] sm:$0xff]
  %v85 = vld [vmem:[%s3 + $0x88] sm:$0xff]
  %v86 = vld [vmem:[%s3 + $0x90] sm:$0xff]
  %v87 = vld [vmem:[%s3 + $0x98] sm:$0xff]
  %v88 = vld [vmem:[%s3 + $0xa0] sm:$0xff]
  %v89 = vld [vmem:[%s3 + $0xa8] sm:$0xff]
  %v90 = vld [vmem:[%s3 + $0xb0] sm:$0xff]
  %v91 = vld [vmem:[%s3 + $0xb8] sm:$0xff]
  %v92 = vld [vmem:[%s3 + $0xc0] sm:$0xff]
  %v93 = vld [vmem:[%s3 + $0xc8] sm:$0xff]
  %v94 = vld [vmem:[%s3 + $0xd0] sm:$0xff]
  %v95 = vld [vmem:[%s3 + $0xd8] sm:$0xff]
  %v96 = vld [vmem:[%s3 + $0xe0] sm:$0xff]
  %v97 = vld [vmem:[%s3 + $0xe8] sm:$0xff]
  %v98 = vld [vmem:[%s3 + $0xf0] sm:$0xff]
  %v99 = vld [vmem:[%s3 + $0xf8] sm:$0xff]
  %v100 = vld [vmem:[%s1] sm:$0xff]
  %v101 = vld [vmem:[%s1 + $0x8] sm:$0xff]
  %v102 = vld [vmem:[%s1 + $0x10] sm:$0xff]
  %v103 = vld [vmem:[%s1 + $0x18] sm:$0xff]
  %v104 = vld [vmem:[%s1 + $0x20] sm:$0xff]
  %v105 = vld [vmem:[%s1 + $0x28] sm:$0xff]
  %v122 = vunpack.c.l.b16 %v52
  %v123 = vunpack.c.l.b16 %v53
  %v124 = vunpack.c.l.b16 %v54
  %v125 = vunpack.c.l.b16 %v55
  %v126 = vunpack.c.l.b16 %v56
  %v127 = vunpack.c.l.b16 %v57
  %v128 = vunpack.c.l.b16 %v58
  %v129 = vunpack.c.l.b16 %v59
  %v130 = vunpack.c.l.b16 %v60
  %v131 = vunpack.c.l.b16 %v61
  %v132 = vunpack.c.l.b16 %v62
  %v133 = vunpack.c.l.b16 %v63
  %v134 = vunpack.c.l.b16 %v64
  %v135 = vunpack.c.l.b16 %v65
  %v136 = vunpack.c.l.b16 %v66
  %v137 = vunpack.c.l.b16 %v67
  %v138 = vpack.c.b16 %v123, %v122
  %v139 = vpack.c.b16 %v125, %v124
  %v140 = vpack.c.b16 %v127, %v126
  %v141 = vpack.c.b16 %v129, %v128
  %v142 = vpack.c.b16 %v131, %v130
  %v143 = vpack.c.b16 %v133, %v132
  %v144 = vpack.c.b16 %v135, %v134
  %v145 = vpack.c.b16 %v137, %v136
  %v152 = vunpack.c.l.b16 %v100
  %v153 = vunpack.c.h.b16 %v100
  %v154 = vunpack.c.l.b16 %v101
  %v155 = vunpack.c.h.b16 %v101
  %v156 = vunpack.c.l.b16 %v102
  %v157 = vunpack.c.h.b16 %v102
  %v158 = vunpack.c.l.b16 %v103
  %v159 = vunpack.c.h.b16 %v103
  %v160 = vunpack.c.l.b16 %v104
  %v161 = vunpack.c.h.b16 %v104
  %v162 = vunpack.c.l.b16 %v105
  %v163 = vunpack.c.h.b16 %v105
  %v164 = vpack.c.b16 %v154, %v152
  %v165 = vpack.c.b16 %v155, %v153
  %v166 = vpack.c.b16 %v158, %v156
  %v167 = vpack.c.b16 %v159, %v157
  %v168 = vpack.c.b16 %v162, %v160
  %v169 = vpack.c.b16 %v163, %v161
  %vm176 = vcmask 392192
  %v178 = vsel %vm176, %v138, 0
  %v181 = vsel %vm176, %v139, 0
  %v184 = vsel %vm176, %v140, 0
  %v187 = vsel %vm176, %v141, 0
  %v190 = vsel %vm176, %v142, 0
  %v193 = vsel %vm176, %v143, 0
  %v196 = vsel %vm176, %v144, 0
  %v199 = vsel %vm176, %v145, 0
  %201 = vmatprep.subr.bf16.mxu0 %v165
  %202 = vmatpush1.bf16.msra.mxu0 %v164
  %203 = vmatprep.subr.bf16.mxu0 %v167
  %204 = vmatpush1.bf16.msra.mxu0 %v166
  %205 = vmatprep.subr.bf16.mxu0 %v169
  %206 = vmatpush1.bf16.msra.mxu0 %v168
  %207 = vmatprep.subr.bf16.mxu0 0
  %208 = vmatpush1.bf16.msra.mxu0 0
  %209 = vmatprep.subr.bf16.mxu0 0
  %210 = vmatpush1.bf16.msra.mxu0 0
  %211 = vmatprep.subr.bf16.mxu0 0
  %212 = vmatpush1.bf16.msra.mxu0 0
  %213 = vmatprep.subr.bf16.mxu0 0
  %214 = vmatpush1.bf16.msra.mxu0 0
  %215 = vmatprep.subr.bf16.mxu0 0
  %216 = vmatpush1.bf16.msra.mxu0 0
  %217 = vmatprep.subr.bf16.mxu0 0
  %218 = vmatpush1.bf16.msra.mxu0 0
  %219 = vmatprep.subr.bf16.mxu0 0
  %220 = vmatpush1.bf16.msra.mxu0 0
  %221 = vmatprep.subr.bf16.mxu0 0
  %222 = vmatpush1.bf16.msra.mxu0 0
  %223 = vmatprep.subr.bf16.mxu0 0
  %224 = vmatpush1.bf16.msra.mxu0 0
  %225 = vmatprep.subr.bf16.mxu0 0
  %226 = vmatpush1.bf16.msra.mxu0 0
  %227 = vmatprep.subr.bf16.mxu0 0
  %228 = vmatpush1.bf16.msra.mxu0 0
  %229 = vmatprep.subr.bf16.mxu0 0
  %230 = vmatpush1.bf16.msra.mxu0 0
  %231 = vmatprep.subr.bf16.mxu0 0
  %232 = vmatpush1.bf16.msra.mxu0 0
  %233 = vmatprep.mubr.bf16.mxu0 0
  %234 = vmatmul.mubr.bf16.gmra.mrb[0].mxu0 %v178
  %v235 = vpop.f32.mrb[0].mxu0
  %v236 = vadd.f32 0.0, %v235
  %v237 = vpop.f32.mrb[0].mxu0
  %v238 = vadd.f32 0.0, %v237
  %v239 = vpop.f32.mrb[0].mxu0
  %v240 = vadd.f32 0.0, %v239
  %v241 = vpop.f32.mrb[0].mxu0
  %v242 = vadd.f32 0.0, %v241
  %243 = vmatprep.mubr.bf16.mxu0 0
  %244 = vmatmul.mubr.bf16.gmra.mrb[0].mxu0 %v181
  %v245 = vpop.f32.mrb[0].mxu0
  %v246 = vadd.f32 0.0, %v245
  %v247 = vpop.f32.mrb[0].mxu0
  %v248 = vadd.f32 0.0, %v247
  %v249 = vpop.f32.mrb[0].mxu0
  %v250 = vadd.f32 0.0, %v249
  %v251 = vpop.f32.mrb[0].mxu0
  %v252 = vadd.f32 0.0, %v251
  %253 = vmatprep.mubr.bf16.mxu0 0
  %254 = vmatmul.mubr.bf16.gmra.mrb[0].mxu0 %v184
  %v255 = vpop.f32.mrb[0].mxu0
  %v256 = vadd.f32 0.0, %v255
  %v257 = vpop.f32.mrb[0].mxu0
  %v258 = vadd.f32 0.0, %v257
  %v259 = vpop.f32.mrb[0].mxu0
  %v260 = vadd.f32 0.0, %v259
  %v261 = vpop.f32.mrb[0].mxu0
  %v262 = vadd.f32 0.0, %v261
  %263 = vmatprep.mubr.bf16.mxu0 0
  %264 = vmatmul.mubr.bf16.gmra.mrb[0].mxu0 %v187
  %v265 = vpop.f32.mrb[0].mxu0
  %v266 = vadd.f32 0.0, %v265
  %v267 = vpop.f32.mrb[0].mxu0
  %v268 = vadd.f32 0.0, %v267
  %v269 = vpop.f32.mrb[0].mxu0
  %v270 = vadd.f32 0.0, %v269
  %v271 = vpop.f32.mrb[0].mxu0
  %v272 = vadd.f32 0.0, %v271
  %273 = vmatprep.mubr.bf16.mxu0 0
  %274 = vmatmul.mubr.bf16.gmra.mrb[0].mxu0 %v190
  %v275 = vpop.f32.mrb[0].mxu0
  %v276 = vadd.f32 0.0, %v275
  %v277 = vpop.f32.mrb[0].mxu0
  %v278 = vadd.f32 0.0, %v277
  %v279 = vpop.f32.mrb[0].mxu0
  %v280 = vadd.f32 0.0, %v279
  %v281 = vpop.f32.mrb[0].mxu0
  %v282 = vadd.f32 0.0, %v281
  %283 = vmatprep.mubr.bf16.mxu0 0
  %284 = vmatmul.mubr.bf16.gmra.mrb[0].mxu0 %v193
  %v285 = vpop.f32.mrb[0].mxu0
  %v286 = vadd.f32 0.0, %v285
  %v287 = vpop.f32.mrb[0].mxu0
  %v288 = vadd.f32 0.0, %v287
  %v289 = vpop.f32.mrb[0].mxu0
  %v290 = vadd.f32 0.0, %v289
  %v291 = vpop.f32.mrb[0].mxu0
  %v292 = vadd.f32 0.0, %v291
  %293 = vmatprep.mubr.bf16.mxu0 0
  %294 = vmatmul.mubr.bf16.gmra.mrb[0].mxu0 %v196
  %v295 = vpop.f32.mrb[0].mxu0
  %v296 = vadd.f32 0.0, %v295
  %v297 = vpop.f32.mrb[0].mxu0
  %v298 = vadd.f32 0.0, %v297
  %v299 = vpop.f32.mrb[0].mxu0
  %v300 = vadd.f32 0.0, %v299
  %v301 = vpop.f32.mrb[0].mxu0
  %v302 = vadd.f32 0.0, %v301
  %303 = vmatprep.mubr.bf16.mxu0 0
  %304 = vmatmul.mubr.bf16.gmra.mrb[0].mxu0 %v199
  %v305 = vpop.f32.mrb[0].mxu0
  %v306 = vadd.f32 0.0, %v305
  %v307 = vpop.f32.mrb[0].mxu0
  %v308 = vadd.f32 0.0, %v307
  %v309 = vpop.f32.mrb[0].mxu0
  %v310 = vadd.f32 0.0, %v309
  %v311 = vpop.f32.mrb[0].mxu0
  %v312 = vadd.f32 0.0, %v311
  %313 = vdwg.mxu0
  %v314 = vadd.f32 %v68, %v236
  %v315 = vadd.f32 %v69, %v238
  %v316 = vadd.f32 %v70, %v240
  %v317 = vadd.f32 %v71, %v242
  %v318 = vadd.f32 %v72, %v246
  %v319 = vadd.f32 %v73, %v248
  %v320 = vadd.f32 %v74, %v250
  %v321 = vadd.f32 %v75, %v252
  %v322 = vadd.f32 %v76, %v256
  %v323 = vadd.f32 %v77, %v258
  %v324 = vadd.f32 %v78, %v260
  %v325 = vadd.f32 %v79, %v262
  %v326 = vadd.f32 %v80, %v266
  %v327 = vadd.f32 %v81, %v268
  %v328 = vadd.f32 %v82, %v270
  %v329 = vadd.f32 %v83, %v272
  %v330 = vadd.f32 %v84, %v276
  %v331 = vadd.f32 %v85, %v278
  %v332 = vadd.f32 %v86, %v280
  %v333 = vadd.f32 %v87, %v282
  %v334 = vadd.f32 %v88, %v286
  %v335 = vadd.f32 %v89, %v288
  %v336 = vadd.f32 %v90, %v290
  %v337 = vadd.f32 %v91, %v292
  %v338 = vadd.f32 %v92, %v296
  %v339 = vadd.f32 %v93, %v298
  %v340 = vadd.f32 %v94, %v300
  %v341 = vadd.f32 %v95, %v302
  %v342 = vadd.f32 %v96, %v306
  %v343 = vadd.f32 %v97, %v308
  %v344 = vadd.f32 %v98, %v310
  %v345 = vadd.f32 %v99, %v312
  %346 = vst [vmem:[%s3] sm:$0xff] %v314
  %vm347 = vcmask 523264
  %348 = vst.msk [vmem:[%s3 + $0x8] sm:$0xff] %vm347, %v315
  %349 = vst [vmem:[%s3 + $0x10] sm:$0xff] %v316
  %350 = vst.msk [vmem:[%s3 + $0x18] sm:$0xff] %vm347, %v317
  %351 = vst [vmem:[%s3 + $0x20] sm:$0xff] %v318
  %352 = vst.msk [vmem:[%s3 + $0x28] sm:$0xff] %vm347, %v319
  %353 = vst [vmem:[%s3 + $0x30] sm:$0xff] %v320
  %354 = vst.msk [vmem:[%s3 + $0x38] sm:$0xff] %vm347, %v321
  %355 = vst [vmem:[%s3 + $0x40] sm:$0xff] %v322
  %356 = vst.msk [vmem:[%s3 + $0x48] sm:$0xff] %vm347, %v323
  %357 = vst [vmem:[%s3 + $0x50] sm:$0xff] %v324
  %358 = vst.msk [vmem:[%s3 + $0x58] sm:$0xff] %vm347, %v325
  %359 = vst [vmem:[%s3 + $0x60] sm:$0xff] %v326
  %360 = vst.msk [vmem:[%s3 + $0x68] sm:$0xff] %vm347, %v327
  %361 = vst [vmem:[%s3 + $0x70] sm:$0xff] %v328
  %362 = vst.msk [vmem:[%s3 + $0x78] sm:$0xff] %vm347, %v329
  %363 = vst [vmem:[%s3 + $0x80] sm:$0xff] %v330
  %364 = vst.msk [vmem:[%s3 + $0x88] sm:$0xff] %vm347, %v331
  %365 = vst [vmem:[%s3 + $0x90] sm:$0xff] %v332
  %366 = vst.msk [vmem:[%s3 + $0x98] sm:$0xff] %vm347, %v333
  %367 = vst [vmem:[%s3 + $0xa0] sm:$0xff] %v334
  %368 = vst.msk [vmem:[%s3 + $0xa8] sm:$0xff] %vm347, %v335
  %369 = vst [vmem:[%s3 + $0xb0] sm:$0xff] %v336
  %370 = vst.msk [vmem:[%s3 + $0xb8] sm:$0xff] %vm347, %v337
  %371 = vst [vmem:[%s3 + $0xc0] sm:$0xff] %v338
  %372 = vst.msk [vmem:[%s3 + $0xc8] sm:$0xff] %vm347, %v339
  %373 = vst [vmem:[%s3 + $0xd0] sm:$0xff] %v340
  %374 = vst.msk [vmem:[%s3 + $0xd8] sm:$0xff] %vm347, %v341
  %375 = vst [vmem:[%s3 + $0xe0] sm:$0xff] %v342
  %376 = vst.msk [vmem:[%s3 + $0xe8] sm:$0xff] %vm347, %v343
  %377 = vst [vmem:[%s3 + $0xf0] sm:$0xff] %v344
  %378 = vst.msk [vmem:[%s3 + $0xf8] sm:$0xff] %vm347, %v345
  // Predicated region
  $region18: #{efficientnet_forward.14} parent=0 // pred_check
    %p379 = pneg %p15
  $region19: #{efficientnet_forward.14} parent=0 // pred_check_branch
    %381 = sbr.rel (%p379) target = $region21
  $region20: #{efficientnet_forward.14} parent=0 // pred_region
    %v382 = vld [vmem:[%s3] sm:$0xff]
    %v383 = vld [vmem:[%s3 + $0x8] sm:$0xff]
    %v384 = vld [vmem:[%s3 + $0x10] sm:$0xff]
    %v385 = vld [vmem:[%s3 + $0x18] sm:$0xff]
    %v386 = vld [vmem:[%s3 + $0x20] sm:$0xff]
    %v387 = vld [vmem:[%s3 + $0x28] sm:$0xff]
    %v388 = vld [vmem:[%s3 + $0x30] sm:$0xff]
    %v389 = vld [vmem:[%s3 + $0x38] sm:$0xff]
    %v390 = vld [vmem:[%s3 + $0x40] sm:$0xff]
    %v391 = vld [vmem:[%s3 + $0x48] sm:$0xff]
    %v392 = vld [vmem:[%s3 + $0x50] sm:$0xff]
    %v393 = vld [vmem:[%s3 + $0x58] sm:$0xff]
    %v394 = vld [vmem:[%s3 + $0x60] sm:$0xff]
    %v395 = vld [vmem:[%s3 + $0x68] sm:$0xff]
    %v396 = vld [vmem:[%s3 + $0x70] sm:$0xff]
    %v397 = vld [vmem:[%s3 + $0x78] sm:$0xff]
    %v398 = vld [vmem:[%s3 + $0x80] sm:$0xff]
    %v399 = vld [vmem:[%s3 + $0x88] sm:$0xff]
    %v400 = vld [vmem:[%s3 + $0x90] sm:$0xff]
    %v401 = vld [vmem:[%s3 + $0x98] sm:$0xff]
    %v402 = vld [vmem:[%s3 + $0xa0] sm:$0xff]
    %v403 = vld [vmem:[%s3 + $0xa8] sm:$0xff]
    %v404 = vld [vmem:[%s3 + $0xb0] sm:$0xff]
    %v405 = vld [vmem:[%s3 + $0xb8] sm:$0xff]
    %v406 = vld [vmem:[%s3 + $0xc0] sm:$0xff]
    %v407 = vld [vmem:[%s3 + $0xc8] sm:$0xff]
    %v408 = vld [vmem:[%s3 + $0xd0] sm:$0xff]
    %v409 = vld [vmem:[%s3 + $0xd8] sm:$0xff]
    %v410 = vld [vmem:[%s3 + $0xe0] sm:$0xff]
    %v411 = vld [vmem:[%s3 + $0xe8] sm:$0xff]
    %v412 = vld [vmem:[%s3 + $0xf0] sm:$0xff]
    %v413 = vld [vmem:[%s3 + $0xf8] sm:$0xff]
    %v414 = vld [vmem:[%s2] sm:$0x3]
    %v416 = vlaneseq
    %v417 = vshrl.u32 %v416, 7
    %v418 = vsub.s32 0, %v417
    %v419 = vrot.slane %v414, %v418
    %v420 = vlaneseq
    %v421 = vshrl.u32 %v420, 7
    %v422 = vsub.s32 1, %v421
    %v423 = vrot.slane %v414, %v422
    %v426 = vadd.f32 %v382, %v419
    %v427 = vadd.f32 %v383, %v423
    %v428 = vadd.f32 %v384, %v419
    %v429 = vadd.f32 %v385, %v423
    %v430 = vadd.f32 %v386, %v419
    %v431 = vadd.f32 %v387, %v423
    %v432 = vadd.f32 %v388, %v419
    %v433 = vadd.f32 %v389, %v423
    %v434 = vadd.f32 %v390, %v419
    %v435 = vadd.f32 %v391, %v423
    %v436 = vadd.f32 %v392, %v419
    %v437 = vadd.f32 %v393, %v423
    %v438 = vadd.f32 %v394, %v419
    %v439 = vadd.f32 %v395, %v423
    %v440 = vadd.f32 %v396, %v419
    %v441 = vadd.f32 %v397, %v423
    %v442 = vadd.f32 %v398, %v419
    %v443 = vadd.f32 %v399, %v423
    %v444 = vadd.f32 %v400, %v419
    %v445 = vadd.f32 %v401, %v423
    %v446 = vadd.f32 %v402, %v419
    %v447 = vadd.f32 %v403, %v423
    %v448 = vadd.f32 %v404, %v419
    %v449 = vadd.f32 %v405, %v423
    %v450 = vadd.f32 %v406, %v419
    %v451 = vadd.f32 %v407, %v423
    %v452 = vadd.f32 %v408, %v419
    %v453 = vadd.f32 %v409, %v423
    %v454 = vadd.f32 %v410, %v419
    %v455 = vadd.f32 %v411, %v423
    %v456 = vadd.f32 %v412, %v419
    %v457 = vadd.f32 %v413, %v423
    %v458 = vxor.u32 %v426, 2147483648
    %v459 = vxor.u32 %v427, 2147483648
    %v460 = vxor.u32 %v428, 2147483648
    %v461 = vxor.u32 %v429, 2147483648
    %v462 = vxor.u32 %v430, 2147483648
    %v463 = vxor.u32 %v431, 2147483648
    %v464 = vxor.u32 %v432, 2147483648
    %v465 = vxor.u32 %v433, 2147483648
    %v466 = vxor.u32 %v434, 2147483648
    %v467 = vxor.u32 %v435, 2147483648
    %v468 = vxor.u32 %v436, 2147483648
    %v469 = vxor.u32 %v437, 2147483648
    %v470 = vxor.u32 %v438, 2147483648
    %v471 = vxor.u32 %v439, 2147483648
    %v472 = vxor.u32 %v440, 2147483648
    %v473 = vxor.u32 %v441, 2147483648
    %v474 = vxor.u32 %v442, 2147483648
    %v475 = vxor.u32 %v443, 2147483648
    %v476 = vxor.u32 %v444, 2147483648
    %v477 = vxor.u32 %v445, 2147483648
    %v478 = vxor.u32 %v446, 2147483648
    %v479 = vxor.u32 %v447, 2147483648
    %v480 = vxor.u32 %v448, 2147483648
    %v481 = vxor.u32 %v449, 2147483648
    %v482 = vxor.u32 %v450, 2147483648
    %v483 = vxor.u32 %v451, 2147483648
    %v484 = vxor.u32 %v452, 2147483648
    %v485 = vxor.u32 %v453, 2147483648
    %v486 = vxor.u32 %v454, 2147483648
    %v487 = vxor.u32 %v455, 2147483648
    %v488 = vxor.u32 %v456, 2147483648
    %v489 = vxor.u32 %v457, 2147483648
    %v490 = vmul.f32 %v458, 1.442695
    %v491 = vpow.pop %v490
    %v492 = vmul.f32 %v459, 1.442695
    %v493 = vpow.pop %v492
    %v494 = vmul.f32 %v460, 1.442695
    %v495 = vpow.pop %v494
    %v496 = vmul.f32 %v461, 1.442695
    %v497 = vpow.pop %v496
    %v498 = vmul.f32 %v462, 1.442695
    %v499 = vpow.pop %v498
    %v500 = vmul.f32 %v463, 1.442695
    %v501 = vpow.pop %v500
    %v502 = vmul.f32 %v464, 1.442695
    %v503 = vpow.pop %v502
    %v504 = vmul.f32 %v465, 1.442695
    %v505 = vpow.pop %v504
    %v506 = vmul.f32 %v466, 1.442695
    %v507 = vpow.pop %v506
    %v508 = vmul.f32 %v467, 1.442695
    %v509 = vpow.pop %v508
    %v510 = vmul.f32 %v468, 1.442695
    %v511 = vpow.pop %v510
    %v512 = vmul.f32 %v469, 1.442695
    %v513 = vpow.pop %v512
    %v514 = vmul.f32 %v470, 1.442695
    %v515 = vpow.pop %v514
    %v516 = vmul.f32 %v471, 1.442695
    %v517 = vpow.pop %v516
    %v518 = vmul.f32 %v472, 1.442695
    %v519 = vpow.pop %v518
    %v520 = vmul.f32 %v473, 1.442695
    %v521 = vpow.pop %v520
    %v522 = vmul.f32 %v474, 1.442695
    %v523 = vpow.pop %v522
    %v524 = vmul.f32 %v475, 1.442695
    %v525 = vpow.pop %v524
    %v526 = vmul.f32 %v476, 1.442695
    %v527 = vpow.pop %v526
    %v528 = vmul.f32 %v477, 1.442695
    %v529 = vpow.pop %v528
    %v530 = vmul.f32 %v478, 1.442695
    %v531 = vpow.pop %v530
    %v532 = vmul.f32 %v479, 1.442695
    %v533 = vpow.pop %v532
    %v534 = vmul.f32 %v480, 1.442695
    %v535 = vpow.pop %v534
    %v536 = vmul.f32 %v481, 1.442695
    %v537 = vpow.pop %v536
    %v538 = vmul.f32 %v482, 1.442695
    %v539 = vpow.pop %v538
    %v540 = vmul.f32 %v483, 1.442695
    %v541 = vpow.pop %v540
    %v542 = vmul.f32 %v484, 1.442695
    %v543 = vpow.pop %v542
    %v544 = vmul.f32 %v485, 1.442695
    %v545 = vpow.pop %v544
    %v546 = vmul.f32 %v486, 1.442695
    %v547 = vpow.pop %v546
    %v548 = vmul.f32 %v487, 1.442695
    %v549 = vpow.pop %v548
    %v550 = vmul.f32 %v488, 1.442695
    %v551 = vpow.pop %v550
    %v552 = vmul.f32 %v489, 1.442695
    %v553 = vpow.pop %v552
    %v554 = vadd.f32 %v491, 1.0
    %v555 = vadd.f32 %v493, 1.0
    %v556 = vadd.f32 %v495, 1.0
    %v557 = vadd.f32 %v497, 1.0
    %v558 = vadd.f32 %v499, 1.0
    %v559 = vadd.f32 %v501, 1.0
    %v560 = vadd.f32 %v503, 1.0
    %v561 = vadd.f32 %v505, 1.0
    %v562 = vadd.f32 %v507, 1.0
    %v563 = vadd.f32 %v509, 1.0
    %v564 = vadd.f32 %v511, 1.0
    %v565 = vadd.f32 %v513, 1.0
    %v566 = vadd.f32 %v515, 1.0
    %v567 = vadd.f32 %v517, 1.0
    %v568 = vadd.f32 %v519, 1.0
    %v569 = vadd.f32 %v521, 1.0
    %v570 = vadd.f32 %v523, 1.0
    %v571 = vadd.f32 %v525, 1.0
    %v572 = vadd.f32 %v527, 1.0
    %v573 = vadd.f32 %v529, 1.0
    %v574 = vadd.f32 %v531, 1.0
    %v575 = vadd.f32 %v533, 1.0
    %v576 = vadd.f32 %v535, 1.0
    %v577 = vadd.f32 %v537, 1.0
    %v578 = vadd.f32 %v539, 1.0
    %v579 = vadd.f32 %v541, 1.0
    %v580 = vadd.f32 %v543, 1.0
    %v581 = vadd.f32 %v545, 1.0
    %v582 = vadd.f32 %v547, 1.0
    %v583 = vadd.f32 %v549, 1.0
    %v584 = vadd.f32 %v551, 1.0
    %v585 = vadd.f32 %v553, 1.0
    %v586 = vrcp.pop %v554
    %v587 = vmul.f32 1.0, %v586
    %v588 = vrcp.pop %v555
    %v589 = vmul.f32 1.0, %v588
    %v590 = vrcp.pop %v556
    %v591 = vmul.f32 1.0, %v590
    %v592 = vrcp.pop %v557
    %v593 = vmul.f32 1.0, %v592
    %v594 = vrcp.pop %v558
    %v595 = vmul.f32 1.0, %v594
    %v596 = vrcp.pop %v559
    %v597 = vmul.f32 1.0, %v596
    %v598 = vrcp.pop %v560
    %v599 = vmul.f32 1.0, %v598
    %v600 = vrcp.pop %v561
    %v601 = vmul.f32 1.0, %v600
    %v602 = vrcp.pop %v562
    %v603 = vmul.f32 1.0, %v602
    %v604 = vrcp.pop %v563
    %v605 = vmul.f32 1.0, %v604
    %v606 = vrcp.pop %v564
    %v607 = vmul.f32 1.0, %v606
    %v608 = vrcp.pop %v565
    %v609 = vmul.f32 1.0, %v608
    %v610 = vrcp.pop %v566
    %v611 = vmul.f32 1.0, %v610
    %v612 = vrcp.pop %v567
    %v613 = vmul.f32 1.0, %v612
    %v614 = vrcp.pop %v568
    %v615 = vmul.f32 1.0, %v614
    %v616 = vrcp.pop %v569
    %v617 = vmul.f32 1.0, %v616
    %v618 = vrcp.pop %v570
    %v619 = vmul.f32 1.0, %v618
    %v620 = vrcp.pop %v571
    %v621 = vmul.f32 1.0, %v620
    %v622 = vrcp.pop %v572
    %v623 = vmul.f32 1.0, %v622
    %v624 = vrcp.pop %v573
    %v625 = vmul.f32 1.0, %v624
    %v626 = vrcp.pop %v574
    %v627 = vmul.f32 1.0, %v626
    %v628 = vrcp.pop %v575
    %v629 = vmul.f32 1.0, %v628
    %v630 = vrcp.pop %v576
    %v631 = vmul.f32 1.0, %v630
    %v632 = vrcp.pop %v577
    %v633 = vmul.f32 1.0, %v632
    %v634 = vrcp.pop %v578
    %v635 = vmul.f32 1.0, %v634
    %v636 = vrcp.pop %v579
    %v637 = vmul.f32 1.0, %v636
    %v638 = vrcp.pop %v580
    %v639 = vmul.f32 1.0, %v638
    %v640 = vrcp.pop %v581
    %v641 = vmul.f32 1.0, %v640
    %v642 = vrcp.pop %v582
    %v643 = vmul.f32 1.0, %v642
    %v644 = vrcp.pop %v583
    %v645 = vmul.f32 1.0, %v644
    %v646 = vrcp.pop %v584
    %v647 = vmul.f32 1.0, %v646
    %v648 = vrcp.pop %v585
    %v649 = vmul.f32 1.0, %v648
    %v650 = vmul.f32 %v426, %v587
    %v651 = vmul.f32 %v427, %v589
    %v652 = vmul.f32 %v428, %v591
    %v653 = vmul.f32 %v429, %v593
    %v654 = vmul.f32 %v430, %v595
    %v655 = vmul.f32 %v431, %v597
    %v656 = vmul.f32 %v432, %v599
    %v657 = vmul.f32 %v433, %v601
    %v658 = vmul.f32 %v434, %v603
    %v659 = vmul.f32 %v435, %v605
    %v660 = vmul.f32 %v436, %v607
    %v661 = vmul.f32 %v437, %v609
    %v662 = vmul.f32 %v438, %v611
    %v663 = vmul.f32 %v439, %v613
    %v664 = vmul.f32 %v440, %v615
    %v665 = vmul.f32 %v441, %v617
    %v666 = vmul.f32 %v442, %v619
    %v667 = vmul.f32 %v443, %v621
    %v668 = vmul.f32 %v444, %v623
    %v669 = vmul.f32 %v445, %v625
    %v670 = vmul.f32 %v446, %v627
    %v671 = vmul.f32 %v447, %v629
    %v672 = vmul.f32 %v448, %v631
    %v673 = vmul.f32 %v449, %v633
    %v674 = vmul.f32 %v450, %v635
    %v675 = vmul.f32 %v451, %v637
    %v676 = vmul.f32 %v452, %v639
    %v677 = vmul.f32 %v453, %v641
    %v678 = vmul.f32 %v454, %v643
    %v679 = vmul.f32 %v455, %v645
    %v680 = vmul.f32 %v456, %v647
    %v681 = vmul.f32 %v457, %v649
    %682 = vst [vmem:[%s3] sm:$0xff] %v650
    %683 = vst.msk [vmem:[%s3 + $0x8] sm:$0xff] %vm347, %v651
    %684 = vst [vmem:[%s3 + $0x10] sm:$0xff] %v652
    %685 = vst.msk [vmem:[%s3 + $0x18] sm:$0xff] %vm347, %v653
    %686 = vst [vmem:[%s3 + $0x20] sm:$0xff] %v654
    %687 = vst.msk [vmem:[%s3 + $0x28] sm:$0xff] %vm347, %v655
    %688 = vst [vmem:[%s3 + $0x30] sm:$0xff] %v656
    %689 = vst.msk [vmem:[%s3 + $0x38] sm:$0xff] %vm347, %v657
    %690 = vst [vmem:[%s3 + $0x40] sm:$0xff] %v658
    %691 = vst.msk [vmem:[%s3 + $0x48] sm:$0xff] %vm347, %v659
    %692 = vst [vmem:[%s3 + $0x50] sm:$0xff] %v660
    %693 = vst.msk [vmem:[%s3 + $0x58] sm:$0xff] %vm347, %v661
    %694 = vst [vmem:[%s3 + $0x60] sm:$0xff] %v662
    %695 = vst.msk [vmem:[%s3 + $0x68] sm:$0xff] %vm347, %v663
    %696 = vst [vmem:[%s3 + $0x70] sm:$0xff] %v664
    %697 = vst.msk [vmem:[%s3 + $0x78] sm:$0xff] %vm347, %v665
    %698 = vst [vmem:[%s3 + $0x80] sm:$0xff] %v666
    %699 = vst.msk [vmem:[%s3 + $0x88] sm:$0xff] %vm347, %v667
    %700 = vst [vmem:[%s3 + $0x90] sm:$0xff] %v668
    %701 = vst.msk [vmem:[%s3 + $0x98] sm:$0xff] %vm347, %v669
    %702 = vst [vmem:[%s3 + $0xa0] sm:$0xff] %v670
    %703 = vst.msk [vmem:[%s3 + $0xa8] sm:$0xff] %vm347, %v671
    %704 = vst [vmem:[%s3 + $0xb0] sm:$0xff] %v672
    %705 = vst.msk [vmem:[%s3 + $0xb8] sm:$0xff] %vm347, %v673
    %706 = vst [vmem:[%s3 + $0xc0] sm:$0xff] %v674
    %707 = vst.msk [vmem:[%s3 + $0xc8] sm:$0xff] %vm347, %v675
    %708 = vst [vmem:[%s3 + $0xd0] sm:$0xff] %v676
    %709 = vst.msk [vmem:[%s3 + $0xd8] sm:$0xff] %vm347, %v677
    %710 = vst [vmem:[%s3 + $0xe0] sm:$0xff] %v678
    %711 = vst.msk [vmem:[%s3 + $0xe8] sm:$0xff] %vm347, %v679
    %712 = vst [vmem:[%s3 + $0xf0] sm:$0xff] %v680
    %713 = vst.msk [vmem:[%s3 + $0xf8] sm:$0xff] %vm347, %v681
  $region21: #{efficientnet_forward.14} parent=0 // pred_fallthru
    _
  // Predicated region
  $region22: #{efficientnet_forward.14} parent=0 // pred_check
    _
  $region23: #{efficientnet_forward.14} parent=0 // pred_check_branch
    %715 = sbr.rel (0) target = $region25
  $region24: #{efficientnet_forward.14} parent=0 // pred_region
    _
  $region25: #{efficientnet_forward.14} parent=0 // pred_fallthru
    _
  // Predicated region
  $region26: #{efficientnet_forward.14} parent=0 // pred_check
    _
  $region27: #{efficientnet_forward.14} parent=0 // pred_check_branch
    %717 = sbr.rel (0) target = $region29
  $region28: #{efficientnet_forward.14} parent=0 // pred_region
    _
  $region29: #{efficientnet_forward.14} parent=0 // pred_fallthru
    _

// kernel: efficientnet_forward.16
$region0: #{efficientnet_forward.16}
  #allocation0 [shape = 'u32[]', space=smem, size = 0x4, offset = 0x4, fixed_abs, tag = 'smem constant byte address 0x4 - core index']
  #allocation1 [shape = 'u32[144,128]{1,0:T(1,128)}', space=vmem, size = 0x12000, scoped, tag = 'internal scratch']
  %s0 = inlined_call_operand.vmem [shape: bf16[128,192], index: 0, kind: input, shape index: {}]
  %s1 = inlined_call_operand.vmem [shape: bf16[2,1,192], index: 1, kind: input, shape index: {}]
  %s2 = inlined_call_operand.vmem [shape: bf16[192,48], index: 2, kind: input, shape index: {}]
  %s3 = inlined_call_operand.vmem [shape: f32[1,48], index: 3, kind: input, shape index: {}]
  %s4 = inlined_call_operand.vmem [shape: f32[128,48], index: 4, kind: output, shape index: {}]
  %s5 = sld [smem:[#allocation0]]
  $region57: #{efficientnet_forward.16} parent=0
    _
  %s7 = ssub.s32 1, %s5
  %s8 = scalar_select 0, %s7, %s5
  loop: start=0, step=1, limit=4
  $region2: #{efficientnet_forward.16} parent=0 // loop_pre_header
    _
  $region3: #{efficientnet_forward.16} parent=0 // loop_header
    %s10 = sphi 0, %s14
    %p11 = scmp.ge.s32.totalorder %s10, 4
    %s17 = sphi 0, %s36
    %s18 = sphi 0, %s32
    %s19 = sphi 0, %s28
    %s20 = sphi 0, %s17
    %s21 = sphi 0, %s18
    %s22 = sphi 0, %s19
    %s23 = sphi 0, %s20
    %s24 = sphi 0, %s21
    %s25 = sphi 0, %s22
    %s41 = sphi 0, %s43
    %s44 = sphi 0, %s41
    %s45 = sphi 0, %s44
    %s61 = sphi 0, %s45
    %s69 = sphi 0, %s71
    %s72 = sphi 0, %s69
    %s73 = sphi 0, %s72
    %s89 = sphi 0, %s73
    %s97 = sphi 0, %s99
    %s100 = sphi 0, %s97
    %s101 = sphi 0, %s100
    %s117 = sphi 0, %s101
    %s123 = sphi 0, %s125
    %s126 = sphi 0, %s123
    %s127 = sphi 0, %s126
    %s143 = sphi 0, %s127
    %s151 = sphi 0, %s153
    %s154 = sphi 0, %s151
    %s155 = sphi 0, %s154
    %s171 = sphi 0, %s155
  $region4: #{efficientnet_forward.16} parent=0 // loop_header_branch
    %13 = sbr.rel (%p11) target = $region8
  $region5: #{efficientnet_forward.16} parent=0 // loop_body
    %s15 = ssub.s32 %s10, 1
    %s16 = ssub.s32 %s10, 2
    %s26 = sadd.s32 1, %s19
    %p27 = scmp.ge.s32.totalorder %s26, 1
    %s28 = scalar_select %p27, 0, %s26
    %s29 = sadd.s32 1, %s18
    %s30 = scalar_select %p27, %s29, %s18
    %p31 = scmp.ge.s32.totalorder %s30, 1
    %s32 = scalar_select %p31, 0, %s30
    %s33 = sadd.s32 1, %s17
    %s34 = scalar_select %p31, %s33, %s17
    %p35 = scmp.ge.s32.totalorder %s34, 2
    %s36 = scalar_select %p35, 0, %s34
    %s37 = ssub.s32 %s17, %s36
    %s38 = ssub.s32 %s19, %s28
    %s39 = sor.u32 %s37, %s38
    %p40 = scmp.eq.s32.totalorder %s39, 0
    %s42 = sadd.s32 %s41, 1
    %s43 = scalar_select %p40, %s41, %s42
    %p46 = pneg %p40
    %p47 = scmp.eq.s32.totalorder %s10, 1
    %p48 = por %p46, %p47
    %p49 = scmp.ne.s32.totalorder %s41, %s44
    %p50 = scmp.eq.s32.totalorder %s10, 0
    %p51 = por %p49, %p50
    %p52 = scmp.ne.s32.totalorder %s41, %s44
    %p53 = scmp.eq.s32.totalorder %s15, 1
    %p54 = por %p52, %p53
    %p55 = scmp.ne.s32.totalorder %s44, %s45
    %p56 = scmp.eq.s32.totalorder %s15, 0
    %p57 = por %p55, %p56
    %p58 = scmp.ne.s32.totalorder %s44, %s45
    %p59 = scmp.eq.s32.totalorder %s16, 1
    %p60 = por %p58, %p59
    %p62 = scmp.ne.s32.totalorder %s45, %s61
    %p63 = scmp.eq.s32.totalorder %s16, 0
    %p64 = por %p62, %p63
    %s65 = ssub.s32 %s17, %s36
    %s66 = ssub.s32 %s19, %s28
    %s67 = sor.u32 %s65, %s66
    %p68 = scmp.eq.s32.totalorder %s67, 0
    %s70 = sadd.s32 %s69, 1
    %s71 = scalar_select %p68, %s69, %s70
    %p74 = pneg %p68
    %p75 = scmp.eq.s32.totalorder %s10, 1
    %p76 = por %p74, %p75
    %p77 = scmp.ne.s32.totalorder %s69, %s72
    %p78 = scmp.eq.s32.totalorder %s10, 0
    %p79 = por %p77, %p78
    %p80 = scmp.ne.s32.totalorder %s69, %s72
    %p81 = scmp.eq.s32.totalorder %s15, 1
    %p82 = por %p80, %p81
    %p83 = scmp.ne.s32.totalorder %s72, %s73
    %p84 = scmp.eq.s32.totalorder %s15, 0
    %p85 = por %p83, %p84
    %p86 = scmp.ne.s32.totalorder %s72, %s73
    %p87 = scmp.eq.s32.totalorder %s16, 1
    %p88 = por %p86, %p87
    %p90 = scmp.ne.s32.totalorder %s73, %s89
    %p91 = scmp.eq.s32.totalorder %s16, 0
    %p92 = por %p90, %p91
    %s93 = ssub.s32 %s19, %s28
    %s94 = ssub.s32 %s18, %s32
    %s95 = sor.u32 %s93, %s94
    %p96 = scmp.eq.s32.totalorder %s95, 0
    %s98 = sadd.s32 %s97, 1
    %s99 = scalar_select %p96, %s97, %s98
    %p102 = pneg %p96
    %p103 = scmp.eq.s32.totalorder %s10, 1
    %p104 = por %p102, %p103
    %p105 = scmp.ne.s32.totalorder %s97, %s100
    %p106 = scmp.eq.s32.totalorder %s10, 0
    %p107 = por %p105, %p106
    %p108 = scmp.ne.s32.totalorder %s97, %s100
    %p109 = scmp.eq.s32.totalorder %s15, 1
    %p110 = por %p108, %p109
    %p111 = scmp.ne.s32.totalorder %s100, %s101
    %p112 = scmp.eq.s32.totalorder %s15, 0
    %p113 = por %p111, %p112
    %p114 = scmp.ne.s32.totalorder %s100, %s101
    %p115 = scmp.eq.s32.totalorder %s16, 1
    %p116 = por %p114, %p115
    %p118 = scmp.ne.s32.totalorder %s101, %s117
    %p119 = scmp.eq.s32.totalorder %s16, 0
    %p120 = por %p118, %p119
    %s121 = ssub.s32 %s18, %s32
    %p122 = scmp.eq.s32.totalorder %s121, 0
    %s124 = sadd.s32 %s123, 1
    %s125 = scalar_select %p122, %s123, %s124
    %p128 = pneg %p122
    %p129 = scmp.eq.s32.totalorder %s10, 1
    %p130 = por %p128, %p129
    %p131 = scmp.ne.s32.totalorder %s123, %s126
    %p132 = scmp.eq.s32.totalorder %s10, 0
    %p133 = por %p131, %p132
    %p134 = scmp.ne.s32.totalorder %s123, %s126
    %p135 = scmp.eq.s32.totalorder %s15, 1
    %p136 = por %p134, %p135
    %p137 = scmp.ne.s32.totalorder %s126, %s127
    %p138 = scmp.eq.s32.totalorder %s15, 0
    %p139 = por %p137, %p138
    %p140 = scmp.ne.s32.totalorder %s126, %s127
    %p141 = scmp.eq.s32.totalorder %s16, 1
    %p142 = por %p140, %p141
    %p144 = scmp.ne.s32.totalorder %s127, %s143
    %p145 = scmp.eq.s32.totalorder %s16, 0
    %p146 = por %p144, %p145
    %s147 = ssub.s32 %s17, %s36
    %s148 = ssub.s32 %s18, %s32
    %s149 = sor.u32 %s147, %s148
    %p150 = scmp.eq.s32.totalorder %s149, 0
    %s152 = sadd.s32 %s151, 1
    %s153 = scalar_select %p150, %s151, %s152
    %p156 = pneg %p150
    %p157 = scmp.eq.s32.totalorder %s10, 1
    %p158 = por %p156, %p157
    %p159 = scmp.ne.s32.totalorder %s151, %s154
    %p160 = scmp.eq.s32.totalorder %s10, 0
    %p161 = por %p159, %p160
    %p162 = scmp.ne.s32.totalorder %s151, %s154
    %p163 = scmp.eq.s32.totalorder %s15, 1
    %p164 = por %p162, %p163
    %p165 = scmp.ne.s32.totalorder %s154, %s155
    %p166 = scmp.eq.s32.totalorder %s15, 0
    %p167 = por %p165, %p166
    %p168 = scmp.ne.s32.totalorder %s154, %s155
    %p169 = scmp.eq.s32.totalorder %s16, 1
    %p170 = por %p168, %p169
    %p172 = scmp.ne.s32.totalorder %s155, %s171
    %p173 = scmp.eq.s32.totalorder %s16, 0
    %p174 = por %p172, %p173
    %p175 = scmp.le.s32.totalorder 1, %s10
    %p176 = scmp.lt.s32.totalorder %s10, 3
    %p177 = pnand %p175, %p176
    %p178 = pneg %p177
    // Predicated region
    $region9: #{efficientnet_forward.16} parent=5 // pred_check
      _
    $region10: #{efficientnet_forward.16} parent=5 // pred_check_branch
      %180 = sbr.rel (%p177) target = $region12
    $region11: #{efficientnet_forward.16} parent=5 // pred_region
      %s181 = ssub.s32 %s10, 1
      // Predicated region
      $region13: #{efficientnet_forward.16} parent=11 // pred_check
        %p182 = pneg %p113
      $region14: #{efficientnet_forward.16} parent=11 // pred_check_branch
        %184 = sbr.rel (%p182) target = $region16
      $region15: #{efficientnet_forward.16} parent=11 // pred_region
        %s185 = smul.u32 24, %s22
        %p186 = scmp.lt.s32.totalorder %s185, 23
        %s187 = scalar_select %p186, %s185, 23
        %p188 = scmp.lt.s32.totalorder %s21, 0
        %s189 = scalar_select %p188, %s21, 0
        %s190 = sadd.s32 %s189, %s187
        %s191 = smul.addr %s190, 4
        %s192 = scalar_lea.vmem %s2, %s191
        %s193 = smul.u32 24, %s22
      $region16: #{efficientnet_forward.16} parent=11 // pred_fallthru
        _
      // Predicated region
      $region17: #{efficientnet_forward.16} parent=11 // pred_check
        %p194 = pneg %p139
      $region18: #{efficientnet_forward.16} parent=11 // pred_check_branch
        %196 = sbr.rel (%p194) target = $region20
      $region19: #{efficientnet_forward.16} parent=11 // pred_region
        %p197 = scmp.lt.s32.totalorder %s21, 0
        %s198 = scalar_select %p197, %s21, 0
        %s199 = scalar_lea.vmem %s3, %s198
      $region20: #{efficientnet_forward.16} parent=11 // pred_fallthru
        _
    $region12: #{efficientnet_forward.16} parent=5 // pred_fallthru
      _
    %p200 = scmp.lt.s32.totalorder %s10, 2
    // Predicated region
    $region21: #{efficientnet_forward.16} parent=5 // pred_check
      %p201 = pneg %p200
    $region22: #{efficientnet_forward.16} parent=5 // pred_check_branch
      %203 = sbr.rel (%p201) target = $region24
    $region23: #{efficientnet_forward.16} parent=5 // pred_region
      // Predicated region
      $region25: #{efficientnet_forward.16} parent=23 // pred_check
        %p204 = pneg %p51
      $region26: #{efficientnet_forward.16} parent=23 // pred_check_branch
        %206 = sbr.rel (%p204) target = $region28
      $region27: #{efficientnet_forward.16} parent=23 // pred_region
        %s207 = smul.u32 8, %s17
        %s208 = smul.u32 2, %s19
        %p209 = scmp.lt.s32.totalorder %s207, 15
        %s210 = scalar_select %p209, %s207, 15
        %p211 = scmp.lt.s32.totalorder %s208, 1
        %s212 = scalar_select %p211, %s208, 1
        %s213 = smul.addr %s210, 2
        %s214 = sadd.s32 %s212, %s213
        %s215 = smul.addr %s214, 4
        %s216 = scalar_lea.vmem %s0, %s215
        %s217 = smul.u32 8, %s17
        %s218 = smul.u32 2, %s19
      $region28: #{efficientnet_forward.16} parent=23 // pred_fallthru
        _
      // Predicated region
      $region29: #{efficientnet_forward.16} parent=23 // pred_check
        %p219 = pneg %p79
      $region30: #{efficientnet_forward.16} parent=23 // pred_check_branch
        %221 = sbr.rel (%p219) target = $region32
      $region31: #{efficientnet_forward.16} parent=23 // pred_region
        %s222 = smul.u32 2, %s19
        %p223 = scmp.lt.s32.totalorder %s17, 1
        %s224 = scalar_select %p223, %s17, 1
        %p225 = scmp.lt.s32.totalorder %s222, 1
        %s226 = scalar_select %p225, %s222, 1
        %s227 = smul.addr %s224, 2
        %s228 = sadd.s32 %s226, %s227
        %s229 = scalar_lea.vmem %s1, %s228
        %s230 = smul.u32 2, %s19
      $region32: #{efficientnet_forward.16} parent=23 // pred_fallthru
        _
    $region24: #{efficientnet_forward.16} parent=5 // pred_fallthru
      _
    %p231 = scmp.le.s32.totalorder 1, %s10
    %p232 = scmp.lt.s32.totalorder %s10, 3
    %p233 = pnand %p231, %p232
    %p234 = pneg %p233
    // Predicated region
    $region33: #{efficientnet_forward.16} parent=5 // pred_check
      _
    $region34: #{efficientnet_forward.16} parent=5 // pred_check_branch
      %236 = sbr.rel (%p233) target = $region36
    $region35: #{efficientnet_forward.16} parent=5 // pred_region
      %s237 = ssub.s32 %s10, 1
      %s238 = smul.u32 8, %s20
      %s239 = smul.u32 2, %s22
      %p240 = scmp.lt.s32.totalorder %s238, 15
      %s241 = scalar_select %p240, %s238, 15
      %p242 = scmp.lt.s32.totalorder %s239, 1
      %s243 = scalar_select %p242, %s239, 1
      %s244 = smul.addr %s241, 2
      %s245 = sadd.s32 %s243, %s244
      %s246 = smul.addr %s245, 4
      %s247 = scalar_lea.vmem %s0, %s246
      %p248 = pneg %p57
      %p249 = pneg %p54
      %s250 = smul.u32 2, %s22
      %p251 = scmp.lt.s32.totalorder %s20, 1
      %s252 = scalar_select %p251, %s20, 1
      %p253 = scmp.lt.s32.totalorder %s250, 1
      %s254 = scalar_select %p253, %s250, 1
      %s255 = smul.addr %s252, 2
      %s256 = sadd.s32 %s254, %s255
      %s257 = scalar_lea.vmem %s1, %s256
      %p258 = pneg %p85
      %p259 = pneg %p82
      %s260 = smul.u32 24, %s22
      %p261 = scmp.lt.s32.totalorder %s260, 23
      %s262 = scalar_select %p261, %s260, 23
      %p263 = scmp.lt.s32.totalorder %s21, 0
      %s264 = scalar_select %p263, %s21, 0
      %s265 = sadd.s32 %s264, %s262
      %s266 = smul.addr %s265, 4
      %s267 = scalar_lea.vmem %s2, %s266
      %p268 = pneg %p113
      %p269 = pneg %p110
      %p270 = scmp.lt.s32.totalorder %s21, 0
      %s271 = scalar_select %p270, %s21, 0
      %s272 = scalar_lea.vmem %s3, %s271
      %p273 = pneg %p139
      %p274 = pneg %p136
      %p275 = pneg %p167
      %p276 = pneg %p164
      %s277 = smul.u32 8, %s20
      %p278 = scmp.lt.s32.totalorder %s277, 15
      %s279 = scalar_select %p278, %s277, 15
      %p280 = scmp.lt.s32.totalorder %s21, 0
      %s281 = scalar_select %p280, %s21, 0
      %s282 = sadd.s32 %s281, %s279
      %s283 = smul.addr %s282, 8
      %s284 = scalar_lea.vmem %s4, %s283
      %s285 = smul.u32 8, %s20
      %s286 = smul.u32 2, %s22
      %p287 = scmp.lt.s32.totalorder %s285, 15
      %s288 = scalar_select %p287, %s285, 15
      %p289 = scmp.lt.s32.totalorder %s286, 1
      %s290 = scalar_select %p289, %s286, 1
      %s291 = smul.addr %s288, 2
      %s292 = sadd.s32 %s290, %s291
      %s293 = smul.addr %s292, 4
      %s294 = scalar_lea.vmem %s0, %s293
      %s295 = smul.u32 8, %s20
      %s296 = smul.u32 2, %s22
      %s297 = smul.u32 2, %s22
      %p298 = scmp.lt.s32.totalorder %s20, 1
      %s299 = scalar_select %p298, %s20, 1
      %p300 = scmp.lt.s32.totalorder %s297, 1
      %s301 = scalar_select %p300, %s297, 1
      %s302 = smul.addr %s299, 2
      %s303 = sadd.s32 %s301, %s302
      %s304 = scalar_lea.vmem %s1, %s303
      %s305 = smul.u32 2, %s22
      %s306 = smul.u32 24, %s22
      %p307 = scmp.lt.s32.totalorder %s306, 23
      %s308 = scalar_select %p307, %s306, 23
      %p309 = scmp.lt.s32.totalorder %s21, 0
      %s310 = scalar_select %p309, %s21, 0
      %s311 = sadd.s32 %s310, %s308
      %s312 = smul.addr %s311, 4
      %s313 = scalar_lea.vmem %s2, %s312
      %s314 = smul.u32 24, %s22
      %p315 = scmp.lt.s32.totalorder %s21, 0
      %s316 = scalar_select %p315, %s21, 0
      %s317 = scalar_lea.vmem %s3, %s316
      %s318 = smul.u32 8, %s20
      %p319 = scmp.lt.s32.totalorder %s318, 15
      %s320 = scalar_select %p319, %s318, 15
      %p321 = scmp.lt.s32.totalorder %s21, 0
      %s322 = scalar_select %p321, %s21, 0
      %s323 = sadd.s32 %s322, %s320
      %s324 = smul.addr %s323, 8
      %s325 = scalar_lea.vmem %s4, %s324
      %s326 = smul.u32 8, %s20
      %p328 = scmp.eq.s32.totalorder %s22, 0
      // Predicated region
      $region37: #{efficientnet_forward.16} parent=35 // pred_check
        %p329 = pneg %p328
      $region38: #{efficientnet_forward.16} parent=35 // pred_check_branch
        %331 = sbr.rel (%p329) target = $region40
      $region39: #{efficientnet_forward.16} parent=35 // pred_region
        %vm332 = vcmask 392192
        %333 = vst.msk [vmem:[%s325] sm:$0xff] %vm332, 0.0
        %334 = vst.msk [vmem:[%s325 + $0x8] sm:$0xff] %vm332, 0.0
        %335 = vst.msk [vmem:[%s325 + $0x10] sm:$0xff] %vm332, 0.0
        %336 = vst.msk [vmem:[%s325 + $0x18] sm:$0xff] %vm332, 0.0
        %337 = vst.msk [vmem:[%s325 + $0x20] sm:$0xff] %vm332, 0.0
        %338 = vst.msk [vmem:[%s325 + $0x28] sm:$0xff] %vm332, 0.0
        %339 = vst.msk [vmem:[%s325 + $0x30] sm:$0xff] %vm332, 0.0
        %340 = vst.msk [vmem:[%s325 + $0x38] sm:$0xff] %vm332, 0.0
      $region40: #{efficientnet_forward.16} parent=35 // pred_fallthru
        _
      %v341 = vld [vmem:[%s294] sm:$0xff]
      %v342 = vld [vmem:[%s294 + $0x8] sm:$0xff]
      %v343 = vld [vmem:[%s294 + $0x10] sm:$0xff]
      %v344 = vld [vmem:[%s294 + $0x18] sm:$0xff]
      %v345 = vld [vmem:[%s294 + $0x20] sm:$0xff]
      %v346 = vld [vmem:[%s294 + $0x28] sm:$0xff]
      %v347 = vld [vmem:[%s294 + $0x30] sm:$0xff]
      %v348 = vld [vmem:[%s294 + $0x38] sm:$0xff]
      %v349 = vld [vmem:[%s304] sm:$0x3]
      %v352 = vunpack.c.l.s4 1966171168
      %v353 = vunpack.c.0.s8 %v352
      %v354 = vlaneseq
      %v355 = vshrl.u32 %v354, 7
      %v356 = vsub.s32 %v353, %v355
      %v357 = vrot.slane %v349, %v356
      %v358 = vcombine.high %v357, %v357
      %v360 = vunpack.c.l.s4 1966171168
      %v361 = vunpack.c.0.s8 %v360
      %v362 = vlaneseq
      %v363 = vshrl.u32 %v362, 7
      %v364 = vsub.s32 %v361, %v363
      %v365 = vrot.slane %v357, %v364
      %v367 = vunpack.c.l.s4 1966171168
      %v368 = vunpack.c.0.s8 %v367
      %v369 = vlaneseq
      %v370 = vshrl.u32 %v369, 7
      %v371 = vsub.s32 %v368, %v370
      %v372 = vrot.slane %v358, %v371
      %v374 = vpack.i.b16 %v365, %v365
      %v376 = vlaneseq
      %v377 = vshrl.u32 %v376, 7
      %v378 = vsub.s32 0, %v377
      %v379 = vrot.slane %v374, %v378
      %v381 = vpack.i.b16 %v372, %v372
      %v383 = vlaneseq
      %v384 = vshrl.u32 %v383, 7
      %v385 = vsub.s32 0, %v384
      %v386 = vrot.slane %v381, %v385
      %v389 = vunpack.c.l.b16 %v379
      %v390 = vunpack.c.l.b16 %v386
      %v391 = vpack.c.b16 %v390, %v389
      %v393 = vmul.bf16 %v341, %v391
      %v394 = vmul.bf16 %v342, %v391
      %v395 = vmul.bf16 %v343, %v391
      %v396 = vmul.bf16 %v344, %v391
      %v397 = vmul.bf16 %v345, %v391
      %v398 = vmul.bf16 %v346, %v391
      %v399 = vmul.bf16 %v347, %v391
      %v400 = vmul.bf16 %v348, %v391
      %v401 = vld [vmem:[%s325] sm:$0xff]
      %v402 = vld [vmem:[%s325 + $0x8] sm:$0xff]
      %v403 = vld [vmem:[%s325 + $0x10] sm:$0xff]
      %v404 = vld [vmem:[%s325 + $0x18] sm:$0xff]
      %v405 = vld [vmem:[%s325 + $0x20] sm:$0xff]
      %v406 = vld [vmem:[%s325 + $0x28] sm:$0xff]
      %v407 = vld [vmem:[%s325 + $0x30] sm:$0xff]
      %v408 = vld [vmem:[%s325 + $0x38] sm:$0xff]
      %v409 = vld [vmem:[%s313] sm:$0xf]
      %v410 = vld [vmem:[%s313 + $0x4] sm:$0xf]
      %v411 = vld [vmem:[%s313 + $0x8] sm:$0xf]
      %v412 = vld [vmem:[%s313 + $0xc] sm:$0xf]
      %v413 = vld [vmem:[%s313 + $0x10] sm:$0xf]
      %v414 = vld [vmem:[%s313 + $0x14] sm:$0xf]
      %v415 = vld [vmem:[%s313 + $0x18] sm:$0xf]
      %v416 = vld [vmem:[%s313 + $0x1c] sm:$0xf]
      %v417 = vld [vmem:[%s313 + $0x20] sm:$0xf]
      %v418 = vld [vmem:[%s313 + $0x24] sm:$0xf]
      %v419 = vld [vmem:[%s313 + $0x28] sm:$0xf]
      %v420 = vld [vmem:[%s313 + $0x2c] sm:$0xf]
      %v421 = vld [vmem:[%s313 + $0x30] sm:$0xf]
      %v422 = vld [vmem:[%s313 + $0x34] sm:$0xf]
      %v423 = vld [vmem:[%s313 + $0x38] sm:$0xf]
      %v424 = vld [vmem:[%s313 + $0x3c] sm:$0xf]
      %v425 = vld [vmem:[%s313 + $0x40] sm:$0xf]
      %v426 = vld [vmem:[%s313 + $0x44] sm:$0xf]
      %v427 = vld [vmem:[%s313 + $0x48] sm:$0xf]
      %v428 = vld [vmem:[%s313 + $0x4c] sm:$0xf]
      %v429 = vld [vmem:[%s313 + $0x50] sm:$0xf]
      %v430 = vld [vmem:[%s313 + $0x54] sm:$0xf]
      %v431 = vld [vmem:[%s313 + $0x58] sm:$0xf]
      %v432 = vld [vmem:[%s313 + $0x5c] sm:$0xf]
      %v441 = vunpack.c.l.b16 %v393
      %v442 = vunpack.c.h.b16 %v393
      %v443 = vunpack.c.l.b16 %v394
      %v444 = vunpack.c.h.b16 %v394
      %v445 = vunpack.c.l.b16 %v395
      %v446 = vunpack.c.h.b16 %v395
      %v447 = vunpack.c.l.b16 %v396
      %v448 = vunpack.c.h.b16 %v396
      %v449 = vunpack.c.l.b16 %v397
      %v450 = vunpack.c.h.b16 %v397
      %v451 = vunpack.c.l.b16 %v398
      %v452 = vunpack.c.h.b16 %v398
      %v453 = vunpack.c.l.b16 %v399
      %v454 = vunpack.c.h.b16 %v399
      %v455 = vunpack.c.l.b16 %v400
      %v456 = vunpack.c.h.b16 %v400
      %v457 = vpack.c.b16 %v443, %v441
      %v458 = vpack.c.b16 %v444, %v442
      %v459 = vpack.c.b16 %v447, %v445
      %v460 = vpack.c.b16 %v448, %v446
      %v461 = vpack.c.b16 %v451, %v449
      %v462 = vpack.c.b16 %v452, %v450
      %v463 = vpack.c.b16 %v455, %v453
      %v464 = vpack.c.b16 %v456, %v454
      %v493 = vunpack.c.l.b16 %v409
      %v494 = vunpack.c.l.b16 %v410
      %v495 = vunpack.c.l.b16 %v411
      %v496 = vunpack.c.l.b16 %v412
      %v497 = vunpack.c.l.b16 %v413
      %v498 = vunpack.c.l.b16 %v414
      %v499 = vunpack.c.l.b16 %v415
      %v500 = vunpack.c.l.b16 %v416
      %v501 = vunpack.c.l.b16 %v417
      %v502 = vunpack.c.l.b16 %v418
      %v503 = vunpack.c.l.b16 %v419
      %v504 = vunpack.c.l.b16 %v420
      %v505 = vunpack.c.l.b16 %v421
      %v506 = vunpack.c.l.b16 %v422
      %v507 = vunpack.c.l.b16 %v423
      %v508 = vunpack.c.l.b16 %v424
      %v509 = vunpack.c.l.b16 %v425
      %v510 = vunpack.c.l.b16 %v426
      %v511 = vunpack.c.l.b16 %v427
      %v512 = vunpack.c.l.b16 %v428
      %v513 = vunpack.c.l.b16 %v429
      %v514 = vunpack.c.l.b16 %v430
      %v515 = vunpack.c.l.b16 %v431
      %v516 = vunpack.c.l.b16 %v432
      %v517 = vpack.c.b16 %v494, %v493
      %v518 = vpack.c.b16 %v496, %v495
      %v519 = vpack.c.b16 %v498, %v497
      %v520 = vpack.c.b16 %v500, %v499
      %v521 = vpack.c.b16 %v502, %v501
      %v522 = vpack.c.b16 %v504, %v503
      %v523 = vpack.c.b16 %v506, %v505
      %v524 = vpack.c.b16 %v508, %v507
      %v525 = vpack.c.b16 %v510, %v509
      %v526 = vpack.c.b16 %v512, %v511
      %v527 = vpack.c.b16 %v514, %v513
      %v528 = vpack.c.b16 %v516, %v515
      %vm541 = vcmask 523264
      %v543 = vsel %vm541, %v458, 0
      %v546 = vsel %vm541, %v460, 0
      %v549 = vsel %vm541, %v462, 0
      %v552 = vsel %vm541, %v464, 0
      %554 = vmatprep.subr.bf16.mxu0 0
      %555 = vmatpush1.bf16.msra.mxu0 %v517
      %556 = vmatprep.subr.bf16.mxu0 0
      %557 = vmatpush1.bf16.msra.mxu0 %v518
      %558 = vmatprep.subr.bf16.mxu0 0
      %559 = vmatpush1.bf16.msra.mxu0 %v519
      %560 = vmatprep.subr.bf16.mxu0 0
      %561 = vmatpush1.bf16.msra.mxu0 %v520
      %562 = vmatprep.subr.bf16.mxu0 0
      %563 = vmatpush1.bf16.msra.mxu0 %v521
      %564 = vmatprep.subr.bf16.mxu0 0
      %565 = vmatpush1.bf16.msra.mxu0 %v522
      %566 = vmatprep.subr.bf16.mxu0 0
      %567 = vmatpush1.bf16.msra.mxu0 %v523
      %568 = vmatprep.subr.bf16.mxu0 0
      %569 = vmatpush1.bf16.msra.mxu0 %v524
      %570 = vmatprep.subr.bf16.mxu0 0
      %571 = vmatpush1.bf16.msra.mxu0 %v525
      %572 = vmatprep.subr.bf16.mxu0 0
      %573 = vmatpush1.bf16.msra.mxu0 %v526
      %574 = vmatprep.subr.bf16.mxu0 0
      %575 = vmatpush1.bf16.msra.mxu0 %v527
      %576 = vmatprep.subr.bf16.mxu0 0
      %577 = vmatpush1.bf16.msra.mxu0 %v528
      %578 = vmatprep.subr.bf16.mxu0 0
      %579 = vmatpush1.bf16.msra.mxu0 0
      %580 = vmatprep.subr.bf16.mxu0 0
      %581 = vmatpush1.bf16.msra.mxu0 0
      %582 = vmatprep.subr.bf16.mxu0 0
      %583 = vmatpush1.bf16.msra.mxu0 0
      %584 = vmatprep.subr.bf16.mxu0 0
      %585 = vmatpush1.bf16.msra.mxu0 0
      %586 = vmatprep.mubr.bf16.mxu0 %v543
      %587 = vmatmul.mubr.bf16.gmra.mrb[0].mxu0 %v457
      %v588 = vpop.f32.mrb[0].mxu0
      %v589 = vadd.f32 0.0, %v588
      %v590 = vpop.f32.mrb[0].mxu0
      %v591 = vpop.f32.mrb[0].mxu0
      %v592 = vadd.f32 0.0, %v591
      %v593 = vpop.f32.mrb[0].mxu0
      %594 = vmatprep.mubr.bf16.mxu0 %v546
      %595 = vmatmul.mubr.bf16.gmra.mrb[0].mxu0 %v459
      %v596 = vpop.f32.mrb[0].mxu0
      %v597 = vadd.f32 0.0, %v596
      %v598 = vpop.f32.mrb[0].mxu0
      %v599 = vpop.f32.mrb[0].mxu0
      %v600 = vadd.f32 0.0, %v599
      %v601 = vpop.f32.mrb[0].mxu0
      %602 = vmatprep.mubr.bf16.mxu0 %v549
      %603 = vmatmul.mubr.bf16.gmra.mrb[0].mxu0 %v461
      %v604 = vpop.f32.mrb[0].mxu0
      %v605 = vadd.f32 0.0, %v604
      %v606 = vpop.f32.mrb[0].mxu0
      %v607 = vpop.f32.mrb[0].mxu0
      %v608 = vadd.f32 0.0, %v607
      %v609 = vpop.f32.mrb[0].mxu0
      %610 = vmatprep.mubr.bf16.mxu0 %v552
      %611 = vmatmul.mubr.bf16.gmra.mrb[0].mxu0 %v463
      %v612 = vpop.f32.mrb[0].mxu0
      %v613 = vadd.f32 0.0, %v612
      %v614 = vpop.f32.mrb[0].mxu0
      %v615 = vpop.f32.mrb[0].mxu0
      %v616 = vadd.f32 0.0, %v615
      %v617 = vpop.f32.mrb[0].mxu0
      %618 = vdwg.mxu0
      %v619 = vadd.f32 %v401, %v589
      %v620 = vadd.f32 %v402, %v592
      %v621 = vadd.f32 %v403, %v597
      %v622 = vadd.f32 %v404, %v600
      %v623 = vadd.f32 %v405, %v605
      %v624 = vadd.f32 %v406, %v608
      %v625 = vadd.f32 %v407, %v613
      %v626 = vadd.f32 %v408, %v616
      %vm627 = vcmask 392192
      %628 = vst.msk [vmem:[%s325] sm:$0xff] %vm627, %v619
      %629 = vst.msk [vmem:[%s325 + $0x8] sm:$0xff] %vm627, %v620
      %630 = vst.msk [vmem:[%s325 + $0x10] sm:$0xff] %vm627, %v621
      %631 = vst.msk [vmem:[%s325 + $0x18] sm:$0xff] %vm627, %v622
      %632 = vst.msk [vmem:[%s325 + $0x20] sm:$0xff] %vm627, %v623
      %633 = vst.msk [vmem:[%s325 + $0x28] sm:$0xff] %vm627, %v624
      %634 = vst.msk [vmem:[%s325 + $0x30] sm:$0xff] %vm627, %v625
      %635 = vst.msk [vmem:[%s325 + $0x38] sm:$0xff] %vm627, %v626
      // Predicated region
      $region41: #{efficientnet_forward.16} parent=35 // pred_check
        %p636 = pneg %p328
      $region42: #{efficientnet_forward.16} parent=35 // pred_check_branch
        %638 = sbr.rel (%p636) target = $region44
      $region43: #{efficientnet_forward.16} parent=35 // pred_region
        %v639 = vld [vmem:[%s325] sm:$0xff]
        %v640 = vld [vmem:[%s325 + $0x8] sm:$0xff]
        %v641 = vld [vmem:[%s325 + $0x10] sm:$0xff]
        %v642 = vld [vmem:[%s325 + $0x18] sm:$0xff]
        %v643 = vld [vmem:[%s325 + $0x20] sm:$0xff]
        %v644 = vld [vmem:[%s325 + $0x28] sm:$0xff]
        %v645 = vld [vmem:[%s325 + $0x30] sm:$0xff]
        %v646 = vld [vmem:[%s325 + $0x38] sm:$0xff]
        %v647 = vld [vmem:[%s317] sm:$0x1]
        %v649 = vlaneseq
        %v650 = vshrl.u32 %v649, 7
        %v651 = vsub.s32 0, %v650
        %v652 = vrot.slane %v647, %v651
        %v654 = vadd.f32 %v639, %v652
        %v655 = vadd.f32 %v640, %v652
        %v656 = vadd.f32 %v641, %v652
        %v657 = vadd.f32 %v642, %v652
        %v658 = vadd.f32 %v643, %v652
        %v659 = vadd.f32 %v644, %v652
        %v660 = vadd.f32 %v645, %v652
        %v661 = vadd.f32 %v646, %v652
        %662 = vst.msk [vmem:[%s325] sm:$0xff] %vm627, %v654
        %663 = vst.msk [vmem:[%s325 + $0x8] sm:$0xff] %vm627, %v655
        %664 = vst.msk [vmem:[%s325 + $0x10] sm:$0xff] %vm627, %v656
        %665 = vst.msk [vmem:[%s325 + $0x18] sm:$0xff] %vm627, %v657
        %666 = vst.msk [vmem:[%s325 + $0x20] sm:$0xff] %vm627, %v658
        %667 = vst.msk [vmem:[%s325 + $0x28] sm:$0xff] %vm627, %v659
        %668 = vst.msk [vmem:[%s325 + $0x30] sm:$0xff] %vm627, %v660
        %669 = vst.msk [vmem:[%s325 + $0x38] sm:$0xff] %vm627, %v661
      $region44: #{efficientnet_forward.16} parent=35 // pred_fallthru
        _
      %s670 = smul.u32 8, %s20
      %p671 = scmp.lt.s32.totalorder %s670, 15
      %s672 = scalar_select %p671, %s670, 15
      %p673 = scmp.lt.s32.totalorder %s21, 0
      %s674 = scalar_select %p673, %s21, 0
      %s675 = sadd.s32 %s674, %s672
      %s676 = smul.addr %s675, 8
      %s677 = scalar_lea.vmem %s4, %s676
      // Predicated region
      $region45: #{efficientnet_forward.16} parent=35 // pred_check
        %p678 = pneg %p164
      $region46: #{efficientnet_forward.16} parent=35 // pred_check_branch
        %680 = sbr.rel (%p678) target = $region48
      $region47: #{efficientnet_forward.16} parent=35 // pred_region
        %s681 = smul.u32 8, %s20
      $region48: #{efficientnet_forward.16} parent=35 // pred_fallthru
        _
    $region36: #{efficientnet_forward.16} parent=5 // pred_fallthru
      _
    %p682 = scmp.le.s32.totalorder 2, %s10
    // Predicated region
    $region49: #{efficientnet_forward.16} parent=5 // pred_check
      %p683 = pneg %p682
    $region50: #{efficientnet_forward.16} parent=5 // pred_check_branch
      %685 = sbr.rel (%p683) target = $region52
    $region51: #{efficientnet_forward.16} parent=5 // pred_region
      %s686 = ssub.s32 %s10, 2
      // Predicated region
      $region53: #{efficientnet_forward.16} parent=51 // pred_check
        %p687 = pneg %p170
      $region54: #{efficientnet_forward.16} parent=51 // pred_check_branch
        %689 = sbr.rel (%p687) target = $region56
      $region55: #{efficientnet_forward.16} parent=51 // pred_region
        %s690 = smul.u32 8, %s23
        %p691 = scmp.lt.s32.totalorder %s690, 15
        %s692 = scalar_select %p691, %s690, 15
        %p693 = scmp.lt.s32.totalorder %s24, 0
        %s694 = scalar_select %p693, %s24, 0
        %s695 = sadd.s32 %s694, %s692
        %s696 = smul.addr %s695, 8
        %s697 = scalar_lea.vmem %s4, %s696
      $region56: #{efficientnet_forward.16} parent=51 // pred_fallthru
        _
    $region52: #{efficientnet_forward.16} parent=5 // pred_fallthru
      _
  $region6: #{efficientnet_forward.16} parent=0 // loop_footer
    %s14 = sadd.s32 1, %s10
  $region7: #{efficientnet_forward.16} parent=0 // loop_footer_branch
    %9 = sbr.rel target = $region3
  $region8: #{efficientnet_forward.16} parent=0 // loop_exit
    _

// kernel: efficientnet_forward.18
$region0: #{efficientnet_forward.18}
  #allocation0 [shape = 'u32[]', space=smem, size = 0x4, offset = 0x4, fixed_abs, tag = 'smem constant byte address 0x4 - core index']
  #allocation1 [shape = 'u32[144,128]{1,0:T(1,128)}', space=vmem, size = 0x12000, scoped, tag = 'internal scratch']
  %s0 = inlined_call_operand.vmem [shape: f32[2,64,128], index: 0, kind: input, shape index: {}]
  %s1 = inlined_call_operand.vmem [shape: f32[2,128], index: 1, kind: output, shape index: {}]
  %s2 = sld [smem:[#allocation0]]
  $region22: #{efficientnet_forward.18} parent=0
    _
  %s4 = ssub.s32 1, %s2
  %s5 = scalar_select 0, %s4, %s2
  // Predicated region
  $region2: #{efficientnet_forward.18} parent=0 // pred_check
    _
  $region3: #{efficientnet_forward.18} parent=0 // pred_check_branch
    %7 = sbr.rel (0) target = $region5
  $region4: #{efficientnet_forward.18} parent=0 // pred_region
    _
  $region5: #{efficientnet_forward.18} parent=0 // pred_fallthru
    _
  %p8 = scmp.eq.s32.totalorder 0, 0
  // Predicated region
  $region6: #{efficientnet_forward.18} parent=0 // pred_check
    %p9 = pneg %p8
  $region7: #{efficientnet_forward.18} parent=0 // pred_check_branch
    %11 = sbr.rel (%p9) target = $region9
  $region8: #{efficientnet_forward.18} parent=0 // pred_region
    %12 = vst [vmem:[%s1] sm:$0x3] 0.0
  $region9: #{efficientnet_forward.18} parent=0 // pred_fallthru
    _
  %v13 = vld [vmem:[%s0] sm:$0xff]
  %v14 = vld [vmem:[%s0 + $0x8] sm:$0xff]
  %v15 = vld [vmem:[%s0 + $0x10] sm:$0xff]
  %v16 = vld [vmem:[%s0 + $0x18] sm:$0xff]
  %v17 = vld [vmem:[%s0 + $0x20] sm:$0xff]
  %v18 = vld [vmem:[%s0 + $0x28] sm:$0xff]
  %v19 = vld [vmem:[%s0 + $0x30] sm:$0xff]
  %v20 = vld [vmem:[%s0 + $0x38] sm:$0xff]
  %v21 = vld [vmem:[%s0 + $0x40] sm:$0xff]
  %v22 = vld [vmem:[%s0 + $0x48] sm:$0xff]
  %v23 = vld [vmem:[%s0 + $0x50] sm:$0xff]
  %v24 = vld [vmem:[%s0 + $0x58] sm:$0xff]
  %v25 = vld [vmem:[%s0 + $0x60] sm:$0xff]
  %v26 = vld [vmem:[%s0 + $0x68] sm:$0xff]
  %v27 = vld [vmem:[%s0 + $0x70] sm:$0xff]
  %v28 = vld [vmem:[%s0 + $0x78] sm:$0xff]
  %v29 = vmax.f32 %v13, 1e-06
  %v30 = vmax.f32 %v14, 1e-06
  %v31 = vmax.f32 %v15, 1e-06
  %v32 = vmax.f32 %v16, 1e-06
  %v33 = vmax.f32 %v17, 1e-06
  %v34 = vmax.f32 %v18, 1e-06
  %v35 = vmax.f32 %v19, 1e-06
  %v36 = vmax.f32 %v20, 1e-06
  %v37 = vmax.f32 %v21, 1e-06
  %v38 = vmax.f32 %v22, 1e-06
  %v39 = vmax.f32 %v23, 1e-06
  %v40 = vmax.f32 %v24, 1e-06
  %v41 = vmax.f32 %v25, 1e-06
  %v42 = vmax.f32 %v26, 1e-06
  %v43 = vmax.f32 %v27, 1e-06
  %v44 = vmax.f32 %v28, 1e-06
  %v45 = vmul.f32 %v29, %v29
  %v46 = vmul.f32 %v30, %v30
  %v47 = vmul.f32 %v31, %v31
  %v48 = vmul.f32 %v32, %v32
  %v49 = vmul.f32 %v33, %v33
  %v50 = vmul.f32 %v34, %v34
  %v51 = vmul.f32 %v35, %v35
  %v52 = vmul.f32 %v36, %v36
  %v53 = vmul.f32 %v37, %v37
  %v54 = vmul.f32 %v38, %v38
  %v55 = vmul.f32 %v39, %v39
  %v56 = vmul.f32 %v40, %v40
  %v57 = vmul.f32 %v41, %v41
  %v58 = vmul.f32 %v42, %v42
  %v59 = vmul.f32 %v43, %v43
  %v60 = vmul.f32 %v44, %v44
  %v61 = vmul.f32 %v45, %v29
  %v62 = vmul.f32 %v46, %v30
  %v63 = vmul.f32 %v47, %v31
  %v64 = vmul.f32 %v48, %v32
  %v65 = vmul.f32 %v49, %v33
  %v66 = vmul.f32 %v50, %v34
  %v67 = vmul.f32 %v51, %v35
  %v68 = vmul.f32 %v52, %v36
  %v69 = vmul.f32 %v53, %v37
  %v70 = vmul.f32 %v54, %v38
  %v71 = vmul.f32 %v55, %v39
  %v72 = vmul.f32 %v56, %v40
  %v73 = vmul.f32 %v57, %v41
  %v74 = vmul.f32 %v58, %v42
  %v75 = vmul.f32 %v59, %v43
  %v76 = vmul.f32 %v60, %v44
  %v77 = vld [vmem:[%s1] sm:$0x3]
  %v78 = vadd.f32 %v61, %v62
  %v79 = vadd.f32 %v78, %v63
  %v80 = vadd.f32 %v79, %v64
  %v81 = vadd.f32 %v80, %v65
  %v82 = vadd.f32 %v81, %v66
  %v83 = vadd.f32 %v82, %v67
  %v84 = vadd.f32 %v83, %v68
  %v85 = vrot.slane %v84, 4
  %v86 = vadd.f32 %v84, %v85
  %v87 = vrot.slane %v86, 2
  %v88 = vadd.f32 %v86, %v87
  %v89 = vrot.slane %v88, 1
  %v90 = vadd.f32 %v88, %v89
  %v91 = vadd.f32 %v69, %v70
  %v92 = vadd.f32 %v91, %v71
  %v93 = vadd.f32 %v92, %v72
  %v94 = vadd.f32 %v93, %v73
  %v95 = vadd.f32 %v94, %v74
  %v96 = vadd.f32 %v95, %v75
  %v97 = vadd.f32 %v96, %v76
  %v98 = vrot.slane %v97, 4
  %v99 = vadd.f32 %v97, %v98
  %v100 = vrot.slane %v99, 2
  %v101 = vadd.f32 %v99, %v100
  %v102 = vrot.slane %v101, 1
  %v103 = vadd.f32 %v101, %v102
  %vm106 = vcmask 1041409
  %v107 = vsel %vm106, %v103, %v90
  %v109 = vadd.f32 %v77, %v107
  %110 = vst [vmem:[%s1] sm:$0x3] %v109
  // Predicated region
  $region10: #{efficientnet_forward.18} parent=0 // pred_check
    %p111 = pneg %p8
  $region11: #{efficientnet_forward.18} parent=0 // pred_check_branch
    %113 = sbr.rel (%p111) target = $region13
  $region12: #{efficientnet_forward.18} parent=0 // pred_region
    %v114 = vld [vmem:[%s1] sm:$0x3]
    %v115 = vmul.f32 %v114, 0.015625
    %v116 = vpow.f32 %v115, 0.33333334
    %117 = vst [vmem:[%s1] sm:$0x3] %v116
  $region13: #{efficientnet_forward.18} parent=0 // pred_fallthru
    _
  // Predicated region
  $region14: #{efficientnet_forward.18} parent=0 // pred_check
    _
  $region15: #{efficientnet_forward.18} parent=0 // pred_check_branch
    %119 = sbr.rel (0) target = $region17
  $region16: #{efficientnet_forward.18} parent=0 // pred_region
    _
  $region17: #{efficientnet_forward.18} parent=0 // pred_fallthru
    _
  // Predicated region
  $region18: #{efficientnet_forward.18} parent=0 // pred_check
    _
  $region19: #{efficientnet_forward.18} parent=0 // pred_check_branch
    %121 = sbr.rel (0) target = $region21
  $region20: #{efficientnet_forward.18} parent=0 // pred_region
    _
  $region21: #{efficientnet_forward.18} parent=0 // pred_fallthru
    _

// kernel: efficientnet_forward.17
$region0: #{efficientnet_forward.17}
  #allocation0 [shape = 'u32[]', space=smem, size = 0x4, offset = 0x4, fixed_abs, tag = 'smem constant byte address 0x4 - core index']
  #allocation1 [shape = 'u32[144,128]{1,0:T(1,128)}', space=vmem, size = 0x12000, scoped, tag = 'internal scratch']
  %s0 = inlined_call_operand.vmem [shape: bf16[128,48], index: 0, kind: input, shape index: {}]
  %s1 = inlined_call_operand.vmem [shape: bf16[48,128], index: 1, kind: input, shape index: {}]
  %s2 = inlined_call_operand.vmem [shape: f32[1,128], index: 2, kind: input, shape index: {}]
  %s3 = inlined_call_operand.vmem [shape: f32[128,128], index: 3, kind: output, shape index: {}]
  %s4 = sld [smem:[#allocation0]]
  $region30: #{efficientnet_forward.17} parent=0
    _
  %s6 = ssub.s32 1, %s4
  %s7 = scalar_select 0, %s6, %s4
  // Predicated region
  $region2: #{efficientnet_forward.17} parent=0 // pred_check
    _
  $region3: #{efficientnet_forward.17} parent=0 // pred_check_branch
    %9 = sbr.rel (0) target = $region5
  $region4: #{efficientnet_forward.17} parent=0 // pred_region
    _
  $region5: #{efficientnet_forward.17} parent=0 // pred_fallthru
    _
  // Predicated region
  $region6: #{efficientnet_forward.17} parent=0 // pred_check
    _
  $region7: #{efficientnet_forward.17} parent=0 // pred_check_branch
    %11 = sbr.rel (0) target = $region9
  $region8: #{efficientnet_forward.17} parent=0 // pred_region
    _
  $region9: #{efficientnet_forward.17} parent=0 // pred_fallthru
    _
  // Predicated region
  $region10: #{efficientnet_forward.17} parent=0 // pred_check
    _
  $region11: #{efficientnet_forward.17} parent=0 // pred_check_branch
    %13 = sbr.rel (0) target = $region13
  $region12: #{efficientnet_forward.17} parent=0 // pred_region
    _
  $region13: #{efficientnet_forward.17} parent=0 // pred_fallthru
    _
  %p15 = scmp.eq.s32.totalorder 0, 0
  // Predicated region
  $region14: #{efficientnet_forward.17} parent=0 // pred_check
    %p16 = pneg %p15
  $region15: #{efficientnet_forward.17} parent=0 // pred_check_branch
    %18 = sbr.rel (%p16) target = $region17
  $region16: #{efficientnet_forward.17} parent=0 // pred_region
    %19 = vst [vmem:[%s3] sm:$0xff] 0.0
    %20 = vst [vmem:[%s3 + $0x8] sm:$0xff] 0.0
    %21 = vst [vmem:[%s3 + $0x10] sm:$0xff] 0.0
    %22 = vst [vmem:[%s3 + $0x18] sm:$0xff] 0.0
    %23 = vst [vmem:[%s3 + $0x20] sm:$0xff] 0.0
    %24 = vst [vmem:[%s3 + $0x28] sm:$0xff] 0.0
    %25 = vst [vmem:[%s3 + $0x30] sm:$0xff] 0.0
    %26 = vst [vmem:[%s3 + $0x38] sm:$0xff] 0.0
    %27 = vst [vmem:[%s3 + $0x40] sm:$0xff] 0.0
    %28 = vst [vmem:[%s3 + $0x48] sm:$0xff] 0.0
    %29 = vst [vmem:[%s3 + $0x50] sm:$0xff] 0.0
    %30 = vst [vmem:[%s3 + $0x58] sm:$0xff] 0.0
    %31 = vst [vmem:[%s3 + $0x60] sm:$0xff] 0.0
    %32 = vst [vmem:[%s3 + $0x68] sm:$0xff] 0.0
    %33 = vst [vmem:[%s3 + $0x70] sm:$0xff] 0.0
    %34 = vst [vmem:[%s3 + $0x78] sm:$0xff] 0.0
  $region17: #{efficientnet_forward.17} parent=0 // pred_fallthru
    _
  %v35 = vld [vmem:[%s0] sm:$0xf]
  %v36 = vld [vmem:[%s0 + $0x4] sm:$0xf]
  %v37 = vld [vmem:[%s0 + $0x8] sm:$0xf]
  %v38 = vld [vmem:[%s0 + $0xc] sm:$0xf]
  %v39 = vld [vmem:[%s0 + $0x10] sm:$0xf]
  %v40 = vld [vmem:[%s0 + $0x14] sm:$0xf]
  %v41 = vld [vmem:[%s0 + $0x18] sm:$0xf]
  %v42 = vld [vmem:[%s0 + $0x1c] sm:$0xf]
  %v43 = vld [vmem:[%s0 + $0x20] sm:$0xf]
  %v44 = vld [vmem:[%s0 + $0x24] sm:$0xf]
  %v45 = vld [vmem:[%s0 + $0x28] sm:$0xf]
  %v46 = vld [vmem:[%s0 + $0x2c] sm:$0xf]
  %v47 = vld [vmem:[%s0 + $0x30] sm:$0xf]
  %v48 = vld [vmem:[%s0 + $0x34] sm:$0xf]
  %v49 = vld [vmem:[%s0 + $0x38] sm:$0xf]
  %v50 = vld [vmem:[%s0 + $0x3c] sm:$0xf]
  %v51 = vld [vmem:[%s3] sm:$0xff]
  %v52 = vld [vmem:[%s3 + $0x8] sm:$0xff]
  %v53 = vld [vmem:[%s3 + $0x10] sm:$0xff]
  %v54 = vld [vmem:[%s3 + $0x18] sm:$0xff]
  %v55 = vld [vmem:[%s3 + $0x20] sm:$0xff]
  %v56 = vld [vmem:[%s3 + $0x28] sm:$0xff]
  %v57 = vld [vmem:[%s3 + $0x30] sm:$0xff]
  %v58 = vld [vmem:[%s3 + $0x38] sm:$0xff]
  %v59 = vld [vmem:[%s3 + $0x40] sm:$0xff]
  %v60 = vld [vmem:[%s3 + $0x48] sm:$0xff]
  %v61 = vld [vmem:[%s3 + $0x50] sm:$0xff]
  %v62 = vld [vmem:[%s3 + $0x58] sm:$0xff]
  %v63 = vld [vmem:[%s3 + $0x60] sm:$0xff]
  %v64 = vld [vmem:[%s3 + $0x68] sm:$0xff]
  %v65 = vld [vmem:[%s3 + $0x70] sm:$0xff]
  %v66 = vld [vmem:[%s3 + $0x78] sm:$0xff]
  %v67 = vld [vmem:[%s1] sm:$0xf]
  %v68 = vld [vmem:[%s1 + $0x4] sm:$0xf]
  %v69 = vld [vmem:[%s1 + $0x8] sm:$0xf]
  %v70 = vld [vmem:[%s1 + $0xc] sm:$0xf]
  %v71 = vld [vmem:[%s1 + $0x10] sm:$0xf]
  %v72 = vld [vmem:[%s1 + $0x14] sm:$0xf]
  %v89 = vunpack.c.l.b16 %v35
  %v90 = vunpack.c.l.b16 %v36
  %v91 = vunpack.c.l.b16 %v37
  %v92 = vunpack.c.l.b16 %v38
  %v93 = vunpack.c.l.b16 %v39
  %v94 = vunpack.c.l.b16 %v40
  %v95 = vunpack.c.l.b16 %v41
  %v96 = vunpack.c.l.b16 %v42
  %v97 = vunpack.c.l.b16 %v43
  %v98 = vunpack.c.l.b16 %v44
  %v99 = vunpack.c.l.b16 %v45
  %v100 = vunpack.c.l.b16 %v46
  %v101 = vunpack.c.l.b16 %v47
  %v102 = vunpack.c.l.b16 %v48
  %v103 = vunpack.c.l.b16 %v49
  %v104 = vunpack.c.l.b16 %v50
  %v105 = vpack.c.b16 %v90, %v89
  %v106 = vpack.c.b16 %v92, %v91
  %v107 = vpack.c.b16 %v94, %v93
  %v108 = vpack.c.b16 %v96, %v95
  %v109 = vpack.c.b16 %v98, %v97
  %v110 = vpack.c.b16 %v100, %v99
  %v111 = vpack.c.b16 %v102, %v101
  %v112 = vpack.c.b16 %v104, %v103
  %v119 = vunpack.c.l.b16 %v67
  %v120 = vunpack.c.l.b16 %v68
  %v121 = vunpack.c.l.b16 %v69
  %v122 = vunpack.c.l.b16 %v70
  %v123 = vunpack.c.l.b16 %v71
  %v124 = vunpack.c.l.b16 %v72
  %v125 = vpack.c.b16 %v120, %v119
  %v126 = vpack.c.b16 %v122, %v121
  %v127 = vpack.c.b16 %v124, %v123
  %vm131 = vcmask 392192
  %v133 = vsel %vm131, %v105, 0
  %v136 = vsel %vm131, %v106, 0
  %v139 = vsel %vm131, %v107, 0
  %v142 = vsel %vm131, %v108, 0
  %v145 = vsel %vm131, %v109, 0
  %v148 = vsel %vm131, %v110, 0
  %v151 = vsel %vm131, %v111, 0
  %v154 = vsel %vm131, %v112, 0
  %156 = vmatprep.subr.bf16.mxu0 0
  %157 = vmatpush1.bf16.msra.mxu0 %v125
  %158 = vmatprep.subr.bf16.mxu0 0
  %159 = vmatpush1.bf16.msra.mxu0 %v126
  %160 = vmatprep.subr.bf16.mxu0 0
  %161 = vmatpush1.bf16.msra.mxu0 %v127
  %162 = vmatprep.subr.bf16.mxu0 0
  %163 = vmatpush1.bf16.msra.mxu0 0
  %164 = vmatprep.subr.bf16.mxu0 0
  %165 = vmatpush1.bf16.msra.mxu0 0
  %166 = vmatprep.subr.bf16.mxu0 0
  %167 = vmatpush1.bf16.msra.mxu0 0
  %168 = vmatprep.subr.bf16.mxu0 0
  %169 = vmatpush1.bf16.msra.mxu0 0
  %170 = vmatprep.subr.bf16.mxu0 0
  %171 = vmatpush1.bf16.msra.mxu0 0
  %172 = vmatprep.subr.bf16.mxu0 0
  %173 = vmatpush1.bf16.msra.mxu0 0
  %174 = vmatprep.subr.bf16.mxu0 0
  %175 = vmatpush1.bf16.msra.mxu0 0
  %176 = vmatprep.subr.bf16.mxu0 0
  %177 = vmatpush1.bf16.msra.mxu0 0
  %178 = vmatprep.subr.bf16.mxu0 0
  %179 = vmatpush1.bf16.msra.mxu0 0
  %180 = vmatprep.subr.bf16.mxu0 0
  %181 = vmatpush1.bf16.msra.mxu0 0
  %182 = vmatprep.subr.bf16.mxu0 0
  %183 = vmatpush1.bf16.msra.mxu0 0
  %184 = vmatprep.subr.bf16.mxu0 0
  %185 = vmatpush1.bf16.msra.mxu0 0
  %186 = vmatprep.subr.bf16.mxu0 0
  %187 = vmatpush1.bf16.msra.mxu0 0
  %188 = vmatprep.mubr.bf16.mxu0 0
  %189 = vmatmul.mubr.bf16.gmra.mrb[0].mxu0 %v133
  %v190 = vpop.f32.mrb[0].mxu0
  %v191 = vadd.f32 0.0, %v190
  %v192 = vpop.f32.mrb[0].mxu0
  %v193 = vpop.f32.mrb[0].mxu0
  %v194 = vadd.f32 0.0, %v193
  %v195 = vpop.f32.mrb[0].mxu0
  %196 = vmatprep.mubr.bf16.mxu0 0
  %197 = vmatmul.mubr.bf16.gmra.mrb[0].mxu0 %v136
  %v198 = vpop.f32.mrb[0].mxu0
  %v199 = vadd.f32 0.0, %v198
  %v200 = vpop.f32.mrb[0].mxu0
  %v201 = vpop.f32.mrb[0].mxu0
  %v202 = vadd.f32 0.0, %v201
  %v203 = vpop.f32.mrb[0].mxu0
  %204 = vmatprep.mubr.bf16.mxu0 0
  %205 = vmatmul.mubr.bf16.gmra.mrb[0].mxu0 %v139
  %v206 = vpop.f32.mrb[0].mxu0
  %v207 = vadd.f32 0.0, %v206
  %v208 = vpop.f32.mrb[0].mxu0
  %v209 = vpop.f32.mrb[0].mxu0
  %v210 = vadd.f32 0.0, %v209
  %v211 = vpop.f32.mrb[0].mxu0
  %212 = vmatprep.mubr.bf16.mxu0 0
  %213 = vmatmul.mubr.bf16.gmra.mrb[0].mxu0 %v142
  %v214 = vpop.f32.mrb[0].mxu0
  %v215 = vadd.f32 0.0, %v214
  %v216 = vpop.f32.mrb[0].mxu0
  %v217 = vpop.f32.mrb[0].mxu0
  %v218 = vadd.f32 0.0, %v217
  %v219 = vpop.f32.mrb[0].mxu0
  %220 = vmatprep.mubr.bf16.mxu0 0
  %221 = vmatmul.mubr.bf16.gmra.mrb[0].mxu0 %v145
  %v222 = vpop.f32.mrb[0].mxu0
  %v223 = vadd.f32 0.0, %v222
  %v224 = vpop.f32.mrb[0].mxu0
  %v225 = vpop.f32.mrb[0].mxu0
  %v226 = vadd.f32 0.0, %v225
  %v227 = vpop.f32.mrb[0].mxu0
  %228 = vmatprep.mubr.bf16.mxu0 0
  %229 = vmatmul.mubr.bf16.gmra.mrb[0].mxu0 %v148
  %v230 = vpop.f32.mrb[0].mxu0
  %v231 = vadd.f32 0.0, %v230
  %v232 = vpop.f32.mrb[0].mxu0
  %v233 = vpop.f32.mrb[0].mxu0
  %v234 = vadd.f32 0.0, %v233
  %v235 = vpop.f32.mrb[0].mxu0
  %236 = vmatprep.mubr.bf16.mxu0 0
  %237 = vmatmul.mubr.bf16.gmra.mrb[0].mxu0 %v151
  %v238 = vpop.f32.mrb[0].mxu0
  %v239 = vadd.f32 0.0, %v238
  %v240 = vpop.f32.mrb[0].mxu0
  %v241 = vpop.f32.mrb[0].mxu0
  %v242 = vadd.f32 0.0, %v241
  %v243 = vpop.f32.mrb[0].mxu0
  %244 = vmatprep.mubr.bf16.mxu0 0
  %245 = vmatmul.mubr.bf16.gmra.mrb[0].mxu0 %v154
  %v246 = vpop.f32.mrb[0].mxu0
  %v247 = vadd.f32 0.0, %v246
  %v248 = vpop.f32.mrb[0].mxu0
  %v249 = vpop.f32.mrb[0].mxu0
  %v250 = vadd.f32 0.0, %v249
  %v251 = vpop.f32.mrb[0].mxu0
  %252 = vdwg.mxu0
  %v253 = vadd.f32 %v51, %v191
  %v254 = vadd.f32 %v52, %v194
  %v255 = vadd.f32 %v53, %v199
  %v256 = vadd.f32 %v54, %v202
  %v257 = vadd.f32 %v55, %v207
  %v258 = vadd.f32 %v56, %v210
  %v259 = vadd.f32 %v57, %v215
  %v260 = vadd.f32 %v58, %v218
  %v261 = vadd.f32 %v59, %v223
  %v262 = vadd.f32 %v60, %v226
  %v263 = vadd.f32 %v61, %v231
  %v264 = vadd.f32 %v62, %v234
  %v265 = vadd.f32 %v63, %v239
  %v266 = vadd.f32 %v64, %v242
  %v267 = vadd.f32 %v65, %v247
  %v268 = vadd.f32 %v66, %v250
  %269 = vst [vmem:[%s3] sm:$0xff] %v253
  %270 = vst [vmem:[%s3 + $0x8] sm:$0xff] %v254
  %271 = vst [vmem:[%s3 + $0x10] sm:$0xff] %v255
  %272 = vst [vmem:[%s3 + $0x18] sm:$0xff] %v256
  %273 = vst [vmem:[%s3 + $0x20] sm:$0xff] %v257
  %274 = vst [vmem:[%s3 + $0x28] sm:$0xff] %v258
  %275 = vst [vmem:[%s3 + $0x30] sm:$0xff] %v259
  %276 = vst [vmem:[%s3 + $0x38] sm:$0xff] %v260
  %277 = vst [vmem:[%s3 + $0x40] sm:$0xff] %v261
  %278 = vst [vmem:[%s3 + $0x48] sm:$0xff] %v262
  %279 = vst [vmem:[%s3 + $0x50] sm:$0xff] %v263
  %280 = vst [vmem:[%s3 + $0x58] sm:$0xff] %v264
  %281 = vst [vmem:[%s3 + $0x60] sm:$0xff] %v265
  %282 = vst [vmem:[%s3 + $0x68] sm:$0xff] %v266
  %283 = vst [vmem:[%s3 + $0x70] sm:$0xff] %v267
  %284 = vst [vmem:[%s3 + $0x78] sm:$0xff] %v268
  // Predicated region
  $region18: #{efficientnet_forward.17} parent=0 // pred_check
    %p285 = pneg %p15
  $region19: #{efficientnet_forward.17} parent=0 // pred_check_branch
    %287 = sbr.rel (%p285) target = $region21
  $region20: #{efficientnet_forward.17} parent=0 // pred_region
    %v288 = vld [vmem:[%s3] sm:$0xff]
    %v289 = vld [vmem:[%s3 + $0x8] sm:$0xff]
    %v290 = vld [vmem:[%s3 + $0x10] sm:$0xff]
    %v291 = vld [vmem:[%s3 + $0x18] sm:$0xff]
    %v292 = vld [vmem:[%s3 + $0x20] sm:$0xff]
    %v293 = vld [vmem:[%s3 + $0x28] sm:$0xff]
    %v294 = vld [vmem:[%s3 + $0x30] sm:$0xff]
    %v295 = vld [vmem:[%s3 + $0x38] sm:$0xff]
    %v296 = vld [vmem:[%s3 + $0x40] sm:$0xff]
    %v297 = vld [vmem:[%s3 + $0x48] sm:$0xff]
    %v298 = vld [vmem:[%s3 + $0x50] sm:$0xff]
    %v299 = vld [vmem:[%s3 + $0x58] sm:$0xff]
    %v300 = vld [vmem:[%s3 + $0x60] sm:$0xff]
    %v301 = vld [vmem:[%s3 + $0x68] sm:$0xff]
    %v302 = vld [vmem:[%s3 + $0x70] sm:$0xff]
    %v303 = vld [vmem:[%s3 + $0x78] sm:$0xff]
    %v304 = vld [vmem:[%s2] sm:$0x1]
    %v306 = vlaneseq
    %v307 = vshrl.u32 %v306, 7
    %v308 = vsub.s32 0, %v307
    %v309 = vrot.slane %v304, %v308
    %v311 = vadd.f32 %v288, %v309
    %v312 = vadd.f32 %v289, %v309
    %v313 = vadd.f32 %v290, %v309
    %v314 = vadd.f32 %v291, %v309
    %v315 = vadd.f32 %v292, %v309
    %v316 = vadd.f32 %v293, %v309
    %v317 = vadd.f32 %v294, %v309
    %v318 = vadd.f32 %v295, %v309
    %v319 = vadd.f32 %v296, %v309
    %v320 = vadd.f32 %v297, %v309
    %v321 = vadd.f32 %v298, %v309
    %v322 = vadd.f32 %v299, %v309
    %v323 = vadd.f32 %v300, %v309
    %v324 = vadd.f32 %v301, %v309
    %v325 = vadd.f32 %v302, %v309
    %v326 = vadd.f32 %v303, %v309
    %v327 = vxor.u32 %v311, 2147483648
    %v328 = vxor.u32 %v312, 2147483648
    %v329 = vxor.u32 %v313, 2147483648
    %v330 = vxor.u32 %v314, 2147483648
    %v331 = vxor.u32 %v315, 2147483648
    %v332 = vxor.u32 %v316, 2147483648
    %v333 = vxor.u32 %v317, 2147483648
    %v334 = vxor.u32 %v318, 2147483648
    %v335 = vxor.u32 %v319, 2147483648
    %v336 = vxor.u32 %v320, 2147483648
    %v337 = vxor.u32 %v321, 2147483648
    %v338 = vxor.u32 %v322, 2147483648
    %v339 = vxor.u32 %v323, 2147483648
    %v340 = vxor.u32 %v324, 2147483648
    %v341 = vxor.u32 %v325, 2147483648
    %v342 = vxor.u32 %v326, 2147483648
    %v343 = vmul.f32 %v327, 1.442695
    %v344 = vpow.pop %v343
    %v345 = vmul.f32 %v328, 1.442695
    %v346 = vpow.pop %v345
    %v347 = vmul.f32 %v329, 1.442695
    %v348 = vpow.pop %v347
    %v349 = vmul.f32 %v330, 1.442695
    %v350 = vpow.pop %v349
    %v351 = vmul.f32 %v331, 1.442695
    %v352 = vpow.pop %v351
    %v353 = vmul.f32 %v332, 1.442695
    %v354 = vpow.pop %v353
    %v355 = vmul.f32 %v333, 1.442695
    %v356 = vpow.pop %v355
    %v357 = vmul.f32 %v334, 1.442695
    %v358 = vpow.pop %v357
    %v359 = vmul.f32 %v335, 1.442695
    %v360 = vpow.pop %v359
    %v361 = vmul.f32 %v336, 1.442695
    %v362 = vpow.pop %v361
    %v363 = vmul.f32 %v337, 1.442695
    %v364 = vpow.pop %v363
    %v365 = vmul.f32 %v338, 1.442695
    %v366 = vpow.pop %v365
    %v367 = vmul.f32 %v339, 1.442695
    %v368 = vpow.pop %v367
    %v369 = vmul.f32 %v340, 1.442695
    %v370 = vpow.pop %v369
    %v371 = vmul.f32 %v341, 1.442695
    %v372 = vpow.pop %v371
    %v373 = vmul.f32 %v342, 1.442695
    %v374 = vpow.pop %v373
    %v375 = vadd.f32 %v344, 1.0
    %v376 = vadd.f32 %v346, 1.0
    %v377 = vadd.f32 %v348, 1.0
    %v378 = vadd.f32 %v350, 1.0
    %v379 = vadd.f32 %v352, 1.0
    %v380 = vadd.f32 %v354, 1.0
    %v381 = vadd.f32 %v356, 1.0
    %v382 = vadd.f32 %v358, 1.0
    %v383 = vadd.f32 %v360, 1.0
    %v384 = vadd.f32 %v362, 1.0
    %v385 = vadd.f32 %v364, 1.0
    %v386 = vadd.f32 %v366, 1.0
    %v387 = vadd.f32 %v368, 1.0
    %v388 = vadd.f32 %v370, 1.0
    %v389 = vadd.f32 %v372, 1.0
    %v390 = vadd.f32 %v374, 1.0
    %v391 = vrcp.pop %v375
    %v392 = vmul.f32 1.0, %v391
    %v393 = vrcp.pop %v376
    %v394 = vmul.f32 1.0, %v393
    %v395 = vrcp.pop %v377
    %v396 = vmul.f32 1.0, %v395
    %v397 = vrcp.pop %v378
    %v398 = vmul.f32 1.0, %v397
    %v399 = vrcp.pop %v379
    %v400 = vmul.f32 1.0, %v399
    %v401 = vrcp.pop %v380
    %v402 = vmul.f32 1.0, %v401
    %v403 = vrcp.pop %v381
    %v404 = vmul.f32 1.0, %v403
    %v405 = vrcp.pop %v382
    %v406 = vmul.f32 1.0, %v405
    %v407 = vrcp.pop %v383
    %v408 = vmul.f32 1.0, %v407
    %v409 = vrcp.pop %v384
    %v410 = vmul.f32 1.0, %v409
    %v411 = vrcp.pop %v385
    %v412 = vmul.f32 1.0, %v411
    %v413 = vrcp.pop %v386
    %v414 = vmul.f32 1.0, %v413
    %v415 = vrcp.pop %v387
    %v416 = vmul.f32 1.0, %v415
    %v417 = vrcp.pop %v388
    %v418 = vmul.f32 1.0, %v417
    %v419 = vrcp.pop %v389
    %v420 = vmul.f32 1.0, %v419
    %v421 = vrcp.pop %v390
    %v422 = vmul.f32 1.0, %v421
    %v423 = vmul.f32 %v311, %v392
    %v424 = vmul.f32 %v312, %v394
    %v425 = vmul.f32 %v313, %v396
    %v426 = vmul.f32 %v314, %v398
    %v427 = vmul.f32 %v315, %v400
    %v428 = vmul.f32 %v316, %v402
    %v429 = vmul.f32 %v317, %v404
    %v430 = vmul.f32 %v318, %v406
    %v431 = vmul.f32 %v319, %v408
    %v432 = vmul.f32 %v320, %v410
    %v433 = vmul.f32 %v321, %v412
    %v434 = vmul.f32 %v322, %v414
    %v435 = vmul.f32 %v323, %v416
    %v436 = vmul.f32 %v324, %v418
    %v437 = vmul.f32 %v325, %v420
    %v438 = vmul.f32 %v326, %v422
    %439 = vst [vmem:[%s3] sm:$0xff] %v423
    %440 = vst [vmem:[%s3 + $0x8] sm:$0xff] %v424
    %441 = vst [vmem:[%s3 + $0x10] sm:$0xff] %v425
    %442 = vst [vmem:[%s3 + $0x18] sm:$0xff] %v426
    %443 = vst [vmem:[%s3 + $0x20] sm:$0xff] %v427
    %444 = vst [vmem:[%s3 + $0x28] sm:$0xff] %v428
    %445 = vst [vmem:[%s3 + $0x30] sm:$0xff] %v429
    %446 = vst [vmem:[%s3 + $0x38] sm:$0xff] %v430
    %447 = vst [vmem:[%s3 + $0x40] sm:$0xff] %v431
    %448 = vst [vmem:[%s3 + $0x48] sm:$0xff] %v432
    %449 = vst [vmem:[%s3 + $0x50] sm:$0xff] %v433
    %450 = vst [vmem:[%s3 + $0x58] sm:$0xff] %v434
    %451 = vst [vmem:[%s3 + $0x60] sm:$0xff] %v435
    %452 = vst [vmem:[%s3 + $0x68] sm:$0xff] %v436
    %453 = vst [vmem:[%s3 + $0x70] sm:$0xff] %v437
    %454 = vst [vmem:[%s3 + $0x78] sm:$0xff] %v438
  $region21: #{efficientnet_forward.17} parent=0 // pred_fallthru
    _
  // Predicated region
  $region22: #{efficientnet_forward.17} parent=0 // pred_check
    _
  $region23: #{efficientnet_forward.17} parent=0 // pred_check_branch
    %456 = sbr.rel (0) target = $region25
  $region24: #{efficientnet_forward.17} parent=0 // pred_region
    _
  $region25: #{efficientnet_forward.17} parent=0 // pred_fallthru
    _
  // Predicated region
  $region26: #{efficientnet_forward.17} parent=0 // pred_check
    _
  $region27: #{efficientnet_forward.17} parent=0 // pred_check_branch
    %458 = sbr.rel (0) target = $region29
  $region28: #{efficientnet_forward.17} parent=0 // pred_region
    _
  $region29: #{efficientnet_forward.17} parent=0 // pred_fallthru
    _

// kernel: efficientnet_forward.15
$region0: #{efficientnet_forward.15}
  #allocation0 [shape = 'u32[]', space=smem, size = 0x4, offset = 0x4, fixed_abs, tag = 'smem constant byte address 0x4 - core index']
  #allocation1 [shape = 'u32[144,128]{1,0:T(1,128)}', space=vmem, size = 0x12000, scoped, tag = 'internal scratch']
  %s0 = inlined_call_operand.vmem [shape: bf16[2,10,10,192], index: 0, kind: input, shape index: {}]
  %s1 = inlined_call_operand.vmem [shape: f32[9,192], index: 1, kind: input, shape index: {}]
  %s2 = inlined_call_operand.vmem [shape: f32[2,8,8,192], index: 2, kind: output, shape index: {}]
  %s3 = sld [smem:[#allocation0]]
  $region41: #{efficientnet_forward.15} parent=0
    _
  %s5 = ssub.s32 1, %s3
  %s6 = scalar_select 0, %s5, %s3
  loop: start=0, step=1, limit=4
  $region2: #{efficientnet_forward.15} parent=0 // loop_pre_header
    _
  $region3: #{efficientnet_forward.15} parent=0 // loop_header
    %s8 = sphi 0, %s12
    %p9 = scmp.ge.s32.totalorder %s8, 4
    %s18 = sphi 0, %s20
    %s21 = sphi 0, %s18
    %s22 = sphi 0, %s21
    %s38 = sphi 0, %s22
    %s42 = sphi 0, %s42
    %s44 = sphi 0, %s42
    %s45 = sphi 0, %s44
    %s59 = sphi 0, %s45
    %s65 = sphi 0, %s67
    %s68 = sphi 0, %s65
    %s69 = sphi 0, %s68
    %s85 = sphi 0, %s69
  $region4: #{efficientnet_forward.15} parent=0 // loop_header_branch
    %11 = sbr.rel (%p9) target = $region8
  $region5: #{efficientnet_forward.15} parent=0 // loop_body
    %s13 = ssub.s32 %s8, 1
    %s14 = ssub.s32 %s8, 2
    %s15 = sadd.s32 %s8, 1
    %s16 = ssub.s32 %s8, %s15
    %p17 = scmp.eq.s32.totalorder %s16, 0
    %s19 = sadd.s32 %s18, 1
    %s20 = scalar_select %p17, %s18, %s19
    %p23 = pneg %p17
    %p24 = scmp.eq.s32.totalorder %s8, 1
    %p25 = por %p23, %p24
    %p26 = scmp.ne.s32.totalorder %s18, %s21
    %p27 = scmp.eq.s32.totalorder %s8, 0
    %p28 = por %p26, %p27
    %p29 = scmp.ne.s32.totalorder %s18, %s21
    %p30 = scmp.eq.s32.totalorder %s13, 1
    %p31 = por %p29, %p30
    %p32 = scmp.ne.s32.totalorder %s21, %s22
    %p33 = scmp.eq.s32.totalorder %s13, 0
    %p34 = por %p32, %p33
    %p35 = scmp.ne.s32.totalorder %s21, %s22
    %p36 = scmp.eq.s32.totalorder %s14, 1
    %p37 = por %p35, %p36
    %p39 = scmp.ne.s32.totalorder %s22, %s38
    %p40 = scmp.eq.s32.totalorder %s14, 0
    %p41 = por %p39, %p40
    %s43 = sadd.s32 %s42, 1
    %p46 = scmp.eq.s32.totalorder %s8, 1
    %p47 = scmp.ne.s32.totalorder %s42, %s44
    %p48 = scmp.eq.s32.totalorder %s8, 0
    %p49 = por %p47, %p48
    %p50 = scmp.ne.s32.totalorder %s42, %s44
    %p51 = scmp.eq.s32.totalorder %s13, 1
    %p52 = por %p50, %p51
    %p53 = scmp.ne.s32.totalorder %s44, %s45
    %p54 = scmp.eq.s32.totalorder %s13, 0
    %p55 = por %p53, %p54
    %p56 = scmp.ne.s32.totalorder %s44, %s45
    %p57 = scmp.eq.s32.totalorder %s14, 1
    %p58 = por %p56, %p57
    %p60 = scmp.ne.s32.totalorder %s45, %s59
    %p61 = scmp.eq.s32.totalorder %s14, 0
    %p62 = por %p60, %p61
    %s63 = ssub.s32 %s8, %s15
    %p64 = scmp.eq.s32.totalorder %s63, 0
    %s66 = sadd.s32 %s65, 1
    %s67 = scalar_select %p64, %s65, %s66
    %p70 = pneg %p64
    %p71 = scmp.eq.s32.totalorder %s8, 1
    %p72 = por %p70, %p71
    %p73 = scmp.ne.s32.totalorder %s65, %s68
    %p74 = scmp.eq.s32.totalorder %s8, 0
    %p75 = por %p73, %p74
    %p76 = scmp.ne.s32.totalorder %s65, %s68
    %p77 = scmp.eq.s32.totalorder %s13, 1
    %p78 = por %p76, %p77
    %p79 = scmp.ne.s32.totalorder %s68, %s69
    %p80 = scmp.eq.s32.totalorder %s13, 0
    %p81 = por %p79, %p80
    %p82 = scmp.ne.s32.totalorder %s68, %s69
    %p83 = scmp.eq.s32.totalorder %s14, 1
    %p84 = por %p82, %p83
    %p86 = scmp.ne.s32.totalorder %s69, %s85
    %p87 = scmp.eq.s32.totalorder %s14, 0
    %p88 = por %p86, %p87
    %p89 = scmp.le.s32.totalorder 1, %s8
    %p90 = scmp.lt.s32.totalorder %s8, 3
    %p91 = pnand %p89, %p90
    %p92 = pneg %p91
    // Predicated region
    $region9: #{efficientnet_forward.15} parent=5 // pred_check
      _
    $region10: #{efficientnet_forward.15} parent=5 // pred_check_branch
      %94 = sbr.rel (%p91) target = $region12
    $region11: #{efficientnet_forward.15} parent=5 // pred_region
      %s95 = ssub.s32 %s8, 1
      // Predicated region
      $region13: #{efficientnet_forward.15} parent=11 // pred_check
        %p96 = pneg %p55
      $region14: #{efficientnet_forward.15} parent=11 // pred_check_branch
        %98 = sbr.rel (%p96) target = $region16
      $region15: #{efficientnet_forward.15} parent=11 // pred_region
        _
      $region16: #{efficientnet_forward.15} parent=11 // pred_fallthru
        _
    $region12: #{efficientnet_forward.15} parent=5 // pred_fallthru
      _
    %p99 = scmp.lt.s32.totalorder %s8, 2
    // Predicated region
    $region17: #{efficientnet_forward.15} parent=5 // pred_check
      %p100 = pneg %p99
    $region18: #{efficientnet_forward.15} parent=5 // pred_check_branch
      %102 = sbr.rel (%p100) target = $region20
    $region19: #{efficientnet_forward.15} parent=5 // pred_region
      // Predicated region
      $region21: #{efficientnet_forward.15} parent=19 // pred_check
        %p103 = pneg %p28
      $region22: #{efficientnet_forward.15} parent=19 // pred_check_branch
        %105 = sbr.rel (%p103) target = $region24
      $region23: #{efficientnet_forward.15} parent=19 // pred_region
        %p106 = scmp.lt.s32.totalorder %s8, 1
        %s107 = scalar_select %p106, %s8, 1
        %s108 = smul.addr %s107, 40
        %s109 = smul.addr %s108, 4
        %s110 = scalar_lea.vmem %s0, %s109
      $region24: #{efficientnet_forward.15} parent=19 // pred_fallthru
        _
    $region20: #{efficientnet_forward.15} parent=5 // pred_fallthru
      _
    %p111 = scmp.le.s32.totalorder 1, %s8
    %p112 = scmp.lt.s32.totalorder %s8, 3
    %p113 = pnand %p111, %p112
    %p114 = pneg %p113
    // Predicated region
    $region25: #{efficientnet_forward.15} parent=5 // pred_check
      _
    $region26: #{efficientnet_forward.15} parent=5 // pred_check_branch
      %116 = sbr.rel (%p113) target = $region28
    $region27: #{efficientnet_forward.15} parent=5 // pred_region
      %s117 = ssub.s32 %s8, 1
      %p118 = scmp.lt.s32.totalorder %s13, 1
      %s119 = scalar_select %p118, %s13, 1
      %s120 = smul.addr %s119, 40
      %s121 = smul.addr %s120, 4
      %s122 = scalar_lea.vmem %s0, %s121
      %p123 = pneg %p34
      %p124 = pneg %p31
      %p125 = pneg %p55
      %p126 = pneg %p52
      %p127 = pneg %p81
      %p128 = pneg %p78
      %p129 = scmp.lt.s32.totalorder %s13, 1
      %s130 = scalar_select %p129, %s13, 1
      %s131 = smul.addr %s130, 16
      %s132 = smul.addr %s131, 8
      %s133 = scalar_lea.vmem %s2, %s132
      %p134 = scmp.lt.s32.totalorder %s13, 1
      %s135 = scalar_select %p134, %s13, 1
      %s136 = smul.addr %s135, 40
      %s137 = smul.addr %s136, 4
      %s138 = scalar_lea.vmem %s0, %s137
      %p139 = scmp.lt.s32.totalorder %s13, 1
      %s140 = scalar_select %p139, %s13, 1
      %s141 = smul.addr %s140, 16
      %s142 = smul.addr %s141, 8
      %s143 = scalar_lea.vmem %s2, %s142
      %v144 = vld [vmem:[%s138] sm:$0xff]
      %v145 = vld [vmem:[%s138 + $0x10] sm:$0xff]
      %v146 = vld [vmem:[%s138 + $0x20] sm:$0xff]
      %v147 = vld [vmem:[%s138 + $0x30] sm:$0xff]
      %v148 = vld [vmem:[%s138 + $0x40] sm:$0xff]
      %v149 = vld [vmem:[%s138 + $0x50] sm:$0xff]
      %v150 = vld [vmem:[%s138 + $0x60] sm:$0xff]
      %v151 = vld [vmem:[%s138 + $0x70] sm:$0xff]
      %v152 = vunpack.c.l.bf16 %v144
      %v153 = vunpack.c.h.bf16 %v144
      %v154 = vunpack.c.l.bf16 %v145
      %v155 = vunpack.c.h.bf16 %v145
      %v156 = vunpack.c.l.bf16 %v146
      %v157 = vunpack.c.h.bf16 %v146
      %v158 = vunpack.c.l.bf16 %v147
      %v159 = vunpack.c.h.bf16 %v147
      %v160 = vunpack.c.l.bf16 %v148
      %v161 = vunpack.c.h.bf16 %v148
      %v162 = vunpack.c.l.bf16 %v149
      %v163 = vunpack.c.h.bf16 %v149
      %v164 = vunpack.c.l.bf16 %v150
      %v165 = vunpack.c.h.bf16 %v150
      %v166 = vunpack.c.l.bf16 %v151
      %v167 = vunpack.c.h.bf16 %v151
      %v168 = vld [vmem:[%s1] ss:$8 sm:$0x3]
      %v170 = vlaneseq
      %v171 = vshrl.u32 %v170, 7
      %v172 = vsub.s32 0, %v171
      %v173 = vrot.slane %v168, %v172
      %v174 = vlaneseq
      %v175 = vshrl.u32 %v174, 7
      %v176 = vsub.s32 1, %v175
      %v177 = vrot.slane %v168, %v176
      %v180 = vmul.f32 %v152, %v173
      %v181 = vmul.f32 %v153, %v177
      %v182 = vmul.f32 %v154, %v173
      %v183 = vmul.f32 %v155, %v177
      %v184 = vmul.f32 %v156, %v173
      %v185 = vmul.f32 %v157, %v177
      %v186 = vmul.f32 %v158, %v173
      %v187 = vmul.f32 %v159, %v177
      %v188 = vmul.f32 %v160, %v173
      %v189 = vmul.f32 %v161, %v177
      %v190 = vmul.f32 %v162, %v173
      %v191 = vmul.f32 %v163, %v177
      %v192 = vmul.f32 %v164, %v173
      %v193 = vmul.f32 %v165, %v177
      %v194 = vmul.f32 %v166, %v173
      %v195 = vmul.f32 %v167, %v177
      %v196 = vadd.f32 %v180, 0.0
      %v197 = vadd.f32 %v181, 0.0
      %v198 = vadd.f32 %v182, 0.0
      %v199 = vadd.f32 %v183, 0.0
      %v200 = vadd.f32 %v184, 0.0
      %v201 = vadd.f32 %v185, 0.0
      %v202 = vadd.f32 %v186, 0.0
      %v203 = vadd.f32 %v187, 0.0
      %v204 = vadd.f32 %v188, 0.0
      %v205 = vadd.f32 %v189, 0.0
      %v206 = vadd.f32 %v190, 0.0
      %v207 = vadd.f32 %v191, 0.0
      %v208 = vadd.f32 %v192, 0.0
      %v209 = vadd.f32 %v193, 0.0
      %v210 = vadd.f32 %v194, 0.0
      %v211 = vadd.f32 %v195, 0.0
      %v212 = vld [vmem:[%s138 + $0x8] sm:$0x11]
      %v213 = vld [vmem:[%s138 + $0x18] sm:$0x11]
      %v214 = vld [vmem:[%s138 + $0x28] sm:$0x11]
      %v215 = vld [vmem:[%s138 + $0x38] sm:$0x11]
      %v216 = vld [vmem:[%s138 + $0x48] sm:$0x11]
      %v217 = vld [vmem:[%s138 + $0x58] sm:$0x11]
      %v218 = vld [vmem:[%s138 + $0x68] sm:$0x11]
      %v219 = vld [vmem:[%s138 + $0x78] sm:$0x11]
      %v220 = vunpack.c.l.bf16 %v212
      %v221 = vunpack.c.h.bf16 %v212
      %v222 = vunpack.c.l.bf16 %v213
      %v223 = vunpack.c.h.bf16 %v213
      %v224 = vunpack.c.l.bf16 %v214
      %v225 = vunpack.c.h.bf16 %v214
      %v226 = vunpack.c.l.bf16 %v215
      %v227 = vunpack.c.h.bf16 %v215
      %v228 = vunpack.c.l.bf16 %v216
      %v229 = vunpack.c.h.bf16 %v216
      %v230 = vunpack.c.l.bf16 %v217
      %v231 = vunpack.c.h.bf16 %v217
      %v232 = vunpack.c.l.bf16 %v218
      %v233 = vunpack.c.h.bf16 %v218
      %v234 = vunpack.c.l.bf16 %v219
      %v235 = vunpack.c.h.bf16 %v219
      %s236 = scalar_lea.vmem %s1, 1
      %v237 = vld [vmem:[%s236] ss:$8 sm:$0x3]
      %v239 = vlaneseq
      %v240 = vshrl.u32 %v239, 7
      %v241 = vsub.s32 0, %v240
      %v242 = vrot.slane %v237, %v241
      %v243 = vlaneseq
      %v244 = vshrl.u32 %v243, 7
      %v245 = vsub.s32 1, %v244
      %v246 = vrot.slane %v237, %v245
      %v249 = vmul.f32 %v152, %v242
      %v250 = vmul.f32 %v153, %v246
      %v251 = vmul.f32 %v220, %v242
      %v252 = vmul.f32 %v221, %v246
      %v253 = vmul.f32 %v154, %v242
      %v254 = vmul.f32 %v155, %v246
      %v255 = vmul.f32 %v222, %v242
      %v256 = vmul.f32 %v223, %v246
      %v257 = vmul.f32 %v156, %v242
      %v258 = vmul.f32 %v157, %v246
      %v259 = vmul.f32 %v224, %v242
      %v260 = vmul.f32 %v225, %v246
      %v261 = vmul.f32 %v158, %v242
      %v262 = vmul.f32 %v159, %v246
      %v263 = vmul.f32 %v226, %v242
      %v264 = vmul.f32 %v227, %v246
      %v265 = vmul.f32 %v160, %v242
      %v266 = vmul.f32 %v161, %v246
      %v267 = vmul.f32 %v228, %v242
      %v268 = vmul.f32 %v229, %v246
      %v269 = vmul.f32 %v162, %v242
      %v270 = vmul.f32 %v163, %v246
      %v271 = vmul.f32 %v230, %v242
      %v272 = vmul.f32 %v231, %v246
      %v273 = vmul.f32 %v164, %v242
      %v274 = vmul.f32 %v165, %v246
      %v275 = vmul.f32 %v232, %v242
      %v276 = vmul.f32 %v233, %v246
      %v277 = vmul.f32 %v166, %v242
      %v278 = vmul.f32 %v167, %v246
      %v279 = vmul.f32 %v234, %v242
      %v280 = vmul.f32 %v235, %v246
      %vm313 = vcmask 1046528
      %v314 = vrot.slane %v249, 1
      %v315 = vrot.slane %v251, 1
      %v316 = vsel %vm313, %v314, %v315
      %v317 = vrot.slane %v250, 1
      %v318 = vrot.slane %v252, 1
      %v319 = vsel %vm313, %v317, %v318
      %v320 = vrot.slane %v253, 1
      %v321 = vrot.slane %v255, 1
      %v322 = vsel %vm313, %v320, %v321
      %v323 = vrot.slane %v254, 1
      %v324 = vrot.slane %v256, 1
      %v325 = vsel %vm313, %v323, %v324
      %v326 = vrot.slane %v257, 1
      %v327 = vrot.slane %v259, 1
      %v328 = vsel %vm313, %v326, %v327
      %v329 = vrot.slane %v258, 1
      %v330 = vrot.slane %v260, 1
      %v331 = vsel %vm313, %v329, %v330
      %v332 = vrot.slane %v261, 1
      %v333 = vrot.slane %v263, 1
      %v334 = vsel %vm313, %v332, %v333
      %v335 = vrot.slane %v262, 1
      %v336 = vrot.slane %v264, 1
      %v337 = vsel %vm313, %v335, %v336
      %v338 = vrot.slane %v265, 1
      %v339 = vrot.slane %v267, 1
      %v340 = vsel %vm313, %v338, %v339
      %v341 = vrot.slane %v266, 1
      %v342 = vrot.slane %v268, 1
      %v343 = vsel %vm313, %v341, %v342
      %v344 = vrot.slane %v269, 1
      %v345 = vrot.slane %v271, 1
      %v346 = vsel %vm313, %v344, %v345
      %v347 = vrot.slane %v270, 1
      %v348 = vrot.slane %v272, 1
      %v349 = vsel %vm313, %v347, %v348
      %v350 = vrot.slane %v273, 1
      %v351 = vrot.slane %v275, 1
      %v352 = vsel %vm313, %v350, %v351
      %v353 = vrot.slane %v274, 1
      %v354 = vrot.slane %v276, 1
      %v355 = vsel %vm313, %v353, %v354
      %v356 = vrot.slane %v277, 1
      %v357 = vrot.slane %v279, 1
      %v358 = vsel %vm313, %v356, %v357
      %v359 = vrot.slane %v278, 1
      %v360 = vrot.slane %v280, 1
      %v361 = vsel %vm313, %v359, %v360
      %v378 = vadd.f32 %v196, %v316
      %v379 = vadd.f32 %v197, %v319
      %v380 = vadd.f32 %v198, %v322
      %v381 = vadd.f32 %v199, %v325
      %v382 = vadd.f32 %v200, %v328
      %v383 = vadd.f32 %v201, %v331
      %v384 = vadd.f32 %v202, %v334
      %v385 = vadd.f32 %v203, %v337
      %v386 = vadd.f32 %v204, %v340
      %v387 = vadd.f32 %v205, %v343
      %v388 = vadd.f32 %v206, %v346
      %v389 = vadd.f32 %v207, %v349
      %v390 = vadd.f32 %v208, %v352
      %v391 = vadd.f32 %v209, %v355
      %v392 = vadd.f32 %v210, %v358
      %v393 = vadd.f32 %v211, %v361
      %v394 = vld [vmem:[%s138] sm:$0xee]
      %v395 = vld [vmem:[%s138 + $0x10] sm:$0xee]
      %v396 = vld [vmem:[%s138 + $0x20] sm:$0xee]
      %v397 = vld [vmem:[%s138 + $0x30] sm:$0xee]
      %v398 = vld [vmem:[%s138 + $0x40] sm:$0xee]
      %v399 = vld [vmem:[%s138 + $0x50] sm:$0xee]
      %v400 = vld [vmem:[%s138 + $0x60] sm:$0xee]
      %v401 = vld [vmem:[%s138 + $0x70] sm:$0xee]
      %v402 = vunpack.c.l.bf16 %v394
      %v403 = vunpack.c.h.bf16 %v394
      %v404 = vunpack.c.l.bf16 %v395
      %v405 = vunpack.c.h.bf16 %v395
      %v406 = vunpack.c.l.bf16 %v396
      %v407 = vunpack.c.h.bf16 %v396
      %v408 = vunpack.c.l.bf16 %v397
      %v409 = vunpack.c.h.bf16 %v397
      %v410 = vunpack.c.l.bf16 %v398
      %v411 = vunpack.c.h.bf16 %v398
      %v412 = vunpack.c.l.bf16 %v399
      %v413 = vunpack.c.h.bf16 %v399
      %v414 = vunpack.c.l.bf16 %v400
      %v415 = vunpack.c.h.bf16 %v400
      %v416 = vunpack.c.l.bf16 %v401
      %v417 = vunpack.c.h.bf16 %v401
      %s418 = scalar_lea.vmem %s1, 2
      %v419 = vld [vmem:[%s418] ss:$8 sm:$0x3]
      %v421 = vlaneseq
      %v422 = vshrl.u32 %v421, 7
      %v423 = vsub.s32 0, %v422
      %v424 = vrot.slane %v419, %v423
      %v425 = vlaneseq
      %v426 = vshrl.u32 %v425, 7
      %v427 = vsub.s32 1, %v426
      %v428 = vrot.slane %v419, %v427
      %v431 = vmul.f32 %v402, %v424
      %v432 = vmul.f32 %v403, %v428
      %v433 = vmul.f32 %v220, %v424
      %v434 = vmul.f32 %v221, %v428
      %v435 = vmul.f32 %v404, %v424
      %v436 = vmul.f32 %v405, %v428
      %v437 = vmul.f32 %v222, %v424
      %v438 = vmul.f32 %v223, %v428
      %v439 = vmul.f32 %v406, %v424
      %v440 = vmul.f32 %v407, %v428
      %v441 = vmul.f32 %v224, %v424
      %v442 = vmul.f32 %v225, %v428
      %v443 = vmul.f32 %v408, %v424
      %v444 = vmul.f32 %v409, %v428
      %v445 = vmul.f32 %v226, %v424
      %v446 = vmul.f32 %v227, %v428
      %v447 = vmul.f32 %v410, %v424
      %v448 = vmul.f32 %v411, %v428
      %v449 = vmul.f32 %v228, %v424
      %v450 = vmul.f32 %v229, %v428
      %v451 = vmul.f32 %v412, %v424
      %v452 = vmul.f32 %v413, %v428
      %v453 = vmul.f32 %v230, %v424
      %v454 = vmul.f32 %v231, %v428
      %v455 = vmul.f32 %v414, %v424
      %v456 = vmul.f32 %v415, %v428
      %v457 = vmul.f32 %v232, %v424
      %v458 = vmul.f32 %v233, %v428
      %v459 = vmul.f32 %v416, %v424
      %v460 = vmul.f32 %v417, %v428
      %v461 = vmul.f32 %v234, %v424
      %v462 = vmul.f32 %v235, %v428
      %vm495 = vcmask 1045504
      %v496 = vrot.slane %v431, 2
      %v497 = vrot.slane %v433, 2
      %v498 = vsel %vm495, %v496, %v497
      %v499 = vrot.slane %v432, 2
      %v500 = vrot.slane %v434, 2
      %v501 = vsel %vm495, %v499, %v500
      %v502 = vrot.slane %v435, 2
      %v503 = vrot.slane %v437, 2
      %v504 = vsel %vm495, %v502, %v503
      %v505 = vrot.slane %v436, 2
      %v506 = vrot.slane %v438, 2
      %v507 = vsel %vm495, %v505, %v506
      %v508 = vrot.slane %v439, 2
      %v509 = vrot.slane %v441, 2
      %v510 = vsel %vm495, %v508, %v509
      %v511 = vrot.slane %v440, 2
      %v512 = vrot.slane %v442, 2
      %v513 = vsel %vm495, %v511, %v512
      %v514 = vrot.slane %v443, 2
      %v515 = vrot.slane %v445, 2
      %v516 = vsel %vm495, %v514, %v515
      %v517 = vrot.slane %v444, 2
      %v518 = vrot.slane %v446, 2
      %v519 = vsel %vm495, %v517, %v518
      %v520 = vrot.slane %v447, 2
      %v521 = vrot.slane %v449, 2
      %v522 = vsel %vm495, %v520, %v521
      %v523 = vrot.slane %v448, 2
      %v524 = vrot.slane %v450, 2
      %v525 = vsel %vm495, %v523, %v524
      %v526 = vrot.slane %v451, 2
      %v527 = vrot.slane %v453, 2
      %v528 = vsel %vm495, %v526, %v527
      %v529 = vrot.slane %v452, 2
      %v530 = vrot.slane %v454, 2
      %v531 = vsel %vm495, %v529, %v530
      %v532 = vrot.slane %v455, 2
      %v533 = vrot.slane %v457, 2
      %v534 = vsel %vm495, %v532, %v533
      %v535 = vrot.slane %v456, 2
      %v536 = vrot.slane %v458, 2
      %v537 = vsel %vm495, %v535, %v536
      %v538 = vrot.slane %v459, 2
      %v539 = vrot.slane %v461, 2
      %v540 = vsel %vm495, %v538, %v539
      %v541 = vrot.slane %v460, 2
      %v542 = vrot.slane %v462, 2
      %v543 = vsel %vm495, %v541, %v542
      %v560 = vadd.f32 %v378, %v498
      %v561 = vadd.f32 %v379, %v501
      %v562 = vadd.f32 %v380, %v504
      %v563 = vadd.f32 %v381, %v507
      %v564 = vadd.f32 %v382, %v510
      %v565 = vadd.f32 %v383, %v513
      %v566 = vadd.f32 %v384, %v516
      %v567 = vadd.f32 %v385, %v519
      %v568 = vadd.f32 %v386, %v522
      %v569 = vadd.f32 %v387, %v525
      %v570 = vadd.f32 %v388, %v528
      %v571 = vadd.f32 %v389, %v531
      %v572 = vadd.f32 %v390, %v534
      %v573 = vadd.f32 %v391, %v537
      %v574 = vadd.f32 %v392, %v540
      %v575 = vadd.f32 %v393, %v543
      %s576 = scalar_lea.vmem %s138, 16
      %v577 = vld [vmem:[%s576] sm:$0xff]
      %v578 = vld [vmem:[%s576 + $0x10] sm:$0xff]
      %v579 = vld [vmem:[%s576 + $0x20] sm:$0xff]
      %v580 = vld [vmem:[%s576 + $0x30] sm:$0xff]
      %v581 = vld [vmem:[%s576 + $0x40] sm:$0xff]
      %v582 = vld [vmem:[%s576 + $0x50] sm:$0xff]
      %v583 = vld [vmem:[%s576 + $0x60] sm:$0xff]
      %v584 = vld [vmem:[%s576 + $0x70] sm:$0xff]
      %v585 = vunpack.c.l.bf16 %v577
      %v586 = vunpack.c.h.bf16 %v577
      %v587 = vunpack.c.l.bf16 %v578
      %v588 = vunpack.c.h.bf16 %v578
      %v589 = vunpack.c.l.bf16 %v579
      %v590 = vunpack.c.h.bf16 %v579
      %v591 = vunpack.c.l.bf16 %v580
      %v592 = vunpack.c.h.bf16 %v580
      %v593 = vunpack.c.l.bf16 %v581
      %v594 = vunpack.c.h.bf16 %v581
      %v595 = vunpack.c.l.bf16 %v582
      %v596 = vunpack.c.h.bf16 %v582
      %v597 = vunpack.c.l.bf16 %v583
      %v598 = vunpack.c.h.bf16 %v583
      %v599 = vunpack.c.l.bf16 %v584
      %v600 = vunpack.c.h.bf16 %v584
      %s601 = scalar_lea.vmem %s1, 3
      %v602 = vld [vmem:[%s601] ss:$8 sm:$0x3]
      %v604 = vlaneseq
      %v605 = vshrl.u32 %v604, 7
      %v606 = vsub.s32 0, %v605
      %v607 = vrot.slane %v602, %v606
      %v608 = vlaneseq
      %v609 = vshrl.u32 %v608, 7
      %v610 = vsub.s32 1, %v609
      %v611 = vrot.slane %v602, %v610
      %v614 = vmul.f32 %v585, %v607
      %v615 = vmul.f32 %v586, %v611
      %v616 = vmul.f32 %v587, %v607
      %v617 = vmul.f32 %v588, %v611
      %v618 = vmul.f32 %v589, %v607
      %v619 = vmul.f32 %v590, %v611
      %v620 = vmul.f32 %v591, %v607
      %v621 = vmul.f32 %v592, %v611
      %v622 = vmul.f32 %v593, %v607
      %v623 = vmul.f32 %v594, %v611
      %v624 = vmul.f32 %v595, %v607
      %v625 = vmul.f32 %v596, %v611
      %v626 = vmul.f32 %v597, %v607
      %v627 = vmul.f32 %v598, %v611
      %v628 = vmul.f32 %v599, %v607
      %v629 = vmul.f32 %v600, %v611
      %v630 = vadd.f32 %v560, %v614
      %v631 = vadd.f32 %v561, %v615
      %v632 = vadd.f32 %v562, %v616
      %v633 = vadd.f32 %v563, %v617
      %v634 = vadd.f32 %v564, %v618
      %v635 = vadd.f32 %v565, %v619
      %v636 = vadd.f32 %v566, %v620
      %v637 = vadd.f32 %v567, %v621
      %v638 = vadd.f32 %v568, %v622
      %v639 = vadd.f32 %v569, %v623
      %v640 = vadd.f32 %v570, %v624
      %v641 = vadd.f32 %v571, %v625
      %v642 = vadd.f32 %v572, %v626
      %v643 = vadd.f32 %v573, %v627
      %v644 = vadd.f32 %v574, %v628
      %v645 = vadd.f32 %v575, %v629
      %v646 = vld [vmem:[%s576 + $0x8] sm:$0x11]
      %v647 = vld [vmem:[%s576 + $0x18] sm:$0x11]
      %v648 = vld [vmem:[%s576 + $0x28] sm:$0x11]
      %v649 = vld [vmem:[%s576 + $0x38] sm:$0x11]
      %v650 = vld [vmem:[%s576 + $0x48] sm:$0x11]
      %v651 = vld [vmem:[%s576 + $0x58] sm:$0x11]
      %v652 = vld [vmem:[%s576 + $0x68] sm:$0x11]
      %v653 = vld [vmem:[%s576 + $0x78] sm:$0x11]
      %v654 = vunpack.c.l.bf16 %v646
      %v655 = vunpack.c.h.bf16 %v646
      %v656 = vunpack.c.l.bf16 %v647
      %v657 = vunpack.c.h.bf16 %v647
      %v658 = vunpack.c.l.bf16 %v648
      %v659 = vunpack.c.h.bf16 %v648
      %v660 = vunpack.c.l.bf16 %v649
      %v661 = vunpack.c.h.bf16 %v649
      %v662 = vunpack.c.l.bf16 %v650
      %v663 = vunpack.c.h.bf16 %v650
      %v664 = vunpack.c.l.bf16 %v651
      %v665 = vunpack.c.h.bf16 %v651
      %v666 = vunpack.c.l.bf16 %v652
      %v667 = vunpack.c.h.bf16 %v652
      %v668 = vunpack.c.l.bf16 %v653
      %v669 = vunpack.c.h.bf16 %v653
      %s670 = scalar_lea.vmem %s1, 4
      %v671 = vld [vmem:[%s670] ss:$8 sm:$0x3]
      %v673 = vlaneseq
      %v674 = vshrl.u32 %v673, 7
      %v675 = vsub.s32 0, %v674
      %v676 = vrot.slane %v671, %v675
      %v677 = vlaneseq
      %v678 = vshrl.u32 %v677, 7
      %v679 = vsub.s32 1, %v678
      %v680 = vrot.slane %v671, %v679
      %v683 = vmul.f32 %v585, %v676
      %v684 = vmul.f32 %v586, %v680
      %v685 = vmul.f32 %v654, %v676
      %v686 = vmul.f32 %v655, %v680
      %v687 = vmul.f32 %v587, %v676
      %v688 = vmul.f32 %v588, %v680
      %v689 = vmul.f32 %v656, %v676
      %v690 = vmul.f32 %v657, %v680
      %v691 = vmul.f32 %v589, %v676
      %v692 = vmul.f32 %v590, %v680
      %v693 = vmul.f32 %v658, %v676
      %v694 = vmul.f32 %v659, %v680
      %v695 = vmul.f32 %v591, %v676
      %v696 = vmul.f32 %v592, %v680
      %v697 = vmul.f32 %v660, %v676
      %v698 = vmul.f32 %v661, %v680
      %v699 = vmul.f32 %v593, %v676
      %v700 = vmul.f32 %v594, %v680
      %v701 = vmul.f32 %v662, %v676
      %v702 = vmul.f32 %v663, %v680
      %v703 = vmul.f32 %v595, %v676
      %v704 = vmul.f32 %v596, %v680
      %v705 = vmul.f32 %v664, %v676
      %v706 = vmul.f32 %v665, %v680
      %v707 = vmul.f32 %v597, %v676
      %v708 = vmul.f32 %v598, %v680
      %v709 = vmul.f32 %v666, %v676
      %v710 = vmul.f32 %v667, %v680
      %v711 = vmul.f32 %v599, %v676
      %v712 = vmul.f32 %v600, %v680
      %v713 = vmul.f32 %v668, %v676
      %v714 = vmul.f32 %v669, %v680
      %v747 = vrot.slane %v683, 1
      %v748 = vrot.slane %v685, 1
      %v749 = vsel %vm313, %v747, %v748
      %v750 = vrot.slane %v684, 1
      %v751 = vrot.slane %v686, 1
      %v752 = vsel %vm313, %v750, %v751
      %v753 = vrot.slane %v687, 1
      %v754 = vrot.slane %v689, 1
      %v755 = vsel %vm313, %v753, %v754
      %v756 = vrot.slane %v688, 1
      %v757 = vrot.slane %v690, 1
      %v758 = vsel %vm313, %v756, %v757
      %v759 = vrot.slane %v691, 1
      %v760 = vrot.slane %v693, 1
      %v761 = vsel %vm313, %v759, %v760
      %v762 = vrot.slane %v692, 1
      %v763 = vrot.slane %v694, 1
      %v764 = vsel %vm313, %v762, %v763
      %v765 = vrot.slane %v695, 1
      %v766 = vrot.slane %v697, 1
      %v767 = vsel %vm313, %v765, %v766
      %v768 = vrot.slane %v696, 1
      %v769 = vrot.slane %v698, 1
      %v770 = vsel %vm313, %v768, %v769
      %v771 = vrot.slane %v699, 1
      %v772 = vrot.slane %v701, 1
      %v773 = vsel %vm313, %v771, %v772
      %v774 = vrot.slane %v700, 1
      %v775 = vrot.slane %v702, 1
      %v776 = vsel %vm313, %v774, %v775
      %v777 = vrot.slane %v703, 1
      %v778 = vrot.slane %v705, 1
      %v779 = vsel %vm313, %v777, %v778
      %v780 = vrot.slane %v704, 1
      %v781 = vrot.slane %v706, 1
      %v782 = vsel %vm313, %v780, %v781
      %v783 = vrot.slane %v707, 1
      %v784 = vrot.slane %v709, 1
      %v785 = vsel %vm313, %v783, %v784
      %v786 = vrot.slane %v708, 1
      %v787 = vrot.slane %v710, 1
      %v788 = vsel %vm313, %v786, %v787
      %v789 = vrot.slane %v711, 1
      %v790 = vrot.slane %v713, 1
      %v791 = vsel %vm313, %v789, %v790
      %v792 = vrot.slane %v712, 1
      %v793 = vrot.slane %v714, 1
      %v794 = vsel %vm313, %v792, %v793
      %v811 = vadd.f32 %v630, %v749
      %v812 = vadd.f32 %v631, %v752
      %v813 = vadd.f32 %v632, %v755
      %v814 = vadd.f32 %v633, %v758
      %v815 = vadd.f32 %v634, %v761
      %v816 = vadd.f32 %v635, %v764
      %v817 = vadd.f32 %v636, %v767
      %v818 = vadd.f32 %v637, %v770
      %v819 = vadd.f32 %v638, %v773
      %v820 = vadd.f32 %v639, %v776
      %v821 = vadd.f32 %v640, %v779
      %v822 = vadd.f32 %v641, %v782
      %v823 = vadd.f32 %v642, %v785
      %v824 = vadd.f32 %v643, %v788
      %v825 = vadd.f32 %v644, %v791
      %v826 = vadd.f32 %v645, %v794
      %v827 = vld [vmem:[%s576] sm:$0xee]
      %v828 = vld [vmem:[%s576 + $0x10] sm:$0xee]
      %v829 = vld [vmem:[%s576 + $0x20] sm:$0xee]
      %v830 = vld [vmem:[%s576 + $0x30] sm:$0xee]
      %v831 = vld [vmem:[%s576 + $0x40] sm:$0xee]
      %v832 = vld [vmem:[%s576 + $0x50] sm:$0xee]
      %v833 = vld [vmem:[%s576 + $0x60] sm:$0xee]
      %v834 = vld [vmem:[%s576 + $0x70] sm:$0xee]
      %v835 = vunpack.c.l.bf16 %v827
      %v836 = vunpack.c.h.bf16 %v827
      %v837 = vunpack.c.l.bf16 %v828
      %v838 = vunpack.c.h.bf16 %v828
      %v839 = vunpack.c.l.bf16 %v829
      %v840 = vunpack.c.h.bf16 %v829
      %v841 = vunpack.c.l.bf16 %v830
      %v842 = vunpack.c.h.bf16 %v830
      %v843 = vunpack.c.l.bf16 %v831
      %v844 = vunpack.c.h.bf16 %v831
      %v845 = vunpack.c.l.bf16 %v832
      %v846 = vunpack.c.h.bf16 %v832
      %v847 = vunpack.c.l.bf16 %v833
      %v848 = vunpack.c.h.bf16 %v833
      %v849 = vunpack.c.l.bf16 %v834
      %v850 = vunpack.c.h.bf16 %v834
      %s851 = scalar_lea.vmem %s1, 5
      %v852 = vld [vmem:[%s851] ss:$8 sm:$0x3]
      %v854 = vlaneseq
      %v855 = vshrl.u32 %v854, 7
      %v856 = vsub.s32 0, %v855
      %v857 = vrot.slane %v852, %v856
      %v858 = vlaneseq
      %v859 = vshrl.u32 %v858, 7
      %v860 = vsub.s32 1, %v859
      %v861 = vrot.slane %v852, %v860
      %v864 = vmul.f32 %v835, %v857
      %v865 = vmul.f32 %v836, %v861
      %v866 = vmul.f32 %v654, %v857
      %v867 = vmul.f32 %v655, %v861
      %v868 = vmul.f32 %v837, %v857
      %v869 = vmul.f32 %v838, %v861
      %v870 = vmul.f32 %v656, %v857
      %v871 = vmul.f32 %v657, %v861
      %v872 = vmul.f32 %v839, %v857
      %v873 = vmul.f32 %v840, %v861
      %v874 = vmul.f32 %v658, %v857
      %v875 = vmul.f32 %v659, %v861
      %v876 = vmul.f32 %v841, %v857
      %v877 = vmul.f32 %v842, %v861
      %v878 = vmul.f32 %v660, %v857
      %v879 = vmul.f32 %v661, %v861
      %v880 = vmul.f32 %v843, %v857
      %v881 = vmul.f32 %v844, %v861
      %v882 = vmul.f32 %v662, %v857
      %v883 = vmul.f32 %v663, %v861
      %v884 = vmul.f32 %v845, %v857
      %v885 = vmul.f32 %v846, %v861
      %v886 = vmul.f32 %v664, %v857
      %v887 = vmul.f32 %v665, %v861
      %v888 = vmul.f32 %v847, %v857
      %v889 = vmul.f32 %v848, %v861
      %v890 = vmul.f32 %v666, %v857
      %v891 = vmul.f32 %v667, %v861
      %v892 = vmul.f32 %v849, %v857
      %v893 = vmul.f32 %v850, %v861
      %v894 = vmul.f32 %v668, %v857
      %v895 = vmul.f32 %v669, %v861
      %v928 = vrot.slane %v864, 2
      %v929 = vrot.slane %v866, 2
      %v930 = vsel %vm495, %v928, %v929
      %v931 = vrot.slane %v865, 2
      %v932 = vrot.slane %v867, 2
      %v933 = vsel %vm495, %v931, %v932
      %v934 = vrot.slane %v868, 2
      %v935 = vrot.slane %v870, 2
      %v936 = vsel %vm495, %v934, %v935
      %v937 = vrot.slane %v869, 2
      %v938 = vrot.slane %v871, 2
      %v939 = vsel %vm495, %v937, %v938
      %v940 = vrot.slane %v872, 2
      %v941 = vrot.slane %v874, 2
      %v942 = vsel %vm495, %v940, %v941
      %v943 = vrot.slane %v873, 2
      %v944 = vrot.slane %v875, 2
      %v945 = vsel %vm495, %v943, %v944
      %v946 = vrot.slane %v876, 2
      %v947 = vrot.slane %v878, 2
      %v948 = vsel %vm495, %v946, %v947
      %v949 = vrot.slane %v877, 2
      %v950 = vrot.slane %v879, 2
      %v951 = vsel %vm495, %v949, %v950
      %v952 = vrot.slane %v880, 2
      %v953 = vrot.slane %v882, 2
      %v954 = vsel %vm495, %v952, %v953
      %v955 = vrot.slane %v881, 2
      %v956 = vrot.slane %v883, 2
      %v957 = vsel %vm495, %v955, %v956
      %v958 = vrot.slane %v884, 2
      %v959 = vrot.slane %v886, 2
      %v960 = vsel %vm495, %v958, %v959
      %v961 = vrot.slane %v885, 2
      %v962 = vrot.slane %v887, 2
      %v963 = vsel %vm495, %v961, %v962
      %v964 = vrot.slane %v888, 2
      %v965 = vrot.slane %v890, 2
      %v966 = vsel %vm495, %v964, %v965
      %v967 = vrot.slane %v889, 2
      %v968 = vrot.slane %v891, 2
      %v969 = vsel %vm495, %v967, %v968
      %v970 = vrot.slane %v892, 2
      %v971 = vrot.slane %v894, 2
      %v972 = vsel %vm495, %v970, %v971
      %v973 = vrot.slane %v893, 2
      %v974 = vrot.slane %v895, 2
      %v975 = vsel %vm495, %v973, %v974
      %v992 = vadd.f32 %v811, %v930
      %v993 = vadd.f32 %v812, %v933
      %v994 = vadd.f32 %v813, %v936
      %v995 = vadd.f32 %v814, %v939
      %v996 = vadd.f32 %v815, %v942
      %v997 = vadd.f32 %v816, %v945
      %v998 = vadd.f32 %v817, %v948
      %v999 = vadd.f32 %v818, %v951
      %v1000 = vadd.f32 %v819, %v954
      %v1001 = vadd.f32 %v820, %v957
      %v1002 = vadd.f32 %v821, %v960
      %v1003 = vadd.f32 %v822, %v963
      %v1004 = vadd.f32 %v823, %v966
      %v1005 = vadd.f32 %v824, %v969
      %v1006 = vadd.f32 %v825, %v972
      %v1007 = vadd.f32 %v826, %v975
      %s1008 = scalar_lea.vmem %s138, 32
      %v1009 = vld [vmem:[%s1008] sm:$0xff]
      %v1010 = vld [vmem:[%s1008 + $0x10] sm:$0xff]
      %v1011 = vld [vmem:[%s1008 + $0x20] sm:$0xff]
      %v1012 = vld [vmem:[%s1008 + $0x30] sm:$0xff]
      %v1013 = vld [vmem:[%s1008 + $0x40] sm:$0xff]
      %v1014 = vld [vmem:[%s1008 + $0x50] sm:$0xff]
      %v1015 = vld [vmem:[%s1008 + $0x60] sm:$0xff]
      %v1016 = vld [vmem:[%s1008 + $0x70] sm:$0xff]
      %v1017 = vunpack.c.l.bf16 %v1009
      %v1018 = vunpack.c.h.bf16 %v1009
      %v1019 = vunpack.c.l.bf16 %v1010
      %v1020 = vunpack.c.h.bf16 %v1010
      %v1021 = vunpack.c.l.bf16 %v1011
      %v1022 = vunpack.c.h.bf16 %v1011
      %v1023 = vunpack.c.l.bf16 %v1012
      %v1024 = vunpack.c.h.bf16 %v1012
      %v1025 = vunpack.c.l.bf16 %v1013
      %v1026 = vunpack.c.h.bf16 %v1013
      %v1027 = vunpack.c.l.bf16 %v1014
      %v1028 = vunpack.c.h.bf16 %v1014
      %v1029 = vunpack.c.l.bf16 %v1015
      %v1030 = vunpack.c.h.bf16 %v1015
      %v1031 = vunpack.c.l.bf16 %v1016
      %v1032 = vunpack.c.h.bf16 %v1016
      %s1033 = scalar_lea.vmem %s1, 6
      %v1034 = vld [vmem:[%s1033] ss:$8 sm:$0x3]
      %v1036 = vlaneseq
      %v1037 = vshrl.u32 %v1036, 7
      %v1038 = vsub.s32 0, %v1037
      %v1039 = vrot.slane %v1034, %v1038
      %v1040 = vlaneseq
      %v1041 = vshrl.u32 %v1040, 7
      %v1042 = vsub.s32 1, %v1041
      %v1043 = vrot.slane %v1034, %v1042
      %v1046 = vmul.f32 %v1017, %v1039
      %v1047 = vmul.f32 %v1018, %v1043
      %v1048 = vmul.f32 %v1019, %v1039
      %v1049 = vmul.f32 %v1020, %v1043
      %v1050 = vmul.f32 %v1021, %v1039
      %v1051 = vmul.f32 %v1022, %v1043
      %v1052 = vmul.f32 %v1023, %v1039
      %v1053 = vmul.f32 %v1024, %v1043
      %v1054 = vmul.f32 %v1025, %v1039
      %v1055 = vmul.f32 %v1026, %v1043
      %v1056 = vmul.f32 %v1027, %v1039
      %v1057 = vmul.f32 %v1028, %v1043
      %v1058 = vmul.f32 %v1029, %v1039
      %v1059 = vmul.f32 %v1030, %v1043
      %v1060 = vmul.f32 %v1031, %v1039
      %v1061 = vmul.f32 %v1032, %v1043
      %v1062 = vadd.f32 %v992, %v1046
      %v1063 = vadd.f32 %v993, %v1047
      %v1064 = vadd.f32 %v994, %v1048
      %v1065 = vadd.f32 %v995, %v1049
      %v1066 = vadd.f32 %v996, %v1050
      %v1067 = vadd.f32 %v997, %v1051
      %v1068 = vadd.f32 %v998, %v1052
      %v1069 = vadd.f32 %v999, %v1053
      %v1070 = vadd.f32 %v1000, %v1054
      %v1071 = vadd.f32 %v1001, %v1055
      %v1072 = vadd.f32 %v1002, %v1056
      %v1073 = vadd.f32 %v1003, %v1057
      %v1074 = vadd.f32 %v1004, %v1058
      %v1075 = vadd.f32 %v1005, %v1059
      %v1076 = vadd.f32 %v1006, %v1060
      %v1077 = vadd.f32 %v1007, %v1061
      %v1078 = vld [vmem:[%s1008 + $0x8] sm:$0x11]
      %v1079 = vld [vmem:[%s1008 + $0x18] sm:$0x11]
      %v1080 = vld [vmem:[%s1008 + $0x28] sm:$0x11]
      %v1081 = vld [vmem:[%s1008 + $0x38] sm:$0x11]
      %v1082 = vld [vmem:[%s1008 + $0x48] sm:$0x11]
      %v1083 = vld [vmem:[%s1008 + $0x58] sm:$0x11]
      %v1084 = vld [vmem:[%s1008 + $0x68] sm:$0x11]
      %v1085 = vld [vmem:[%s1008 + $0x78] sm:$0x11]
      %v1086 = vunpack.c.l.bf16 %v1078
      %v1087 = vunpack.c.h.bf16 %v1078
      %v1088 = vunpack.c.l.bf16 %v1079
      %v1089 = vunpack.c.h.bf16 %v1079
      %v1090 = vunpack.c.l.bf16 %v1080
      %v1091 = vunpack.c.h.bf16 %v1080
      %v1092 = vunpack.c.l.bf16 %v1081
      %v1093 = vunpack.c.h.bf16 %v1081
      %v1094 = vunpack.c.l.bf16 %v1082
      %v1095 = vunpack.c.h.bf16 %v1082
      %v1096 = vunpack.c.l.bf16 %v1083
      %v1097 = vunpack.c.h.bf16 %v1083
      %v1098 = vunpack.c.l.bf16 %v1084
      %v1099 = vunpack.c.h.bf16 %v1084
      %v1100 = vunpack.c.l.bf16 %v1085
      %v1101 = vunpack.c.h.bf16 %v1085
      %s1102 = scalar_lea.vmem %s1, 7
      %v1103 = vld [vmem:[%s1102] ss:$8 sm:$0x3]
      %v1105 = vlaneseq
      %v1106 = vshrl.u32 %v1105, 7
      %v1107 = vsub.s32 0, %v1106
      %v1108 = vrot.slane %v1103, %v1107
      %v1109 = vlaneseq
      %v1110 = vshrl.u32 %v1109, 7
      %v1111 = vsub.s32 1, %v1110
      %v1112 = vrot.slane %v1103, %v1111
      %v1115 = vmul.f32 %v1017, %v1108
      %v1116 = vmul.f32 %v1018, %v1112
      %v1117 = vmul.f32 %v1086, %v1108
      %v1118 = vmul.f32 %v1087, %v1112
      %v1119 = vmul.f32 %v1019, %v1108
      %v1120 = vmul.f32 %v1020, %v1112
      %v1121 = vmul.f32 %v1088, %v1108
      %v1122 = vmul.f32 %v1089, %v1112
      %v1123 = vmul.f32 %v1021, %v1108
      %v1124 = vmul.f32 %v1022, %v1112
      %v1125 = vmul.f32 %v1090, %v1108
      %v1126 = vmul.f32 %v1091, %v1112
      %v1127 = vmul.f32 %v1023, %v1108
      %v1128 = vmul.f32 %v1024, %v1112
      %v1129 = vmul.f32 %v1092, %v1108
      %v1130 = vmul.f32 %v1093, %v1112
      %v1131 = vmul.f32 %v1025, %v1108
      %v1132 = vmul.f32 %v1026, %v1112
      %v1133 = vmul.f32 %v1094, %v1108
      %v1134 = vmul.f32 %v1095, %v1112
      %v1135 = vmul.f32 %v1027, %v1108
      %v1136 = vmul.f32 %v1028, %v1112
      %v1137 = vmul.f32 %v1096, %v1108
      %v1138 = vmul.f32 %v1097, %v1112
      %v1139 = vmul.f32 %v1029, %v1108
      %v1140 = vmul.f32 %v1030, %v1112
      %v1141 = vmul.f32 %v1098, %v1108
      %v1142 = vmul.f32 %v1099, %v1112
      %v1143 = vmul.f32 %v1031, %v1108
      %v1144 = vmul.f32 %v1032, %v1112
      %v1145 = vmul.f32 %v1100, %v1108
      %v1146 = vmul.f32 %v1101, %v1112
      %v1179 = vrot.slane %v1115, 1
      %v1180 = vrot.slane %v1117, 1
      %v1181 = vsel %vm313, %v1179, %v1180
      %v1182 = vrot.slane %v1116, 1
      %v1183 = vrot.slane %v1118, 1
      %v1184 = vsel %vm313, %v1182, %v1183
      %v1185 = vrot.slane %v1119, 1
      %v1186 = vrot.slane %v1121, 1
      %v1187 = vsel %vm313, %v1185, %v1186
      %v1188 = vrot.slane %v1120, 1
      %v1189 = vrot.slane %v1122, 1
      %v1190 = vsel %vm313, %v1188, %v1189
      %v1191 = vrot.slane %v1123, 1
      %v1192 = vrot.slane %v1125, 1
      %v1193 = vsel %vm313, %v1191, %v1192
      %v1194 = vrot.slane %v1124, 1
      %v1195 = vrot.slane %v1126, 1
      %v1196 = vsel %vm313, %v1194, %v1195
      %v1197 = vrot.slane %v1127, 1
      %v1198 = vrot.slane %v1129, 1
      %v1199 = vsel %vm313, %v1197, %v1198
      %v1200 = vrot.slane %v1128, 1
      %v1201 = vrot.slane %v1130, 1
      %v1202 = vsel %vm313, %v1200, %v1201
      %v1203 = vrot.slane %v1131, 1
      %v1204 = vrot.slane %v1133, 1
      %v1205 = vsel %vm313, %v1203, %v1204
      %v1206 = vrot.slane %v1132, 1
      %v1207 = vrot.slane %v1134, 1
      %v1208 = vsel %vm313, %v1206, %v1207
      %v1209 = vrot.slane %v1135, 1
      %v1210 = vrot.slane %v1137, 1
      %v1211 = vsel %vm313, %v1209, %v1210
      %v1212 = vrot.slane %v1136, 1
      %v1213 = vrot.slane %v1138, 1
      %v1214 = vsel %vm313, %v1212, %v1213
      %v1215 = vrot.slane %v1139, 1
      %v1216 = vrot.slane %v1141, 1
      %v1217 = vsel %vm313, %v1215, %v1216
      %v1218 = vrot.slane %v1140, 1
      %v1219 = vrot.slane %v1142, 1
      %v1220 = vsel %vm313, %v1218, %v1219
      %v1221 = vrot.slane %v1143, 1
      %v1222 = vrot.slane %v1145, 1
      %v1223 = vsel %vm313, %v1221, %v1222
      %v1224 = vrot.slane %v1144, 1
      %v1225 = vrot.slane %v1146, 1
      %v1226 = vsel %vm313, %v1224, %v1225
      %v1243 = vadd.f32 %v1062, %v1181
      %v1244 = vadd.f32 %v1063, %v1184
      %v1245 = vadd.f32 %v1064, %v1187
      %v1246 = vadd.f32 %v1065, %v1190
      %v1247 = vadd.f32 %v1066, %v1193
      %v1248 = vadd.f32 %v1067, %v1196
      %v1249 = vadd.f32 %v1068, %v1199
      %v1250 = vadd.f32 %v1069, %v1202
      %v1251 = vadd.f32 %v1070, %v1205
      %v1252 = vadd.f32 %v1071, %v1208
      %v1253 = vadd.f32 %v1072, %v1211
      %v1254 = vadd.f32 %v1073, %v1214
      %v1255 = vadd.f32 %v1074, %v1217
      %v1256 = vadd.f32 %v1075, %v1220
      %v1257 = vadd.f32 %v1076, %v1223
      %v1258 = vadd.f32 %v1077, %v1226
      %v1259 = vld [vmem:[%s1008] sm:$0xee]
      %v1260 = vld [vmem:[%s1008 + $0x10] sm:$0xee]
      %v1261 = vld [vmem:[%s1008 + $0x20] sm:$0xee]
      %v1262 = vld [vmem:[%s1008 + $0x30] sm:$0xee]
      %v1263 = vld [vmem:[%s1008 + $0x40] sm:$0xee]
      %v1264 = vld [vmem:[%s1008 + $0x50] sm:$0xee]
      %v1265 = vld [vmem:[%s1008 + $0x60] sm:$0xee]
      %v1266 = vld [vmem:[%s1008 + $0x70] sm:$0xee]
      %v1267 = vunpack.c.l.bf16 %v1259
      %v1268 = vunpack.c.h.bf16 %v1259
      %v1269 = vunpack.c.l.bf16 %v1260
      %v1270 = vunpack.c.h.bf16 %v1260
      %v1271 = vunpack.c.l.bf16 %v1261
      %v1272 = vunpack.c.h.bf16 %v1261
      %v1273 = vunpack.c.l.bf16 %v1262
      %v1274 = vunpack.c.h.bf16 %v1262
      %v1275 = vunpack.c.l.bf16 %v1263
      %v1276 = vunpack.c.h.bf16 %v1263
      %v1277 = vunpack.c.l.bf16 %v1264
      %v1278 = vunpack.c.h.bf16 %v1264
      %v1279 = vunpack.c.l.bf16 %v1265
      %v1280 = vunpack.c.h.bf16 %v1265
      %v1281 = vunpack.c.l.bf16 %v1266
      %v1282 = vunpack.c.h.bf16 %v1266
      %s1283 = scalar_lea.vmem %s1, 16
      %v1284 = vld [vmem:[%s1283] ss:$8 sm:$0x3]
      %v1286 = vlaneseq
      %v1287 = vshrl.u32 %v1286, 7
      %v1288 = vsub.s32 0, %v1287
      %v1289 = vrot.slane %v1284, %v1288
      %v1290 = vlaneseq
      %v1291 = vshrl.u32 %v1290, 7
      %v1292 = vsub.s32 1, %v1291
      %v1293 = vrot.slane %v1284, %v1292
      %v1296 = vmul.f32 %v1267, %v1289
      %v1297 = vmul.f32 %v1268, %v1293
      %v1298 = vmul.f32 %v1086, %v1289
      %v1299 = vmul.f32 %v1087, %v1293
      %v1300 = vmul.f32 %v1269, %v1289
      %v1301 = vmul.f32 %v1270, %v1293
      %v1302 = vmul.f32 %v1088, %v1289
      %v1303 = vmul.f32 %v1089, %v1293
      %v1304 = vmul.f32 %v1271, %v1289
      %v1305 = vmul.f32 %v1272, %v1293
      %v1306 = vmul.f32 %v1090, %v1289
      %v1307 = vmul.f32 %v1091, %v1293
      %v1308 = vmul.f32 %v1273, %v1289
      %v1309 = vmul.f32 %v1274, %v1293
      %v1310 = vmul.f32 %v1092, %v1289
      %v1311 = vmul.f32 %v1093, %v1293
      %v1312 = vmul.f32 %v1275, %v1289
      %v1313 = vmul.f32 %v1276, %v1293
      %v1314 = vmul.f32 %v1094, %v1289
      %v1315 = vmul.f32 %v1095, %v1293
      %v1316 = vmul.f32 %v1277, %v1289
      %v1317 = vmul.f32 %v1278, %v1293
      %v1318 = vmul.f32 %v1096, %v1289
      %v1319 = vmul.f32 %v1097, %v1293
      %v1320 = vmul.f32 %v1279, %v1289
      %v1321 = vmul.f32 %v1280, %v1293
      %v1322 = vmul.f32 %v1098, %v1289
      %v1323 = vmul.f32 %v1099, %v1293
      %v1324 = vmul.f32 %v1281, %v1289
      %v1325 = vmul.f32 %v1282, %v1293
      %v1326 = vmul.f32 %v1100, %v1289
      %v1327 = vmul.f32 %v1101, %v1293
      %v1360 = vrot.slane %v1296, 2
      %v1361 = vrot.slane %v1298, 2
      %v1362 = vsel %vm495, %v1360, %v1361
      %v1363 = vrot.slane %v1297, 2
      %v1364 = vrot.slane %v1299, 2
      %v1365 = vsel %vm495, %v1363, %v1364
      %v1366 = vrot.slane %v1300, 2
      %v1367 = vrot.slane %v1302, 2
      %v1368 = vsel %vm495, %v1366, %v1367
      %v1369 = vrot.slane %v1301, 2
      %v1370 = vrot.slane %v1303, 2
      %v1371 = vsel %vm495, %v1369, %v1370
      %v1372 = vrot.slane %v1304, 2
      %v1373 = vrot.slane %v1306, 2
      %v1374 = vsel %vm495, %v1372, %v1373
      %v1375 = vrot.slane %v1305, 2
      %v1376 = vrot.slane %v1307, 2
      %v1377 = vsel %vm495, %v1375, %v1376
      %v1378 = vrot.slane %v1308, 2
      %v1379 = vrot.slane %v1310, 2
      %v1380 = vsel %vm495, %v1378, %v1379
      %v1381 = vrot.slane %v1309, 2
      %v1382 = vrot.slane %v1311, 2
      %v1383 = vsel %vm495, %v1381, %v1382
      %v1384 = vrot.slane %v1312, 2
      %v1385 = vrot.slane %v1314, 2
      %v1386 = vsel %vm495, %v1384, %v1385
      %v1387 = vrot.slane %v1313, 2
      %v1388 = vrot.slane %v1315, 2
      %v1389 = vsel %vm495, %v1387, %v1388
      %v1390 = vrot.slane %v1316, 2
      %v1391 = vrot.slane %v1318, 2
      %v1392 = vsel %vm495, %v1390, %v1391
      %v1393 = vrot.slane %v1317, 2
      %v1394 = vrot.slane %v1319, 2
      %v1395 = vsel %vm495, %v1393, %v1394
      %v1396 = vrot.slane %v1320, 2
      %v1397 = vrot.slane %v1322, 2
      %v1398 = vsel %vm495, %v1396, %v1397
      %v1399 = vrot.slane %v1321, 2
      %v1400 = vrot.slane %v1323, 2
      %v1401 = vsel %vm495, %v1399, %v1400
      %v1402 = vrot.slane %v1324, 2
      %v1403 = vrot.slane %v1326, 2
      %v1404 = vsel %vm495, %v1402, %v1403
      %v1405 = vrot.slane %v1325, 2
      %v1406 = vrot.slane %v1327, 2
      %v1407 = vsel %vm495, %v1405, %v1406
      %v1424 = vadd.f32 %v1243, %v1362
      %v1425 = vadd.f32 %v1244, %v1365
      %v1426 = vadd.f32 %v1245, %v1368
      %v1427 = vadd.f32 %v1246, %v1371
      %v1428 = vadd.f32 %v1247, %v1374
      %v1429 = vadd.f32 %v1248, %v1377
      %v1430 = vadd.f32 %v1249, %v1380
      %v1431 = vadd.f32 %v1250, %v1383
      %v1432 = vadd.f32 %v1251, %v1386
      %v1433 = vadd.f32 %v1252, %v1389
      %v1434 = vadd.f32 %v1253, %v1392
      %v1435 = vadd.f32 %v1254, %v1395
      %v1436 = vadd.f32 %v1255, %v1398
      %v1437 = vadd.f32 %v1256, %v1401
      %v1438 = vadd.f32 %v1257, %v1404
      %v1439 = vadd.f32 %v1258, %v1407
      %v1440 = vxor.u32 %v1424, 2147483648
      %v1441 = vxor.u32 %v1425, 2147483648
      %v1442 = vxor.u32 %v1426, 2147483648
      %v1443 = vxor.u32 %v1427, 2147483648
      %v1444 = vxor.u32 %v1428, 2147483648
      %v1445 = vxor.u32 %v1429, 2147483648
      %v1446 = vxor.u32 %v1430, 2147483648
      %v1447 = vxor.u32 %v1431, 2147483648
      %v1448 = vxor.u32 %v1432, 2147483648
      %v1449 = vxor.u32 %v1433, 2147483648
      %v1450 = vxor.u32 %v1434, 2147483648
      %v1451 = vxor.u32 %v1435, 2147483648
      %v1452 = vxor.u32 %v1436, 2147483648
      %v1453 = vxor.u32 %v1437, 2147483648
      %v1454 = vxor.u32 %v1438, 2147483648
      %v1455 = vxor.u32 %v1439, 2147483648
      %v1456 = vmul.f32 %v1440, 1.442695
      %v1457 = vpow.pop %v1456
      %v1458 = vmul.f32 %v1441, 1.442695
      %v1459 = vpow.pop %v1458
      %v1460 = vmul.f32 %v1442, 1.442695
      %v1461 = vpow.pop %v1460
      %v1462 = vmul.f32 %v1443, 1.442695
      %v1463 = vpow.pop %v1462
      %v1464 = vmul.f32 %v1444, 1.442695
      %v1465 = vpow.pop %v1464
      %v1466 = vmul.f32 %v1445, 1.442695
      %v1467 = vpow.pop %v1466
      %v1468 = vmul.f32 %v1446, 1.442695
      %v1469 = vpow.pop %v1468
      %v1470 = vmul.f32 %v1447, 1.442695
      %v1471 = vpow.pop %v1470
      %v1472 = vmul.f32 %v1448, 1.442695
      %v1473 = vpow.pop %v1472
      %v1474 = vmul.f32 %v1449, 1.442695
      %v1475 = vpow.pop %v1474
      %v1476 = vmul.f32 %v1450, 1.442695
      %v1477 = vpow.pop %v1476
      %v1478 = vmul.f32 %v1451, 1.442695
      %v1479 = vpow.pop %v1478
      %v1480 = vmul.f32 %v1452, 1.442695
      %v1481 = vpow.pop %v1480
      %v1482 = vmul.f32 %v1453, 1.442695
      %v1483 = vpow.pop %v1482
      %v1484 = vmul.f32 %v1454, 1.442695
      %v1485 = vpow.pop %v1484
      %v1486 = vmul.f32 %v1455, 1.442695
      %v1487 = vpow.pop %v1486
      %v1488 = vadd.f32 %v1457, 1.0
      %v1489 = vadd.f32 %v1459, 1.0
      %v1490 = vadd.f32 %v1461, 1.0
      %v1491 = vadd.f32 %v1463, 1.0
      %v1492 = vadd.f32 %v1465, 1.0
      %v1493 = vadd.f32 %v1467, 1.0
      %v1494 = vadd.f32 %v1469, 1.0
      %v1495 = vadd.f32 %v1471, 1.0
      %v1496 = vadd.f32 %v1473, 1.0
      %v1497 = vadd.f32 %v1475, 1.0
      %v1498 = vadd.f32 %v1477, 1.0
      %v1499 = vadd.f32 %v1479, 1.0
      %v1500 = vadd.f32 %v1481, 1.0
      %v1501 = vadd.f32 %v1483, 1.0
      %v1502 = vadd.f32 %v1485, 1.0
      %v1503 = vadd.f32 %v1487, 1.0
      %v1504 = vrcp.pop %v1488
      %v1505 = vmul.f32 1.0, %v1504
      %v1506 = vrcp.pop %v1489
      %v1507 = vmul.f32 1.0, %v1506
      %v1508 = vrcp.pop %v1490
      %v1509 = vmul.f32 1.0, %v1508
      %v1510 = vrcp.pop %v1491
      %v1511 = vmul.f32 1.0, %v1510
      %v1512 = vrcp.pop %v1492
      %v1513 = vmul.f32 1.0, %v1512
      %v1514 = vrcp.pop %v1493
      %v1515 = vmul.f32 1.0, %v1514
      %v1516 = vrcp.pop %v1494
      %v1517 = vmul.f32 1.0, %v1516
      %v1518 = vrcp.pop %v1495
      %v1519 = vmul.f32 1.0, %v1518
      %v1520 = vrcp.pop %v1496
      %v1521 = vmul.f32 1.0, %v1520
      %v1522 = vrcp.pop %v1497
      %v1523 = vmul.f32 1.0, %v1522
      %v1524 = vrcp.pop %v1498
      %v1525 = vmul.f32 1.0, %v1524
      %v1526 = vrcp.pop %v1499
      %v1527 = vmul.f32 1.0, %v1526
      %v1528 = vrcp.pop %v1500
      %v1529 = vmul.f32 1.0, %v1528
      %v1530 = vrcp.pop %v1501
      %v1531 = vmul.f32 1.0, %v1530
      %v1532 = vrcp.pop %v1502
      %v1533 = vmul.f32 1.0, %v1532
      %v1534 = vrcp.pop %v1503
      %v1535 = vmul.f32 1.0, %v1534
      %v1536 = vmul.f32 %v1424, %v1505
      %v1537 = vmul.f32 %v1425, %v1507
      %v1538 = vmul.f32 %v1426, %v1509
      %v1539 = vmul.f32 %v1427, %v1511
      %v1540 = vmul.f32 %v1428, %v1513
      %v1541 = vmul.f32 %v1429, %v1515
      %v1542 = vmul.f32 %v1430, %v1517
      %v1543 = vmul.f32 %v1431, %v1519
      %v1544 = vmul.f32 %v1432, %v1521
      %v1545 = vmul.f32 %v1433, %v1523
      %v1546 = vmul.f32 %v1434, %v1525
      %v1547 = vmul.f32 %v1435, %v1527
      %v1548 = vmul.f32 %v1436, %v1529
      %v1549 = vmul.f32 %v1437, %v1531
      %v1550 = vmul.f32 %v1438, %v1533
      %v1551 = vmul.f32 %v1439, %v1535
      %1552 = vst [vmem:[%s143] sm:$0xff] %v1536
      %vm1553 = vcmask 523264
      %1554 = vst.msk [vmem:[%s143 + $0x8] sm:$0xff] %vm1553, %v1537
      %1555 = vst [vmem:[%s143 + $0x10] sm:$0xff] %v1538
      %1556 = vst.msk [vmem:[%s143 + $0x18] sm:$0xff] %vm1553, %v1539
      %1557 = vst [vmem:[%s143 + $0x20] sm:$0xff] %v1540
      %1558 = vst.msk [vmem:[%s143 + $0x28] sm:$0xff] %vm1553, %v1541
      %1559 = vst [vmem:[%s143 + $0x30] sm:$0xff] %v1542
      %1560 = vst.msk [vmem:[%s143 + $0x38] sm:$0xff] %vm1553, %v1543
      %1561 = vst [vmem:[%s143 + $0x40] sm:$0xff] %v1544
      %1562 = vst.msk [vmem:[%s143 + $0x48] sm:$0xff] %vm1553, %v1545
      %1563 = vst [vmem:[%s143 + $0x50] sm:$0xff] %v1546
      %1564 = vst.msk [vmem:[%s143 + $0x58] sm:$0xff] %vm1553, %v1547
      %1565 = vst [vmem:[%s143 + $0x60] sm:$0xff] %v1548
      %1566 = vst.msk [vmem:[%s143 + $0x68] sm:$0xff] %vm1553, %v1549
      %1567 = vst [vmem:[%s143 + $0x70] sm:$0xff] %v1550
      %1568 = vst.msk [vmem:[%s143 + $0x78] sm:$0xff] %vm1553, %v1551
      %p1569 = scmp.lt.s32.totalorder %s13, 1
      %s1570 = scalar_select %p1569, %s13, 1
      %s1571 = smul.addr %s1570, 16
      %s1572 = smul.addr %s1571, 8
      %s1573 = scalar_lea.vmem %s2, %s1572
      // Predicated region
      $region29: #{efficientnet_forward.15} parent=27 // pred_check
        %p1574 = pneg %p78
      $region30: #{efficientnet_forward.15} parent=27 // pred_check_branch
        %1576 = sbr.rel (%p1574) target = $region32
      $region31: #{efficientnet_forward.15} parent=27 // pred_region
        _
      $region32: #{efficientnet_forward.15} parent=27 // pred_fallthru
        _
    $region28: #{efficientnet_forward.15} parent=5 // pred_fallthru
      _
    %p1577 = scmp.le.s32.totalorder 2, %s8
    // Predicated region
    $region33: #{efficientnet_forward.15} parent=5 // pred_check
      %p1578 = pneg %p1577
    $region34: #{efficientnet_forward.15} parent=5 // pred_check_branch
      %1580 = sbr.rel (%p1578) target = $region36
    $region35: #{efficientnet_forward.15} parent=5 // pred_region
      %s1581 = ssub.s32 %s8, 2
      // Predicated region
      $region37: #{efficientnet_forward.15} parent=35 // pred_check
        %p1582 = pneg %p84
      $region38: #{efficientnet_forward.15} parent=35 // pred_check_branch
        %1584 = sbr.rel (%p1582) target = $region40
      $region39: #{efficientnet_forward.15} parent=35 // pred_region
        %p1585 = scmp.lt.s32.totalorder %s14, 1
        %s1586 = scalar_select %p1585, %s14, 1
        %s1587 = smul.addr %s1586, 16
        %s1588 = smul.addr %s1587, 8
        %s1589 = scalar_lea.vmem %s2, %s1588
      $region40: #{efficientnet_forward.15} parent=35 // pred_fallthru
        _
    $region36: #{efficientnet_forward.15} parent=5 // pred_fallthru
      _
  $region6: #{efficientnet_forward.15} parent=0 // loop_footer
    %s12 = sadd.s32 1, %s8
  $region7: #{efficientnet_forward.15} parent=0 // loop_footer_branch
    %7 = sbr.rel target = $region3
  $region8: #{efficientnet_forward.15} parent=0 // loop_exit
    _

// kernel: efficientnet_forward.19
$region0: #{efficientnet_forward.19}
  #allocation0 [shape = 'u32[]', space=smem, size = 0x4, offset = 0x4, fixed_abs, tag = 'smem constant byte address 0x4 - core index']
  #allocation1 [shape = 'u32[144,128]{1,0:T(1,128)}', space=vmem, size = 0x12000, scoped, tag = 'internal scratch']
  %s0 = inlined_call_operand.vmem [shape: bf16[16,128], index: 0, kind: input, shape index: {}]
  %s1 = inlined_call_operand.vmem [shape: bf16[128,200], index: 1, kind: input, shape index: {}]
  %s2 = inlined_call_operand.vmem [shape: f32[1,200], index: 2, kind: input, shape index: {}]
  %s3 = inlined_call_operand.vmem [shape: f32[16,200], index: 3, kind: output, shape index: {}]
  %s4 = sld [smem:[#allocation0]]
  $region30: #{efficientnet_forward.19} parent=0
    _
  %s6 = ssub.s32 1, %s4
  %s7 = scalar_select 0, %s6, %s4
  // Predicated region
  $region2: #{efficientnet_forward.19} parent=0 // pred_check
    _
  $region3: #{efficientnet_forward.19} parent=0 // pred_check_branch
    %9 = sbr.rel (0) target = $region5
  $region4: #{efficientnet_forward.19} parent=0 // pred_region
    _
  $region5: #{efficientnet_forward.19} parent=0 // pred_fallthru
    _
  // Predicated region
  $region6: #{efficientnet_forward.19} parent=0 // pred_check
    _
  $region7: #{efficientnet_forward.19} parent=0 // pred_check_branch
    %11 = sbr.rel (0) target = $region9
  $region8: #{efficientnet_forward.19} parent=0 // pred_region
    _
  $region9: #{efficientnet_forward.19} parent=0 // pred_fallthru
    _
  // Predicated region
  $region10: #{efficientnet_forward.19} parent=0 // pred_check
    _
  $region11: #{efficientnet_forward.19} parent=0 // pred_check_branch
    %13 = sbr.rel (0) target = $region13
  $region12: #{efficientnet_forward.19} parent=0 // pred_region
    _
  $region13: #{efficientnet_forward.19} parent=0 // pred_fallthru
    _
  %p15 = scmp.eq.s32.totalorder 0, 0
  // Predicated region
  $region14: #{efficientnet_forward.19} parent=0 // pred_check
    %p16 = pneg %p15
  $region15: #{efficientnet_forward.19} parent=0 // pred_check_branch
    %18 = sbr.rel (%p16) target = $region17
  $region16: #{efficientnet_forward.19} parent=0 // pred_region
    %19 = vst [vmem:[%s3] sm:$0xff] 0.0
    %vm20 = vcmask 588800
    %21 = vst.msk [vmem:[%s3 + $0x8] sm:$0xff] %vm20, 0.0
    %22 = vst [vmem:[%s3 + $0x10] sm:$0xff] 0.0
    %23 = vst.msk [vmem:[%s3 + $0x18] sm:$0xff] %vm20, 0.0
  $region17: #{efficientnet_forward.19} parent=0 // pred_fallthru
    _
  %v24 = vld [vmem:[%s0] sm:$0xf]
  %v25 = vld [vmem:[%s0 + $0x4] sm:$0xf]
  %v26 = vld [vmem:[%s3] sm:$0xff]
  %v27 = vld [vmem:[%s3 + $0x8] sm:$0xff]
  %v28 = vld [vmem:[%s3 + $0x10] sm:$0xff]
  %v29 = vld [vmem:[%s3 + $0x18] sm:$0xff]
  %v30 = vld [vmem:[%s1] sm:$0xff]
  %v31 = vld [vmem:[%s1 + $0x8] sm:$0xff]
  %v32 = vld [vmem:[%s1 + $0x10] sm:$0xff]
  %v33 = vld [vmem:[%s1 + $0x18] sm:$0xff]
  %v34 = vld [vmem:[%s1 + $0x20] sm:$0xff]
  %v35 = vld [vmem:[%s1 + $0x28] sm:$0xff]
  %v36 = vld [vmem:[%s1 + $0x30] sm:$0xff]
  %v37 = vld [vmem:[%s1 + $0x38] sm:$0xff]
  %v38 = vld [vmem:[%s1 + $0x40] sm:$0xff]
  %v39 = vld [vmem:[%s1 + $0x48] sm:$0xff]
  %v40 = vld [vmem:[%s1 + $0x50] sm:$0xff]
  %v41 = vld [vmem:[%s1 + $0x58] sm:$0xff]
  %v42 = vld [vmem:[%s1 + $0x60] sm:$0xff]
  %v43 = vld [vmem:[%s1 + $0x68] sm:$0xff]
  %v44 = vld [vmem:[%s1 + $0x70] sm:$0xff]
  %v45 = vld [vmem:[%s1 + $0x78] sm:$0xff]
  %v48 = vunpack.c.l.b16 %v24
  %v49 = vunpack.c.l.b16 %v25
  %v50 = vpack.c.b16 %v49, %v48
  %v68 = vunpack.c.l.b16 %v30
  %v69 = vunpack.c.h.b16 %v30
  %v70 = vunpack.c.l.b16 %v31
  %v71 = vunpack.c.h.b16 %v31
  %v72 = vunpack.c.l.b16 %v32
  %v73 = vunpack.c.h.b16 %v32
  %v74 = vunpack.c.l.b16 %v33
  %v75 = vunpack.c.h.b16 %v33
  %v76 = vunpack.c.l.b16 %v34
  %v77 = vunpack.c.h.b16 %v34
  %v78 = vunpack.c.l.b16 %v35
  %v79 = vunpack.c.h.b16 %v35
  %v80 = vunpack.c.l.b16 %v36
  %v81 = vunpack.c.h.b16 %v36
  %v82 = vunpack.c.l.b16 %v37
  %v83 = vunpack.c.h.b16 %v37
  %v84 = vunpack.c.l.b16 %v38
  %v85 = vunpack.c.h.b16 %v38
  %v86 = vunpack.c.l.b16 %v39
  %v87 = vunpack.c.h.b16 %v39
  %v88 = vunpack.c.l.b16 %v40
  %v89 = vunpack.c.h.b16 %v40
  %v90 = vunpack.c.l.b16 %v41
  %v91 = vunpack.c.h.b16 %v41
  %v92 = vunpack.c.l.b16 %v42
  %v93 = vunpack.c.h.b16 %v42
  %v94 = vunpack.c.l.b16 %v43
  %v95 = vunpack.c.h.b16 %v43
  %v96 = vunpack.c.l.b16 %v44
  %v97 = vunpack.c.h.b16 %v44
  %v98 = vunpack.c.l.b16 %v45
  %v99 = vunpack.c.h.b16 %v45
  %v100 = vpack.c.b16 %v70, %v68
  %v101 = vpack.c.b16 %v71, %v69
  %v102 = vpack.c.b16 %v74, %v72
  %v103 = vpack.c.b16 %v75, %v73
  %v104 = vpack.c.b16 %v78, %v76
  %v105 = vpack.c.b16 %v79, %v77
  %v106 = vpack.c.b16 %v82, %v80
  %v107 = vpack.c.b16 %v83, %v81
  %v108 = vpack.c.b16 %v86, %v84
  %v109 = vpack.c.b16 %v87, %v85
  %v110 = vpack.c.b16 %v90, %v88
  %v111 = vpack.c.b16 %v91, %v89
  %v112 = vpack.c.b16 %v94, %v92
  %v113 = vpack.c.b16 %v95, %v93
  %v114 = vpack.c.b16 %v98, %v96
  %v115 = vpack.c.b16 %v99, %v97
  %132 = vmatprep.subr.bf16.mxu0 %v101
  %133 = vmatpush1.bf16.msra.mxu0 %v100
  %134 = vmatprep.subr.bf16.mxu0 %v103
  %135 = vmatpush1.bf16.msra.mxu0 %v102
  %136 = vmatprep.subr.bf16.mxu0 %v105
  %137 = vmatpush1.bf16.msra.mxu0 %v104
  %138 = vmatprep.subr.bf16.mxu0 %v107
  %139 = vmatpush1.bf16.msra.mxu0 %v106
  %140 = vmatprep.subr.bf16.mxu0 %v109
  %141 = vmatpush1.bf16.msra.mxu0 %v108
  %142 = vmatprep.subr.bf16.mxu0 %v111
  %143 = vmatpush1.bf16.msra.mxu0 %v110
  %144 = vmatprep.subr.bf16.mxu0 %v113
  %145 = vmatpush1.bf16.msra.mxu0 %v112
  %146 = vmatprep.subr.bf16.mxu0 %v115
  %147 = vmatpush1.bf16.msra.mxu0 %v114
  %148 = vmatprep.subr.bf16.mxu0 0
  %149 = vmatpush1.bf16.msra.mxu0 0
  %150 = vmatprep.subr.bf16.mxu0 0
  %151 = vmatpush1.bf16.msra.mxu0 0
  %152 = vmatprep.subr.bf16.mxu0 0
  %153 = vmatpush1.bf16.msra.mxu0 0
  %154 = vmatprep.subr.bf16.mxu0 0
  %155 = vmatpush1.bf16.msra.mxu0 0
  %156 = vmatprep.subr.bf16.mxu0 0
  %157 = vmatpush1.bf16.msra.mxu0 0
  %158 = vmatprep.subr.bf16.mxu0 0
  %159 = vmatpush1.bf16.msra.mxu0 0
  %160 = vmatprep.subr.bf16.mxu0 0
  %161 = vmatpush1.bf16.msra.mxu0 0
  %162 = vmatprep.subr.bf16.mxu0 0
  %163 = vmatpush1.bf16.msra.mxu0 0
  %164 = vmatprep.mubr.bf16.mxu0 0
  %165 = vmatmul.mubr.bf16.gmra.mrb[0].mxu0 %v50
  %v166 = vpop.f32.mrb[0].mxu0
  %v167 = vadd.f32 0.0, %v166
  %v168 = vpop.f32.mrb[0].mxu0
  %v169 = vadd.f32 0.0, %v168
  %v170 = vpop.f32.mrb[0].mxu0
  %v171 = vadd.f32 0.0, %v170
  %v172 = vpop.f32.mrb[0].mxu0
  %v173 = vadd.f32 0.0, %v172
  %174 = vdwg.mxu0
  %v175 = vadd.f32 %v26, %v167
  %v176 = vadd.f32 %v27, %v169
  %v177 = vadd.f32 %v28, %v171
  %v178 = vadd.f32 %v29, %v173
  %179 = vst [vmem:[%s3] sm:$0xff] %v175
  %vm180 = vcmask 588800
  %181 = vst.msk [vmem:[%s3 + $0x8] sm:$0xff] %vm180, %v176
  %182 = vst [vmem:[%s3 + $0x10] sm:$0xff] %v177
  %183 = vst.msk [vmem:[%s3 + $0x18] sm:$0xff] %vm180, %v178
  // Predicated region
  $region18: #{efficientnet_forward.19} parent=0 // pred_check
    %p184 = pneg %p15
  $region19: #{efficientnet_forward.19} parent=0 // pred_check_branch
    %186 = sbr.rel (%p184) target = $region21
  $region20: #{efficientnet_forward.19} parent=0 // pred_region
    %v187 = vld [vmem:[%s3] sm:$0xff]
    %v188 = vld [vmem:[%s3 + $0x8] sm:$0xff]
    %v189 = vld [vmem:[%s3 + $0x10] sm:$0xff]
    %v190 = vld [vmem:[%s3 + $0x18] sm:$0xff]
    %v191 = vld [vmem:[%s2] sm:$0x3]
    %v193 = vlaneseq
    %v194 = vshrl.u32 %v193, 7
    %v195 = vsub.s32 0, %v194
    %v196 = vrot.slane %v191, %v195
    %v197 = vlaneseq
    %v198 = vshrl.u32 %v197, 7
    %v199 = vsub.s32 1, %v198
    %v200 = vrot.slane %v191, %v199
    %v203 = vadd.f32 %v187, %v196
    %v204 = vadd.f32 %v188, %v200
    %v205 = vadd.f32 %v189, %v196
    %v206 = vadd.f32 %v190, %v200
    %207 = vst [vmem:[%s3] sm:$0xff] %v203
    %208 = vst.msk [vmem:[%s3 + $0x8] sm:$0xff] %vm180, %v204
    %209 = vst [vmem:[%s3 + $0x10] sm:$0xff] %v205
    %210 = vst.msk [vmem:[%s3 + $0x18] sm:$0xff] %vm180, %v206
  $region21: #{efficientnet_forward.19} parent=0 // pred_fallthru
    _
  // Predicated region
  $region22: #{efficientnet_forward.19} parent=0 // pred_check
    _
  $region23: #{efficientnet_forward.19} parent=0 // pred_check_branch
    %212 = sbr.rel (0) target = $region25
  $region24: #{efficientnet_forward.19} parent=0 // pred_region
    _
  $region25: #{efficientnet_forward.19} parent=0 // pred_fallthru
    _
  // Predicated region
  $region26: #{efficientnet_forward.19} parent=0 // pred_check
    _
  $region27: #{efficientnet_forward.19} parent=0 // pred_check_branch
    %214 = sbr.rel (0) target = $region29
  $region28: #{efficientnet_forward.19} parent=0 // pred_region
    _
  $region29: #{efficientnet_forward.19} parent=0 // pred_fallthru
    _

</llo_original>
